<compile_context>
chip_gen: v7x
topology: tpu7x:2x2x1
jax: 0.10.0
libtpu: 0.0.40
codegen_flags: <defaults>
</compile_context>

<pallas_src>
import functools

import jax
import jax.numpy as jnp
from jax.experimental import pallas as pl
from jax.experimental.pallas import tpu as pltpu


# ----------------------------- Pallas kernel ------------------------------

def _adain_resblock_kernel(x_ref, gb_ref, lmask_ref, rmask_ref, wc_ref, bc_ref,
                           o_ref, ypad_ref, cols_ref, *,
                           Bt, H, W, C, pad_top, eps):
    HW = H * W
    # Tap (di, dj) of flattened output row r lives at padded row
    #   base + di*W + dj + r, where the interior (y) starts at row pad_top.
    base = pad_top - (W + 1)

    # Zero only the pad rows; the interior is fully overwritten per element.
    zeros_pad = jnp.zeros((pad_top, C), jnp.bfloat16)
    ypad_ref[pl.ds(0, pad_top), :] = zeros_pad
    ypad_ref[pl.ds(pad_top + HW, pad_top), :] = zeros_pad

    inv_hw = 1.0 / HW

    for b in range(Bt):
        x = x_ref[b]                                          # (HW, C) f32
        gb = gb_ref[b]                                        # (1, 2C) f32
        gamma = gb[:, :C]
        beta = gb[:, C:]

        # --- InstanceNorm2d (no affine, biased var) in one pass + AdaIN+ReLU
        s1 = jnp.sum(x, axis=0, keepdims=True)                # (1, C)
        s2 = jnp.sum(x * x, axis=0, keepdims=True)            # (1, C)
        mean = s1 * inv_hw
        var = s2 * inv_hw - mean * mean
        scale = gamma * jax.lax.rsqrt(var + eps)              # (1, C)
        shift = beta - mean * scale                           # (1, C)
        y = jnp.maximum(x * scale + shift, 0.0).astype(jnp.bfloat16)

        # Interior store is sublane-aligned (pad_top % 16 == 0).
        ypad_ref[pl.ds(pad_top, HW), :] = y

        # --- im2col: nine shifted windows -> (HW, 9C) bf16.  The left/right
        # masks kill the horizontal wrap-around of the flattened layout.
        for di in range(3):
            for dj in range(3):
                tap = di * 3 + dj
                patch = ypad_ref[pl.ds(base + di * W + dj, HW), :]
                if dj == 0:
                    patch = patch * lmask_ref[...]
                elif dj == 2:
                    patch = patch * rmask_ref[...]
                cols_ref[:, pl.ds(tap * C, C)] = patch

        # --- 3x3 conv as ONE MXU matmul, bf16 in / f32 accumulation.
        conv = jnp.dot(cols_ref[...], wc_ref[...],
                       preferred_element_type=jnp.float32)    # (HW, C)

        # --- conv bias + residual (re-read x so it isn't live across conv).
        o_ref[b] = conv + bc_ref[...] + x_ref[b]


# ------------------------------ JAX wrapper --------------------------------

def _pick_batch_block(n, max_bt=8):
    bt = 1
    for cand in range(1, min(n, max_bt) + 1):
        if n % cand == 0:
            bt = cand
    return bt


def adain_resblock_forward(x_nchw, style, params, *, eps=1e-5):
    N, C, H, W = x_nchw.shape
    HW = H * W
    assert C % 128 == 0, "channels must be a multiple of 128 (lane-dense)"
    assert HW % 8 == 0, "H*W must be a multiple of 8 (sublane alignment)"
    # TODO(synk): for large resolutions, tile the H*W axis (conv rows + 1-row
    # halo, stats via a first-pass reduction) to respect v7x's 64 MiB VMEM.

    Bt = _pick_batch_block(N)
    pad_top = ((W + 1 + 15) // 16) * 16        # >= W+1, bf16 sublane aligned
    pad_rows = 2 * pad_top + HW

    # NCHW -> flattened NHWC (clean 2-D (rows, lanes) tiles inside the kernel).
    x_flat = jnp.transpose(x_nchw, (0, 2, 3, 1)).reshape(N, HW, C)
    x_flat = x_flat.astype(jnp.float32)

    # Style FC hoisted out of the kernel: full-f32 gamma/beta.
    gb = jnp.dot(style.astype(jnp.float32),
                 jnp.transpose(params["fc_w"]).astype(jnp.float32),
                 precision=jax.lax.Precision.HIGHEST) + params["fc_b"]
    gb = gb.reshape(N, 1, 2 * C).astype(jnp.float32)

    # Conv weight OIHW -> (kh, kw, Cin, Cout) -> (9*Cin, Cout) bf16 so the
    # MXU runs at native rate with f32 accumulation (tap order = kh*3 + kw,
    # matching the in-kernel im2col concat order).
    w_conv = jnp.transpose(params["conv_w"], (2, 3, 1, 0))
    w_conv = w_conv.reshape(9 * C, C).astype(jnp.bfloat16)
    b_conv = params["conv_b"].reshape(1, C).astype(jnp.float32)

    # Grid-invariant horizontal-wrap masks (hoisted broadcast).
    col = jnp.arange(HW, dtype=jnp.int32) % W
    left_ok = jnp.broadcast_to((col > 0)[:, None], (HW, C)).astype(jnp.bfloat16)
    right_ok = jnp.broadcast_to((col < W - 1)[:, None], (HW, C)).astype(jnp.bfloat16)

    kernel = functools.partial(_adain_resblock_kernel, Bt=Bt, H=H, W=W, C=C,
                               pad_top=pad_top, eps=eps)

    out_flat = pl.pallas_call(
        kernel,
        out_shape=jax.ShapeDtypeStruct((N, HW, C), jnp.float32),
        grid_spec=pltpu.PrefetchScalarGridSpec(
            num_scalar_prefetch=0,
            grid=(N // Bt,),
            in_specs=[
                pl.BlockSpec((Bt, HW, C), lambda n: (n, 0, 0)),       # x
                pl.BlockSpec((Bt, 1, 2 * C), lambda n: (n, 0, 0)),    # gamma/beta
                pl.BlockSpec((HW, C), lambda n: (0, 0)),              # left mask
                pl.BlockSpec((HW, C), lambda n: (0, 0)),              # right mask
                pl.BlockSpec((9 * C, C), lambda n: (0, 0)),           # conv W
                pl.BlockSpec((1, C), lambda n: (0, 0)),               # conv b
            ],
            out_specs=pl.BlockSpec((Bt, HW, C), lambda n: (n, 0, 0)),
            scratch_shapes=[
                pltpu.VMEM((pad_rows, C), jnp.bfloat16),              # padded act
                pltpu.VMEM((HW, 9 * C), jnp.bfloat16),                # im2col
            ],
        ),
        compiler_params=pltpu.CompilerParams(
            dimension_semantics=("parallel",)),
    )(x_flat, gb, left_ok, right_ok, w_conv, b_conv)

    return jnp.transpose(out_flat.reshape(N, H, W, C), (0, 3, 1, 2))


# ------------------------------ reference ----------------------------------

def reference_forward(x, style, params, *, eps=1e-5):
    C = x.shape[1]
    gb = jnp.dot(style, params["fc_w"].T,
                 precision=jax.lax.Precision.HIGHEST) + params["fc_b"]
    gamma = gb[:, :C][:, :, None, None]
    beta = gb[:, C:][:, :, None, None]
    mean = jnp.mean(x, axis=(2, 3), keepdims=True)
    var = jnp.var(x, axis=(2, 3), keepdims=True)
    y = jax.nn.relu(gamma * (x - mean) / jnp.sqrt(var + eps) + beta)
    out = jax.lax.conv_general_dilated(
        y, params["conv_w"], (1, 1), [(1, 1), (1, 1)],
        dimension_numbers=("NCHW", "OIHW", "NCHW"),
        precision=jax.lax.Precision.HIGHEST)
    return out + params["conv_b"][None, :, None, None] + x


def init_params(key, channels, style_dim):
    ks = jax.random.split(key, 4)
    return {
        "fc_w": jax.random.normal(ks[0], (2 * channels, style_dim),
                                  jnp.float32) / jnp.sqrt(style_dim),
        "fc_b": 0.01 * jax.random.normal(ks[1], (2 * channels,), jnp.float32),
        "conv_w": jax.random.normal(ks[2], (channels, channels, 3, 3),
                                    jnp.float32) / jnp.sqrt(9 * channels),
        "conv_b": 0.01 * jax.random.normal(ks[3], (channels,), jnp.float32),
    }


if __name__ == "__main__":
    N, C, H, W = 2, 128, 16, 16
    S = 64

    key = jax.random.PRNGKey(0)
    kx, ks, kp = jax.random.split(key, 3)
    x = jax.random.normal(kx, (N, C, H, W), jnp.float32)
    style = jax.random.normal(ks, (N, S), jnp.float32)
    params = init_params(kp, C, S)

    out = jax.block_until_ready(adain_resblock_forward(x, style, params))
    ref = jax.block_until_ready(reference_forward(x, style, params))

    assert out.shape == (N, C, H, W), out.shape
    max_err = float(jnp.max(jnp.abs(out - ref)))
    # Activations/conv weights are intentionally bf16 on the MXU (f32 accum);
    # norm stats, gamma/beta, bias and residual are exact f32.
    assert jnp.allclose(out, ref, rtol=3e-2, atol=3e-2), max_err
    print("KERNEL_OK")
</pallas_src>

<mosaic_0001>
module attributes {stable_mosaic.version = 11 : i64} {
  func.func @_adain_resblock_kernel(%arg0: i32, %arg1: memref<2x256x128xf32, #tpu.memory_space<vmem>>, %arg2: memref<2x1x256xf32, #tpu.memory_space<vmem>>, %arg3: memref<256x128xbf16, #tpu.memory_space<vmem>>, %arg4: memref<256x128xbf16, #tpu.memory_space<vmem>>, %arg5: memref<1152x128xbf16, #tpu.memory_space<vmem>>, %arg6: memref<1x128xf32, #tpu.memory_space<vmem>>, %arg7: memref<2x256x128xf32, #tpu.memory_space<vmem>>, %arg8: memref<320x128xbf16, #tpu.memory_space<vmem>>, %arg9: memref<256x1152xbf16, #tpu.memory_space<vmem>>) attributes {dimension_semantics = [#tpu.dimension_semantics<parallel>], iteration_bounds = array<i64: 1>, scalar_prefetch = 0 : i64, scratch_operands = 2 : i64, tpu.core_type = #tpu.core_type<tc>, window_params = [{transform_indices = @transform_0, window_bounds = array<i64: 2, 256, 128>}, {transform_indices = @transform_1, window_bounds = array<i64: 2, 1, 256>}, {pipeline_mode = #tpu.pipeline_mode<synchronous>, transform_indices = @transform_2, window_bounds = array<i64: 256, 128>}, {pipeline_mode = #tpu.pipeline_mode<synchronous>, transform_indices = @transform_3, window_bounds = array<i64: 256, 128>}, {pipeline_mode = #tpu.pipeline_mode<synchronous>, transform_indices = @transform_4, window_bounds = array<i64: 1152, 128>}, {pipeline_mode = #tpu.pipeline_mode<synchronous>, transform_indices = @transform_5, window_bounds = array<i64: 1, 128>}, {transform_indices = @transform_6, window_bounds = array<i64: 2, 256, 128>}]} {
    %cst = arith.constant 0.000000e+00 : bf16
    %0 = vector.broadcast %cst : bf16 to vector<32x128xbf16>
    %c0 = arith.constant 0 : index
    %c0_0 = arith.constant 0 : index
    %1 = vector.load %arg8[%c0, %c0_0] : memref<320x128xbf16, #tpu.memory_space<vmem>>, vector<32x128xbf16>
    tpu.vector_store %arg8[%c0, %c0_0], %0 {strides = array<i32>} : memref<320x128xbf16, #tpu.memory_space<vmem>>, vector<32x128xbf16>,
    %c288 = arith.constant 288 : index
    %c0_1 = arith.constant 0 : index
    %2 = vector.load %arg8[%c288, %c0_1] : memref<320x128xbf16, #tpu.memory_space<vmem>>, vector<32x128xbf16>
    tpu.vector_store %arg8[%c288, %c0_1], %0 {strides = array<i32>} : memref<320x128xbf16, #tpu.memory_space<vmem>>, vector<32x128xbf16>,
    %c0_2 = arith.constant 0 : index
    %c0_3 = arith.constant 0 : index
    %c0_4 = arith.constant 0 : index
    %3 = vector.load %arg1[%c0_2, %c0_3, %c0_4] : memref<2x256x128xf32, #tpu.memory_space<vmem>>, vector<1x256x128xf32>
    %4 = vector.shape_cast %3 : vector<1x256x128xf32> to vector<256x128xf32>
    %c0_5 = arith.constant 0 : index
    %c0_6 = arith.constant 0 : index
    %c0_7 = arith.constant 0 : index
    %5 = vector.load %arg2[%c0_5, %c0_6, %c0_7] : memref<2x1x256xf32, #tpu.memory_space<vmem>>, vector<1x1x256xf32>
    %6 = vector.shape_cast %5 : vector<1x1x256xf32> to vector<1x256xf32>
    %7 = vector.extract_strided_slice %6 {offsets = [0, 0], sizes = [1, 128], strides = [1, 1]} : vector<1x256xf32> to vector<1x128xf32>
    %8 = vector.extract_strided_slice %6 {offsets = [0, 128], sizes = [1, 128], strides = [1, 1]} : vector<1x256xf32> to vector<1x128xf32>
    %cst_8 = arith.constant dense<0.000000e+00> : vector<128xf32>
    %9 = vector.multi_reduction <add>, %4, %cst_8 [0] : vector<256x128xf32> to vector<128xf32>
    %10 = vector.shape_cast %9 : vector<128xf32> to vector<1x128xf32>
    %11 = arith.mulf %4, %4 : vector<256x128xf32>
    %cst_9 = arith.constant dense<0.000000e+00> : vector<128xf32>
    %12 = vector.multi_reduction <add>, %11, %cst_9 [0] : vector<256x128xf32> to vector<128xf32>
    %13 = vector.shape_cast %12 : vector<128xf32> to vector<1x128xf32>
    %cst_10 = arith.constant 3.906250e-03 : f32
    %14 = vector.broadcast %cst_10 : f32 to vector<1x128xf32>
    %15 = arith.mulf %10, %14 : vector<1x128xf32>
    %cst_11 = arith.constant 3.906250e-03 : f32
    %16 = vector.broadcast %cst_11 : f32 to vector<1x128xf32>
    %17 = arith.mulf %13, %16 : vector<1x128xf32>
    %18 = arith.mulf %15, %15 : vector<1x128xf32>
    %19 = arith.subf %17, %18 : vector<1x128xf32>
    %cst_12 = arith.constant 9.99999974E-6 : f32
    %20 = vector.broadcast %cst_12 : f32 to vector<1x128xf32>
    %21 = arith.addf %19, %20 : vector<1x128xf32>
    %22 = math.rsqrt %21 : vector<1x128xf32>
    %23 = arith.mulf %7, %22 : vector<1x128xf32>
    %24 = arith.mulf %15, %23 : vector<1x128xf32>
    %25 = arith.subf %8, %24 : vector<1x128xf32>
    %26 = vector.broadcast %23 : vector<1x128xf32> to vector<256x128xf32>
    %27 = arith.mulf %4, %26 : vector<256x128xf32>
    %28 = vector.broadcast %25 : vector<1x128xf32> to vector<256x128xf32>
    %29 = arith.addf %27, %28 : vector<256x128xf32>
    %cst_13 = arith.constant 0.000000e+00 : f32
    %30 = vector.broadcast %cst_13 : f32 to vector<256x128xf32>
    %31 = arith.maximumf %29, %30 : vector<256x128xf32>
    %32 = arith.truncf %31 : vector<256x128xf32> to vector<256x128xbf16>
    %c32 = arith.constant 32 : index
    %c0_14 = arith.constant 0 : index
    %33 = vector.load %arg8[%c32, %c0_14] : memref<320x128xbf16, #tpu.memory_space<vmem>>, vector<256x128xbf16>
    tpu.vector_store %arg8[%c32, %c0_14], %32 {strides = array<i32>} : memref<320x128xbf16, #tpu.memory_space<vmem>>, vector<256x128xbf16>,
    %c15 = arith.constant 15 : index
    %c0_15 = arith.constant 0 : index
    %34 = vector.load %arg8[%c15, %c0_15] : memref<320x128xbf16, #tpu.memory_space<vmem>>, vector<256x128xbf16>
    %c0_16 = arith.constant 0 : index
    %c0_17 = arith.constant 0 : index
    %35 = vector.load %arg3[%c0_16, %c0_17] : memref<256x128xbf16, #tpu.memory_space<vmem>>, vector<256x128xbf16>
    %36 = arith.mulf %34, %35 : vector<256x128xbf16>
    %c0_18 = arith.constant 0 : index
    %c0_19 = arith.constant 0 : index
    %37 = vector.load %arg9[%c0_18, %c0_19] : memref<256x1152xbf16, #tpu.memory_space<vmem>>, vector<256x128xbf16>
    tpu.vector_store %arg9[%c0_18, %c0_19], %36 {strides = array<i32>} : memref<256x1152xbf16, #tpu.memory_space<vmem>>, vector<256x128xbf16>,
    %c16 = arith.constant 16 : index
    %c0_20 = arith.constant 0 : index
    %38 = vector.load %arg8[%c16, %c0_20] : memref<320x128xbf16, #tpu.memory_space<vmem>>, vector<256x128xbf16>
    %c0_21 = arith.constant 0 : index
    %c128 = arith.constant 128 : index
    %39 = vector.load %arg9[%c0_21, %c128] : memref<256x1152xbf16, #tpu.memory_space<vmem>>, vector<256x128xbf16>
    tpu.vector_store %arg9[%c0_21, %c128], %38 {strides = array<i32>} : memref<256x1152xbf16, #tpu.memory_space<vmem>>, vector<256x128xbf16>,
    %c17 = arith.constant 17 : index
    %c0_22 = arith.constant 0 : index
    %40 = vector.load %arg8[%c17, %c0_22] : memref<320x128xbf16, #tpu.memory_space<vmem>>, vector<256x128xbf16>
    %c0_23 = arith.constant 0 : index
    %c0_24 = arith.constant 0 : index
    %41 = vector.load %arg4[%c0_23, %c0_24] : memref<256x128xbf16, #tpu.memory_space<vmem>>, vector<256x128xbf16>
    %42 = arith.mulf %40, %41 : vector<256x128xbf16>
    %c0_25 = arith.constant 0 : index
    %c256 = arith.constant 256 : index
    %43 = vector.load %arg9[%c0_25, %c256] : memref<256x1152xbf16, #tpu.memory_space<vmem>>, vector<256x128xbf16>
    tpu.vector_store %arg9[%c0_25, %c256], %42 {strides = array<i32>} : memref<256x1152xbf16, #tpu.memory_space<vmem>>, vector<256x128xbf16>,
    %c31 = arith.constant 31 : index
    %c0_26 = arith.constant 0 : index
    %44 = vector.load %arg8[%c31, %c0_26] : memref<320x128xbf16, #tpu.memory_space<vmem>>, vector<256x128xbf16>
    %c0_27 = arith.constant 0 : index
    %c0_28 = arith.constant 0 : index
    %45 = vector.load %arg3[%c0_27, %c0_28] : memref<256x128xbf16, #tpu.memory_space<vmem>>, vector<256x128xbf16>
    %46 = arith.mulf %44, %45 : vector<256x128xbf16>
    %c0_29 = arith.constant 0 : index
    %c384 = arith.constant 384 : index
    %47 = vector.load %arg9[%c0_29, %c384] : memref<256x1152xbf16, #tpu.memory_space<vmem>>, vector<256x128xbf16>
    tpu.vector_store %arg9[%c0_29, %c384], %46 {strides = array<i32>} : memref<256x1152xbf16, #tpu.memory_space<vmem>>, vector<256x128xbf16>,
    %c32_30 = arith.constant 32 : index
    %c0_31 = arith.constant 0 : index
    %48 = vector.load %arg8[%c32_30, %c0_31] : memref<320x128xbf16, #tpu.memory_space<vmem>>, vector<256x128xbf16>
    %c0_32 = arith.constant 0 : index
    %c512 = arith.constant 512 : index
    %49 = vector.load %arg9[%c0_32, %c512] : memref<256x1152xbf16, #tpu.memory_space<vmem>>, vector<256x128xbf16>
    tpu.vector_store %arg9[%c0_32, %c512], %48 {strides = array<i32>} : memref<256x1152xbf16, #tpu.memory_space<vmem>>, vector<256x128xbf16>,
    %c33 = arith.constant 33 : index
    %c0_33 = arith.constant 0 : index
    %50 = vector.load %arg8[%c33, %c0_33] : memref<320x128xbf16, #tpu.memory_space<vmem>>, vector<256x128xbf16>
    %c0_34 = arith.constant 0 : index
    %c0_35 = arith.constant 0 : index
    %51 = vector.load %arg4[%c0_34, %c0_35] : memref<256x128xbf16, #tpu.memory_space<vmem>>, vector<256x128xbf16>
    %52 = arith.mulf %50, %51 : vector<256x128xbf16>
    %c0_36 = arith.constant 0 : index
    %c640 = arith.constant 640 : index
    %53 = vector.load %arg9[%c0_36, %c640] : memref<256x1152xbf16, #tpu.memory_space<vmem>>, vector<256x128xbf16>
    tpu.vector_store %arg9[%c0_36, %c640], %52 {strides = array<i32>} : memref<256x1152xbf16, #tpu.memory_space<vmem>>, vector<256x128xbf16>,
    %c47 = arith.constant 47 : index
    %c0_37 = arith.constant 0 : index
    %54 = vector.load %arg8[%c47, %c0_37] : memref<320x128xbf16, #tpu.memory_space<vmem>>, vector<256x128xbf16>
    %c0_38 = arith.constant 0 : index
    %c0_39 = arith.constant 0 : index
    %55 = vector.load %arg3[%c0_38, %c0_39] : memref<256x128xbf16, #tpu.memory_space<vmem>>, vector<256x128xbf16>
    %56 = arith.mulf %54, %55 : vector<256x128xbf16>
    %c0_40 = arith.constant 0 : index
    %c768 = arith.constant 768 : index
    %57 = vector.load %arg9[%c0_40, %c768] : memref<256x1152xbf16, #tpu.memory_space<vmem>>, vector<256x128xbf16>
    tpu.vector_store %arg9[%c0_40, %c768], %56 {strides = array<i32>} : memref<256x1152xbf16, #tpu.memory_space<vmem>>, vector<256x128xbf16>,
    %c48 = arith.constant 48 : index
    %c0_41 = arith.constant 0 : index
    %58 = vector.load %arg8[%c48, %c0_41] : memref<320x128xbf16, #tpu.memory_space<vmem>>, vector<256x128xbf16>
    %c0_42 = arith.constant 0 : index
    %c896 = arith.constant 896 : index
    %59 = vector.load %arg9[%c0_42, %c896] : memref<256x1152xbf16, #tpu.memory_space<vmem>>, vector<256x128xbf16>
    tpu.vector_store %arg9[%c0_42, %c896], %58 {strides = array<i32>} : memref<256x1152xbf16, #tpu.memory_space<vmem>>, vector<256x128xbf16>,
    %c49 = arith.constant 49 : index
    %c0_43 = arith.constant 0 : index
    %60 = vector.load %arg8[%c49, %c0_43] : memref<320x128xbf16, #tpu.memory_space<vmem>>, vector<256x128xbf16>
    %c0_44 = arith.constant 0 : index
    %c0_45 = arith.constant 0 : index
    %61 = vector.load %arg4[%c0_44, %c0_45] : memref<256x128xbf16, #tpu.memory_space<vmem>>, vector<256x128xbf16>
    %62 = arith.mulf %60, %61 : vector<256x128xbf16>
    %c0_46 = arith.constant 0 : index
    %c1024 = arith.constant 1024 : index
    %63 = vector.load %arg9[%c0_46, %c1024] : memref<256x1152xbf16, #tpu.memory_space<vmem>>, vector<256x128xbf16>
    tpu.vector_store %arg9[%c0_46, %c1024], %62 {strides = array<i32>} : memref<256x1152xbf16, #tpu.memory_space<vmem>>, vector<256x128xbf16>,
    %c0_47 = arith.constant 0 : index
    %c0_48 = arith.constant 0 : index
    %64 = vector.load %arg9[%c0_47, %c0_48] : memref<256x1152xbf16, #tpu.memory_space<vmem>>, vector<256x1152xbf16>
    %c0_49 = arith.constant 0 : index
    %c0_50 = arith.constant 0 : index
    %65 = vector.load %arg5[%c0_49, %c0_50] : memref<1152x128xbf16, #tpu.memory_space<vmem>>, vector<1152x128xbf16>
    %cst_51 = arith.constant dense<0.000000e+00> : vector<256x128xf32>
    %66 = tpu.matmul %64, %65, %cst_51 {dimension_numbers = #tpu.dot_dimension_numbers<[1], [0], [0], [1], [0, 0, 1, 1], [], []>} : vector<256x1152xbf16>, vector<1152x128xbf16>, vector<256x128xf32> -> vector<256x128xf32>
    %c0_52 = arith.constant 0 : index
    %c0_53 = arith.constant 0 : index
    %67 = vector.load %arg6[%c0_52, %c0_53] : memref<1x128xf32, #tpu.memory_space<vmem>>, vector<1x128xf32>
    %68 = vector.broadcast %67 : vector<1x128xf32> to vector<256x128xf32>
    %69 = arith.addf %66, %68 : vector<256x128xf32>
    %c0_54 = arith.constant 0 : index
    %c0_55 = arith.constant 0 : index
    %c0_56 = arith.constant 0 : index
    %70 = vector.load %arg1[%c0_54, %c0_55, %c0_56] : memref<2x256x128xf32, #tpu.memory_space<vmem>>, vector<1x256x128xf32>
    %71 = vector.shape_cast %70 : vector<1x256x128xf32> to vector<256x128xf32>
    %72 = arith.addf %69, %71 : vector<256x128xf32>
    %c0_57 = arith.constant 0 : index
    %c0_58 = arith.constant 0 : index
    %c0_59 = arith.constant 0 : index
    %73 = vector.load %arg7[%c0_57, %c0_58, %c0_59] : memref<2x256x128xf32, #tpu.memory_space<vmem>>, vector<1x256x128xf32>
    %74 = vector.shape_cast %73 : vector<1x256x128xf32> to vector<256x128xf32>
    %75 = vector.shape_cast %72 : vector<256x128xf32> to vector<1x256x128xf32>
    tpu.vector_store %arg7[%c0_57, %c0_58, %c0_59], %75 {strides = array<i32>} : memref<2x256x128xf32, #tpu.memory_space<vmem>>, vector<1x256x128xf32>,
    %c1 = arith.constant 1 : index
    %c0_60 = arith.constant 0 : index
    %c0_61 = arith.constant 0 : index
    %76 = vector.load %arg1[%c1, %c0_60, %c0_61] : memref<2x256x128xf32, #tpu.memory_space<vmem>>, vector<1x256x128xf32>
    %77 = vector.shape_cast %76 : vector<1x256x128xf32> to vector<256x128xf32>
    %c1_62 = arith.constant 1 : index
    %c0_63 = arith.constant 0 : index
    %c0_64 = arith.constant 0 : index
    %78 = vector.load %arg2[%c1_62, %c0_63, %c0_64] : memref<2x1x256xf32, #tpu.memory_space<vmem>>, vector<1x1x256xf32>
    %79 = vector.shape_cast %78 : vector<1x1x256xf32> to vector<1x256xf32>
    %80 = vector.extract_strided_slice %79 {offsets = [0, 0], sizes = [1, 128], strides = [1, 1]} : vector<1x256xf32> to vector<1x128xf32>
    %81 = vector.extract_strided_slice %79 {offsets = [0, 128], sizes = [1, 128], strides = [1, 1]} : vector<1x256xf32> to vector<1x128xf32>
    %cst_65 = arith.constant dense<0.000000e+00> : vector<128xf32>
    %82 = vector.multi_reduction <add>, %77, %cst_65 [0] : vector<256x128xf32> to vector<128xf32>
    %83 = vector.shape_cast %82 : vector<128xf32> to vector<1x128xf32>
    %84 = arith.mulf %77, %77 : vector<256x128xf32>
    %cst_66 = arith.constant dense<0.000000e+00> : vector<128xf32>
    %85 = vector.multi_reduction <add>, %84, %cst_66 [0] : vector<256x128xf32> to vector<128xf32>
    %86 = vector.shape_cast %85 : vector<128xf32> to vector<1x128xf32>
    %cst_67 = arith.constant 3.906250e-03 : f32
    %87 = vector.broadcast %cst_67 : f32 to vector<1x128xf32>
    %88 = arith.mulf %83, %87 : vector<1x128xf32>
    %cst_68 = arith.constant 3.906250e-03 : f32
    %89 = vector.broadcast %cst_68 : f32 to vector<1x128xf32>
    %90 = arith.mulf %86, %89 : vector<1x128xf32>
    %91 = arith.mulf %88, %88 : vector<1x128xf32>
    %92 = arith.subf %90, %91 : vector<1x128xf32>
    %cst_69 = arith.constant 9.99999974E-6 : f32
    %93 = vector.broadcast %cst_69 : f32 to vector<1x128xf32>
    %94 = arith.addf %92, %93 : vector<1x128xf32>
    %95 = math.rsqrt %94 : vector<1x128xf32>
    %96 = arith.mulf %80, %95 : vector<1x128xf32>
    %97 = arith.mulf %88, %96 : vector<1x128xf32>
    %98 = arith.subf %81, %97 : vector<1x128xf32>
    %99 = vector.broadcast %96 : vector<1x128xf32> to vector<256x128xf32>
    %100 = arith.mulf %77, %99 : vector<256x128xf32>
    %101 = vector.broadcast %98 : vector<1x128xf32> to vector<256x128xf32>
    %102 = arith.addf %100, %101 : vector<256x128xf32>
    %cst_70 = arith.constant 0.000000e+00 : f32
    %103 = vector.broadcast %cst_70 : f32 to vector<256x128xf32>
    %104 = arith.maximumf %102, %103 : vector<256x128xf32>
    %105 = arith.truncf %104 : vector<256x128xf32> to vector<256x128xbf16>
    %c32_71 = arith.constant 32 : index
    %c0_72 = arith.constant 0 : index
    %106 = vector.load %arg8[%c32_71, %c0_72] : memref<320x128xbf16, #tpu.memory_space<vmem>>, vector<256x128xbf16>
    tpu.vector_store %arg8[%c32_71, %c0_72], %105 {strides = array<i32>} : memref<320x128xbf16, #tpu.memory_space<vmem>>, vector<256x128xbf16>,
    %c15_73 = arith.constant 15 : index
    %c0_74 = arith.constant 0 : index
    %107 = vector.load %arg8[%c15_73, %c0_74] : memref<320x128xbf16, #tpu.memory_space<vmem>>, vector<256x128xbf16>
    %c0_75 = arith.constant 0 : index
    %c0_76 = arith.constant 0 : index
    %108 = vector.load %arg3[%c0_75, %c0_76] : memref<256x128xbf16, #tpu.memory_space<vmem>>, vector<256x128xbf16>
    %109 = arith.mulf %107, %108 : vector<256x128xbf16>
    %c0_77 = arith.constant 0 : index
    %c0_78 = arith.constant 0 : index
    %110 = vector.load %arg9[%c0_77, %c0_78] : memref<256x1152xbf16, #tpu.memory_space<vmem>>, vector<256x128xbf16>
    tpu.vector_store %arg9[%c0_77, %c0_78], %109 {strides = array<i32>} : memref<256x1152xbf16, #tpu.memory_space<vmem>>, vector<256x128xbf16>,
    %c16_79 = arith.constant 16 : index
    %c0_80 = arith.constant 0 : index
    %111 = vector.load %arg8[%c16_79, %c0_80] : memref<320x128xbf16, #tpu.memory_space<vmem>>, vector<256x128xbf16>
    %c0_81 = arith.constant 0 : index
    %c128_82 = arith.constant 128 : index
    %112 = vector.load %arg9[%c0_81, %c128_82] : memref<256x1152xbf16, #tpu.memory_space<vmem>>, vector<256x128xbf16>
    tpu.vector_store %arg9[%c0_81, %c128_82], %111 {strides = array<i32>} : memref<256x1152xbf16, #tpu.memory_space<vmem>>, vector<256x128xbf16>,
    %c17_83 = arith.constant 17 : index
    %c0_84 = arith.constant 0 : index
    %113 = vector.load %arg8[%c17_83, %c0_84] : memref<320x128xbf16, #tpu.memory_space<vmem>>, vector<256x128xbf16>
    %c0_85 = arith.constant 0 : index
    %c0_86 = arith.constant 0 : index
    %114 = vector.load %arg4[%c0_85, %c0_86] : memref<256x128xbf16, #tpu.memory_space<vmem>>, vector<256x128xbf16>
    %115 = arith.mulf %113, %114 : vector<256x128xbf16>
    %c0_87 = arith.constant 0 : index
    %c256_88 = arith.constant 256 : index
    %116 = vector.load %arg9[%c0_87, %c256_88] : memref<256x1152xbf16, #tpu.memory_space<vmem>>, vector<256x128xbf16>
    tpu.vector_store %arg9[%c0_87, %c256_88], %115 {strides = array<i32>} : memref<256x1152xbf16, #tpu.memory_space<vmem>>, vector<256x128xbf16>,
    %c31_89 = arith.constant 31 : index
    %c0_90 = arith.constant 0 : index
    %117 = vector.load %arg8[%c31_89, %c0_90] : memref<320x128xbf16, #tpu.memory_space<vmem>>, vector<256x128xbf16>
    %c0_91 = arith.constant 0 : index
    %c0_92 = arith.constant 0 : index
    %118 = vector.load %arg3[%c0_91, %c0_92] : memref<256x128xbf16, #tpu.memory_space<vmem>>, vector<256x128xbf16>
    %119 = arith.mulf %117, %118 : vector<256x128xbf16>
    %c0_93 = arith.constant 0 : index
    %c384_94 = arith.constant 384 : index
    %120 = vector.load %arg9[%c0_93, %c384_94] : memref<256x1152xbf16, #tpu.memory_space<vmem>>, vector<256x128xbf16>
    tpu.vector_store %arg9[%c0_93, %c384_94], %119 {strides = array<i32>} : memref<256x1152xbf16, #tpu.memory_space<vmem>>, vector<256x128xbf16>,
    %c32_95 = arith.constant 32 : index
    %c0_96 = arith.constant 0 : index
    %121 = vector.load %arg8[%c32_95, %c0_96] : memref<320x128xbf16, #tpu.memory_space<vmem>>, vector<256x128xbf16>
    %c0_97 = arith.constant 0 : index
    %c512_98 = arith.constant 512 : index
    %122 = vector.load %arg9[%c0_97, %c512_98] : memref<256x1152xbf16, #tpu.memory_space<vmem>>, vector<256x128xbf16>
    tpu.vector_store %arg9[%c0_97, %c512_98], %121 {strides = array<i32>} : memref<256x1152xbf16, #tpu.memory_space<vmem>>, vector<256x128xbf16>,
    %c33_99 = arith.constant 33 : index
    %c0_100 = arith.constant 0 : index
    %123 = vector.load %arg8[%c33_99, %c0_100] : memref<320x128xbf16, #tpu.memory_space<vmem>>, vector<256x128xbf16>
    %c0_101 = arith.constant 0 : index
    %c0_102 = arith.constant 0 : index
    %124 = vector.load %arg4[%c0_101, %c0_102] : memref<256x128xbf16, #tpu.memory_space<vmem>>, vector<256x128xbf16>
    %125 = arith.mulf %123, %124 : vector<256x128xbf16>
    %c0_103 = arith.constant 0 : index
    %c640_104 = arith.constant 640 : index
    %126 = vector.load %arg9[%c0_103, %c640_104] : memref<256x1152xbf16, #tpu.memory_space<vmem>>, vector<256x128xbf16>
    tpu.vector_store %arg9[%c0_103, %c640_104], %125 {strides = array<i32>} : memref<256x1152xbf16, #tpu.memory_space<vmem>>, vector<256x128xbf16>,
    %c47_105 = arith.constant 47 : index
    %c0_106 = arith.constant 0 : index
    %127 = vector.load %arg8[%c47_105, %c0_106] : memref<320x128xbf16, #tpu.memory_space<vmem>>, vector<256x128xbf16>
    %c0_107 = arith.constant 0 : index
    %c0_108 = arith.constant 0 : index
    %128 = vector.load %arg3[%c0_107, %c0_108] : memref<256x128xbf16, #tpu.memory_space<vmem>>, vector<256x128xbf16>
    %129 = arith.mulf %127, %128 : vector<256x128xbf16>
    %c0_109 = arith.constant 0 : index
    %c768_110 = arith.constant 768 : index
    %130 = vector.load %arg9[%c0_109, %c768_110] : memref<256x1152xbf16, #tpu.memory_space<vmem>>, vector<256x128xbf16>
    tpu.vector_store %arg9[%c0_109, %c768_110], %129 {strides = array<i32>} : memref<256x1152xbf16, #tpu.memory_space<vmem>>, vector<256x128xbf16>,
    %c48_111 = arith.constant 48 : index
    %c0_112 = arith.constant 0 : index
    %131 = vector.load %arg8[%c48_111, %c0_112] : memref<320x128xbf16, #tpu.memory_space<vmem>>, vector<256x128xbf16>
    %c0_113 = arith.constant 0 : index
    %c896_114 = arith.constant 896 : index
    %132 = vector.load %arg9[%c0_113, %c896_114] : memref<256x1152xbf16, #tpu.memory_space<vmem>>, vector<256x128xbf16>
    tpu.vector_store %arg9[%c0_113, %c896_114], %131 {strides = array<i32>} : memref<256x1152xbf16, #tpu.memory_space<vmem>>, vector<256x128xbf16>,
    %c49_115 = arith.constant 49 : index
    %c0_116 = arith.constant 0 : index
    %133 = vector.load %arg8[%c49_115, %c0_116] : memref<320x128xbf16, #tpu.memory_space<vmem>>, vector<256x128xbf16>
    %c0_117 = arith.constant 0 : index
    %c0_118 = arith.constant 0 : index
    %134 = vector.load %arg4[%c0_117, %c0_118] : memref<256x128xbf16, #tpu.memory_space<vmem>>, vector<256x128xbf16>
    %135 = arith.mulf %133, %134 : vector<256x128xbf16>
    %c0_119 = arith.constant 0 : index
    %c1024_120 = arith.constant 1024 : index
    %136 = vector.load %arg9[%c0_119, %c1024_120] : memref<256x1152xbf16, #tpu.memory_space<vmem>>, vector<256x128xbf16>
    tpu.vector_store %arg9[%c0_119, %c1024_120], %135 {strides = array<i32>} : memref<256x1152xbf16, #tpu.memory_space<vmem>>, vector<256x128xbf16>,
    %c0_121 = arith.constant 0 : index
    %c0_122 = arith.constant 0 : index
    %137 = vector.load %arg9[%c0_121, %c0_122] : memref<256x1152xbf16, #tpu.memory_space<vmem>>, vector<256x1152xbf16>
    %c0_123 = arith.constant 0 : index
    %c0_124 = arith.constant 0 : index
    %138 = vector.load %arg5[%c0_123, %c0_124] : memref<1152x128xbf16, #tpu.memory_space<vmem>>, vector<1152x128xbf16>
    %cst_125 = arith.constant dense<0.000000e+00> : vector<256x128xf32>
    %139 = tpu.matmul %137, %138, %cst_125 {dimension_numbers = #tpu.dot_dimension_numbers<[1], [0], [0], [1], [0, 0, 1, 1], [], []>} : vector<256x1152xbf16>, vector<1152x128xbf16>, vector<256x128xf32> -> vector<256x128xf32>
    %c0_126 = arith.constant 0 : index
    %c0_127 = arith.constant 0 : index
    %140 = vector.load %arg6[%c0_126, %c0_127] : memref<1x128xf32, #tpu.memory_space<vmem>>, vector<1x128xf32>
    %141 = vector.broadcast %140 : vector<1x128xf32> to vector<256x128xf32>
    %142 = arith.addf %139, %141 : vector<256x128xf32>
    %c1_128 = arith.constant 1 : index
    %c0_129 = arith.constant 0 : index
    %c0_130 = arith.constant 0 : index
    %143 = vector.load %arg1[%c1_128, %c0_129, %c0_130] : memref<2x256x128xf32, #tpu.memory_space<vmem>>, vector<1x256x128xf32>
    %144 = vector.shape_cast %143 : vector<1x256x128xf32> to vector<256x128xf32>
    %145 = arith.addf %142, %144 : vector<256x128xf32>
    %c1_131 = arith.constant 1 : index
    %c0_132 = arith.constant 0 : index
    %c0_133 = arith.constant 0 : index
    %146 = vector.load %arg7[%c1_131, %c0_132, %c0_133] : memref<2x256x128xf32, #tpu.memory_space<vmem>>, vector<1x256x128xf32>
    %147 = vector.shape_cast %146 : vector<1x256x128xf32> to vector<256x128xf32>
    %148 = vector.shape_cast %145 : vector<256x128xf32> to vector<1x256x128xf32>
    tpu.vector_store %arg7[%c1_131, %c0_132, %c0_133], %148 {strides = array<i32>} : memref<2x256x128xf32, #tpu.memory_space<vmem>>, vector<1x256x128xf32>,
    return
  }
  func.func @transform_0(%arg0: i32) -> (i32, i32, i32) {
    %c0_i32 = arith.constant 0 : i32
    %c0_i32_0 = arith.constant 0 : i32
    %c0_i32_1 = arith.constant 0 : i32
    return %arg0, %c0_i32, %c0_i32_0 : i32, i32, i32
  }
  func.func @transform_1(%arg0: i32) -> (i32, i32, i32) {
    %c0_i32 = arith.constant 0 : i32
    %c0_i32_0 = arith.constant 0 : i32
    %c0_i32_1 = arith.constant 0 : i32
    return %arg0, %c0_i32, %c0_i32_0 : i32, i32, i32
  }
  func.func @transform_2(%arg0: i32) -> (i32, i32) {
    %c0_i32 = arith.constant 0 : i32
    %c0_i32_0 = arith.constant 0 : i32
    %c0_i32_1 = arith.constant 0 : i32
    return %c0_i32, %c0_i32_0 : i32, i32
  }
  func.func @transform_3(%arg0: i32) -> (i32, i32) {
    %c0_i32 = arith.constant 0 : i32
    %c0_i32_0 = arith.constant 0 : i32
    %c0_i32_1 = arith.constant 0 : i32
    return %c0_i32, %c0_i32_0 : i32, i32
  }
  func.func @transform_4(%arg0: i32) -> (i32, i32) {
    %c0_i32 = arith.constant 0 : i32
    %c0_i32_0 = arith.constant 0 : i32
    %c0_i32_1 = arith.constant 0 : i32
    return %c0_i32, %c0_i32_0 : i32, i32
  }
  func.func @transform_5(%arg0: i32) -> (i32, i32) {
    %c0_i32 = arith.constant 0 : i32
    %c0_i32_0 = arith.constant 0 : i32
    %c0_i32_1 = arith.constant 0 : i32
    return %c0_i32, %c0_i32_0 : i32, i32
  }
  func.func @transform_6(%arg0: i32) -> (i32, i32, i32) {
    %c0_i32 = arith.constant 0 : i32
    %c0_i32_0 = arith.constant 0 : i32
    %c0_i32_1 = arith.constant 0 : i32
    return %arg0, %c0_i32, %c0_i32_0 : i32, i32, i32
  }
}

</mosaic_0001>

<llo_original>
// kernel: tpu_custom_call.1
$region0: #{tpu_custom_call.1}
  #allocation0 [shape = 'u32[]', space=smem, size = 0x4, offset = 0x4, fixed_abs, tag = 'smem constant byte address 0x4 - core index']
  #allocation1 [shape = 'u32[144,128]{1,0:T(1,128)}', space=vmem, size = 0x12000, scoped, tag = 'internal scratch']
  #allocation2 [shape = 'bf16[320,128]{1,0:T(16,128)(2,1)}', space=vmem, size = 0x14000, scoped, tag = 'scratch operand']
  #allocation3 [shape = 'bf16[256,1152]{1,0:T(16,128)(2,1)}', space=vmem, size = 0x90000, scoped, tag = 'scratch operand']
  %s0 = inlined_call_operand.hbm [shape: f32[2,256,128], index: 0, kind: input, shape index: {}]
  %s1 = inlined_call_operand.hbm [shape: f32[2,1,256], index: 1, kind: input, shape index: {}]
  %s2 = inlined_call_operand.hbm [shape: bf16[256,128], index: 2, kind: input, shape index: {}]
  %s3 = inlined_call_operand.hbm [shape: bf16[256,128], index: 3, kind: input, shape index: {}]
  %s4 = inlined_call_operand.hbm [shape: bf16[1152,128], index: 4, kind: input, shape index: {}]
  %s5 = inlined_call_operand.vmem [shape: f32[1,128], index: 5, kind: input, shape index: {}]
  %s6 = inlined_call_operand.hbm [shape: f32[2,256,128], index: 6, kind: output, shape index: {}]
  %s7 = sld [smem:[#allocation0]]
  $region54: #{tpu_custom_call.1} parent=0
    _
  %s9 = ssub.s32 1, %s7
  %s10 = scalar_select 0, %s9, %s7
  $region1: #{tpu_custom_call.1} parent=0
    #allocation4 [shape = 'u8[262144]{0}', space=vmem, size = 0x40000, scoped, tag = 'input window, operand 0, single buffered']
    #allocation5 [shape = 's32[1]{0}', space=sflag, size = 0x4, scoped, tag = 'scoped memory for tpu_custom_call.1']
    #allocation6 [shape = 's32[1]{0}', space=sflag, size = 0x4, scoped, tag = 'scoped memory for tpu_custom_call.1']
    #allocation7 [shape = 'u8[2048]{0}', space=vmem, size = 0x800, scoped, tag = 'input window, operand 1, single buffered']
    #allocation8 [shape = 's32[1]{0}', space=sflag, size = 0x4, scoped, tag = 'scoped memory for tpu_custom_call.1']
    #allocation9 [shape = 'u8[65536]{0}', space=vmem, size = 0x10000, scoped, tag = 'input window, operand 2, single buffered']
    #allocation10 [shape = 'u8[65536]{0}', space=vmem, size = 0x10000, scoped, tag = 'input window, operand 3, single buffered']
    #allocation11 [shape = 's32[1]{0}', space=sflag, size = 0x4, scoped, tag = 'scoped memory for tpu_custom_call.1']
    #allocation12 [shape = 'u8[294912]{0}', space=vmem, size = 0x48000, scoped, tag = 'input window, operand 4, single buffered']
    #allocation13 [shape = 'u8[262144]{0}', space=vmem, size = 0x40000, scoped, tag = 'output window, operand 0, single buffered']
    %11 = vsyncpa [#allocation5], 0
    %12 = vsyncpa [#allocation8], 0
    %13 = vsyncpa [#allocation11], 0
    %14 = vsyncpa [#allocation6], 0
    // Predicated region
    $region2: #{tpu_custom_call.1} parent=1 // pred_check
      _
    $region3: #{tpu_custom_call.1} parent=1 // pred_check_branch
      %16 = sbr.rel (0) target = $region5
    $region4: #{tpu_custom_call.1} parent=1 // pred_region
      %s18 = ssub.s32 8192, 8192
      %19 = vsyncadd [#allocation5], %s18
      %s20 = sshll.u32 [#allocation4], 4
      %s21 = int_to_ptr.vmem [resolvable:$true] %s20
      %26 = dma.hbm_to_vmem [thread:$0]  %s0, 8192, %s21, [#allocation5], 128, 128, 8
    $region5: #{tpu_custom_call.1} parent=1 // pred_fallthru
      _
    // Predicated region
    $region6: #{tpu_custom_call.1} parent=1 // pred_check
      _
    $region7: #{tpu_custom_call.1} parent=1 // pred_check_branch
      %28 = sbr.rel (0) target = $region9
    $region8: #{tpu_custom_call.1} parent=1 // pred_region
      %s30 = ssub.s32 64, 64
      %31 = vsyncadd [#allocation8], %s30
      %s32 = sshll.u32 [#allocation7], 4
      %s33 = int_to_ptr.vmem [resolvable:$true] %s32
      %38 = dma.hbm_to_vmem [thread:$0]  %s1, 64, %s33, [#allocation8], 32, 32, 2
    $region9: #{tpu_custom_call.1} parent=1 // pred_fallthru
      _
    // Predicated region
    $region10: #{tpu_custom_call.1} parent=1 // pred_check
      _
    $region11: #{tpu_custom_call.1} parent=1 // pred_check_branch
      %40 = sbr.rel (0) target = $region13
    $region12: #{tpu_custom_call.1} parent=1 // pred_region
      %s42 = ssub.s32 2048, 2048
      %43 = vsyncadd [#allocation8], %s42
      %s44 = sshll.u32 [#allocation9], 4
      %s45 = int_to_ptr.vmem [resolvable:$true] %s44
      %50 = dma.hbm_to_vmem [thread:$0]  %s2, 2048, %s45, [#allocation8], 64, 64, 4
    $region13: #{tpu_custom_call.1} parent=1 // pred_fallthru
      _
    // Predicated region
    $region14: #{tpu_custom_call.1} parent=1 // pred_check
      _
    $region15: #{tpu_custom_call.1} parent=1 // pred_check_branch
      %52 = sbr.rel (0) target = $region17
    $region16: #{tpu_custom_call.1} parent=1 // pred_region
      %s54 = ssub.s32 2048, 2048
      %55 = vsyncadd [#allocation11], %s54
      %s56 = sshll.u32 [#allocation10], 4
      %s57 = int_to_ptr.vmem [resolvable:$true] %s56
      %62 = dma.hbm_to_vmem [thread:$0]  %s3, 2048, %s57, [#allocation11], 64, 64, 4
    $region17: #{tpu_custom_call.1} parent=1 // pred_fallthru
      _
    // Predicated region
    $region18: #{tpu_custom_call.1} parent=1 // pred_check
      _
    $region19: #{tpu_custom_call.1} parent=1 // pred_check_branch
      %64 = sbr.rel (0) target = $region21
    $region20: #{tpu_custom_call.1} parent=1 // pred_region
      %s66 = ssub.s32 9216, 9216
      %67 = vsyncadd [#allocation11], %s66
      %s68 = sshll.u32 [#allocation12], 4
      %s69 = int_to_ptr.vmem [resolvable:$true] %s68
      %74 = dma.hbm_to_vmem [thread:$0]  %s4, 9216, %s69, [#allocation11], 64, 64, 4
    $region21: #{tpu_custom_call.1} parent=1 // pred_fallthru
      _
    // Predicated region
    $region22: #{tpu_custom_call.1} parent=1 // pred_check
      _
    $region23: #{tpu_custom_call.1} parent=1 // pred_check_branch
      %76 = sbr.rel (0) target = $region25
    $region24: #{tpu_custom_call.1} parent=1 // pred_region
      _
    $region25: #{tpu_custom_call.1} parent=1 // pred_fallthru
      _
    // Predicated region
    $region26: #{tpu_custom_call.1} parent=1 // pred_check
      _
    $region27: #{tpu_custom_call.1} parent=1 // pred_check_branch
      %78 = sbr.rel (0) target = $region29
    $region28: #{tpu_custom_call.1} parent=1 // pred_region
      %79 = dma.done [#allocation5], 8192
    $region29: #{tpu_custom_call.1} parent=1 // pred_fallthru
      _
    // Predicated region
    $region30: #{tpu_custom_call.1} parent=1 // pred_check
      _
    $region31: #{tpu_custom_call.1} parent=1 // pred_check_branch
      %81 = sbr.rel (0) target = $region33
    $region32: #{tpu_custom_call.1} parent=1 // pred_region
      %82 = dma.done [#allocation8], 64
    $region33: #{tpu_custom_call.1} parent=1 // pred_fallthru
      _
    // Predicated region
    $region34: #{tpu_custom_call.1} parent=1 // pred_check
      _
    $region35: #{tpu_custom_call.1} parent=1 // pred_check_branch
      %84 = sbr.rel (0) target = $region37
    $region36: #{tpu_custom_call.1} parent=1 // pred_region
      %85 = dma.done [#allocation8], 2048
    $region37: #{tpu_custom_call.1} parent=1 // pred_fallthru
      _
    // Predicated region
    $region38: #{tpu_custom_call.1} parent=1 // pred_check
      _
    $region39: #{tpu_custom_call.1} parent=1 // pred_check_branch
      %87 = sbr.rel (0) target = $region41
    $region40: #{tpu_custom_call.1} parent=1 // pred_region
      %88 = dma.done [#allocation11], 2048
    $region41: #{tpu_custom_call.1} parent=1 // pred_fallthru
      _
    // Predicated region
    $region42: #{tpu_custom_call.1} parent=1 // pred_check
      _
    $region43: #{tpu_custom_call.1} parent=1 // pred_check_branch
      %90 = sbr.rel (0) target = $region45
    $region44: #{tpu_custom_call.1} parent=1 // pred_region
      %91 = dma.done [#allocation11], 9216
    $region45: #{tpu_custom_call.1} parent=1 // pred_fallthru
      _
    %93 = vst [vmem:[#allocation2] sm:$0xff] 0
    %94 = vst [vmem:[#allocation2 + $0x8] sm:$0xff] 0
    %95 = vst [vmem:[#allocation2 + $0x90] sm:$0xff] 0
    %96 = vst [vmem:[#allocation2 + $0x98] sm:$0xff] 0
    %v97 = vld [vmem:[#allocation4] sm:$0xff]
    %v98 = vld [vmem:[#allocation4 + $0x8] sm:$0xff]
    %v99 = vld [vmem:[#allocation4 + $0x10] sm:$0xff]
    %v100 = vld [vmem:[#allocation4 + $0x18] sm:$0xff]
    %v101 = vld [vmem:[#allocation4 + $0x20] sm:$0xff]
    %v102 = vld [vmem:[#allocation4 + $0x28] sm:$0xff]
    %v103 = vld [vmem:[#allocation4 + $0x30] sm:$0xff]
    %v104 = vld [vmem:[#allocation4 + $0x38] sm:$0xff]
    %v105 = vld [vmem:[#allocation4 + $0x40] sm:$0xff]
    %v106 = vld [vmem:[#allocation4 + $0x48] sm:$0xff]
    %v107 = vld [vmem:[#allocation4 + $0x50] sm:$0xff]
    %v108 = vld [vmem:[#allocation4 + $0x58] sm:$0xff]
    %v109 = vld [vmem:[#allocation4 + $0x60] sm:$0xff]
    %v110 = vld [vmem:[#allocation4 + $0x68] sm:$0xff]
    %v111 = vld [vmem:[#allocation4 + $0x70] sm:$0xff]
    %v112 = vld [vmem:[#allocation4 + $0x78] sm:$0xff]
    %v113 = vld [vmem:[#allocation4 + $0x80] sm:$0xff]
    %v114 = vld [vmem:[#allocation4 + $0x88] sm:$0xff]
    %v115 = vld [vmem:[#allocation4 + $0x90] sm:$0xff]
    %v116 = vld [vmem:[#allocation4 + $0x98] sm:$0xff]
    %v117 = vld [vmem:[#allocation4 + $0xa0] sm:$0xff]
    %v118 = vld [vmem:[#allocation4 + $0xa8] sm:$0xff]
    %v119 = vld [vmem:[#allocation4 + $0xb0] sm:$0xff]
    %v120 = vld [vmem:[#allocation4 + $0xb8] sm:$0xff]
    %v121 = vld [vmem:[#allocation4 + $0xc0] sm:$0xff]
    %v122 = vld [vmem:[#allocation4 + $0xc8] sm:$0xff]
    %v123 = vld [vmem:[#allocation4 + $0xd0] sm:$0xff]
    %v124 = vld [vmem:[#allocation4 + $0xd8] sm:$0xff]
    %v125 = vld [vmem:[#allocation4 + $0xe0] sm:$0xff]
    %v126 = vld [vmem:[#allocation4 + $0xe8] sm:$0xff]
    %v127 = vld [vmem:[#allocation4 + $0xf0] sm:$0xff]
    %v128 = vld [vmem:[#allocation4 + $0xf8] sm:$0xff]
    %v129 = vld [vmem:[#allocation7] sm:$0x3]
    %v130 = vadd.f32 %v97, %v98
    %v131 = vadd.f32 %v130, %v99
    %v132 = vadd.f32 %v131, %v100
    %v133 = vadd.f32 %v132, %v101
    %v134 = vadd.f32 %v133, %v102
    %v135 = vadd.f32 %v134, %v103
    %v136 = vadd.f32 %v135, %v104
    %v137 = vadd.f32 %v136, %v105
    %v138 = vadd.f32 %v137, %v106
    %v139 = vadd.f32 %v138, %v107
    %v140 = vadd.f32 %v139, %v108
    %v141 = vadd.f32 %v140, %v109
    %v142 = vadd.f32 %v141, %v110
    %v143 = vadd.f32 %v142, %v111
    %v144 = vadd.f32 %v143, %v112
    %v145 = vadd.f32 %v144, %v113
    %v146 = vadd.f32 %v145, %v114
    %v147 = vadd.f32 %v146, %v115
    %v148 = vadd.f32 %v147, %v116
    %v149 = vadd.f32 %v148, %v117
    %v150 = vadd.f32 %v149, %v118
    %v151 = vadd.f32 %v150, %v119
    %v152 = vadd.f32 %v151, %v120
    %v153 = vadd.f32 %v152, %v121
    %v154 = vadd.f32 %v153, %v122
    %v155 = vadd.f32 %v154, %v123
    %v156 = vadd.f32 %v155, %v124
    %v157 = vadd.f32 %v156, %v125
    %v158 = vadd.f32 %v157, %v126
    %v159 = vadd.f32 %v158, %v127
    %v160 = vadd.f32 %v159, %v128
    %v161 = vrot.slane %v160, 4
    %v162 = vadd.f32 %v160, %v161
    %v163 = vrot.slane %v162, 2
    %v164 = vadd.f32 %v162, %v163
    %v165 = vrot.slane %v164, 1
    %v166 = vadd.f32 %v164, %v165
    %v167 = vmul.f32 %v97, %v97
    %v168 = vmul.f32 %v98, %v98
    %v169 = vmul.f32 %v99, %v99
    %v170 = vmul.f32 %v100, %v100
    %v171 = vmul.f32 %v101, %v101
    %v172 = vmul.f32 %v102, %v102
    %v173 = vmul.f32 %v103, %v103
    %v174 = vmul.f32 %v104, %v104
    %v175 = vmul.f32 %v105, %v105
    %v176 = vmul.f32 %v106, %v106
    %v177 = vmul.f32 %v107, %v107
    %v178 = vmul.f32 %v108, %v108
    %v179 = vmul.f32 %v109, %v109
    %v180 = vmul.f32 %v110, %v110
    %v181 = vmul.f32 %v111, %v111
    %v182 = vmul.f32 %v112, %v112
    %v183 = vmul.f32 %v113, %v113
    %v184 = vmul.f32 %v114, %v114
    %v185 = vmul.f32 %v115, %v115
    %v186 = vmul.f32 %v116, %v116
    %v187 = vmul.f32 %v117, %v117
    %v188 = vmul.f32 %v118, %v118
    %v189 = vmul.f32 %v119, %v119
    %v190 = vmul.f32 %v120, %v120
    %v191 = vmul.f32 %v121, %v121
    %v192 = vmul.f32 %v122, %v122
    %v193 = vmul.f32 %v123, %v123
    %v194 = vmul.f32 %v124, %v124
    %v195 = vmul.f32 %v125, %v125
    %v196 = vmul.f32 %v126, %v126
    %v197 = vmul.f32 %v127, %v127
    %v198 = vmul.f32 %v128, %v128
    %v199 = vadd.f32 %v167, %v168
    %v200 = vadd.f32 %v199, %v169
    %v201 = vadd.f32 %v200, %v170
    %v202 = vadd.f32 %v201, %v171
    %v203 = vadd.f32 %v202, %v172
    %v204 = vadd.f32 %v203, %v173
    %v205 = vadd.f32 %v204, %v174
    %v206 = vadd.f32 %v205, %v175
    %v207 = vadd.f32 %v206, %v176
    %v208 = vadd.f32 %v207, %v177
    %v209 = vadd.f32 %v208, %v178
    %v210 = vadd.f32 %v209, %v179
    %v211 = vadd.f32 %v210, %v180
    %v212 = vadd.f32 %v211, %v181
    %v213 = vadd.f32 %v212, %v182
    %v214 = vadd.f32 %v213, %v183
    %v215 = vadd.f32 %v214, %v184
    %v216 = vadd.f32 %v215, %v185
    %v217 = vadd.f32 %v216, %v186
    %v218 = vadd.f32 %v217, %v187
    %v219 = vadd.f32 %v218, %v188
    %v220 = vadd.f32 %v219, %v189
    %v221 = vadd.f32 %v220, %v190
    %v222 = vadd.f32 %v221, %v191
    %v223 = vadd.f32 %v222, %v192
    %v224 = vadd.f32 %v223, %v193
    %v225 = vadd.f32 %v224, %v194
    %v226 = vadd.f32 %v225, %v195
    %v227 = vadd.f32 %v226, %v196
    %v228 = vadd.f32 %v227, %v197
    %v229 = vadd.f32 %v228, %v198
    %v230 = vrot.slane %v229, 4
    %v231 = vadd.f32 %v229, %v230
    %v232 = vrot.slane %v231, 2
    %v233 = vadd.f32 %v231, %v232
    %v234 = vrot.slane %v233, 1
    %v235 = vadd.f32 %v233, %v234
    %v236 = vmul.f32 %v166, 0.00390625
    %v237 = vmul.f32 %v235, 0.00390625
    %v238 = vmul.f32 %v236, %v236
    %v239 = vsub.f32 %v237, %v238
    %v240 = vadd.f32 %v239, 1e-05
    %v241 = vrsqrt.pop %v240
    %v242 = vmul.f32 %v129, %v241
    %v243 = vmul.f32 %v236, %v242
    %v245 = vrot.slane %v129, 1
    %v247 = vsub.f32 %v245, %v243
    %v249 = vlaneseq
    %v250 = vshrl.u32 %v249, 7
    %v251 = vsub.s32 0, %v250
    %v252 = vrot.slane %v242, %v251
    %v254 = vmul.f32 %v97, %v252
    %v255 = vmul.f32 %v98, %v252
    %v256 = vmul.f32 %v99, %v252
    %v257 = vmul.f32 %v100, %v252
    %v258 = vmul.f32 %v101, %v252
    %v259 = vmul.f32 %v102, %v252
    %v260 = vmul.f32 %v103, %v252
    %v261 = vmul.f32 %v104, %v252
    %v262 = vmul.f32 %v105, %v252
    %v263 = vmul.f32 %v106, %v252
    %v264 = vmul.f32 %v107, %v252
    %v265 = vmul.f32 %v108, %v252
    %v266 = vmul.f32 %v109, %v252
    %v267 = vmul.f32 %v110, %v252
    %v268 = vmul.f32 %v111, %v252
    %v269 = vmul.f32 %v112, %v252
    %v270 = vmul.f32 %v113, %v252
    %v271 = vmul.f32 %v114, %v252
    %v272 = vmul.f32 %v115, %v252
    %v273 = vmul.f32 %v116, %v252
    %v274 = vmul.f32 %v117, %v252
    %v275 = vmul.f32 %v118, %v252
    %v276 = vmul.f32 %v119, %v252
    %v277 = vmul.f32 %v120, %v252
    %v278 = vmul.f32 %v121, %v252
    %v279 = vmul.f32 %v122, %v252
    %v280 = vmul.f32 %v123, %v252
    %v281 = vmul.f32 %v124, %v252
    %v282 = vmul.f32 %v125, %v252
    %v283 = vmul.f32 %v126, %v252
    %v284 = vmul.f32 %v127, %v252
    %v285 = vmul.f32 %v128, %v252
    %v287 = vlaneseq
    %v288 = vshrl.u32 %v287, 7
    %v289 = vsub.s32 0, %v288
    %v290 = vrot.slane %v247, %v289
    %v292 = vadd.f32 %v254, %v290
    %v293 = vadd.f32 %v255, %v290
    %v294 = vadd.f32 %v256, %v290
    %v295 = vadd.f32 %v257, %v290
    %v296 = vadd.f32 %v258, %v290
    %v297 = vadd.f32 %v259, %v290
    %v298 = vadd.f32 %v260, %v290
    %v299 = vadd.f32 %v261, %v290
    %v300 = vadd.f32 %v262, %v290
    %v301 = vadd.f32 %v263, %v290
    %v302 = vadd.f32 %v264, %v290
    %v303 = vadd.f32 %v265, %v290
    %v304 = vadd.f32 %v266, %v290
    %v305 = vadd.f32 %v267, %v290
    %v306 = vadd.f32 %v268, %v290
    %v307 = vadd.f32 %v269, %v290
    %v308 = vadd.f32 %v270, %v290
    %v309 = vadd.f32 %v271, %v290
    %v310 = vadd.f32 %v272, %v290
    %v311 = vadd.f32 %v273, %v290
    %v312 = vadd.f32 %v274, %v290
    %v313 = vadd.f32 %v275, %v290
    %v314 = vadd.f32 %v276, %v290
    %v315 = vadd.f32 %v277, %v290
    %v316 = vadd.f32 %v278, %v290
    %v317 = vadd.f32 %v279, %v290
    %v318 = vadd.f32 %v280, %v290
    %v319 = vadd.f32 %v281, %v290
    %v320 = vadd.f32 %v282, %v290
    %v321 = vadd.f32 %v283, %v290
    %v322 = vadd.f32 %v284, %v290
    %v323 = vadd.f32 %v285, %v290
    %v324 = vmax.f32 %v292, 0.0
    %v325 = vmax.f32 %v293, 0.0
    %v326 = vmax.f32 %v294, 0.0
    %v327 = vmax.f32 %v295, 0.0
    %v328 = vmax.f32 %v296, 0.0
    %v329 = vmax.f32 %v297, 0.0
    %v330 = vmax.f32 %v298, 0.0
    %v331 = vmax.f32 %v299, 0.0
    %v332 = vmax.f32 %v300, 0.0
    %v333 = vmax.f32 %v301, 0.0
    %v334 = vmax.f32 %v302, 0.0
    %v335 = vmax.f32 %v303, 0.0
    %v336 = vmax.f32 %v304, 0.0
    %v337 = vmax.f32 %v305, 0.0
    %v338 = vmax.f32 %v306, 0.0
    %v339 = vmax.f32 %v307, 0.0
    %v340 = vmax.f32 %v308, 0.0
    %v341 = vmax.f32 %v309, 0.0
    %v342 = vmax.f32 %v310, 0.0
    %v343 = vmax.f32 %v311, 0.0
    %v344 = vmax.f32 %v312, 0.0
    %v345 = vmax.f32 %v313, 0.0
    %v346 = vmax.f32 %v314, 0.0
    %v347 = vmax.f32 %v315, 0.0
    %v348 = vmax.f32 %v316, 0.0
    %v349 = vmax.f32 %v317, 0.0
    %v350 = vmax.f32 %v318, 0.0
    %v351 = vmax.f32 %v319, 0.0
    %v352 = vmax.f32 %v320, 0.0
    %v353 = vmax.f32 %v321, 0.0
    %v354 = vmax.f32 %v322, 0.0
    %v355 = vmax.f32 %v323, 0.0
    %v356 = vpack.c.bf16 %v325, %v324
    %v357 = vpack.c.bf16 %v327, %v326
    %v358 = vpack.c.bf16 %v329, %v328
    %v359 = vpack.c.bf16 %v331, %v330
    %v360 = vpack.c.bf16 %v333, %v332
    %v361 = vpack.c.bf16 %v335, %v334
    %v362 = vpack.c.bf16 %v337, %v336
    %v363 = vpack.c.bf16 %v339, %v338
    %v364 = vpack.c.bf16 %v341, %v340
    %v365 = vpack.c.bf16 %v343, %v342
    %v366 = vpack.c.bf16 %v345, %v344
    %v367 = vpack.c.bf16 %v347, %v346
    %v368 = vpack.c.bf16 %v349, %v348
    %v369 = vpack.c.bf16 %v351, %v350
    %v370 = vpack.c.bf16 %v353, %v352
    %v371 = vpack.c.bf16 %v355, %v354
    %372 = vst [vmem:[#allocation2 + $0x10] sm:$0xff] %v356
    %373 = vst [vmem:[#allocation2 + $0x18] sm:$0xff] %v357
    %374 = vst [vmem:[#allocation2 + $0x20] sm:$0xff] %v358
    %375 = vst [vmem:[#allocation2 + $0x28] sm:$0xff] %v359
    %376 = vst [vmem:[#allocation2 + $0x30] sm:$0xff] %v360
    %377 = vst [vmem:[#allocation2 + $0x38] sm:$0xff] %v361
    %378 = vst [vmem:[#allocation2 + $0x40] sm:$0xff] %v362
    %379 = vst [vmem:[#allocation2 + $0x48] sm:$0xff] %v363
    %380 = vst [vmem:[#allocation2 + $0x50] sm:$0xff] %v364
    %381 = vst [vmem:[#allocation2 + $0x58] sm:$0xff] %v365
    %382 = vst [vmem:[#allocation2 + $0x60] sm:$0xff] %v366
    %383 = vst [vmem:[#allocation2 + $0x68] sm:$0xff] %v367
    %384 = vst [vmem:[#allocation2 + $0x70] sm:$0xff] %v368
    %385 = vst [vmem:[#allocation2 + $0x78] sm:$0xff] %v369
    %386 = vst [vmem:[#allocation2 + $0x80] sm:$0xff] %v370
    %387 = vst [vmem:[#allocation2 + $0x88] sm:$0xff] %v371
    %v388 = vld [vmem:[#allocation2] sm:$0x80]
    %v389 = vld [vmem:[#allocation2 + $0x8] sm:$0xff]
    %v390 = vld [vmem:[#allocation2 + $0x10] sm:$0xff]
    %v391 = vld [vmem:[#allocation2 + $0x18] sm:$0xff]
    %v392 = vld [vmem:[#allocation2 + $0x20] sm:$0xff]
    %v393 = vld [vmem:[#allocation2 + $0x28] sm:$0xff]
    %v394 = vld [vmem:[#allocation2 + $0x30] sm:$0xff]
    %v395 = vld [vmem:[#allocation2 + $0x38] sm:$0xff]
    %v396 = vld [vmem:[#allocation2 + $0x40] sm:$0xff]
    %v397 = vld [vmem:[#allocation2 + $0x48] sm:$0xff]
    %v398 = vld [vmem:[#allocation2 + $0x50] sm:$0xff]
    %v399 = vld [vmem:[#allocation2 + $0x58] sm:$0xff]
    %v400 = vld [vmem:[#allocation2 + $0x60] sm:$0xff]
    %v401 = vld [vmem:[#allocation2 + $0x68] sm:$0xff]
    %v402 = vld [vmem:[#allocation2 + $0x70] sm:$0xff]
    %v403 = vld [vmem:[#allocation2 + $0x78] sm:$0xff]
    %v404 = vld [vmem:[#allocation2 + $0x80] sm:$0xff]
    %v405 = vld [vmem:[#allocation9] sm:$0xf]
    %v406 = vld [vmem:[#allocation9 + $0x4] sm:$0xf]
    %v407 = vld [vmem:[#allocation9 + $0x8] sm:$0xf]
    %v408 = vld [vmem:[#allocation9 + $0xc] sm:$0xf]
    %v409 = vld [vmem:[#allocation9 + $0x10] sm:$0xf]
    %v410 = vld [vmem:[#allocation9 + $0x14] sm:$0xf]
    %v411 = vld [vmem:[#allocation9 + $0x18] sm:$0xf]
    %v412 = vld [vmem:[#allocation9 + $0x1c] sm:$0xf]
    %v413 = vld [vmem:[#allocation9 + $0x20] sm:$0xf]
    %v414 = vld [vmem:[#allocation9 + $0x24] sm:$0xf]
    %v415 = vld [vmem:[#allocation9 + $0x28] sm:$0xf]
    %v416 = vld [vmem:[#allocation9 + $0x2c] sm:$0xf]
    %v417 = vld [vmem:[#allocation9 + $0x30] sm:$0xf]
    %v418 = vld [vmem:[#allocation9 + $0x34] sm:$0xf]
    %v419 = vld [vmem:[#allocation9 + $0x38] sm:$0xf]
    %v420 = vld [vmem:[#allocation9 + $0x3c] sm:$0xf]
    %v421 = vld [vmem:[#allocation9 + $0x40] sm:$0xf]
    %v422 = vld [vmem:[#allocation9 + $0x44] sm:$0xf]
    %v423 = vld [vmem:[#allocation9 + $0x48] sm:$0xf]
    %v424 = vld [vmem:[#allocation9 + $0x4c] sm:$0xf]
    %v425 = vld [vmem:[#allocation9 + $0x50] sm:$0xf]
    %v426 = vld [vmem:[#allocation9 + $0x54] sm:$0xf]
    %v427 = vld [vmem:[#allocation9 + $0x58] sm:$0xf]
    %v428 = vld [vmem:[#allocation9 + $0x5c] sm:$0xf]
    %v429 = vld [vmem:[#allocation9 + $0x60] sm:$0xf]
    %v430 = vld [vmem:[#allocation9 + $0x64] sm:$0xf]
    %v431 = vld [vmem:[#allocation9 + $0x68] sm:$0xf]
    %v432 = vld [vmem:[#allocation9 + $0x6c] sm:$0xf]
    %v433 = vld [vmem:[#allocation9 + $0x70] sm:$0xf]
    %v434 = vld [vmem:[#allocation9 + $0x74] sm:$0xf]
    %v435 = vld [vmem:[#allocation9 + $0x78] sm:$0xf]
    %v436 = vld [vmem:[#allocation9 + $0x7c] sm:$0xf]
    %v469 = vunpack.c.l.b16 %v405
    %v470 = vunpack.c.l.b16 %v406
    %v471 = vunpack.c.l.b16 %v407
    %v472 = vunpack.c.l.b16 %v408
    %v473 = vunpack.c.l.b16 %v409
    %v474 = vunpack.c.l.b16 %v410
    %v475 = vunpack.c.l.b16 %v411
    %v476 = vunpack.c.l.b16 %v412
    %v477 = vunpack.c.l.b16 %v413
    %v478 = vunpack.c.l.b16 %v414
    %v479 = vunpack.c.l.b16 %v415
    %v480 = vunpack.c.l.b16 %v416
    %v481 = vunpack.c.l.b16 %v417
    %v482 = vunpack.c.l.b16 %v418
    %v483 = vunpack.c.l.b16 %v419
    %v484 = vunpack.c.l.b16 %v420
    %v485 = vunpack.c.l.b16 %v421
    %v486 = vunpack.c.l.b16 %v422
    %v487 = vunpack.c.l.b16 %v423
    %v488 = vunpack.c.l.b16 %v424
    %v489 = vunpack.c.l.b16 %v425
    %v490 = vunpack.c.l.b16 %v426
    %v491 = vunpack.c.l.b16 %v427
    %v492 = vunpack.c.l.b16 %v428
    %v493 = vunpack.c.l.b16 %v429
    %v494 = vunpack.c.l.b16 %v430
    %v495 = vunpack.c.l.b16 %v431
    %v496 = vunpack.c.l.b16 %v432
    %v497 = vunpack.c.l.b16 %v433
    %v498 = vunpack.c.l.b16 %v434
    %v499 = vunpack.c.l.b16 %v435
    %v500 = vunpack.c.l.b16 %v436
    %v501 = vpack.c.b16 %v470, %v469
    %v502 = vpack.c.b16 %v472, %v471
    %v503 = vpack.c.b16 %v474, %v473
    %v504 = vpack.c.b16 %v476, %v475
    %v505 = vpack.c.b16 %v478, %v477
    %v506 = vpack.c.b16 %v480, %v479
    %v507 = vpack.c.b16 %v482, %v481
    %v508 = vpack.c.b16 %v484, %v483
    %v509 = vpack.c.b16 %v486, %v485
    %v510 = vpack.c.b16 %v488, %v487
    %v511 = vpack.c.b16 %v490, %v489
    %v512 = vpack.c.b16 %v492, %v491
    %v513 = vpack.c.b16 %v494, %v493
    %v514 = vpack.c.b16 %v496, %v495
    %v515 = vpack.c.b16 %v498, %v497
    %v516 = vpack.c.b16 %v500, %v499
    %vm517 = vsmask.f32 7424
    %v519 = vshll.u32 %v501, 16
    %v521 = vrot.slane %v519, 1
    %v522 = vshrl.u32 %v501, 16
    %v524 = vor.u32 %v522, %v521
    %v526 = vshll.u32 %v502, 16
    %v528 = vrot.slane %v526, 1
    %v529 = vsel %vm517, %v524, %v528
    %v530 = vshrl.u32 %v502, 16
    %v532 = vor.u32 %v530, %v528
    %v534 = vshll.u32 %v503, 16
    %v536 = vrot.slane %v534, 1
    %v537 = vsel %vm517, %v532, %v536
    %v538 = vshrl.u32 %v503, 16
    %v540 = vor.u32 %v538, %v536
    %v542 = vshll.u32 %v504, 16
    %v544 = vrot.slane %v542, 1
    %v545 = vsel %vm517, %v540, %v544
    %v546 = vshrl.u32 %v504, 16
    %v548 = vor.u32 %v546, %v544
    %v550 = vshll.u32 %v505, 16
    %v552 = vrot.slane %v550, 1
    %v553 = vsel %vm517, %v548, %v552
    %v554 = vshrl.u32 %v505, 16
    %v556 = vor.u32 %v554, %v552
    %v558 = vshll.u32 %v506, 16
    %v560 = vrot.slane %v558, 1
    %v561 = vsel %vm517, %v556, %v560
    %v562 = vshrl.u32 %v506, 16
    %v564 = vor.u32 %v562, %v560
    %v566 = vshll.u32 %v507, 16
    %v568 = vrot.slane %v566, 1
    %v569 = vsel %vm517, %v564, %v568
    %v570 = vshrl.u32 %v507, 16
    %v572 = vor.u32 %v570, %v568
    %v574 = vshll.u32 %v508, 16
    %v576 = vrot.slane %v574, 1
    %v577 = vsel %vm517, %v572, %v576
    %v578 = vshrl.u32 %v508, 16
    %v580 = vor.u32 %v578, %v576
    %v582 = vshll.u32 %v509, 16
    %v584 = vrot.slane %v582, 1
    %v585 = vsel %vm517, %v580, %v584
    %v586 = vshrl.u32 %v509, 16
    %v588 = vor.u32 %v586, %v584
    %v590 = vshll.u32 %v510, 16
    %v592 = vrot.slane %v590, 1
    %v593 = vsel %vm517, %v588, %v592
    %v594 = vshrl.u32 %v510, 16
    %v596 = vor.u32 %v594, %v592
    %v598 = vshll.u32 %v511, 16
    %v600 = vrot.slane %v598, 1
    %v601 = vsel %vm517, %v596, %v600
    %v602 = vshrl.u32 %v511, 16
    %v604 = vor.u32 %v602, %v600
    %v606 = vshll.u32 %v512, 16
    %v608 = vrot.slane %v606, 1
    %v609 = vsel %vm517, %v604, %v608
    %v610 = vshrl.u32 %v512, 16
    %v612 = vor.u32 %v610, %v608
    %v614 = vshll.u32 %v513, 16
    %v616 = vrot.slane %v614, 1
    %v617 = vsel %vm517, %v612, %v616
    %v618 = vshrl.u32 %v513, 16
    %v620 = vor.u32 %v618, %v616
    %v622 = vshll.u32 %v514, 16
    %v624 = vrot.slane %v622, 1
    %v625 = vsel %vm517, %v620, %v624
    %v626 = vshrl.u32 %v514, 16
    %v628 = vor.u32 %v626, %v624
    %v630 = vshll.u32 %v515, 16
    %v632 = vrot.slane %v630, 1
    %v633 = vsel %vm517, %v628, %v632
    %v634 = vshrl.u32 %v515, 16
    %v636 = vor.u32 %v634, %v632
    %v638 = vshll.u32 %v516, 16
    %v640 = vrot.slane %v638, 1
    %v641 = vsel %vm517, %v636, %v640
    %v642 = vshrl.u32 %v516, 16
    %v644 = vor.u32 %v642, %v640
    %v662 = vmul.bf16 %v388, %v521
    %v663 = vmul.bf16 %v389, %v529
    %v664 = vmul.bf16 %v390, %v537
    %v665 = vmul.bf16 %v391, %v545
    %v666 = vmul.bf16 %v392, %v553
    %v667 = vmul.bf16 %v393, %v561
    %v668 = vmul.bf16 %v394, %v569
    %v669 = vmul.bf16 %v395, %v577
    %v670 = vmul.bf16 %v396, %v585
    %v671 = vmul.bf16 %v397, %v593
    %v672 = vmul.bf16 %v398, %v601
    %v673 = vmul.bf16 %v399, %v609
    %v674 = vmul.bf16 %v400, %v617
    %v675 = vmul.bf16 %v401, %v625
    %v676 = vmul.bf16 %v402, %v633
    %v677 = vmul.bf16 %v403, %v641
    %v678 = vmul.bf16 %v404, %v644
    %vm679 = vsmask.f32 256
    %v681 = vshrl.u32 %v662, 16
    %v683 = vrot.slane %v681, 7
    %v685 = vshrl.u32 %v663, 16
    %v687 = vrot.slane %v685, 7
    %v688 = vshll.u32 %v663, 16
    %v690 = vor.u32 %v687, %v688
    %v691 = vsel %vm679, %v683, %v690
    %v693 = vshrl.u32 %v664, 16
    %v695 = vrot.slane %v693, 7
    %v696 = vshll.u32 %v664, 16
    %v698 = vor.u32 %v695, %v696
    %v699 = vsel %vm679, %v687, %v698
    %v701 = vshrl.u32 %v665, 16
    %v703 = vrot.slane %v701, 7
    %v704 = vshll.u32 %v665, 16
    %v706 = vor.u32 %v703, %v704
    %v707 = vsel %vm679, %v695, %v706
    %v709 = vshrl.u32 %v666, 16
    %v711 = vrot.slane %v709, 7
    %v712 = vshll.u32 %v666, 16
    %v714 = vor.u32 %v711, %v712
    %v715 = vsel %vm679, %v703, %v714
    %v717 = vshrl.u32 %v667, 16
    %v719 = vrot.slane %v717, 7
    %v720 = vshll.u32 %v667, 16
    %v722 = vor.u32 %v719, %v720
    %v723 = vsel %vm679, %v711, %v722
    %v725 = vshrl.u32 %v668, 16
    %v727 = vrot.slane %v725, 7
    %v728 = vshll.u32 %v668, 16
    %v730 = vor.u32 %v727, %v728
    %v731 = vsel %vm679, %v719, %v730
    %v733 = vshrl.u32 %v669, 16
    %v735 = vrot.slane %v733, 7
    %v736 = vshll.u32 %v669, 16
    %v738 = vor.u32 %v735, %v736
    %v739 = vsel %vm679, %v727, %v738
    %v741 = vshrl.u32 %v670, 16
    %v743 = vrot.slane %v741, 7
    %v744 = vshll.u32 %v670, 16
    %v746 = vor.u32 %v743, %v744
    %v747 = vsel %vm679, %v735, %v746
    %v749 = vshrl.u32 %v671, 16
    %v751 = vrot.slane %v749, 7
    %v752 = vshll.u32 %v671, 16
    %v754 = vor.u32 %v751, %v752
    %v755 = vsel %vm679, %v743, %v754
    %v757 = vshrl.u32 %v672, 16
    %v759 = vrot.slane %v757, 7
    %v760 = vshll.u32 %v672, 16
    %v762 = vor.u32 %v759, %v760
    %v763 = vsel %vm679, %v751, %v762
    %v765 = vshrl.u32 %v673, 16
    %v767 = vrot.slane %v765, 7
    %v768 = vshll.u32 %v673, 16
    %v770 = vor.u32 %v767, %v768
    %v771 = vsel %vm679, %v759, %v770
    %v773 = vshrl.u32 %v674, 16
    %v775 = vrot.slane %v773, 7
    %v776 = vshll.u32 %v674, 16
    %v778 = vor.u32 %v775, %v776
    %v779 = vsel %vm679, %v767, %v778
    %v781 = vshrl.u32 %v675, 16
    %v783 = vrot.slane %v781, 7
    %v784 = vshll.u32 %v675, 16
    %v786 = vor.u32 %v783, %v784
    %v787 = vsel %vm679, %v775, %v786
    %v789 = vshrl.u32 %v676, 16
    %v791 = vrot.slane %v789, 7
    %v792 = vshll.u32 %v676, 16
    %v794 = vor.u32 %v791, %v792
    %v795 = vsel %vm679, %v783, %v794
    %v797 = vshrl.u32 %v677, 16
    %v799 = vrot.slane %v797, 7
    %v800 = vshll.u32 %v677, 16
    %v802 = vor.u32 %v799, %v800
    %v803 = vsel %vm679, %v791, %v802
    %v805 = vshrl.u32 %v678, 16
    %v807 = vrot.slane %v805, 7
    %v808 = vshll.u32 %v678, 16
    %v810 = vor.u32 %v807, %v808
    %v811 = vsel %vm679, %v799, %v810
    %828 = vst [vmem:[#allocation3] sm:$0xff] %v691
    %829 = vst [vmem:[#allocation3 + $0x48] sm:$0xff] %v699
    %830 = vst [vmem:[#allocation3 + $0x90] sm:$0xff] %v707
    %831 = vst [vmem:[#allocation3 + $0xd8] sm:$0xff] %v715
    %832 = vst [vmem:[#allocation3 + $0x120] sm:$0xff] %v723
    %833 = vst [vmem:[#allocation3 + $0x168] sm:$0xff] %v731
    %834 = vst [vmem:[#allocation3 + $0x1b0] sm:$0xff] %v739
    %835 = vst [vmem:[#allocation3 + $0x1f8] sm:$0xff] %v747
    %836 = vst [vmem:[#allocation3 + $0x240] sm:$0xff] %v755
    %837 = vst [vmem:[#allocation3 + $0x288] sm:$0xff] %v763
    %838 = vst [vmem:[#allocation3 + $0x2d0] sm:$0xff] %v771
    %839 = vst [vmem:[#allocation3 + $0x318] sm:$0xff] %v779
    %840 = vst [vmem:[#allocation3 + $0x360] sm:$0xff] %v787
    %841 = vst [vmem:[#allocation3 + $0x3a8] sm:$0xff] %v795
    %842 = vst [vmem:[#allocation3 + $0x3f0] sm:$0xff] %v803
    %843 = vst [vmem:[#allocation3 + $0x438] sm:$0xff] %v811
    %v844 = vld [vmem:[#allocation2 + $0x8] sm:$0xff]
    %v845 = vld [vmem:[#allocation2 + $0x10] sm:$0xff]
    %v846 = vld [vmem:[#allocation2 + $0x18] sm:$0xff]
    %v847 = vld [vmem:[#allocation2 + $0x20] sm:$0xff]
    %v848 = vld [vmem:[#allocation2 + $0x28] sm:$0xff]
    %v849 = vld [vmem:[#allocation2 + $0x30] sm:$0xff]
    %v850 = vld [vmem:[#allocation2 + $0x38] sm:$0xff]
    %v851 = vld [vmem:[#allocation2 + $0x40] sm:$0xff]
    %v852 = vld [vmem:[#allocation2 + $0x48] sm:$0xff]
    %v853 = vld [vmem:[#allocation2 + $0x50] sm:$0xff]
    %v854 = vld [vmem:[#allocation2 + $0x58] sm:$0xff]
    %v855 = vld [vmem:[#allocation2 + $0x60] sm:$0xff]
    %v856 = vld [vmem:[#allocation2 + $0x68] sm:$0xff]
    %v857 = vld [vmem:[#allocation2 + $0x70] sm:$0xff]
    %v858 = vld [vmem:[#allocation2 + $0x78] sm:$0xff]
    %v859 = vld [vmem:[#allocation2 + $0x80] sm:$0xff]
    %860 = vst [vmem:[#allocation3 + $0x8] sm:$0xff] %v844
    %861 = vst [vmem:[#allocation3 + $0x50] sm:$0xff] %v845
    %862 = vst [vmem:[#allocation3 + $0x98] sm:$0xff] %v846
    %863 = vst [vmem:[#allocation3 + $0xe0] sm:$0xff] %v847
    %864 = vst [vmem:[#allocation3 + $0x128] sm:$0xff] %v848
    %865 = vst [vmem:[#allocation3 + $0x170] sm:$0xff] %v849
    %866 = vst [vmem:[#allocation3 + $0x1b8] sm:$0xff] %v850
    %867 = vst [vmem:[#allocation3 + $0x200] sm:$0xff] %v851
    %868 = vst [vmem:[#allocation3 + $0x248] sm:$0xff] %v852
    %869 = vst [vmem:[#allocation3 + $0x290] sm:$0xff] %v853
    %870 = vst [vmem:[#allocation3 + $0x2d8] sm:$0xff] %v854
    %871 = vst [vmem:[#allocation3 + $0x320] sm:$0xff] %v855
    %872 = vst [vmem:[#allocation3 + $0x368] sm:$0xff] %v856
    %873 = vst [vmem:[#allocation3 + $0x3b0] sm:$0xff] %v857
    %874 = vst [vmem:[#allocation3 + $0x3f8] sm:$0xff] %v858
    %875 = vst [vmem:[#allocation3 + $0x440] sm:$0xff] %v859
    %v876 = vld [vmem:[#allocation2 + $0x8] sm:$0xff]
    %v877 = vld [vmem:[#allocation2 + $0x10] sm:$0xff]
    %v878 = vld [vmem:[#allocation2 + $0x18] sm:$0xff]
    %v879 = vld [vmem:[#allocation2 + $0x20] sm:$0xff]
    %v880 = vld [vmem:[#allocation2 + $0x28] sm:$0xff]
    %v881 = vld [vmem:[#allocation2 + $0x30] sm:$0xff]
    %v882 = vld [vmem:[#allocation2 + $0x38] sm:$0xff]
    %v883 = vld [vmem:[#allocation2 + $0x40] sm:$0xff]
    %v884 = vld [vmem:[#allocation2 + $0x48] sm:$0xff]
    %v885 = vld [vmem:[#allocation2 + $0x50] sm:$0xff]
    %v886 = vld [vmem:[#allocation2 + $0x58] sm:$0xff]
    %v887 = vld [vmem:[#allocation2 + $0x60] sm:$0xff]
    %v888 = vld [vmem:[#allocation2 + $0x68] sm:$0xff]
    %v889 = vld [vmem:[#allocation2 + $0x70] sm:$0xff]
    %v890 = vld [vmem:[#allocation2 + $0x78] sm:$0xff]
    %v891 = vld [vmem:[#allocation2 + $0x80] sm:$0xff]
    %v892 = vld [vmem:[#allocation2 + $0x88] sm:$0x1]
    %v893 = vld [vmem:[#allocation10] sm:$0xf]
    %v894 = vld [vmem:[#allocation10 + $0x4] sm:$0xf]
    %v895 = vld [vmem:[#allocation10 + $0x8] sm:$0xf]
    %v896 = vld [vmem:[#allocation10 + $0xc] sm:$0xf]
    %v897 = vld [vmem:[#allocation10 + $0x10] sm:$0xf]
    %v898 = vld [vmem:[#allocation10 + $0x14] sm:$0xf]
    %v899 = vld [vmem:[#allocation10 + $0x18] sm:$0xf]
    %v900 = vld [vmem:[#allocation10 + $0x1c] sm:$0xf]
    %v901 = vld [vmem:[#allocation10 + $0x20] sm:$0xf]
    %v902 = vld [vmem:[#allocation10 + $0x24] sm:$0xf]
    %v903 = vld [vmem:[#allocation10 + $0x28] sm:$0xf]
    %v904 = vld [vmem:[#allocation10 + $0x2c] sm:$0xf]
    %v905 = vld [vmem:[#allocation10 + $0x30] sm:$0xf]
    %v906 = vld [vmem:[#allocation10 + $0x34] sm:$0xf]
    %v907 = vld [vmem:[#allocation10 + $0x38] sm:$0xf]
    %v908 = vld [vmem:[#allocation10 + $0x3c] sm:$0xf]
    %v909 = vld [vmem:[#allocation10 + $0x40] sm:$0xf]
    %v910 = vld [vmem:[#allocation10 + $0x44] sm:$0xf]
    %v911 = vld [vmem:[#allocation10 + $0x48] sm:$0xf]
    %v912 = vld [vmem:[#allocation10 + $0x4c] sm:$0xf]
    %v913 = vld [vmem:[#allocation10 + $0x50] sm:$0xf]
    %v914 = vld [vmem:[#allocation10 + $0x54] sm:$0xf]
    %v915 = vld [vmem:[#allocation10 + $0x58] sm:$0xf]
    %v916 = vld [vmem:[#allocation10 + $0x5c] sm:$0xf]
    %v917 = vld [vmem:[#allocation10 + $0x60] sm:$0xf]
    %v918 = vld [vmem:[#allocation10 + $0x64] sm:$0xf]
    %v919 = vld [vmem:[#allocation10 + $0x68] sm:$0xf]
    %v920 = vld [vmem:[#allocation10 + $0x6c] sm:$0xf]
    %v921 = vld [vmem:[#allocation10 + $0x70] sm:$0xf]
    %v922 = vld [vmem:[#allocation10 + $0x74] sm:$0xf]
    %v923 = vld [vmem:[#allocation10 + $0x78] sm:$0xf]
    %v924 = vld [vmem:[#allocation10 + $0x7c] sm:$0xf]
    %v957 = vunpack.c.l.b16 %v893
    %v958 = vunpack.c.l.b16 %v894
    %v959 = vunpack.c.l.b16 %v895
    %v960 = vunpack.c.l.b16 %v896
    %v961 = vunpack.c.l.b16 %v897
    %v962 = vunpack.c.l.b16 %v898
    %v963 = vunpack.c.l.b16 %v899
    %v964 = vunpack.c.l.b16 %v900
    %v965 = vunpack.c.l.b16 %v901
    %v966 = vunpack.c.l.b16 %v902
    %v967 = vunpack.c.l.b16 %v903
    %v968 = vunpack.c.l.b16 %v904
    %v969 = vunpack.c.l.b16 %v905
    %v970 = vunpack.c.l.b16 %v906
    %v971 = vunpack.c.l.b16 %v907
    %v972 = vunpack.c.l.b16 %v908
    %v973 = vunpack.c.l.b16 %v909
    %v974 = vunpack.c.l.b16 %v910
    %v975 = vunpack.c.l.b16 %v911
    %v976 = vunpack.c.l.b16 %v912
    %v977 = vunpack.c.l.b16 %v913
    %v978 = vunpack.c.l.b16 %v914
    %v979 = vunpack.c.l.b16 %v915
    %v980 = vunpack.c.l.b16 %v916
    %v981 = vunpack.c.l.b16 %v917
    %v982 = vunpack.c.l.b16 %v918
    %v983 = vunpack.c.l.b16 %v919
    %v984 = vunpack.c.l.b16 %v920
    %v985 = vunpack.c.l.b16 %v921
    %v986 = vunpack.c.l.b16 %v922
    %v987 = vunpack.c.l.b16 %v923
    %v988 = vunpack.c.l.b16 %v924
    %v989 = vpack.c.b16 %v958, %v957
    %v990 = vpack.c.b16 %v960, %v959
    %v991 = vpack.c.b16 %v962, %v961
    %v992 = vpack.c.b16 %v964, %v963
    %v993 = vpack.c.b16 %v966, %v965
    %v994 = vpack.c.b16 %v968, %v967
    %v995 = vpack.c.b16 %v970, %v969
    %v996 = vpack.c.b16 %v972, %v971
    %v997 = vpack.c.b16 %v974, %v973
    %v998 = vpack.c.b16 %v976, %v975
    %v999 = vpack.c.b16 %v978, %v977
    %v1000 = vpack.c.b16 %v980, %v979
    %v1001 = vpack.c.b16 %v982, %v981
    %v1002 = vpack.c.b16 %v984, %v983
    %v1003 = vpack.c.b16 %v986, %v985
    %v1004 = vpack.c.b16 %v988, %v987
    %v1006 = vshrl.u32 %v989, 16
    %v1008 = vrot.slane %v1006, 7
    %v1009 = vshll.u32 %v989, 16
    %v1011 = vor.u32 %v1008, %v1009
    %v1013 = vshrl.u32 %v990, 16
    %v1015 = vrot.slane %v1013, 7
    %v1016 = vshll.u32 %v990, 16
    %v1018 = vor.u32 %v1015, %v1016
    %v1019 = vsel %vm679, %v1008, %v1018
    %v1021 = vshrl.u32 %v991, 16
    %v1023 = vrot.slane %v1021, 7
    %v1024 = vshll.u32 %v991, 16
    %v1026 = vor.u32 %v1023, %v1024
    %v1027 = vsel %vm679, %v1015, %v1026
    %v1029 = vshrl.u32 %v992, 16
    %v1031 = vrot.slane %v1029, 7
    %v1032 = vshll.u32 %v992, 16
    %v1034 = vor.u32 %v1031, %v1032
    %v1035 = vsel %vm679, %v1023, %v1034
    %v1037 = vshrl.u32 %v993, 16
    %v1039 = vrot.slane %v1037, 7
    %v1040 = vshll.u32 %v993, 16
    %v1042 = vor.u32 %v1039, %v1040
    %v1043 = vsel %vm679, %v1031, %v1042
    %v1045 = vshrl.u32 %v994, 16
    %v1047 = vrot.slane %v1045, 7
    %v1048 = vshll.u32 %v994, 16
    %v1050 = vor.u32 %v1047, %v1048
    %v1051 = vsel %vm679, %v1039, %v1050
    %v1053 = vshrl.u32 %v995, 16
    %v1055 = vrot.slane %v1053, 7
    %v1056 = vshll.u32 %v995, 16
    %v1058 = vor.u32 %v1055, %v1056
    %v1059 = vsel %vm679, %v1047, %v1058
    %v1061 = vshrl.u32 %v996, 16
    %v1063 = vrot.slane %v1061, 7
    %v1064 = vshll.u32 %v996, 16
    %v1066 = vor.u32 %v1063, %v1064
    %v1067 = vsel %vm679, %v1055, %v1066
    %v1069 = vshrl.u32 %v997, 16
    %v1071 = vrot.slane %v1069, 7
    %v1072 = vshll.u32 %v997, 16
    %v1074 = vor.u32 %v1071, %v1072
    %v1075 = vsel %vm679, %v1063, %v1074
    %v1077 = vshrl.u32 %v998, 16
    %v1079 = vrot.slane %v1077, 7
    %v1080 = vshll.u32 %v998, 16
    %v1082 = vor.u32 %v1079, %v1080
    %v1083 = vsel %vm679, %v1071, %v1082
    %v1085 = vshrl.u32 %v999, 16
    %v1087 = vrot.slane %v1085, 7
    %v1088 = vshll.u32 %v999, 16
    %v1090 = vor.u32 %v1087, %v1088
    %v1091 = vsel %vm679, %v1079, %v1090
    %v1093 = vshrl.u32 %v1000, 16
    %v1095 = vrot.slane %v1093, 7
    %v1096 = vshll.u32 %v1000, 16
    %v1098 = vor.u32 %v1095, %v1096
    %v1099 = vsel %vm679, %v1087, %v1098
    %v1101 = vshrl.u32 %v1001, 16
    %v1103 = vrot.slane %v1101, 7
    %v1104 = vshll.u32 %v1001, 16
    %v1106 = vor.u32 %v1103, %v1104
    %v1107 = vsel %vm679, %v1095, %v1106
    %v1109 = vshrl.u32 %v1002, 16
    %v1111 = vrot.slane %v1109, 7
    %v1112 = vshll.u32 %v1002, 16
    %v1114 = vor.u32 %v1111, %v1112
    %v1115 = vsel %vm679, %v1103, %v1114
    %v1117 = vshrl.u32 %v1003, 16
    %v1119 = vrot.slane %v1117, 7
    %v1120 = vshll.u32 %v1003, 16
    %v1122 = vor.u32 %v1119, %v1120
    %v1123 = vsel %vm679, %v1111, %v1122
    %v1125 = vshrl.u32 %v1004, 16
    %v1127 = vrot.slane %v1125, 7
    %v1128 = vshll.u32 %v1004, 16
    %v1130 = vor.u32 %v1127, %v1128
    %v1131 = vsel %vm679, %v1119, %v1130
    %v1149 = vmul.bf16 %v876, %v1011
    %v1150 = vmul.bf16 %v877, %v1019
    %v1151 = vmul.bf16 %v878, %v1027
    %v1152 = vmul.bf16 %v879, %v1035
    %v1153 = vmul.bf16 %v880, %v1043
    %v1154 = vmul.bf16 %v881, %v1051
    %v1155 = vmul.bf16 %v882, %v1059
    %v1156 = vmul.bf16 %v883, %v1067
    %v1157 = vmul.bf16 %v884, %v1075
    %v1158 = vmul.bf16 %v885, %v1083
    %v1159 = vmul.bf16 %v886, %v1091
    %v1160 = vmul.bf16 %v887, %v1099
    %v1161 = vmul.bf16 %v888, %v1107
    %v1162 = vmul.bf16 %v889, %v1115
    %v1163 = vmul.bf16 %v890, %v1123
    %v1164 = vmul.bf16 %v891, %v1131
    %v1165 = vmul.bf16 %v892, %v1127
    %v1167 = vshrl.u32 %v1149, 16
    %v1169 = vshll.u32 %v1149, 16
    %v1171 = vrot.slane %v1169, 1
    %v1172 = vor.u32 %v1167, %v1171
    %v1174 = vshll.u32 %v1150, 16
    %v1176 = vrot.slane %v1174, 1
    %v1177 = vsel %vm517, %v1172, %v1176
    %v1178 = vshrl.u32 %v1150, 16
    %v1180 = vor.u32 %v1178, %v1176
    %v1182 = vshll.u32 %v1151, 16
    %v1184 = vrot.slane %v1182, 1
    %v1185 = vsel %vm517, %v1180, %v1184
    %v1186 = vshrl.u32 %v1151, 16
    %v1188 = vor.u32 %v1186, %v1184
    %v1190 = vshll.u32 %v1152, 16
    %v1192 = vrot.slane %v1190, 1
    %v1193 = vsel %vm517, %v1188, %v1192
    %v1194 = vshrl.u32 %v1152, 16
    %v1196 = vor.u32 %v1194, %v1192
    %v1198 = vshll.u32 %v1153, 16
    %v1200 = vrot.slane %v1198, 1
    %v1201 = vsel %vm517, %v1196, %v1200
    %v1202 = vshrl.u32 %v1153, 16
    %v1204 = vor.u32 %v1202, %v1200
    %v1206 = vshll.u32 %v1154, 16
    %v1208 = vrot.slane %v1206, 1
    %v1209 = vsel %vm517, %v1204, %v1208
    %v1210 = vshrl.u32 %v1154, 16
    %v1212 = vor.u32 %v1210, %v1208
    %v1214 = vshll.u32 %v1155, 16
    %v1216 = vrot.slane %v1214, 1
    %v1217 = vsel %vm517, %v1212, %v1216
    %v1218 = vshrl.u32 %v1155, 16
    %v1220 = vor.u32 %v1218, %v1216
    %v1222 = vshll.u32 %v1156, 16
    %v1224 = vrot.slane %v1222, 1
    %v1225 = vsel %vm517, %v1220, %v1224
    %v1226 = vshrl.u32 %v1156, 16
    %v1228 = vor.u32 %v1226, %v1224
    %v1230 = vshll.u32 %v1157, 16
    %v1232 = vrot.slane %v1230, 1
    %v1233 = vsel %vm517, %v1228, %v1232
    %v1234 = vshrl.u32 %v1157, 16
    %v1236 = vor.u32 %v1234, %v1232
    %v1238 = vshll.u32 %v1158, 16
    %v1240 = vrot.slane %v1238, 1
    %v1241 = vsel %vm517, %v1236, %v1240
    %v1242 = vshrl.u32 %v1158, 16
    %v1244 = vor.u32 %v1242, %v1240
    %v1246 = vshll.u32 %v1159, 16
    %v1248 = vrot.slane %v1246, 1
    %v1249 = vsel %vm517, %v1244, %v1248
    %v1250 = vshrl.u32 %v1159, 16
    %v1252 = vor.u32 %v1250, %v1248
    %v1254 = vshll.u32 %v1160, 16
    %v1256 = vrot.slane %v1254, 1
    %v1257 = vsel %vm517, %v1252, %v1256
    %v1258 = vshrl.u32 %v1160, 16
    %v1260 = vor.u32 %v1258, %v1256
    %v1262 = vshll.u32 %v1161, 16
    %v1264 = vrot.slane %v1262, 1
    %v1265 = vsel %vm517, %v1260, %v1264
    %v1266 = vshrl.u32 %v1161, 16
    %v1268 = vor.u32 %v1266, %v1264
    %v1270 = vshll.u32 %v1162, 16
    %v1272 = vrot.slane %v1270, 1
    %v1273 = vsel %vm517, %v1268, %v1272
    %v1274 = vshrl.u32 %v1162, 16
    %v1276 = vor.u32 %v1274, %v1272
    %v1278 = vshll.u32 %v1163, 16
    %v1280 = vrot.slane %v1278, 1
    %v1281 = vsel %vm517, %v1276, %v1280
    %v1282 = vshrl.u32 %v1163, 16
    %v1284 = vor.u32 %v1282, %v1280
    %v1286 = vshll.u32 %v1164, 16
    %v1288 = vrot.slane %v1286, 1
    %v1289 = vsel %vm517, %v1284, %v1288
    %v1290 = vshrl.u32 %v1164, 16
    %v1292 = vor.u32 %v1290, %v1288
    %v1294 = vshll.u32 %v1165, 16
    %v1296 = vrot.slane %v1294, 1
    %v1297 = vsel %vm517, %v1292, %v1296
    %1314 = vst [vmem:[#allocation3 + $0x10] sm:$0xff] %v1177
    %1315 = vst [vmem:[#allocation3 + $0x58] sm:$0xff] %v1185
    %1316 = vst [vmem:[#allocation3 + $0xa0] sm:$0xff] %v1193
    %1317 = vst [vmem:[#allocation3 + $0xe8] sm:$0xff] %v1201
    %1318 = vst [vmem:[#allocation3 + $0x130] sm:$0xff] %v1209
    %1319 = vst [vmem:[#allocation3 + $0x178] sm:$0xff] %v1217
    %1320 = vst [vmem:[#allocation3 + $0x1c0] sm:$0xff] %v1225
    %1321 = vst [vmem:[#allocation3 + $0x208] sm:$0xff] %v1233
    %1322 = vst [vmem:[#allocation3 + $0x250] sm:$0xff] %v1241
    %1323 = vst [vmem:[#allocation3 + $0x298] sm:$0xff] %v1249
    %1324 = vst [vmem:[#allocation3 + $0x2e0] sm:$0xff] %v1257
    %1325 = vst [vmem:[#allocation3 + $0x328] sm:$0xff] %v1265
    %1326 = vst [vmem:[#allocation3 + $0x370] sm:$0xff] %v1273
    %1327 = vst [vmem:[#allocation3 + $0x3b8] sm:$0xff] %v1281
    %1328 = vst [vmem:[#allocation3 + $0x400] sm:$0xff] %v1289
    %1329 = vst [vmem:[#allocation3 + $0x448] sm:$0xff] %v1297
    %v1330 = vld [vmem:[#allocation2 + $0x8] sm:$0x80]
    %v1331 = vld [vmem:[#allocation2 + $0x10] sm:$0xff]
    %v1332 = vld [vmem:[#allocation2 + $0x18] sm:$0xff]
    %v1333 = vld [vmem:[#allocation2 + $0x20] sm:$0xff]
    %v1334 = vld [vmem:[#allocation2 + $0x28] sm:$0xff]
    %v1335 = vld [vmem:[#allocation2 + $0x30] sm:$0xff]
    %v1336 = vld [vmem:[#allocation2 + $0x38] sm:$0xff]
    %v1337 = vld [vmem:[#allocation2 + $0x40] sm:$0xff]
    %v1338 = vld [vmem:[#allocation2 + $0x48] sm:$0xff]
    %v1339 = vld [vmem:[#allocation2 + $0x50] sm:$0xff]
    %v1340 = vld [vmem:[#allocation2 + $0x58] sm:$0xff]
    %v1341 = vld [vmem:[#allocation2 + $0x60] sm:$0xff]
    %v1342 = vld [vmem:[#allocation2 + $0x68] sm:$0xff]
    %v1343 = vld [vmem:[#allocation2 + $0x70] sm:$0xff]
    %v1344 = vld [vmem:[#allocation2 + $0x78] sm:$0xff]
    %v1345 = vld [vmem:[#allocation2 + $0x80] sm:$0xff]
    %v1346 = vld [vmem:[#allocation2 + $0x88] sm:$0xff]
    %v1347 = vld [vmem:[#allocation9] sm:$0xf]
    %v1348 = vld [vmem:[#allocation9 + $0x4] sm:$0xf]
    %v1349 = vld [vmem:[#allocation9 + $0x8] sm:$0xf]
    %v1350 = vld [vmem:[#allocation9 + $0xc] sm:$0xf]
    %v1351 = vld [vmem:[#allocation9 + $0x10] sm:$0xf]
    %v1352 = vld [vmem:[#allocation9 + $0x14] sm:$0xf]
    %v1353 = vld [vmem:[#allocation9 + $0x18] sm:$0xf]
    %v1354 = vld [vmem:[#allocation9 + $0x1c] sm:$0xf]
    %v1355 = vld [vmem:[#allocation9 + $0x20] sm:$0xf]
    %v1356 = vld [vmem:[#allocation9 + $0x24] sm:$0xf]
    %v1357 = vld [vmem:[#allocation9 + $0x28] sm:$0xf]
    %v1358 = vld [vmem:[#allocation9 + $0x2c] sm:$0xf]
    %v1359 = vld [vmem:[#allocation9 + $0x30] sm:$0xf]
    %v1360 = vld [vmem:[#allocation9 + $0x34] sm:$0xf]
    %v1361 = vld [vmem:[#allocation9 + $0x38] sm:$0xf]
    %v1362 = vld [vmem:[#allocation9 + $0x3c] sm:$0xf]
    %v1363 = vld [vmem:[#allocation9 + $0x40] sm:$0xf]
    %v1364 = vld [vmem:[#allocation9 + $0x44] sm:$0xf]
    %v1365 = vld [vmem:[#allocation9 + $0x48] sm:$0xf]
    %v1366 = vld [vmem:[#allocation9 + $0x4c] sm:$0xf]
    %v1367 = vld [vmem:[#allocation9 + $0x50] sm:$0xf]
    %v1368 = vld [vmem:[#allocation9 + $0x54] sm:$0xf]
    %v1369 = vld [vmem:[#allocation9 + $0x58] sm:$0xf]
    %v1370 = vld [vmem:[#allocation9 + $0x5c] sm:$0xf]
    %v1371 = vld [vmem:[#allocation9 + $0x60] sm:$0xf]
    %v1372 = vld [vmem:[#allocation9 + $0x64] sm:$0xf]
    %v1373 = vld [vmem:[#allocation9 + $0x68] sm:$0xf]
    %v1374 = vld [vmem:[#allocation9 + $0x6c] sm:$0xf]
    %v1375 = vld [vmem:[#allocation9 + $0x70] sm:$0xf]
    %v1376 = vld [vmem:[#allocation9 + $0x74] sm:$0xf]
    %v1377 = vld [vmem:[#allocation9 + $0x78] sm:$0xf]
    %v1378 = vld [vmem:[#allocation9 + $0x7c] sm:$0xf]
    %v1411 = vunpack.c.l.b16 %v1347
    %v1412 = vunpack.c.l.b16 %v1348
    %v1413 = vunpack.c.l.b16 %v1349
    %v1414 = vunpack.c.l.b16 %v1350
    %v1415 = vunpack.c.l.b16 %v1351
    %v1416 = vunpack.c.l.b16 %v1352
    %v1417 = vunpack.c.l.b16 %v1353
    %v1418 = vunpack.c.l.b16 %v1354
    %v1419 = vunpack.c.l.b16 %v1355
    %v1420 = vunpack.c.l.b16 %v1356
    %v1421 = vunpack.c.l.b16 %v1357
    %v1422 = vunpack.c.l.b16 %v1358
    %v1423 = vunpack.c.l.b16 %v1359
    %v1424 = vunpack.c.l.b16 %v1360
    %v1425 = vunpack.c.l.b16 %v1361
    %v1426 = vunpack.c.l.b16 %v1362
    %v1427 = vunpack.c.l.b16 %v1363
    %v1428 = vunpack.c.l.b16 %v1364
    %v1429 = vunpack.c.l.b16 %v1365
    %v1430 = vunpack.c.l.b16 %v1366
    %v1431 = vunpack.c.l.b16 %v1367
    %v1432 = vunpack.c.l.b16 %v1368
    %v1433 = vunpack.c.l.b16 %v1369
    %v1434 = vunpack.c.l.b16 %v1370
    %v1435 = vunpack.c.l.b16 %v1371
    %v1436 = vunpack.c.l.b16 %v1372
    %v1437 = vunpack.c.l.b16 %v1373
    %v1438 = vunpack.c.l.b16 %v1374
    %v1439 = vunpack.c.l.b16 %v1375
    %v1440 = vunpack.c.l.b16 %v1376
    %v1441 = vunpack.c.l.b16 %v1377
    %v1442 = vunpack.c.l.b16 %v1378
    %v1443 = vpack.c.b16 %v1412, %v1411
    %v1444 = vpack.c.b16 %v1414, %v1413
    %v1445 = vpack.c.b16 %v1416, %v1415
    %v1446 = vpack.c.b16 %v1418, %v1417
    %v1447 = vpack.c.b16 %v1420, %v1419
    %v1448 = vpack.c.b16 %v1422, %v1421
    %v1449 = vpack.c.b16 %v1424, %v1423
    %v1450 = vpack.c.b16 %v1426, %v1425
    %v1451 = vpack.c.b16 %v1428, %v1427
    %v1452 = vpack.c.b16 %v1430, %v1429
    %v1453 = vpack.c.b16 %v1432, %v1431
    %v1454 = vpack.c.b16 %v1434, %v1433
    %v1455 = vpack.c.b16 %v1436, %v1435
    %v1456 = vpack.c.b16 %v1438, %v1437
    %v1457 = vpack.c.b16 %v1440, %v1439
    %v1458 = vpack.c.b16 %v1442, %v1441
    %v1460 = vshll.u32 %v1443, 16
    %v1462 = vrot.slane %v1460, 1
    %v1463 = vshrl.u32 %v1443, 16
    %v1465 = vor.u32 %v1463, %v1462
    %v1467 = vshll.u32 %v1444, 16
    %v1469 = vrot.slane %v1467, 1
    %v1470 = vsel %vm517, %v1465, %v1469
    %v1471 = vshrl.u32 %v1444, 16
    %v1473 = vor.u32 %v1471, %v1469
    %v1475 = vshll.u32 %v1445, 16
    %v1477 = vrot.slane %v1475, 1
    %v1478 = vsel %vm517, %v1473, %v1477
    %v1479 = vshrl.u32 %v1445, 16
    %v1481 = vor.u32 %v1479, %v1477
    %v1483 = vshll.u32 %v1446, 16
    %v1485 = vrot.slane %v1483, 1
    %v1486 = vsel %vm517, %v1481, %v1485
    %v1487 = vshrl.u32 %v1446, 16
    %v1489 = vor.u32 %v1487, %v1485
    %v1491 = vshll.u32 %v1447, 16
    %v1493 = vrot.slane %v1491, 1
    %v1494 = vsel %vm517, %v1489, %v1493
    %v1495 = vshrl.u32 %v1447, 16
    %v1497 = vor.u32 %v1495, %v1493
    %v1499 = vshll.u32 %v1448, 16
    %v1501 = vrot.slane %v1499, 1
    %v1502 = vsel %vm517, %v1497, %v1501
    %v1503 = vshrl.u32 %v1448, 16
    %v1505 = vor.u32 %v1503, %v1501
    %v1507 = vshll.u32 %v1449, 16
    %v1509 = vrot.slane %v1507, 1
    %v1510 = vsel %vm517, %v1505, %v1509
    %v1511 = vshrl.u32 %v1449, 16
    %v1513 = vor.u32 %v1511, %v1509
    %v1515 = vshll.u32 %v1450, 16
    %v1517 = vrot.slane %v1515, 1
    %v1518 = vsel %vm517, %v1513, %v1517
    %v1519 = vshrl.u32 %v1450, 16
    %v1521 = vor.u32 %v1519, %v1517
    %v1523 = vshll.u32 %v1451, 16
    %v1525 = vrot.slane %v1523, 1
    %v1526 = vsel %vm517, %v1521, %v1525
    %v1527 = vshrl.u32 %v1451, 16
    %v1529 = vor.u32 %v1527, %v1525
    %v1531 = vshll.u32 %v1452, 16
    %v1533 = vrot.slane %v1531, 1
    %v1534 = vsel %vm517, %v1529, %v1533
    %v1535 = vshrl.u32 %v1452, 16
    %v1537 = vor.u32 %v1535, %v1533
    %v1539 = vshll.u32 %v1453, 16
    %v1541 = vrot.slane %v1539, 1
    %v1542 = vsel %vm517, %v1537, %v1541
    %v1543 = vshrl.u32 %v1453, 16
    %v1545 = vor.u32 %v1543, %v1541
    %v1547 = vshll.u32 %v1454, 16
    %v1549 = vrot.slane %v1547, 1
    %v1550 = vsel %vm517, %v1545, %v1549
    %v1551 = vshrl.u32 %v1454, 16
    %v1553 = vor.u32 %v1551, %v1549
    %v1555 = vshll.u32 %v1455, 16
    %v1557 = vrot.slane %v1555, 1
    %v1558 = vsel %vm517, %v1553, %v1557
    %v1559 = vshrl.u32 %v1455, 16
    %v1561 = vor.u32 %v1559, %v1557
    %v1563 = vshll.u32 %v1456, 16
    %v1565 = vrot.slane %v1563, 1
    %v1566 = vsel %vm517, %v1561, %v1565
    %v1567 = vshrl.u32 %v1456, 16
    %v1569 = vor.u32 %v1567, %v1565
    %v1571 = vshll.u32 %v1457, 16
    %v1573 = vrot.slane %v1571, 1
    %v1574 = vsel %vm517, %v1569, %v1573
    %v1575 = vshrl.u32 %v1457, 16
    %v1577 = vor.u32 %v1575, %v1573
    %v1579 = vshll.u32 %v1458, 16
    %v1581 = vrot.slane %v1579, 1
    %v1582 = vsel %vm517, %v1577, %v1581
    %v1583 = vshrl.u32 %v1458, 16
    %v1585 = vor.u32 %v1583, %v1581
    %v1603 = vmul.bf16 %v1330, %v1462
    %v1604 = vmul.bf16 %v1331, %v1470
    %v1605 = vmul.bf16 %v1332, %v1478
    %v1606 = vmul.bf16 %v1333, %v1486
    %v1607 = vmul.bf16 %v1334, %v1494
    %v1608 = vmul.bf16 %v1335, %v1502
    %v1609 = vmul.bf16 %v1336, %v1510
    %v1610 = vmul.bf16 %v1337, %v1518
    %v1611 = vmul.bf16 %v1338, %v1526
    %v1612 = vmul.bf16 %v1339, %v1534
    %v1613 = vmul.bf16 %v1340, %v1542
    %v1614 = vmul.bf16 %v1341, %v1550
    %v1615 = vmul.bf16 %v1342, %v1558
    %v1616 = vmul.bf16 %v1343, %v1566
    %v1617 = vmul.bf16 %v1344, %v1574
    %v1618 = vmul.bf16 %v1345, %v1582
    %v1619 = vmul.bf16 %v1346, %v1585
    %v1621 = vshrl.u32 %v1603, 16
    %v1623 = vrot.slane %v1621, 7
    %v1625 = vshrl.u32 %v1604, 16
    %v1627 = vrot.slane %v1625, 7
    %v1628 = vshll.u32 %v1604, 16
    %v1630 = vor.u32 %v1627, %v1628
    %v1631 = vsel %vm679, %v1623, %v1630
    %v1633 = vshrl.u32 %v1605, 16
    %v1635 = vrot.slane %v1633, 7
    %v1636 = vshll.u32 %v1605, 16
    %v1638 = vor.u32 %v1635, %v1636
    %v1639 = vsel %vm679, %v1627, %v1638
    %v1641 = vshrl.u32 %v1606, 16
    %v1643 = vrot.slane %v1641, 7
    %v1644 = vshll.u32 %v1606, 16
    %v1646 = vor.u32 %v1643, %v1644
    %v1647 = vsel %vm679, %v1635, %v1646
    %v1649 = vshrl.u32 %v1607, 16
    %v1651 = vrot.slane %v1649, 7
    %v1652 = vshll.u32 %v1607, 16
    %v1654 = vor.u32 %v1651, %v1652
    %v1655 = vsel %vm679, %v1643, %v1654
    %v1657 = vshrl.u32 %v1608, 16
    %v1659 = vrot.slane %v1657, 7
    %v1660 = vshll.u32 %v1608, 16
    %v1662 = vor.u32 %v1659, %v1660
    %v1663 = vsel %vm679, %v1651, %v1662
    %v1665 = vshrl.u32 %v1609, 16
    %v1667 = vrot.slane %v1665, 7
    %v1668 = vshll.u32 %v1609, 16
    %v1670 = vor.u32 %v1667, %v1668
    %v1671 = vsel %vm679, %v1659, %v1670
    %v1673 = vshrl.u32 %v1610, 16
    %v1675 = vrot.slane %v1673, 7
    %v1676 = vshll.u32 %v1610, 16
    %v1678 = vor.u32 %v1675, %v1676
    %v1679 = vsel %vm679, %v1667, %v1678
    %v1681 = vshrl.u32 %v1611, 16
    %v1683 = vrot.slane %v1681, 7
    %v1684 = vshll.u32 %v1611, 16
    %v1686 = vor.u32 %v1683, %v1684
    %v1687 = vsel %vm679, %v1675, %v1686
    %v1689 = vshrl.u32 %v1612, 16
    %v1691 = vrot.slane %v1689, 7
    %v1692 = vshll.u32 %v1612, 16
    %v1694 = vor.u32 %v1691, %v1692
    %v1695 = vsel %vm679, %v1683, %v1694
    %v1697 = vshrl.u32 %v1613, 16
    %v1699 = vrot.slane %v1697, 7
    %v1700 = vshll.u32 %v1613, 16
    %v1702 = vor.u32 %v1699, %v1700
    %v1703 = vsel %vm679, %v1691, %v1702
    %v1705 = vshrl.u32 %v1614, 16
    %v1707 = vrot.slane %v1705, 7
    %v1708 = vshll.u32 %v1614, 16
    %v1710 = vor.u32 %v1707, %v1708
    %v1711 = vsel %vm679, %v1699, %v1710
    %v1713 = vshrl.u32 %v1615, 16
    %v1715 = vrot.slane %v1713, 7
    %v1716 = vshll.u32 %v1615, 16
    %v1718 = vor.u32 %v1715, %v1716
    %v1719 = vsel %vm679, %v1707, %v1718
    %v1721 = vshrl.u32 %v1616, 16
    %v1723 = vrot.slane %v1721, 7
    %v1724 = vshll.u32 %v1616, 16
    %v1726 = vor.u32 %v1723, %v1724
    %v1727 = vsel %vm679, %v1715, %v1726
    %v1729 = vshrl.u32 %v1617, 16
    %v1731 = vrot.slane %v1729, 7
    %v1732 = vshll.u32 %v1617, 16
    %v1734 = vor.u32 %v1731, %v1732
    %v1735 = vsel %vm679, %v1723, %v1734
    %v1737 = vshrl.u32 %v1618, 16
    %v1739 = vrot.slane %v1737, 7
    %v1740 = vshll.u32 %v1618, 16
    %v1742 = vor.u32 %v1739, %v1740
    %v1743 = vsel %vm679, %v1731, %v1742
    %v1745 = vshrl.u32 %v1619, 16
    %v1747 = vrot.slane %v1745, 7
    %v1748 = vshll.u32 %v1619, 16
    %v1750 = vor.u32 %v1747, %v1748
    %v1751 = vsel %vm679, %v1739, %v1750
    %1768 = vst [vmem:[#allocation3 + $0x18] sm:$0xff] %v1631
    %1769 = vst [vmem:[#allocation3 + $0x60] sm:$0xff] %v1639
    %1770 = vst [vmem:[#allocation3 + $0xa8] sm:$0xff] %v1647
    %1771 = vst [vmem:[#allocation3 + $0xf0] sm:$0xff] %v1655
    %1772 = vst [vmem:[#allocation3 + $0x138] sm:$0xff] %v1663
    %1773 = vst [vmem:[#allocation3 + $0x180] sm:$0xff] %v1671
    %1774 = vst [vmem:[#allocation3 + $0x1c8] sm:$0xff] %v1679
    %1775 = vst [vmem:[#allocation3 + $0x210] sm:$0xff] %v1687
    %1776 = vst [vmem:[#allocation3 + $0x258] sm:$0xff] %v1695
    %1777 = vst [vmem:[#allocation3 + $0x2a0] sm:$0xff] %v1703
    %1778 = vst [vmem:[#allocation3 + $0x2e8] sm:$0xff] %v1711
    %1779 = vst [vmem:[#allocation3 + $0x330] sm:$0xff] %v1719
    %1780 = vst [vmem:[#allocation3 + $0x378] sm:$0xff] %v1727
    %1781 = vst [vmem:[#allocation3 + $0x3c0] sm:$0xff] %v1735
    %1782 = vst [vmem:[#allocation3 + $0x408] sm:$0xff] %v1743
    %1783 = vst [vmem:[#allocation3 + $0x450] sm:$0xff] %v1751
    %v1784 = vld [vmem:[#allocation2 + $0x10] sm:$0xff]
    %v1785 = vld [vmem:[#allocation2 + $0x18] sm:$0xff]
    %v1786 = vld [vmem:[#allocation2 + $0x20] sm:$0xff]
    %v1787 = vld [vmem:[#allocation2 + $0x28] sm:$0xff]
    %v1788 = vld [vmem:[#allocation2 + $0x30] sm:$0xff]
    %v1789 = vld [vmem:[#allocation2 + $0x38] sm:$0xff]
    %v1790 = vld [vmem:[#allocation2 + $0x40] sm:$0xff]
    %v1791 = vld [vmem:[#allocation2 + $0x48] sm:$0xff]
    %v1792 = vld [vmem:[#allocation2 + $0x50] sm:$0xff]
    %v1793 = vld [vmem:[#allocation2 + $0x58] sm:$0xff]
    %v1794 = vld [vmem:[#allocation2 + $0x60] sm:$0xff]
    %v1795 = vld [vmem:[#allocation2 + $0x68] sm:$0xff]
    %v1796 = vld [vmem:[#allocation2 + $0x70] sm:$0xff]
    %v1797 = vld [vmem:[#allocation2 + $0x78] sm:$0xff]
    %v1798 = vld [vmem:[#allocation2 + $0x80] sm:$0xff]
    %v1799 = vld [vmem:[#allocation2 + $0x88] sm:$0xff]
    %1800 = vst [vmem:[#allocation3 + $0x20] sm:$0xff] %v1784
    %1801 = vst [vmem:[#allocation3 + $0x68] sm:$0xff] %v1785
    %1802 = vst [vmem:[#allocation3 + $0xb0] sm:$0xff] %v1786
    %1803 = vst [vmem:[#allocation3 + $0xf8] sm:$0xff] %v1787
    %1804 = vst [vmem:[#allocation3 + $0x140] sm:$0xff] %v1788
    %1805 = vst [vmem:[#allocation3 + $0x188] sm:$0xff] %v1789
    %1806 = vst [vmem:[#allocation3 + $0x1d0] sm:$0xff] %v1790
    %1807 = vst [vmem:[#allocation3 + $0x218] sm:$0xff] %v1791
    %1808 = vst [vmem:[#allocation3 + $0x260] sm:$0xff] %v1792
    %1809 = vst [vmem:[#allocation3 + $0x2a8] sm:$0xff] %v1793
    %1810 = vst [vmem:[#allocation3 + $0x2f0] sm:$0xff] %v1794
    %1811 = vst [vmem:[#allocation3 + $0x338] sm:$0xff] %v1795
    %1812 = vst [vmem:[#allocation3 + $0x380] sm:$0xff] %v1796
    %1813 = vst [vmem:[#allocation3 + $0x3c8] sm:$0xff] %v1797
    %1814 = vst [vmem:[#allocation3 + $0x410] sm:$0xff] %v1798
    %1815 = vst [vmem:[#allocation3 + $0x458] sm:$0xff] %v1799
    %v1816 = vld [vmem:[#allocation2 + $0x10] sm:$0xff]
    %v1817 = vld [vmem:[#allocation2 + $0x18] sm:$0xff]
    %v1818 = vld [vmem:[#allocation2 + $0x20] sm:$0xff]
    %v1819 = vld [vmem:[#allocation2 + $0x28] sm:$0xff]
    %v1820 = vld [vmem:[#allocation2 + $0x30] sm:$0xff]
    %v1821 = vld [vmem:[#allocation2 + $0x38] sm:$0xff]
    %v1822 = vld [vmem:[#allocation2 + $0x40] sm:$0xff]
    %v1823 = vld [vmem:[#allocation2 + $0x48] sm:$0xff]
    %v1824 = vld [vmem:[#allocation2 + $0x50] sm:$0xff]
    %v1825 = vld [vmem:[#allocation2 + $0x58] sm:$0xff]
    %v1826 = vld [vmem:[#allocation2 + $0x60] sm:$0xff]
    %v1827 = vld [vmem:[#allocation2 + $0x68] sm:$0xff]
    %v1828 = vld [vmem:[#allocation2 + $0x70] sm:$0xff]
    %v1829 = vld [vmem:[#allocation2 + $0x78] sm:$0xff]
    %v1830 = vld [vmem:[#allocation2 + $0x80] sm:$0xff]
    %v1831 = vld [vmem:[#allocation2 + $0x88] sm:$0xff]
    %v1832 = vld [vmem:[#allocation2 + $0x90] sm:$0x1]
    %v1833 = vld [vmem:[#allocation10] sm:$0xf]
    %v1834 = vld [vmem:[#allocation10 + $0x4] sm:$0xf]
    %v1835 = vld [vmem:[#allocation10 + $0x8] sm:$0xf]
    %v1836 = vld [vmem:[#allocation10 + $0xc] sm:$0xf]
    %v1837 = vld [vmem:[#allocation10 + $0x10] sm:$0xf]
    %v1838 = vld [vmem:[#allocation10 + $0x14] sm:$0xf]
    %v1839 = vld [vmem:[#allocation10 + $0x18] sm:$0xf]
    %v1840 = vld [vmem:[#allocation10 + $0x1c] sm:$0xf]
    %v1841 = vld [vmem:[#allocation10 + $0x20] sm:$0xf]
    %v1842 = vld [vmem:[#allocation10 + $0x24] sm:$0xf]
    %v1843 = vld [vmem:[#allocation10 + $0x28] sm:$0xf]
    %v1844 = vld [vmem:[#allocation10 + $0x2c] sm:$0xf]
    %v1845 = vld [vmem:[#allocation10 + $0x30] sm:$0xf]
    %v1846 = vld [vmem:[#allocation10 + $0x34] sm:$0xf]
    %v1847 = vld [vmem:[#allocation10 + $0x38] sm:$0xf]
    %v1848 = vld [vmem:[#allocation10 + $0x3c] sm:$0xf]
    %v1849 = vld [vmem:[#allocation10 + $0x40] sm:$0xf]
    %v1850 = vld [vmem:[#allocation10 + $0x44] sm:$0xf]
    %v1851 = vld [vmem:[#allocation10 + $0x48] sm:$0xf]
    %v1852 = vld [vmem:[#allocation10 + $0x4c] sm:$0xf]
    %v1853 = vld [vmem:[#allocation10 + $0x50] sm:$0xf]
    %v1854 = vld [vmem:[#allocation10 + $0x54] sm:$0xf]
    %v1855 = vld [vmem:[#allocation10 + $0x58] sm:$0xf]
    %v1856 = vld [vmem:[#allocation10 + $0x5c] sm:$0xf]
    %v1857 = vld [vmem:[#allocation10 + $0x60] sm:$0xf]
    %v1858 = vld [vmem:[#allocation10 + $0x64] sm:$0xf]
    %v1859 = vld [vmem:[#allocation10 + $0x68] sm:$0xf]
    %v1860 = vld [vmem:[#allocation10 + $0x6c] sm:$0xf]
    %v1861 = vld [vmem:[#allocation10 + $0x70] sm:$0xf]
    %v1862 = vld [vmem:[#allocation10 + $0x74] sm:$0xf]
    %v1863 = vld [vmem:[#allocation10 + $0x78] sm:$0xf]
    %v1864 = vld [vmem:[#allocation10 + $0x7c] sm:$0xf]
    %v1897 = vunpack.c.l.b16 %v1833
    %v1898 = vunpack.c.l.b16 %v1834
    %v1899 = vunpack.c.l.b16 %v1835
    %v1900 = vunpack.c.l.b16 %v1836
    %v1901 = vunpack.c.l.b16 %v1837
    %v1902 = vunpack.c.l.b16 %v1838
    %v1903 = vunpack.c.l.b16 %v1839
    %v1904 = vunpack.c.l.b16 %v1840
    %v1905 = vunpack.c.l.b16 %v1841
    %v1906 = vunpack.c.l.b16 %v1842
    %v1907 = vunpack.c.l.b16 %v1843
    %v1908 = vunpack.c.l.b16 %v1844
    %v1909 = vunpack.c.l.b16 %v1845
    %v1910 = vunpack.c.l.b16 %v1846
    %v1911 = vunpack.c.l.b16 %v1847
    %v1912 = vunpack.c.l.b16 %v1848
    %v1913 = vunpack.c.l.b16 %v1849
    %v1914 = vunpack.c.l.b16 %v1850
    %v1915 = vunpack.c.l.b16 %v1851
    %v1916 = vunpack.c.l.b16 %v1852
    %v1917 = vunpack.c.l.b16 %v1853
    %v1918 = vunpack.c.l.b16 %v1854
    %v1919 = vunpack.c.l.b16 %v1855
    %v1920 = vunpack.c.l.b16 %v1856
    %v1921 = vunpack.c.l.b16 %v1857
    %v1922 = vunpack.c.l.b16 %v1858
    %v1923 = vunpack.c.l.b16 %v1859
    %v1924 = vunpack.c.l.b16 %v1860
    %v1925 = vunpack.c.l.b16 %v1861
    %v1926 = vunpack.c.l.b16 %v1862
    %v1927 = vunpack.c.l.b16 %v1863
    %v1928 = vunpack.c.l.b16 %v1864
    %v1929 = vpack.c.b16 %v1898, %v1897
    %v1930 = vpack.c.b16 %v1900, %v1899
    %v1931 = vpack.c.b16 %v1902, %v1901
    %v1932 = vpack.c.b16 %v1904, %v1903
    %v1933 = vpack.c.b16 %v1906, %v1905
    %v1934 = vpack.c.b16 %v1908, %v1907
    %v1935 = vpack.c.b16 %v1910, %v1909
    %v1936 = vpack.c.b16 %v1912, %v1911
    %v1937 = vpack.c.b16 %v1914, %v1913
    %v1938 = vpack.c.b16 %v1916, %v1915
    %v1939 = vpack.c.b16 %v1918, %v1917
    %v1940 = vpack.c.b16 %v1920, %v1919
    %v1941 = vpack.c.b16 %v1922, %v1921
    %v1942 = vpack.c.b16 %v1924, %v1923
    %v1943 = vpack.c.b16 %v1926, %v1925
    %v1944 = vpack.c.b16 %v1928, %v1927
    %v1946 = vshrl.u32 %v1929, 16
    %v1948 = vrot.slane %v1946, 7
    %v1949 = vshll.u32 %v1929, 16
    %v1951 = vor.u32 %v1948, %v1949
    %v1953 = vshrl.u32 %v1930, 16
    %v1955 = vrot.slane %v1953, 7
    %v1956 = vshll.u32 %v1930, 16
    %v1958 = vor.u32 %v1955, %v1956
    %v1959 = vsel %vm679, %v1948, %v1958
    %v1961 = vshrl.u32 %v1931, 16
    %v1963 = vrot.slane %v1961, 7
    %v1964 = vshll.u32 %v1931, 16
    %v1966 = vor.u32 %v1963, %v1964
    %v1967 = vsel %vm679, %v1955, %v1966
    %v1969 = vshrl.u32 %v1932, 16
    %v1971 = vrot.slane %v1969, 7
    %v1972 = vshll.u32 %v1932, 16
    %v1974 = vor.u32 %v1971, %v1972
    %v1975 = vsel %vm679, %v1963, %v1974
    %v1977 = vshrl.u32 %v1933, 16
    %v1979 = vrot.slane %v1977, 7
    %v1980 = vshll.u32 %v1933, 16
    %v1982 = vor.u32 %v1979, %v1980
    %v1983 = vsel %vm679, %v1971, %v1982
    %v1985 = vshrl.u32 %v1934, 16
    %v1987 = vrot.slane %v1985, 7
    %v1988 = vshll.u32 %v1934, 16
    %v1990 = vor.u32 %v1987, %v1988
    %v1991 = vsel %vm679, %v1979, %v1990
    %v1993 = vshrl.u32 %v1935, 16
    %v1995 = vrot.slane %v1993, 7
    %v1996 = vshll.u32 %v1935, 16
    %v1998 = vor.u32 %v1995, %v1996
    %v1999 = vsel %vm679, %v1987, %v1998
    %v2001 = vshrl.u32 %v1936, 16
    %v2003 = vrot.slane %v2001, 7
    %v2004 = vshll.u32 %v1936, 16
    %v2006 = vor.u32 %v2003, %v2004
    %v2007 = vsel %vm679, %v1995, %v2006
    %v2009 = vshrl.u32 %v1937, 16
    %v2011 = vrot.slane %v2009, 7
    %v2012 = vshll.u32 %v1937, 16
    %v2014 = vor.u32 %v2011, %v2012
    %v2015 = vsel %vm679, %v2003, %v2014
    %v2017 = vshrl.u32 %v1938, 16
    %v2019 = vrot.slane %v2017, 7
    %v2020 = vshll.u32 %v1938, 16
    %v2022 = vor.u32 %v2019, %v2020
    %v2023 = vsel %vm679, %v2011, %v2022
    %v2025 = vshrl.u32 %v1939, 16
    %v2027 = vrot.slane %v2025, 7
    %v2028 = vshll.u32 %v1939, 16
    %v2030 = vor.u32 %v2027, %v2028
    %v2031 = vsel %vm679, %v2019, %v2030
    %v2033 = vshrl.u32 %v1940, 16
    %v2035 = vrot.slane %v2033, 7
    %v2036 = vshll.u32 %v1940, 16
    %v2038 = vor.u32 %v2035, %v2036
    %v2039 = vsel %vm679, %v2027, %v2038
    %v2041 = vshrl.u32 %v1941, 16
    %v2043 = vrot.slane %v2041, 7
    %v2044 = vshll.u32 %v1941, 16
    %v2046 = vor.u32 %v2043, %v2044
    %v2047 = vsel %vm679, %v2035, %v2046
    %v2049 = vshrl.u32 %v1942, 16
    %v2051 = vrot.slane %v2049, 7
    %v2052 = vshll.u32 %v1942, 16
    %v2054 = vor.u32 %v2051, %v2052
    %v2055 = vsel %vm679, %v2043, %v2054
    %v2057 = vshrl.u32 %v1943, 16
    %v2059 = vrot.slane %v2057, 7
    %v2060 = vshll.u32 %v1943, 16
    %v2062 = vor.u32 %v2059, %v2060
    %v2063 = vsel %vm679, %v2051, %v2062
    %v2065 = vshrl.u32 %v1944, 16
    %v2067 = vrot.slane %v2065, 7
    %v2068 = vshll.u32 %v1944, 16
    %v2070 = vor.u32 %v2067, %v2068
    %v2071 = vsel %vm679, %v2059, %v2070
    %v2089 = vmul.bf16 %v1816, %v1951
    %v2090 = vmul.bf16 %v1817, %v1959
    %v2091 = vmul.bf16 %v1818, %v1967
    %v2092 = vmul.bf16 %v1819, %v1975
    %v2093 = vmul.bf16 %v1820, %v1983
    %v2094 = vmul.bf16 %v1821, %v1991
    %v2095 = vmul.bf16 %v1822, %v1999
    %v2096 = vmul.bf16 %v1823, %v2007
    %v2097 = vmul.bf16 %v1824, %v2015
    %v2098 = vmul.bf16 %v1825, %v2023
    %v2099 = vmul.bf16 %v1826, %v2031
    %v2100 = vmul.bf16 %v1827, %v2039
    %v2101 = vmul.bf16 %v1828, %v2047
    %v2102 = vmul.bf16 %v1829, %v2055
    %v2103 = vmul.bf16 %v1830, %v2063
    %v2104 = vmul.bf16 %v1831, %v2071
    %v2105 = vmul.bf16 %v1832, %v2067
    %v2107 = vshrl.u32 %v2089, 16
    %v2109 = vshll.u32 %v2089, 16
    %v2111 = vrot.slane %v2109, 1
    %v2112 = vor.u32 %v2107, %v2111
    %v2114 = vshll.u32 %v2090, 16
    %v2116 = vrot.slane %v2114, 1
    %v2117 = vsel %vm517, %v2112, %v2116
    %v2118 = vshrl.u32 %v2090, 16
    %v2120 = vor.u32 %v2118, %v2116
    %v2122 = vshll.u32 %v2091, 16
    %v2124 = vrot.slane %v2122, 1
    %v2125 = vsel %vm517, %v2120, %v2124
    %v2126 = vshrl.u32 %v2091, 16
    %v2128 = vor.u32 %v2126, %v2124
    %v2130 = vshll.u32 %v2092, 16
    %v2132 = vrot.slane %v2130, 1
    %v2133 = vsel %vm517, %v2128, %v2132
    %v2134 = vshrl.u32 %v2092, 16
    %v2136 = vor.u32 %v2134, %v2132
    %v2138 = vshll.u32 %v2093, 16
    %v2140 = vrot.slane %v2138, 1
    %v2141 = vsel %vm517, %v2136, %v2140
    %v2142 = vshrl.u32 %v2093, 16
    %v2144 = vor.u32 %v2142, %v2140
    %v2146 = vshll.u32 %v2094, 16
    %v2148 = vrot.slane %v2146, 1
    %v2149 = vsel %vm517, %v2144, %v2148
    %v2150 = vshrl.u32 %v2094, 16
    %v2152 = vor.u32 %v2150, %v2148
    %v2154 = vshll.u32 %v2095, 16
    %v2156 = vrot.slane %v2154, 1
    %v2157 = vsel %vm517, %v2152, %v2156
    %v2158 = vshrl.u32 %v2095, 16
    %v2160 = vor.u32 %v2158, %v2156
    %v2162 = vshll.u32 %v2096, 16
    %v2164 = vrot.slane %v2162, 1
    %v2165 = vsel %vm517, %v2160, %v2164
    %v2166 = vshrl.u32 %v2096, 16
    %v2168 = vor.u32 %v2166, %v2164
    %v2170 = vshll.u32 %v2097, 16
    %v2172 = vrot.slane %v2170, 1
    %v2173 = vsel %vm517, %v2168, %v2172
    %v2174 = vshrl.u32 %v2097, 16
    %v2176 = vor.u32 %v2174, %v2172
    %v2178 = vshll.u32 %v2098, 16
    %v2180 = vrot.slane %v2178, 1
    %v2181 = vsel %vm517, %v2176, %v2180
    %v2182 = vshrl.u32 %v2098, 16
    %v2184 = vor.u32 %v2182, %v2180
    %v2186 = vshll.u32 %v2099, 16
    %v2188 = vrot.slane %v2186, 1
    %v2189 = vsel %vm517, %v2184, %v2188
    %v2190 = vshrl.u32 %v2099, 16
    %v2192 = vor.u32 %v2190, %v2188
    %v2194 = vshll.u32 %v2100, 16
    %v2196 = vrot.slane %v2194, 1
    %v2197 = vsel %vm517, %v2192, %v2196
    %v2198 = vshrl.u32 %v2100, 16
    %v2200 = vor.u32 %v2198, %v2196
    %v2202 = vshll.u32 %v2101, 16
    %v2204 = vrot.slane %v2202, 1
    %v2205 = vsel %vm517, %v2200, %v2204
    %v2206 = vshrl.u32 %v2101, 16
    %v2208 = vor.u32 %v2206, %v2204
    %v2210 = vshll.u32 %v2102, 16
    %v2212 = vrot.slane %v2210, 1
    %v2213 = vsel %vm517, %v2208, %v2212
    %v2214 = vshrl.u32 %v2102, 16
    %v2216 = vor.u32 %v2214, %v2212
    %v2218 = vshll.u32 %v2103, 16
    %v2220 = vrot.slane %v2218, 1
    %v2221 = vsel %vm517, %v2216, %v2220
    %v2222 = vshrl.u32 %v2103, 16
    %v2224 = vor.u32 %v2222, %v2220
    %v2226 = vshll.u32 %v2104, 16
    %v2228 = vrot.slane %v2226, 1
    %v2229 = vsel %vm517, %v2224, %v2228
    %v2230 = vshrl.u32 %v2104, 16
    %v2232 = vor.u32 %v2230, %v2228
    %v2234 = vshll.u32 %v2105, 16
    %v2236 = vrot.slane %v2234, 1
    %v2237 = vsel %vm517, %v2232, %v2236
    %2254 = vst [vmem:[#allocation3 + $0x28] sm:$0xff] %v2117
    %2255 = vst [vmem:[#allocation3 + $0x70] sm:$0xff] %v2125
    %2256 = vst [vmem:[#allocation3 + $0xb8] sm:$0xff] %v2133
    %2257 = vst [vmem:[#allocation3 + $0x100] sm:$0xff] %v2141
    %2258 = vst [vmem:[#allocation3 + $0x148] sm:$0xff] %v2149
    %2259 = vst [vmem:[#allocation3 + $0x190] sm:$0xff] %v2157
    %2260 = vst [vmem:[#allocation3 + $0x1d8] sm:$0xff] %v2165
    %2261 = vst [vmem:[#allocation3 + $0x220] sm:$0xff] %v2173
    %2262 = vst [vmem:[#allocation3 + $0x268] sm:$0xff] %v2181
    %2263 = vst [vmem:[#allocation3 + $0x2b0] sm:$0xff] %v2189
    %2264 = vst [vmem:[#allocation3 + $0x2f8] sm:$0xff] %v2197
    %2265 = vst [vmem:[#allocation3 + $0x340] sm:$0xff] %v2205
    %2266 = vst [vmem:[#allocation3 + $0x388] sm:$0xff] %v2213
    %2267 = vst [vmem:[#allocation3 + $0x3d0] sm:$0xff] %v2221
    %2268 = vst [vmem:[#allocation3 + $0x418] sm:$0xff] %v2229
    %2269 = vst [vmem:[#allocation3 + $0x460] sm:$0xff] %v2237
    %v2270 = vld [vmem:[#allocation2 + $0x10] sm:$0x80]
    %v2271 = vld [vmem:[#allocation2 + $0x18] sm:$0xff]
    %v2272 = vld [vmem:[#allocation2 + $0x20] sm:$0xff]
    %v2273 = vld [vmem:[#allocation2 + $0x28] sm:$0xff]
    %v2274 = vld [vmem:[#allocation2 + $0x30] sm:$0xff]
    %v2275 = vld [vmem:[#allocation2 + $0x38] sm:$0xff]
    %v2276 = vld [vmem:[#allocation2 + $0x40] sm:$0xff]
    %v2277 = vld [vmem:[#allocation2 + $0x48] sm:$0xff]
    %v2278 = vld [vmem:[#allocation2 + $0x50] sm:$0xff]
    %v2279 = vld [vmem:[#allocation2 + $0x58] sm:$0xff]
    %v2280 = vld [vmem:[#allocation2 + $0x60] sm:$0xff]
    %v2281 = vld [vmem:[#allocation2 + $0x68] sm:$0xff]
    %v2282 = vld [vmem:[#allocation2 + $0x70] sm:$0xff]
    %v2283 = vld [vmem:[#allocation2 + $0x78] sm:$0xff]
    %v2284 = vld [vmem:[#allocation2 + $0x80] sm:$0xff]
    %v2285 = vld [vmem:[#allocation2 + $0x88] sm:$0xff]
    %v2286 = vld [vmem:[#allocation2 + $0x90] sm:$0xff]
    %v2287 = vld [vmem:[#allocation9] sm:$0xf]
    %v2288 = vld [vmem:[#allocation9 + $0x4] sm:$0xf]
    %v2289 = vld [vmem:[#allocation9 + $0x8] sm:$0xf]
    %v2290 = vld [vmem:[#allocation9 + $0xc] sm:$0xf]
    %v2291 = vld [vmem:[#allocation9 + $0x10] sm:$0xf]
    %v2292 = vld [vmem:[#allocation9 + $0x14] sm:$0xf]
    %v2293 = vld [vmem:[#allocation9 + $0x18] sm:$0xf]
    %v2294 = vld [vmem:[#allocation9 + $0x1c] sm:$0xf]
    %v2295 = vld [vmem:[#allocation9 + $0x20] sm:$0xf]
    %v2296 = vld [vmem:[#allocation9 + $0x24] sm:$0xf]
    %v2297 = vld [vmem:[#allocation9 + $0x28] sm:$0xf]
    %v2298 = vld [vmem:[#allocation9 + $0x2c] sm:$0xf]
    %v2299 = vld [vmem:[#allocation9 + $0x30] sm:$0xf]
    %v2300 = vld [vmem:[#allocation9 + $0x34] sm:$0xf]
    %v2301 = vld [vmem:[#allocation9 + $0x38] sm:$0xf]
    %v2302 = vld [vmem:[#allocation9 + $0x3c] sm:$0xf]
    %v2303 = vld [vmem:[#allocation9 + $0x40] sm:$0xf]
    %v2304 = vld [vmem:[#allocation9 + $0x44] sm:$0xf]
    %v2305 = vld [vmem:[#allocation9 + $0x48] sm:$0xf]
    %v2306 = vld [vmem:[#allocation9 + $0x4c] sm:$0xf]
    %v2307 = vld [vmem:[#allocation9 + $0x50] sm:$0xf]
    %v2308 = vld [vmem:[#allocation9 + $0x54] sm:$0xf]
    %v2309 = vld [vmem:[#allocation9 + $0x58] sm:$0xf]
    %v2310 = vld [vmem:[#allocation9 + $0x5c] sm:$0xf]
    %v2311 = vld [vmem:[#allocation9 + $0x60] sm:$0xf]
    %v2312 = vld [vmem:[#allocation9 + $0x64] sm:$0xf]
    %v2313 = vld [vmem:[#allocation9 + $0x68] sm:$0xf]
    %v2314 = vld [vmem:[#allocation9 + $0x6c] sm:$0xf]
    %v2315 = vld [vmem:[#allocation9 + $0x70] sm:$0xf]
    %v2316 = vld [vmem:[#allocation9 + $0x74] sm:$0xf]
    %v2317 = vld [vmem:[#allocation9 + $0x78] sm:$0xf]
    %v2318 = vld [vmem:[#allocation9 + $0x7c] sm:$0xf]
    %v2351 = vunpack.c.l.b16 %v2287
    %v2352 = vunpack.c.l.b16 %v2288
    %v2353 = vunpack.c.l.b16 %v2289
    %v2354 = vunpack.c.l.b16 %v2290
    %v2355 = vunpack.c.l.b16 %v2291
    %v2356 = vunpack.c.l.b16 %v2292
    %v2357 = vunpack.c.l.b16 %v2293
    %v2358 = vunpack.c.l.b16 %v2294
    %v2359 = vunpack.c.l.b16 %v2295
    %v2360 = vunpack.c.l.b16 %v2296
    %v2361 = vunpack.c.l.b16 %v2297
    %v2362 = vunpack.c.l.b16 %v2298
    %v2363 = vunpack.c.l.b16 %v2299
    %v2364 = vunpack.c.l.b16 %v2300
    %v2365 = vunpack.c.l.b16 %v2301
    %v2366 = vunpack.c.l.b16 %v2302
    %v2367 = vunpack.c.l.b16 %v2303
    %v2368 = vunpack.c.l.b16 %v2304
    %v2369 = vunpack.c.l.b16 %v2305
    %v2370 = vunpack.c.l.b16 %v2306
    %v2371 = vunpack.c.l.b16 %v2307
    %v2372 = vunpack.c.l.b16 %v2308
    %v2373 = vunpack.c.l.b16 %v2309
    %v2374 = vunpack.c.l.b16 %v2310
    %v2375 = vunpack.c.l.b16 %v2311
    %v2376 = vunpack.c.l.b16 %v2312
    %v2377 = vunpack.c.l.b16 %v2313
    %v2378 = vunpack.c.l.b16 %v2314
    %v2379 = vunpack.c.l.b16 %v2315
    %v2380 = vunpack.c.l.b16 %v2316
    %v2381 = vunpack.c.l.b16 %v2317
    %v2382 = vunpack.c.l.b16 %v2318
    %v2383 = vpack.c.b16 %v2352, %v2351
    %v2384 = vpack.c.b16 %v2354, %v2353
    %v2385 = vpack.c.b16 %v2356, %v2355
    %v2386 = vpack.c.b16 %v2358, %v2357
    %v2387 = vpack.c.b16 %v2360, %v2359
    %v2388 = vpack.c.b16 %v2362, %v2361
    %v2389 = vpack.c.b16 %v2364, %v2363
    %v2390 = vpack.c.b16 %v2366, %v2365
    %v2391 = vpack.c.b16 %v2368, %v2367
    %v2392 = vpack.c.b16 %v2370, %v2369
    %v2393 = vpack.c.b16 %v2372, %v2371
    %v2394 = vpack.c.b16 %v2374, %v2373
    %v2395 = vpack.c.b16 %v2376, %v2375
    %v2396 = vpack.c.b16 %v2378, %v2377
    %v2397 = vpack.c.b16 %v2380, %v2379
    %v2398 = vpack.c.b16 %v2382, %v2381
    %v2400 = vshll.u32 %v2383, 16
    %v2402 = vrot.slane %v2400, 1
    %v2403 = vshrl.u32 %v2383, 16
    %v2405 = vor.u32 %v2403, %v2402
    %v2407 = vshll.u32 %v2384, 16
    %v2409 = vrot.slane %v2407, 1
    %v2410 = vsel %vm517, %v2405, %v2409
    %v2411 = vshrl.u32 %v2384, 16
    %v2413 = vor.u32 %v2411, %v2409
    %v2415 = vshll.u32 %v2385, 16
    %v2417 = vrot.slane %v2415, 1
    %v2418 = vsel %vm517, %v2413, %v2417
    %v2419 = vshrl.u32 %v2385, 16
    %v2421 = vor.u32 %v2419, %v2417
    %v2423 = vshll.u32 %v2386, 16
    %v2425 = vrot.slane %v2423, 1
    %v2426 = vsel %vm517, %v2421, %v2425
    %v2427 = vshrl.u32 %v2386, 16
    %v2429 = vor.u32 %v2427, %v2425
    %v2431 = vshll.u32 %v2387, 16
    %v2433 = vrot.slane %v2431, 1
    %v2434 = vsel %vm517, %v2429, %v2433
    %v2435 = vshrl.u32 %v2387, 16
    %v2437 = vor.u32 %v2435, %v2433
    %v2439 = vshll.u32 %v2388, 16
    %v2441 = vrot.slane %v2439, 1
    %v2442 = vsel %vm517, %v2437, %v2441
    %v2443 = vshrl.u32 %v2388, 16
    %v2445 = vor.u32 %v2443, %v2441
    %v2447 = vshll.u32 %v2389, 16
    %v2449 = vrot.slane %v2447, 1
    %v2450 = vsel %vm517, %v2445, %v2449
    %v2451 = vshrl.u32 %v2389, 16
    %v2453 = vor.u32 %v2451, %v2449
    %v2455 = vshll.u32 %v2390, 16
    %v2457 = vrot.slane %v2455, 1
    %v2458 = vsel %vm517, %v2453, %v2457
    %v2459 = vshrl.u32 %v2390, 16
    %v2461 = vor.u32 %v2459, %v2457
    %v2463 = vshll.u32 %v2391, 16
    %v2465 = vrot.slane %v2463, 1
    %v2466 = vsel %vm517, %v2461, %v2465
    %v2467 = vshrl.u32 %v2391, 16
    %v2469 = vor.u32 %v2467, %v2465
    %v2471 = vshll.u32 %v2392, 16
    %v2473 = vrot.slane %v2471, 1
    %v2474 = vsel %vm517, %v2469, %v2473
    %v2475 = vshrl.u32 %v2392, 16
    %v2477 = vor.u32 %v2475, %v2473
    %v2479 = vshll.u32 %v2393, 16
    %v2481 = vrot.slane %v2479, 1
    %v2482 = vsel %vm517, %v2477, %v2481
    %v2483 = vshrl.u32 %v2393, 16
    %v2485 = vor.u32 %v2483, %v2481
    %v2487 = vshll.u32 %v2394, 16
    %v2489 = vrot.slane %v2487, 1
    %v2490 = vsel %vm517, %v2485, %v2489
    %v2491 = vshrl.u32 %v2394, 16
    %v2493 = vor.u32 %v2491, %v2489
    %v2495 = vshll.u32 %v2395, 16
    %v2497 = vrot.slane %v2495, 1
    %v2498 = vsel %vm517, %v2493, %v2497
    %v2499 = vshrl.u32 %v2395, 16
    %v2501 = vor.u32 %v2499, %v2497
    %v2503 = vshll.u32 %v2396, 16
    %v2505 = vrot.slane %v2503, 1
    %v2506 = vsel %vm517, %v2501, %v2505
    %v2507 = vshrl.u32 %v2396, 16
    %v2509 = vor.u32 %v2507, %v2505
    %v2511 = vshll.u32 %v2397, 16
    %v2513 = vrot.slane %v2511, 1
    %v2514 = vsel %vm517, %v2509, %v2513
    %v2515 = vshrl.u32 %v2397, 16
    %v2517 = vor.u32 %v2515, %v2513
    %v2519 = vshll.u32 %v2398, 16
    %v2521 = vrot.slane %v2519, 1
    %v2522 = vsel %vm517, %v2517, %v2521
    %v2523 = vshrl.u32 %v2398, 16
    %v2525 = vor.u32 %v2523, %v2521
    %v2543 = vmul.bf16 %v2270, %v2402
    %v2544 = vmul.bf16 %v2271, %v2410
    %v2545 = vmul.bf16 %v2272, %v2418
    %v2546 = vmul.bf16 %v2273, %v2426
    %v2547 = vmul.bf16 %v2274, %v2434
    %v2548 = vmul.bf16 %v2275, %v2442
    %v2549 = vmul.bf16 %v2276, %v2450
    %v2550 = vmul.bf16 %v2277, %v2458
    %v2551 = vmul.bf16 %v2278, %v2466
    %v2552 = vmul.bf16 %v2279, %v2474
    %v2553 = vmul.bf16 %v2280, %v2482
    %v2554 = vmul.bf16 %v2281, %v2490
    %v2555 = vmul.bf16 %v2282, %v2498
    %v2556 = vmul.bf16 %v2283, %v2506
    %v2557 = vmul.bf16 %v2284, %v2514
    %v2558 = vmul.bf16 %v2285, %v2522
    %v2559 = vmul.bf16 %v2286, %v2525
    %v2561 = vshrl.u32 %v2543, 16
    %v2563 = vrot.slane %v2561, 7
    %v2565 = vshrl.u32 %v2544, 16
    %v2567 = vrot.slane %v2565, 7
    %v2568 = vshll.u32 %v2544, 16
    %v2570 = vor.u32 %v2567, %v2568
    %v2571 = vsel %vm679, %v2563, %v2570
    %v2573 = vshrl.u32 %v2545, 16
    %v2575 = vrot.slane %v2573, 7
    %v2576 = vshll.u32 %v2545, 16
    %v2578 = vor.u32 %v2575, %v2576
    %v2579 = vsel %vm679, %v2567, %v2578
    %v2581 = vshrl.u32 %v2546, 16
    %v2583 = vrot.slane %v2581, 7
    %v2584 = vshll.u32 %v2546, 16
    %v2586 = vor.u32 %v2583, %v2584
    %v2587 = vsel %vm679, %v2575, %v2586
    %v2589 = vshrl.u32 %v2547, 16
    %v2591 = vrot.slane %v2589, 7
    %v2592 = vshll.u32 %v2547, 16
    %v2594 = vor.u32 %v2591, %v2592
    %v2595 = vsel %vm679, %v2583, %v2594
    %v2597 = vshrl.u32 %v2548, 16
    %v2599 = vrot.slane %v2597, 7
    %v2600 = vshll.u32 %v2548, 16
    %v2602 = vor.u32 %v2599, %v2600
    %v2603 = vsel %vm679, %v2591, %v2602
    %v2605 = vshrl.u32 %v2549, 16
    %v2607 = vrot.slane %v2605, 7
    %v2608 = vshll.u32 %v2549, 16
    %v2610 = vor.u32 %v2607, %v2608
    %v2611 = vsel %vm679, %v2599, %v2610
    %v2613 = vshrl.u32 %v2550, 16
    %v2615 = vrot.slane %v2613, 7
    %v2616 = vshll.u32 %v2550, 16
    %v2618 = vor.u32 %v2615, %v2616
    %v2619 = vsel %vm679, %v2607, %v2618
    %v2621 = vshrl.u32 %v2551, 16
    %v2623 = vrot.slane %v2621, 7
    %v2624 = vshll.u32 %v2551, 16
    %v2626 = vor.u32 %v2623, %v2624
    %v2627 = vsel %vm679, %v2615, %v2626
    %v2629 = vshrl.u32 %v2552, 16
    %v2631 = vrot.slane %v2629, 7
    %v2632 = vshll.u32 %v2552, 16
    %v2634 = vor.u32 %v2631, %v2632
    %v2635 = vsel %vm679, %v2623, %v2634
    %v2637 = vshrl.u32 %v2553, 16
    %v2639 = vrot.slane %v2637, 7
    %v2640 = vshll.u32 %v2553, 16
    %v2642 = vor.u32 %v2639, %v2640
    %v2643 = vsel %vm679, %v2631, %v2642
    %v2645 = vshrl.u32 %v2554, 16
    %v2647 = vrot.slane %v2645, 7
    %v2648 = vshll.u32 %v2554, 16
    %v2650 = vor.u32 %v2647, %v2648
    %v2651 = vsel %vm679, %v2639, %v2650
    %v2653 = vshrl.u32 %v2555, 16
    %v2655 = vrot.slane %v2653, 7
    %v2656 = vshll.u32 %v2555, 16
    %v2658 = vor.u32 %v2655, %v2656
    %v2659 = vsel %vm679, %v2647, %v2658
    %v2661 = vshrl.u32 %v2556, 16
    %v2663 = vrot.slane %v2661, 7
    %v2664 = vshll.u32 %v2556, 16
    %v2666 = vor.u32 %v2663, %v2664
    %v2667 = vsel %vm679, %v2655, %v2666
    %v2669 = vshrl.u32 %v2557, 16
    %v2671 = vrot.slane %v2669, 7
    %v2672 = vshll.u32 %v2557, 16
    %v2674 = vor.u32 %v2671, %v2672
    %v2675 = vsel %vm679, %v2663, %v2674
    %v2677 = vshrl.u32 %v2558, 16
    %v2679 = vrot.slane %v2677, 7
    %v2680 = vshll.u32 %v2558, 16
    %v2682 = vor.u32 %v2679, %v2680
    %v2683 = vsel %vm679, %v2671, %v2682
    %v2685 = vshrl.u32 %v2559, 16
    %v2687 = vrot.slane %v2685, 7
    %v2688 = vshll.u32 %v2559, 16
    %v2690 = vor.u32 %v2687, %v2688
    %v2691 = vsel %vm679, %v2679, %v2690
    %2708 = vst [vmem:[#allocation3 + $0x30] sm:$0xff] %v2571
    %2709 = vst [vmem:[#allocation3 + $0x78] sm:$0xff] %v2579
    %2710 = vst [vmem:[#allocation3 + $0xc0] sm:$0xff] %v2587
    %2711 = vst [vmem:[#allocation3 + $0x108] sm:$0xff] %v2595
    %2712 = vst [vmem:[#allocation3 + $0x150] sm:$0xff] %v2603
    %2713 = vst [vmem:[#allocation3 + $0x198] sm:$0xff] %v2611
    %2714 = vst [vmem:[#allocation3 + $0x1e0] sm:$0xff] %v2619
    %2715 = vst [vmem:[#allocation3 + $0x228] sm:$0xff] %v2627
    %2716 = vst [vmem:[#allocation3 + $0x270] sm:$0xff] %v2635
    %2717 = vst [vmem:[#allocation3 + $0x2b8] sm:$0xff] %v2643
    %2718 = vst [vmem:[#allocation3 + $0x300] sm:$0xff] %v2651
    %2719 = vst [vmem:[#allocation3 + $0x348] sm:$0xff] %v2659
    %2720 = vst [vmem:[#allocation3 + $0x390] sm:$0xff] %v2667
    %2721 = vst [vmem:[#allocation3 + $0x3d8] sm:$0xff] %v2675
    %2722 = vst [vmem:[#allocation3 + $0x420] sm:$0xff] %v2683
    %2723 = vst [vmem:[#allocation3 + $0x468] sm:$0xff] %v2691
    %v2724 = vld [vmem:[#allocation2 + $0x18] sm:$0xff]
    %v2725 = vld [vmem:[#allocation2 + $0x20] sm:$0xff]
    %v2726 = vld [vmem:[#allocation2 + $0x28] sm:$0xff]
    %v2727 = vld [vmem:[#allocation2 + $0x30] sm:$0xff]
    %v2728 = vld [vmem:[#allocation2 + $0x38] sm:$0xff]
    %v2729 = vld [vmem:[#allocation2 + $0x40] sm:$0xff]
    %v2730 = vld [vmem:[#allocation2 + $0x48] sm:$0xff]
    %v2731 = vld [vmem:[#allocation2 + $0x50] sm:$0xff]
    %v2732 = vld [vmem:[#allocation2 + $0x58] sm:$0xff]
    %v2733 = vld [vmem:[#allocation2 + $0x60] sm:$0xff]
    %v2734 = vld [vmem:[#allocation2 + $0x68] sm:$0xff]
    %v2735 = vld [vmem:[#allocation2 + $0x70] sm:$0xff]
    %v2736 = vld [vmem:[#allocation2 + $0x78] sm:$0xff]
    %v2737 = vld [vmem:[#allocation2 + $0x80] sm:$0xff]
    %v2738 = vld [vmem:[#allocation2 + $0x88] sm:$0xff]
    %v2739 = vld [vmem:[#allocation2 + $0x90] sm:$0xff]
    %2740 = vst [vmem:[#allocation3 + $0x38] sm:$0xff] %v2724
    %2741 = vst [vmem:[#allocation3 + $0x80] sm:$0xff] %v2725
    %2742 = vst [vmem:[#allocation3 + $0xc8] sm:$0xff] %v2726
    %2743 = vst [vmem:[#allocation3 + $0x110] sm:$0xff] %v2727
    %2744 = vst [vmem:[#allocation3 + $0x158] sm:$0xff] %v2728
    %2745 = vst [vmem:[#allocation3 + $0x1a0] sm:$0xff] %v2729
    %2746 = vst [vmem:[#allocation3 + $0x1e8] sm:$0xff] %v2730
    %2747 = vst [vmem:[#allocation3 + $0x230] sm:$0xff] %v2731
    %2748 = vst [vmem:[#allocation3 + $0x278] sm:$0xff] %v2732
    %2749 = vst [vmem:[#allocation3 + $0x2c0] sm:$0xff] %v2733
    %2750 = vst [vmem:[#allocation3 + $0x308] sm:$0xff] %v2734
    %2751 = vst [vmem:[#allocation3 + $0x350] sm:$0xff] %v2735
    %2752 = vst [vmem:[#allocation3 + $0x398] sm:$0xff] %v2736
    %2753 = vst [vmem:[#allocation3 + $0x3e0] sm:$0xff] %v2737
    %2754 = vst [vmem:[#allocation3 + $0x428] sm:$0xff] %v2738
    %2755 = vst [vmem:[#allocation3 + $0x470] sm:$0xff] %v2739
    %v2756 = vld [vmem:[#allocation2 + $0x18] sm:$0xff]
    %v2757 = vld [vmem:[#allocation2 + $0x20] sm:$0xff]
    %v2758 = vld [vmem:[#allocation2 + $0x28] sm:$0xff]
    %v2759 = vld [vmem:[#allocation2 + $0x30] sm:$0xff]
    %v2760 = vld [vmem:[#allocation2 + $0x38] sm:$0xff]
    %v2761 = vld [vmem:[#allocation2 + $0x40] sm:$0xff]
    %v2762 = vld [vmem:[#allocation2 + $0x48] sm:$0xff]
    %v2763 = vld [vmem:[#allocation2 + $0x50] sm:$0xff]
    %v2764 = vld [vmem:[#allocation2 + $0x58] sm:$0xff]
    %v2765 = vld [vmem:[#allocation2 + $0x60] sm:$0xff]
    %v2766 = vld [vmem:[#allocation2 + $0x68] sm:$0xff]
    %v2767 = vld [vmem:[#allocation2 + $0x70] sm:$0xff]
    %v2768 = vld [vmem:[#allocation2 + $0x78] sm:$0xff]
    %v2769 = vld [vmem:[#allocation2 + $0x80] sm:$0xff]
    %v2770 = vld [vmem:[#allocation2 + $0x88] sm:$0xff]
    %v2771 = vld [vmem:[#allocation2 + $0x90] sm:$0xff]
    %v2772 = vld [vmem:[#allocation2 + $0x98] sm:$0x1]
    %v2773 = vld [vmem:[#allocation10] sm:$0xf]
    %v2774 = vld [vmem:[#allocation10 + $0x4] sm:$0xf]
    %v2775 = vld [vmem:[#allocation10 + $0x8] sm:$0xf]
    %v2776 = vld [vmem:[#allocation10 + $0xc] sm:$0xf]
    %v2777 = vld [vmem:[#allocation10 + $0x10] sm:$0xf]
    %v2778 = vld [vmem:[#allocation10 + $0x14] sm:$0xf]
    %v2779 = vld [vmem:[#allocation10 + $0x18] sm:$0xf]
    %v2780 = vld [vmem:[#allocation10 + $0x1c] sm:$0xf]
    %v2781 = vld [vmem:[#allocation10 + $0x20] sm:$0xf]
    %v2782 = vld [vmem:[#allocation10 + $0x24] sm:$0xf]
    %v2783 = vld [vmem:[#allocation10 + $0x28] sm:$0xf]
    %v2784 = vld [vmem:[#allocation10 + $0x2c] sm:$0xf]
    %v2785 = vld [vmem:[#allocation10 + $0x30] sm:$0xf]
    %v2786 = vld [vmem:[#allocation10 + $0x34] sm:$0xf]
    %v2787 = vld [vmem:[#allocation10 + $0x38] sm:$0xf]
    %v2788 = vld [vmem:[#allocation10 + $0x3c] sm:$0xf]
    %v2789 = vld [vmem:[#allocation10 + $0x40] sm:$0xf]
    %v2790 = vld [vmem:[#allocation10 + $0x44] sm:$0xf]
    %v2791 = vld [vmem:[#allocation10 + $0x48] sm:$0xf]
    %v2792 = vld [vmem:[#allocation10 + $0x4c] sm:$0xf]
    %v2793 = vld [vmem:[#allocation10 + $0x50] sm:$0xf]
    %v2794 = vld [vmem:[#allocation10 + $0x54] sm:$0xf]
    %v2795 = vld [vmem:[#allocation10 + $0x58] sm:$0xf]
    %v2796 = vld [vmem:[#allocation10 + $0x5c] sm:$0xf]
    %v2797 = vld [vmem:[#allocation10 + $0x60] sm:$0xf]
    %v2798 = vld [vmem:[#allocation10 + $0x64] sm:$0xf]
    %v2799 = vld [vmem:[#allocation10 + $0x68] sm:$0xf]
    %v2800 = vld [vmem:[#allocation10 + $0x6c] sm:$0xf]
    %v2801 = vld [vmem:[#allocation10 + $0x70] sm:$0xf]
    %v2802 = vld [vmem:[#allocation10 + $0x74] sm:$0xf]
    %v2803 = vld [vmem:[#allocation10 + $0x78] sm:$0xf]
    %v2804 = vld [vmem:[#allocation10 + $0x7c] sm:$0xf]
    %v2837 = vunpack.c.l.b16 %v2773
    %v2838 = vunpack.c.l.b16 %v2774
    %v2839 = vunpack.c.l.b16 %v2775
    %v2840 = vunpack.c.l.b16 %v2776
    %v2841 = vunpack.c.l.b16 %v2777
    %v2842 = vunpack.c.l.b16 %v2778
    %v2843 = vunpack.c.l.b16 %v2779
    %v2844 = vunpack.c.l.b16 %v2780
    %v2845 = vunpack.c.l.b16 %v2781
    %v2846 = vunpack.c.l.b16 %v2782
    %v2847 = vunpack.c.l.b16 %v2783
    %v2848 = vunpack.c.l.b16 %v2784
    %v2849 = vunpack.c.l.b16 %v2785
    %v2850 = vunpack.c.l.b16 %v2786
    %v2851 = vunpack.c.l.b16 %v2787
    %v2852 = vunpack.c.l.b16 %v2788
    %v2853 = vunpack.c.l.b16 %v2789
    %v2854 = vunpack.c.l.b16 %v2790
    %v2855 = vunpack.c.l.b16 %v2791
    %v2856 = vunpack.c.l.b16 %v2792
    %v2857 = vunpack.c.l.b16 %v2793
    %v2858 = vunpack.c.l.b16 %v2794
    %v2859 = vunpack.c.l.b16 %v2795
    %v2860 = vunpack.c.l.b16 %v2796
    %v2861 = vunpack.c.l.b16 %v2797
    %v2862 = vunpack.c.l.b16 %v2798
    %v2863 = vunpack.c.l.b16 %v2799
    %v2864 = vunpack.c.l.b16 %v2800
    %v2865 = vunpack.c.l.b16 %v2801
    %v2866 = vunpack.c.l.b16 %v2802
    %v2867 = vunpack.c.l.b16 %v2803
    %v2868 = vunpack.c.l.b16 %v2804
    %v2869 = vpack.c.b16 %v2838, %v2837
    %v2870 = vpack.c.b16 %v2840, %v2839
    %v2871 = vpack.c.b16 %v2842, %v2841
    %v2872 = vpack.c.b16 %v2844, %v2843
    %v2873 = vpack.c.b16 %v2846, %v2845
    %v2874 = vpack.c.b16 %v2848, %v2847
    %v2875 = vpack.c.b16 %v2850, %v2849
    %v2876 = vpack.c.b16 %v2852, %v2851
    %v2877 = vpack.c.b16 %v2854, %v2853
    %v2878 = vpack.c.b16 %v2856, %v2855
    %v2879 = vpack.c.b16 %v2858, %v2857
    %v2880 = vpack.c.b16 %v2860, %v2859
    %v2881 = vpack.c.b16 %v2862, %v2861
    %v2882 = vpack.c.b16 %v2864, %v2863
    %v2883 = vpack.c.b16 %v2866, %v2865
    %v2884 = vpack.c.b16 %v2868, %v2867
    %v2886 = vshrl.u32 %v2869, 16
    %v2888 = vrot.slane %v2886, 7
    %v2889 = vshll.u32 %v2869, 16
    %v2891 = vor.u32 %v2888, %v2889
    %v2893 = vshrl.u32 %v2870, 16
    %v2895 = vrot.slane %v2893, 7
    %v2896 = vshll.u32 %v2870, 16
    %v2898 = vor.u32 %v2895, %v2896
    %v2899 = vsel %vm679, %v2888, %v2898
    %v2901 = vshrl.u32 %v2871, 16
    %v2903 = vrot.slane %v2901, 7
    %v2904 = vshll.u32 %v2871, 16
    %v2906 = vor.u32 %v2903, %v2904
    %v2907 = vsel %vm679, %v2895, %v2906
    %v2909 = vshrl.u32 %v2872, 16
    %v2911 = vrot.slane %v2909, 7
    %v2912 = vshll.u32 %v2872, 16
    %v2914 = vor.u32 %v2911, %v2912
    %v2915 = vsel %vm679, %v2903, %v2914
    %v2917 = vshrl.u32 %v2873, 16
    %v2919 = vrot.slane %v2917, 7
    %v2920 = vshll.u32 %v2873, 16
    %v2922 = vor.u32 %v2919, %v2920
    %v2923 = vsel %vm679, %v2911, %v2922
    %v2925 = vshrl.u32 %v2874, 16
    %v2927 = vrot.slane %v2925, 7
    %v2928 = vshll.u32 %v2874, 16
    %v2930 = vor.u32 %v2927, %v2928
    %v2931 = vsel %vm679, %v2919, %v2930
    %v2933 = vshrl.u32 %v2875, 16
    %v2935 = vrot.slane %v2933, 7
    %v2936 = vshll.u32 %v2875, 16
    %v2938 = vor.u32 %v2935, %v2936
    %v2939 = vsel %vm679, %v2927, %v2938
    %v2941 = vshrl.u32 %v2876, 16
    %v2943 = vrot.slane %v2941, 7
    %v2944 = vshll.u32 %v2876, 16
    %v2946 = vor.u32 %v2943, %v2944
    %v2947 = vsel %vm679, %v2935, %v2946
    %v2949 = vshrl.u32 %v2877, 16
    %v2951 = vrot.slane %v2949, 7
    %v2952 = vshll.u32 %v2877, 16
    %v2954 = vor.u32 %v2951, %v2952
    %v2955 = vsel %vm679, %v2943, %v2954
    %v2957 = vshrl.u32 %v2878, 16
    %v2959 = vrot.slane %v2957, 7
    %v2960 = vshll.u32 %v2878, 16
    %v2962 = vor.u32 %v2959, %v2960
    %v2963 = vsel %vm679, %v2951, %v2962
    %v2965 = vshrl.u32 %v2879, 16
    %v2967 = vrot.slane %v2965, 7
    %v2968 = vshll.u32 %v2879, 16
    %v2970 = vor.u32 %v2967, %v2968
    %v2971 = vsel %vm679, %v2959, %v2970
    %v2973 = vshrl.u32 %v2880, 16
    %v2975 = vrot.slane %v2973, 7
    %v2976 = vshll.u32 %v2880, 16
    %v2978 = vor.u32 %v2975, %v2976
    %v2979 = vsel %vm679, %v2967, %v2978
    %v2981 = vshrl.u32 %v2881, 16
    %v2983 = vrot.slane %v2981, 7
    %v2984 = vshll.u32 %v2881, 16
    %v2986 = vor.u32 %v2983, %v2984
    %v2987 = vsel %vm679, %v2975, %v2986
    %v2989 = vshrl.u32 %v2882, 16
    %v2991 = vrot.slane %v2989, 7
    %v2992 = vshll.u32 %v2882, 16
    %v2994 = vor.u32 %v2991, %v2992
    %v2995 = vsel %vm679, %v2983, %v2994
    %v2997 = vshrl.u32 %v2883, 16
    %v2999 = vrot.slane %v2997, 7
    %v3000 = vshll.u32 %v2883, 16
    %v3002 = vor.u32 %v2999, %v3000
    %v3003 = vsel %vm679, %v2991, %v3002
    %v3005 = vshrl.u32 %v2884, 16
    %v3007 = vrot.slane %v3005, 7
    %v3008 = vshll.u32 %v2884, 16
    %v3010 = vor.u32 %v3007, %v3008
    %v3011 = vsel %vm679, %v2999, %v3010
    %v3029 = vmul.bf16 %v2756, %v2891
    %v3030 = vmul.bf16 %v2757, %v2899
    %v3031 = vmul.bf16 %v2758, %v2907
    %v3032 = vmul.bf16 %v2759, %v2915
    %v3033 = vmul.bf16 %v2760, %v2923
    %v3034 = vmul.bf16 %v2761, %v2931
    %v3035 = vmul.bf16 %v2762, %v2939
    %v3036 = vmul.bf16 %v2763, %v2947
    %v3037 = vmul.bf16 %v2764, %v2955
    %v3038 = vmul.bf16 %v2765, %v2963
    %v3039 = vmul.bf16 %v2766, %v2971
    %v3040 = vmul.bf16 %v2767, %v2979
    %v3041 = vmul.bf16 %v2768, %v2987
    %v3042 = vmul.bf16 %v2769, %v2995
    %v3043 = vmul.bf16 %v2770, %v3003
    %v3044 = vmul.bf16 %v2771, %v3011
    %v3045 = vmul.bf16 %v2772, %v3007
    %v3047 = vshrl.u32 %v3029, 16
    %v3049 = vshll.u32 %v3029, 16
    %v3051 = vrot.slane %v3049, 1
    %v3052 = vor.u32 %v3047, %v3051
    %v3054 = vshll.u32 %v3030, 16
    %v3056 = vrot.slane %v3054, 1
    %v3057 = vsel %vm517, %v3052, %v3056
    %v3058 = vshrl.u32 %v3030, 16
    %v3060 = vor.u32 %v3058, %v3056
    %v3062 = vshll.u32 %v3031, 16
    %v3064 = vrot.slane %v3062, 1
    %v3065 = vsel %vm517, %v3060, %v3064
    %v3066 = vshrl.u32 %v3031, 16
    %v3068 = vor.u32 %v3066, %v3064
    %v3070 = vshll.u32 %v3032, 16
    %v3072 = vrot.slane %v3070, 1
    %v3073 = vsel %vm517, %v3068, %v3072
    %v3074 = vshrl.u32 %v3032, 16
    %v3076 = vor.u32 %v3074, %v3072
    %v3078 = vshll.u32 %v3033, 16
    %v3080 = vrot.slane %v3078, 1
    %v3081 = vsel %vm517, %v3076, %v3080
    %v3082 = vshrl.u32 %v3033, 16
    %v3084 = vor.u32 %v3082, %v3080
    %v3086 = vshll.u32 %v3034, 16
    %v3088 = vrot.slane %v3086, 1
    %v3089 = vsel %vm517, %v3084, %v3088
    %v3090 = vshrl.u32 %v3034, 16
    %v3092 = vor.u32 %v3090, %v3088
    %v3094 = vshll.u32 %v3035, 16
    %v3096 = vrot.slane %v3094, 1
    %v3097 = vsel %vm517, %v3092, %v3096
    %v3098 = vshrl.u32 %v3035, 16
    %v3100 = vor.u32 %v3098, %v3096
    %v3102 = vshll.u32 %v3036, 16
    %v3104 = vrot.slane %v3102, 1
    %v3105 = vsel %vm517, %v3100, %v3104
    %v3106 = vshrl.u32 %v3036, 16
    %v3108 = vor.u32 %v3106, %v3104
    %v3110 = vshll.u32 %v3037, 16
    %v3112 = vrot.slane %v3110, 1
    %v3113 = vsel %vm517, %v3108, %v3112
    %v3114 = vshrl.u32 %v3037, 16
    %v3116 = vor.u32 %v3114, %v3112
    %v3118 = vshll.u32 %v3038, 16
    %v3120 = vrot.slane %v3118, 1
    %v3121 = vsel %vm517, %v3116, %v3120
    %v3122 = vshrl.u32 %v3038, 16
    %v3124 = vor.u32 %v3122, %v3120
    %v3126 = vshll.u32 %v3039, 16
    %v3128 = vrot.slane %v3126, 1
    %v3129 = vsel %vm517, %v3124, %v3128
    %v3130 = vshrl.u32 %v3039, 16
    %v3132 = vor.u32 %v3130, %v3128
    %v3134 = vshll.u32 %v3040, 16
    %v3136 = vrot.slane %v3134, 1
    %v3137 = vsel %vm517, %v3132, %v3136
    %v3138 = vshrl.u32 %v3040, 16
    %v3140 = vor.u32 %v3138, %v3136
    %v3142 = vshll.u32 %v3041, 16
    %v3144 = vrot.slane %v3142, 1
    %v3145 = vsel %vm517, %v3140, %v3144
    %v3146 = vshrl.u32 %v3041, 16
    %v3148 = vor.u32 %v3146, %v3144
    %v3150 = vshll.u32 %v3042, 16
    %v3152 = vrot.slane %v3150, 1
    %v3153 = vsel %vm517, %v3148, %v3152
    %v3154 = vshrl.u32 %v3042, 16
    %v3156 = vor.u32 %v3154, %v3152
    %v3158 = vshll.u32 %v3043, 16
    %v3160 = vrot.slane %v3158, 1
    %v3161 = vsel %vm517, %v3156, %v3160
    %v3162 = vshrl.u32 %v3043, 16
    %v3164 = vor.u32 %v3162, %v3160
    %v3166 = vshll.u32 %v3044, 16
    %v3168 = vrot.slane %v3166, 1
    %v3169 = vsel %vm517, %v3164, %v3168
    %v3170 = vshrl.u32 %v3044, 16
    %v3172 = vor.u32 %v3170, %v3168
    %v3174 = vshll.u32 %v3045, 16
    %v3176 = vrot.slane %v3174, 1
    %v3177 = vsel %vm517, %v3172, %v3176
    %3194 = vst [vmem:[#allocation3 + $0x40] sm:$0xff] %v3057
    %3195 = vst [vmem:[#allocation3 + $0x88] sm:$0xff] %v3065
    %3196 = vst [vmem:[#allocation3 + $0xd0] sm:$0xff] %v3073
    %3197 = vst [vmem:[#allocation3 + $0x118] sm:$0xff] %v3081
    %3198 = vst [vmem:[#allocation3 + $0x160] sm:$0xff] %v3089
    %3199 = vst [vmem:[#allocation3 + $0x1a8] sm:$0xff] %v3097
    %3200 = vst [vmem:[#allocation3 + $0x1f0] sm:$0xff] %v3105
    %3201 = vst [vmem:[#allocation3 + $0x238] sm:$0xff] %v3113
    %3202 = vst [vmem:[#allocation3 + $0x280] sm:$0xff] %v3121
    %3203 = vst [vmem:[#allocation3 + $0x2c8] sm:$0xff] %v3129
    %3204 = vst [vmem:[#allocation3 + $0x310] sm:$0xff] %v3137
    %3205 = vst [vmem:[#allocation3 + $0x358] sm:$0xff] %v3145
    %3206 = vst [vmem:[#allocation3 + $0x3a0] sm:$0xff] %v3153
    %3207 = vst [vmem:[#allocation3 + $0x3e8] sm:$0xff] %v3161
    %3208 = vst [vmem:[#allocation3 + $0x430] sm:$0xff] %v3169
    %3209 = vst [vmem:[#allocation3 + $0x478] sm:$0xff] %v3177
    %v3210 = vld [vmem:[#allocation3] sm:$0xff]
    %v3211 = vld [vmem:[#allocation3 + $0x8] sm:$0xff]
    %v3212 = vld [vmem:[#allocation3 + $0x10] sm:$0xff]
    %v3213 = vld [vmem:[#allocation3 + $0x18] sm:$0xff]
    %v3214 = vld [vmem:[#allocation3 + $0x20] sm:$0xff]
    %v3215 = vld [vmem:[#allocation3 + $0x28] sm:$0xff]
    %v3216 = vld [vmem:[#allocation3 + $0x30] sm:$0xff]
    %v3217 = vld [vmem:[#allocation3 + $0x38] sm:$0xff]
    %v3218 = vld [vmem:[#allocation3 + $0x40] sm:$0xff]
    %v3219 = vld [vmem:[#allocation3 + $0x48] sm:$0xff]
    %v3220 = vld [vmem:[#allocation3 + $0x50] sm:$0xff]
    %v3221 = vld [vmem:[#allocation3 + $0x58] sm:$0xff]
    %v3222 = vld [vmem:[#allocation3 + $0x60] sm:$0xff]
    %v3223 = vld [vmem:[#allocation3 + $0x68] sm:$0xff]
    %v3224 = vld [vmem:[#allocation3 + $0x70] sm:$0xff]
    %v3225 = vld [vmem:[#allocation3 + $0x78] sm:$0xff]
    %v3226 = vld [vmem:[#allocation3 + $0x80] sm:$0xff]
    %v3227 = vld [vmem:[#allocation3 + $0x88] sm:$0xff]
    %v3228 = vld [vmem:[#allocation3 + $0x90] sm:$0xff]
    %v3229 = vld [vmem:[#allocation3 + $0x98] sm:$0xff]
    %v3230 = vld [vmem:[#allocation3 + $0xa0] sm:$0xff]
    %v3231 = vld [vmem:[#allocation3 + $0xa8] sm:$0xff]
    %v3232 = vld [vmem:[#allocation3 + $0xb0] sm:$0xff]
    %v3233 = vld [vmem:[#allocation3 + $0xb8] sm:$0xff]
    %v3234 = vld [vmem:[#allocation3 + $0xc0] sm:$0xff]
    %v3235 = vld [vmem:[#allocation3 + $0xc8] sm:$0xff]
    %v3236 = vld [vmem:[#allocation3 + $0xd0] sm:$0xff]
    %v3237 = vld [vmem:[#allocation3 + $0xd8] sm:$0xff]
    %v3238 = vld [vmem:[#allocation3 + $0xe0] sm:$0xff]
    %v3239 = vld [vmem:[#allocation3 + $0xe8] sm:$0xff]
    %v3240 = vld [vmem:[#allocation3 + $0xf0] sm:$0xff]
    %v3241 = vld [vmem:[#allocation3 + $0xf8] sm:$0xff]
    %v3242 = vld [vmem:[#allocation3 + $0x100] sm:$0xff]
    %v3243 = vld [vmem:[#allocation3 + $0x108] sm:$0xff]
    %v3244 = vld [vmem:[#allocation3 + $0x110] sm:$0xff]
    %v3245 = vld [vmem:[#allocation3 + $0x118] sm:$0xff]
    %v3246 = vld [vmem:[#allocation3 + $0x120] sm:$0xff]
    %v3247 = vld [vmem:[#allocation3 + $0x128] sm:$0xff]
    %v3248 = vld [vmem:[#allocation3 + $0x130] sm:$0xff]
    %v3249 = vld [vmem:[#allocation3 + $0x138] sm:$0xff]
    %v3250 = vld [vmem:[#allocation3 + $0x140] sm:$0xff]
    %v3251 = vld [vmem:[#allocation3 + $0x148] sm:$0xff]
    %v3252 = vld [vmem:[#allocation3 + $0x150] sm:$0xff]
    %v3253 = vld [vmem:[#allocation3 + $0x158] sm:$0xff]
    %v3254 = vld [vmem:[#allocation3 + $0x160] sm:$0xff]
    %v3255 = vld [vmem:[#allocation3 + $0x168] sm:$0xff]
    %v3256 = vld [vmem:[#allocation3 + $0x170] sm:$0xff]
    %v3257 = vld [vmem:[#allocation3 + $0x178] sm:$0xff]
    %v3258 = vld [vmem:[#allocation3 + $0x180] sm:$0xff]
    %v3259 = vld [vmem:[#allocation3 + $0x188] sm:$0xff]
    %v3260 = vld [vmem:[#allocation3 + $0x190] sm:$0xff]
    %v3261 = vld [vmem:[#allocation3 + $0x198] sm:$0xff]
    %v3262 = vld [vmem:[#allocation3 + $0x1a0] sm:$0xff]
    %v3263 = vld [vmem:[#allocation3 + $0x1a8] sm:$0xff]
    %v3264 = vld [vmem:[#allocation3 + $0x1b0] sm:$0xff]
    %v3265 = vld [vmem:[#allocation3 + $0x1b8] sm:$0xff]
    %v3266 = vld [vmem:[#allocation3 + $0x1c0] sm:$0xff]
    %v3267 = vld [vmem:[#allocation3 + $0x1c8] sm:$0xff]
    %v3268 = vld [vmem:[#allocation3 + $0x1d0] sm:$0xff]
    %v3269 = vld [vmem:[#allocation3 + $0x1d8] sm:$0xff]
    %v3270 = vld [vmem:[#allocation3 + $0x1e0] sm:$0xff]
    %v3271 = vld [vmem:[#allocation3 + $0x1e8] sm:$0xff]
    %v3272 = vld [vmem:[#allocation3 + $0x1f0] sm:$0xff]
    %v3273 = vld [vmem:[#allocation3 + $0x1f8] sm:$0xff]
    %v3274 = vld [vmem:[#allocation3 + $0x200] sm:$0xff]
    %v3275 = vld [vmem:[#allocation3 + $0x208] sm:$0xff]
    %v3276 = vld [vmem:[#allocation3 + $0x210] sm:$0xff]
    %v3277 = vld [vmem:[#allocation3 + $0x218] sm:$0xff]
    %v3278 = vld [vmem:[#allocation3 + $0x220] sm:$0xff]
    %v3279 = vld [vmem:[#allocation3 + $0x228] sm:$0xff]
    %v3280 = vld [vmem:[#allocation3 + $0x230] sm:$0xff]
    %v3281 = vld [vmem:[#allocation3 + $0x238] sm:$0xff]
    %v3282 = vld [vmem:[#allocation3 + $0x240] sm:$0xff]
    %v3283 = vld [vmem:[#allocation3 + $0x248] sm:$0xff]
    %v3284 = vld [vmem:[#allocation3 + $0x250] sm:$0xff]
    %v3285 = vld [vmem:[#allocation3 + $0x258] sm:$0xff]
    %v3286 = vld [vmem:[#allocation3 + $0x260] sm:$0xff]
    %v3287 = vld [vmem:[#allocation3 + $0x268] sm:$0xff]
    %v3288 = vld [vmem:[#allocation3 + $0x270] sm:$0xff]
    %v3289 = vld [vmem:[#allocation3 + $0x278] sm:$0xff]
    %v3290 = vld [vmem:[#allocation3 + $0x280] sm:$0xff]
    %v3291 = vld [vmem:[#allocation3 + $0x288] sm:$0xff]
    %v3292 = vld [vmem:[#allocation3 + $0x290] sm:$0xff]
    %v3293 = vld [vmem:[#allocation3 + $0x298] sm:$0xff]
    %v3294 = vld [vmem:[#allocation3 + $0x2a0] sm:$0xff]
    %v3295 = vld [vmem:[#allocation3 + $0x2a8] sm:$0xff]
    %v3296 = vld [vmem:[#allocation3 + $0x2b0] sm:$0xff]
    %v3297 = vld [vmem:[#allocation3 + $0x2b8] sm:$0xff]
    %v3298 = vld [vmem:[#allocation3 + $0x2c0] sm:$0xff]
    %v3299 = vld [vmem:[#allocation3 + $0x2c8] sm:$0xff]
    %v3300 = vld [vmem:[#allocation3 + $0x2d0] sm:$0xff]
    %v3301 = vld [vmem:[#allocation3 + $0x2d8] sm:$0xff]
    %v3302 = vld [vmem:[#allocation3 + $0x2e0] sm:$0xff]
    %v3303 = vld [vmem:[#allocation3 + $0x2e8] sm:$0xff]
    %v3304 = vld [vmem:[#allocation3 + $0x2f0] sm:$0xff]
    %v3305 = vld [vmem:[#allocation3 + $0x2f8] sm:$0xff]
    %v3306 = vld [vmem:[#allocation3 + $0x300] sm:$0xff]
    %v3307 = vld [vmem:[#allocation3 + $0x308] sm:$0xff]
    %v3308 = vld [vmem:[#allocation3 + $0x310] sm:$0xff]
    %v3309 = vld [vmem:[#allocation3 + $0x318] sm:$0xff]
    %v3310 = vld [vmem:[#allocation3 + $0x320] sm:$0xff]
    %v3311 = vld [vmem:[#allocation3 + $0x328] sm:$0xff]
    %v3312 = vld [vmem:[#allocation3 + $0x330] sm:$0xff]
    %v3313 = vld [vmem:[#allocation3 + $0x338] sm:$0xff]
    %v3314 = vld [vmem:[#allocation3 + $0x340] sm:$0xff]
    %v3315 = vld [vmem:[#allocation3 + $0x348] sm:$0xff]
    %v3316 = vld [vmem:[#allocation3 + $0x350] sm:$0xff]
    %v3317 = vld [vmem:[#allocation3 + $0x358] sm:$0xff]
    %v3318 = vld [vmem:[#allocation3 + $0x360] sm:$0xff]
    %v3319 = vld [vmem:[#allocation3 + $0x368] sm:$0xff]
    %v3320 = vld [vmem:[#allocation3 + $0x370] sm:$0xff]
    %v3321 = vld [vmem:[#allocation3 + $0x378] sm:$0xff]
    %v3322 = vld [vmem:[#allocation3 + $0x380] sm:$0xff]
    %v3323 = vld [vmem:[#allocation3 + $0x388] sm:$0xff]
    %v3324 = vld [vmem:[#allocation3 + $0x390] sm:$0xff]
    %v3325 = vld [vmem:[#allocation3 + $0x398] sm:$0xff]
    %v3326 = vld [vmem:[#allocation3 + $0x3a0] sm:$0xff]
    %v3327 = vld [vmem:[#allocation3 + $0x3a8] sm:$0xff]
    %v3328 = vld [vmem:[#allocation3 + $0x3b0] sm:$0xff]
    %v3329 = vld [vmem:[#allocation3 + $0x3b8] sm:$0xff]
    %v3330 = vld [vmem:[#allocation3 + $0x3c0] sm:$0xff]
    %v3331 = vld [vmem:[#allocation3 + $0x3c8] sm:$0xff]
    %v3332 = vld [vmem:[#allocation3 + $0x3d0] sm:$0xff]
    %v3333 = vld [vmem:[#allocation3 + $0x3d8] sm:$0xff]
    %v3334 = vld [vmem:[#allocation3 + $0x3e0] sm:$0xff]
    %v3335 = vld [vmem:[#allocation3 + $0x3e8] sm:$0xff]
    %v3336 = vld [vmem:[#allocation3 + $0x3f0] sm:$0xff]
    %v3337 = vld [vmem:[#allocation3 + $0x3f8] sm:$0xff]
    %v3338 = vld [vmem:[#allocation3 + $0x400] sm:$0xff]
    %v3339 = vld [vmem:[#allocation3 + $0x408] sm:$0xff]
    %v3340 = vld [vmem:[#allocation3 + $0x410] sm:$0xff]
    %v3341 = vld [vmem:[#allocation3 + $0x418] sm:$0xff]
    %v3342 = vld [vmem:[#allocation3 + $0x420] sm:$0xff]
    %v3343 = vld [vmem:[#allocation3 + $0x428] sm:$0xff]
    %v3344 = vld [vmem:[#allocation3 + $0x430] sm:$0xff]
    %v3345 = vld [vmem:[#allocation3 + $0x438] sm:$0xff]
    %v3346 = vld [vmem:[#allocation3 + $0x440] sm:$0xff]
    %v3347 = vld [vmem:[#allocation3 + $0x448] sm:$0xff]
    %v3348 = vld [vmem:[#allocation3 + $0x450] sm:$0xff]
    %v3349 = vld [vmem:[#allocation3 + $0x458] sm:$0xff]
    %v3350 = vld [vmem:[#allocation3 + $0x460] sm:$0xff]
    %v3351 = vld [vmem:[#allocation3 + $0x468] sm:$0xff]
    %v3352 = vld [vmem:[#allocation3 + $0x470] sm:$0xff]
    %v3353 = vld [vmem:[#allocation3 + $0x478] sm:$0xff]
    %v3354 = vld [vmem:[#allocation12] sm:$0xf]
    %v3355 = vld [vmem:[#allocation12 + $0x4] sm:$0xf]
    %v3356 = vld [vmem:[#allocation12 + $0x8] sm:$0xf]
    %v3357 = vld [vmem:[#allocation12 + $0xc] sm:$0xf]
    %v3358 = vld [vmem:[#allocation12 + $0x10] sm:$0xf]
    %v3359 = vld [vmem:[#allocation12 + $0x14] sm:$0xf]
    %v3360 = vld [vmem:[#allocation12 + $0x18] sm:$0xf]
    %v3361 = vld [vmem:[#allocation12 + $0x1c] sm:$0xf]
    %v3362 = vld [vmem:[#allocation12 + $0x20] sm:$0xf]
    %v3363 = vld [vmem:[#allocation12 + $0x24] sm:$0xf]
    %v3364 = vld [vmem:[#allocation12 + $0x28] sm:$0xf]
    %v3365 = vld [vmem:[#allocation12 + $0x2c] sm:$0xf]
    %v3366 = vld [vmem:[#allocation12 + $0x30] sm:$0xf]
    %v3367 = vld [vmem:[#allocation12 + $0x34] sm:$0xf]
    %v3368 = vld [vmem:[#allocation12 + $0x38] sm:$0xf]
    %v3369 = vld [vmem:[#allocation12 + $0x3c] sm:$0xf]
    %v3370 = vld [vmem:[#allocation12 + $0x40] sm:$0xf]
    %v3371 = vld [vmem:[#allocation12 + $0x44] sm:$0xf]
    %v3372 = vld [vmem:[#allocation12 + $0x48] sm:$0xf]
    %v3373 = vld [vmem:[#allocation12 + $0x4c] sm:$0xf]
    %v3374 = vld [vmem:[#allocation12 + $0x50] sm:$0xf]
    %v3375 = vld [vmem:[#allocation12 + $0x54] sm:$0xf]
    %v3376 = vld [vmem:[#allocation12 + $0x58] sm:$0xf]
    %v3377 = vld [vmem:[#allocation12 + $0x5c] sm:$0xf]
    %v3378 = vld [vmem:[#allocation12 + $0x60] sm:$0xf]
    %v3379 = vld [vmem:[#allocation12 + $0x64] sm:$0xf]
    %v3380 = vld [vmem:[#allocation12 + $0x68] sm:$0xf]
    %v3381 = vld [vmem:[#allocation12 + $0x6c] sm:$0xf]
    %v3382 = vld [vmem:[#allocation12 + $0x70] sm:$0xf]
    %v3383 = vld [vmem:[#allocation12 + $0x74] sm:$0xf]
    %v3384 = vld [vmem:[#allocation12 + $0x78] sm:$0xf]
    %v3385 = vld [vmem:[#allocation12 + $0x7c] sm:$0xf]
    %v3386 = vld [vmem:[#allocation12 + $0x80] sm:$0xf]
    %v3387 = vld [vmem:[#allocation12 + $0x84] sm:$0xf]
    %v3388 = vld [vmem:[#allocation12 + $0x88] sm:$0xf]
    %v3389 = vld [vmem:[#allocation12 + $0x8c] sm:$0xf]
    %v3390 = vld [vmem:[#allocation12 + $0x90] sm:$0xf]
    %v3391 = vld [vmem:[#allocation12 + $0x94] sm:$0xf]
    %v3392 = vld [vmem:[#allocation12 + $0x98] sm:$0xf]
    %v3393 = vld [vmem:[#allocation12 + $0x9c] sm:$0xf]
    %v3394 = vld [vmem:[#allocation12 + $0xa0] sm:$0xf]
    %v3395 = vld [vmem:[#allocation12 + $0xa4] sm:$0xf]
    %v3396 = vld [vmem:[#allocation12 + $0xa8] sm:$0xf]
    %v3397 = vld [vmem:[#allocation12 + $0xac] sm:$0xf]
    %v3398 = vld [vmem:[#allocation12 + $0xb0] sm:$0xf]
    %v3399 = vld [vmem:[#allocation12 + $0xb4] sm:$0xf]
    %v3400 = vld [vmem:[#allocation12 + $0xb8] sm:$0xf]
    %v3401 = vld [vmem:[#allocation12 + $0xbc] sm:$0xf]
    %v3402 = vld [vmem:[#allocation12 + $0xc0] sm:$0xf]
    %v3403 = vld [vmem:[#allocation12 + $0xc4] sm:$0xf]
    %v3404 = vld [vmem:[#allocation12 + $0xc8] sm:$0xf]
    %v3405 = vld [vmem:[#allocation12 + $0xcc] sm:$0xf]
    %v3406 = vld [vmem:[#allocation12 + $0xd0] sm:$0xf]
    %v3407 = vld [vmem:[#allocation12 + $0xd4] sm:$0xf]
    %v3408 = vld [vmem:[#allocation12 + $0xd8] sm:$0xf]
    %v3409 = vld [vmem:[#allocation12 + $0xdc] sm:$0xf]
    %v3410 = vld [vmem:[#allocation12 + $0xe0] sm:$0xf]
    %v3411 = vld [vmem:[#allocation12 + $0xe4] sm:$0xf]
    %v3412 = vld [vmem:[#allocation12 + $0xe8] sm:$0xf]
    %v3413 = vld [vmem:[#allocation12 + $0xec] sm:$0xf]
    %v3414 = vld [vmem:[#allocation12 + $0xf0] sm:$0xf]
    %v3415 = vld [vmem:[#allocation12 + $0xf4] sm:$0xf]
    %v3416 = vld [vmem:[#allocation12 + $0xf8] sm:$0xf]
    %v3417 = vld [vmem:[#allocation12 + $0xfc] sm:$0xf]
    %v3418 = vld [vmem:[#allocation12 + $0x100] sm:$0xf]
    %v3419 = vld [vmem:[#allocation12 + $0x104] sm:$0xf]
    %v3420 = vld [vmem:[#allocation12 + $0x108] sm:$0xf]
    %v3421 = vld [vmem:[#allocation12 + $0x10c] sm:$0xf]
    %v3422 = vld [vmem:[#allocation12 + $0x110] sm:$0xf]
    %v3423 = vld [vmem:[#allocation12 + $0x114] sm:$0xf]
    %v3424 = vld [vmem:[#allocation12 + $0x118] sm:$0xf]
    %v3425 = vld [vmem:[#allocation12 + $0x11c] sm:$0xf]
    %v3426 = vld [vmem:[#allocation12 + $0x120] sm:$0xf]
    %v3427 = vld [vmem:[#allocation12 + $0x124] sm:$0xf]
    %v3428 = vld [vmem:[#allocation12 + $0x128] sm:$0xf]
    %v3429 = vld [vmem:[#allocation12 + $0x12c] sm:$0xf]
    %v3430 = vld [vmem:[#allocation12 + $0x130] sm:$0xf]
    %v3431 = vld [vmem:[#allocation12 + $0x134] sm:$0xf]
    %v3432 = vld [vmem:[#allocation12 + $0x138] sm:$0xf]
    %v3433 = vld [vmem:[#allocation12 + $0x13c] sm:$0xf]
    %v3434 = vld [vmem:[#allocation12 + $0x140] sm:$0xf]
    %v3435 = vld [vmem:[#allocation12 + $0x144] sm:$0xf]
    %v3436 = vld [vmem:[#allocation12 + $0x148] sm:$0xf]
    %v3437 = vld [vmem:[#allocation12 + $0x14c] sm:$0xf]
    %v3438 = vld [vmem:[#allocation12 + $0x150] sm:$0xf]
    %v3439 = vld [vmem:[#allocation12 + $0x154] sm:$0xf]
    %v3440 = vld [vmem:[#allocation12 + $0x158] sm:$0xf]
    %v3441 = vld [vmem:[#allocation12 + $0x15c] sm:$0xf]
    %v3442 = vld [vmem:[#allocation12 + $0x160] sm:$0xf]
    %v3443 = vld [vmem:[#allocation12 + $0x164] sm:$0xf]
    %v3444 = vld [vmem:[#allocation12 + $0x168] sm:$0xf]
    %v3445 = vld [vmem:[#allocation12 + $0x16c] sm:$0xf]
    %v3446 = vld [vmem:[#allocation12 + $0x170] sm:$0xf]
    %v3447 = vld [vmem:[#allocation12 + $0x174] sm:$0xf]
    %v3448 = vld [vmem:[#allocation12 + $0x178] sm:$0xf]
    %v3449 = vld [vmem:[#allocation12 + $0x17c] sm:$0xf]
    %v3450 = vld [vmem:[#allocation12 + $0x180] sm:$0xf]
    %v3451 = vld [vmem:[#allocation12 + $0x184] sm:$0xf]
    %v3452 = vld [vmem:[#allocation12 + $0x188] sm:$0xf]
    %v3453 = vld [vmem:[#allocation12 + $0x18c] sm:$0xf]
    %v3454 = vld [vmem:[#allocation12 + $0x190] sm:$0xf]
    %v3455 = vld [vmem:[#allocation12 + $0x194] sm:$0xf]
    %v3456 = vld [vmem:[#allocation12 + $0x198] sm:$0xf]
    %v3457 = vld [vmem:[#allocation12 + $0x19c] sm:$0xf]
    %v3458 = vld [vmem:[#allocation12 + $0x1a0] sm:$0xf]
    %v3459 = vld [vmem:[#allocation12 + $0x1a4] sm:$0xf]
    %v3460 = vld [vmem:[#allocation12 + $0x1a8] sm:$0xf]
    %v3461 = vld [vmem:[#allocation12 + $0x1ac] sm:$0xf]
    %v3462 = vld [vmem:[#allocation12 + $0x1b0] sm:$0xf]
    %v3463 = vld [vmem:[#allocation12 + $0x1b4] sm:$0xf]
    %v3464 = vld [vmem:[#allocation12 + $0x1b8] sm:$0xf]
    %v3465 = vld [vmem:[#allocation12 + $0x1bc] sm:$0xf]
    %v3466 = vld [vmem:[#allocation12 + $0x1c0] sm:$0xf]
    %v3467 = vld [vmem:[#allocation12 + $0x1c4] sm:$0xf]
    %v3468 = vld [vmem:[#allocation12 + $0x1c8] sm:$0xf]
    %v3469 = vld [vmem:[#allocation12 + $0x1cc] sm:$0xf]
    %v3470 = vld [vmem:[#allocation12 + $0x1d0] sm:$0xf]
    %v3471 = vld [vmem:[#allocation12 + $0x1d4] sm:$0xf]
    %v3472 = vld [vmem:[#allocation12 + $0x1d8] sm:$0xf]
    %v3473 = vld [vmem:[#allocation12 + $0x1dc] sm:$0xf]
    %v3474 = vld [vmem:[#allocation12 + $0x1e0] sm:$0xf]
    %v3475 = vld [vmem:[#allocation12 + $0x1e4] sm:$0xf]
    %v3476 = vld [vmem:[#allocation12 + $0x1e8] sm:$0xf]
    %v3477 = vld [vmem:[#allocation12 + $0x1ec] sm:$0xf]
    %v3478 = vld [vmem:[#allocation12 + $0x1f0] sm:$0xf]
    %v3479 = vld [vmem:[#allocation12 + $0x1f4] sm:$0xf]
    %v3480 = vld [vmem:[#allocation12 + $0x1f8] sm:$0xf]
    %v3481 = vld [vmem:[#allocation12 + $0x1fc] sm:$0xf]
    %v3482 = vld [vmem:[#allocation12 + $0x200] sm:$0xf]
    %v3483 = vld [vmem:[#allocation12 + $0x204] sm:$0xf]
    %v3484 = vld [vmem:[#allocation12 + $0x208] sm:$0xf]
    %v3485 = vld [vmem:[#allocation12 + $0x20c] sm:$0xf]
    %v3486 = vld [vmem:[#allocation12 + $0x210] sm:$0xf]
    %v3487 = vld [vmem:[#allocation12 + $0x214] sm:$0xf]
    %v3488 = vld [vmem:[#allocation12 + $0x218] sm:$0xf]
    %v3489 = vld [vmem:[#allocation12 + $0x21c] sm:$0xf]
    %v3490 = vld [vmem:[#allocation12 + $0x220] sm:$0xf]
    %v3491 = vld [vmem:[#allocation12 + $0x224] sm:$0xf]
    %v3492 = vld [vmem:[#allocation12 + $0x228] sm:$0xf]
    %v3493 = vld [vmem:[#allocation12 + $0x22c] sm:$0xf]
    %v3494 = vld [vmem:[#allocation12 + $0x230] sm:$0xf]
    %v3495 = vld [vmem:[#allocation12 + $0x234] sm:$0xf]
    %v3496 = vld [vmem:[#allocation12 + $0x238] sm:$0xf]
    %v3497 = vld [vmem:[#allocation12 + $0x23c] sm:$0xf]
    %v3498 = vld [vmem:[%s5] sm:$0x1]
    %v3500 = vlaneseq
    %v3501 = vshrl.u32 %v3500, 7
    %v3502 = vsub.s32 0, %v3501
    %v3503 = vrot.slane %v3498, %v3502
    %v3649 = vunpack.c.l.b16 %v3354
    %v3650 = vunpack.c.l.b16 %v3355
    %v3651 = vunpack.c.l.b16 %v3356
    %v3652 = vunpack.c.l.b16 %v3357
    %v3653 = vunpack.c.l.b16 %v3358
    %v3654 = vunpack.c.l.b16 %v3359
    %v3655 = vunpack.c.l.b16 %v3360
    %v3656 = vunpack.c.l.b16 %v3361
    %v3657 = vunpack.c.l.b16 %v3362
    %v3658 = vunpack.c.l.b16 %v3363
    %v3659 = vunpack.c.l.b16 %v3364
    %v3660 = vunpack.c.l.b16 %v3365
    %v3661 = vunpack.c.l.b16 %v3366
    %v3662 = vunpack.c.l.b16 %v3367
    %v3663 = vunpack.c.l.b16 %v3368
    %v3664 = vunpack.c.l.b16 %v3369
    %v3665 = vunpack.c.l.b16 %v3370
    %v3666 = vunpack.c.l.b16 %v3371
    %v3667 = vunpack.c.l.b16 %v3372
    %v3668 = vunpack.c.l.b16 %v3373
    %v3669 = vunpack.c.l.b16 %v3374
    %v3670 = vunpack.c.l.b16 %v3375
    %v3671 = vunpack.c.l.b16 %v3376
    %v3672 = vunpack.c.l.b16 %v3377
    %v3673 = vunpack.c.l.b16 %v3378
    %v3674 = vunpack.c.l.b16 %v3379
    %v3675 = vunpack.c.l.b16 %v3380
    %v3676 = vunpack.c.l.b16 %v3381
    %v3677 = vunpack.c.l.b16 %v3382
    %v3678 = vunpack.c.l.b16 %v3383
    %v3679 = vunpack.c.l.b16 %v3384
    %v3680 = vunpack.c.l.b16 %v3385
    %v3681 = vunpack.c.l.b16 %v3386
    %v3682 = vunpack.c.l.b16 %v3387
    %v3683 = vunpack.c.l.b16 %v3388
    %v3684 = vunpack.c.l.b16 %v3389
    %v3685 = vunpack.c.l.b16 %v3390
    %v3686 = vunpack.c.l.b16 %v3391
    %v3687 = vunpack.c.l.b16 %v3392
    %v3688 = vunpack.c.l.b16 %v3393
    %v3689 = vunpack.c.l.b16 %v3394
    %v3690 = vunpack.c.l.b16 %v3395
    %v3691 = vunpack.c.l.b16 %v3396
    %v3692 = vunpack.c.l.b16 %v3397
    %v3693 = vunpack.c.l.b16 %v3398
    %v3694 = vunpack.c.l.b16 %v3399
    %v3695 = vunpack.c.l.b16 %v3400
    %v3696 = vunpack.c.l.b16 %v3401
    %v3697 = vunpack.c.l.b16 %v3402
    %v3698 = vunpack.c.l.b16 %v3403
    %v3699 = vunpack.c.l.b16 %v3404
    %v3700 = vunpack.c.l.b16 %v3405
    %v3701 = vunpack.c.l.b16 %v3406
    %v3702 = vunpack.c.l.b16 %v3407
    %v3703 = vunpack.c.l.b16 %v3408
    %v3704 = vunpack.c.l.b16 %v3409
    %v3705 = vunpack.c.l.b16 %v3410
    %v3706 = vunpack.c.l.b16 %v3411
    %v3707 = vunpack.c.l.b16 %v3412
    %v3708 = vunpack.c.l.b16 %v3413
    %v3709 = vunpack.c.l.b16 %v3414
    %v3710 = vunpack.c.l.b16 %v3415
    %v3711 = vunpack.c.l.b16 %v3416
    %v3712 = vunpack.c.l.b16 %v3417
    %v3713 = vunpack.c.l.b16 %v3418
    %v3714 = vunpack.c.l.b16 %v3419
    %v3715 = vunpack.c.l.b16 %v3420
    %v3716 = vunpack.c.l.b16 %v3421
    %v3717 = vunpack.c.l.b16 %v3422
    %v3718 = vunpack.c.l.b16 %v3423
    %v3719 = vunpack.c.l.b16 %v3424
    %v3720 = vunpack.c.l.b16 %v3425
    %v3721 = vunpack.c.l.b16 %v3426
    %v3722 = vunpack.c.l.b16 %v3427
    %v3723 = vunpack.c.l.b16 %v3428
    %v3724 = vunpack.c.l.b16 %v3429
    %v3725 = vunpack.c.l.b16 %v3430
    %v3726 = vunpack.c.l.b16 %v3431
    %v3727 = vunpack.c.l.b16 %v3432
    %v3728 = vunpack.c.l.b16 %v3433
    %v3729 = vunpack.c.l.b16 %v3434
    %v3730 = vunpack.c.l.b16 %v3435
    %v3731 = vunpack.c.l.b16 %v3436
    %v3732 = vunpack.c.l.b16 %v3437
    %v3733 = vunpack.c.l.b16 %v3438
    %v3734 = vunpack.c.l.b16 %v3439
    %v3735 = vunpack.c.l.b16 %v3440
    %v3736 = vunpack.c.l.b16 %v3441
    %v3737 = vunpack.c.l.b16 %v3442
    %v3738 = vunpack.c.l.b16 %v3443
    %v3739 = vunpack.c.l.b16 %v3444
    %v3740 = vunpack.c.l.b16 %v3445
    %v3741 = vunpack.c.l.b16 %v3446
    %v3742 = vunpack.c.l.b16 %v3447
    %v3743 = vunpack.c.l.b16 %v3448
    %v3744 = vunpack.c.l.b16 %v3449
    %v3745 = vunpack.c.l.b16 %v3450
    %v3746 = vunpack.c.l.b16 %v3451
    %v3747 = vunpack.c.l.b16 %v3452
    %v3748 = vunpack.c.l.b16 %v3453
    %v3749 = vunpack.c.l.b16 %v3454
    %v3750 = vunpack.c.l.b16 %v3455
    %v3751 = vunpack.c.l.b16 %v3456
    %v3752 = vunpack.c.l.b16 %v3457
    %v3753 = vunpack.c.l.b16 %v3458
    %v3754 = vunpack.c.l.b16 %v3459
    %v3755 = vunpack.c.l.b16 %v3460
    %v3756 = vunpack.c.l.b16 %v3461
    %v3757 = vunpack.c.l.b16 %v3462
    %v3758 = vunpack.c.l.b16 %v3463
    %v3759 = vunpack.c.l.b16 %v3464
    %v3760 = vunpack.c.l.b16 %v3465
    %v3761 = vunpack.c.l.b16 %v3466
    %v3762 = vunpack.c.l.b16 %v3467
    %v3763 = vunpack.c.l.b16 %v3468
    %v3764 = vunpack.c.l.b16 %v3469
    %v3765 = vunpack.c.l.b16 %v3470
    %v3766 = vunpack.c.l.b16 %v3471
    %v3767 = vunpack.c.l.b16 %v3472
    %v3768 = vunpack.c.l.b16 %v3473
    %v3769 = vunpack.c.l.b16 %v3474
    %v3770 = vunpack.c.l.b16 %v3475
    %v3771 = vunpack.c.l.b16 %v3476
    %v3772 = vunpack.c.l.b16 %v3477
    %v3773 = vunpack.c.l.b16 %v3478
    %v3774 = vunpack.c.l.b16 %v3479
    %v3775 = vunpack.c.l.b16 %v3480
    %v3776 = vunpack.c.l.b16 %v3481
    %v3777 = vunpack.c.l.b16 %v3482
    %v3778 = vunpack.c.l.b16 %v3483
    %v3779 = vunpack.c.l.b16 %v3484
    %v3780 = vunpack.c.l.b16 %v3485
    %v3781 = vunpack.c.l.b16 %v3486
    %v3782 = vunpack.c.l.b16 %v3487
    %v3783 = vunpack.c.l.b16 %v3488
    %v3784 = vunpack.c.l.b16 %v3489
    %v3785 = vunpack.c.l.b16 %v3490
    %v3786 = vunpack.c.l.b16 %v3491
    %v3787 = vunpack.c.l.b16 %v3492
    %v3788 = vunpack.c.l.b16 %v3493
    %v3789 = vunpack.c.l.b16 %v3494
    %v3790 = vunpack.c.l.b16 %v3495
    %v3791 = vunpack.c.l.b16 %v3496
    %v3792 = vunpack.c.l.b16 %v3497
    %v3793 = vpack.c.b16 %v3650, %v3649
    %v3794 = vpack.c.b16 %v3652, %v3651
    %v3795 = vpack.c.b16 %v3654, %v3653
    %v3796 = vpack.c.b16 %v3656, %v3655
    %v3797 = vpack.c.b16 %v3658, %v3657
    %v3798 = vpack.c.b16 %v3660, %v3659
    %v3799 = vpack.c.b16 %v3662, %v3661
    %v3800 = vpack.c.b16 %v3664, %v3663
    %v3801 = vpack.c.b16 %v3666, %v3665
    %v3802 = vpack.c.b16 %v3668, %v3667
    %v3803 = vpack.c.b16 %v3670, %v3669
    %v3804 = vpack.c.b16 %v3672, %v3671
    %v3805 = vpack.c.b16 %v3674, %v3673
    %v3806 = vpack.c.b16 %v3676, %v3675
    %v3807 = vpack.c.b16 %v3678, %v3677
    %v3808 = vpack.c.b16 %v3680, %v3679
    %v3809 = vpack.c.b16 %v3682, %v3681
    %v3810 = vpack.c.b16 %v3684, %v3683
    %v3811 = vpack.c.b16 %v3686, %v3685
    %v3812 = vpack.c.b16 %v3688, %v3687
    %v3813 = vpack.c.b16 %v3690, %v3689
    %v3814 = vpack.c.b16 %v3692, %v3691
    %v3815 = vpack.c.b16 %v3694, %v3693
    %v3816 = vpack.c.b16 %v3696, %v3695
    %v3817 = vpack.c.b16 %v3698, %v3697
    %v3818 = vpack.c.b16 %v3700, %v3699
    %v3819 = vpack.c.b16 %v3702, %v3701
    %v3820 = vpack.c.b16 %v3704, %v3703
    %v3821 = vpack.c.b16 %v3706, %v3705
    %v3822 = vpack.c.b16 %v3708, %v3707
    %v3823 = vpack.c.b16 %v3710, %v3709
    %v3824 = vpack.c.b16 %v3712, %v3711
    %v3825 = vpack.c.b16 %v3714, %v3713
    %v3826 = vpack.c.b16 %v3716, %v3715
    %v3827 = vpack.c.b16 %v3718, %v3717
    %v3828 = vpack.c.b16 %v3720, %v3719
    %v3829 = vpack.c.b16 %v3722, %v3721
    %v3830 = vpack.c.b16 %v3724, %v3723
    %v3831 = vpack.c.b16 %v3726, %v3725
    %v3832 = vpack.c.b16 %v3728, %v3727
    %v3833 = vpack.c.b16 %v3730, %v3729
    %v3834 = vpack.c.b16 %v3732, %v3731
    %v3835 = vpack.c.b16 %v3734, %v3733
    %v3836 = vpack.c.b16 %v3736, %v3735
    %v3837 = vpack.c.b16 %v3738, %v3737
    %v3838 = vpack.c.b16 %v3740, %v3739
    %v3839 = vpack.c.b16 %v3742, %v3741
    %v3840 = vpack.c.b16 %v3744, %v3743
    %v3841 = vpack.c.b16 %v3746, %v3745
    %v3842 = vpack.c.b16 %v3748, %v3747
    %v3843 = vpack.c.b16 %v3750, %v3749
    %v3844 = vpack.c.b16 %v3752, %v3751
    %v3845 = vpack.c.b16 %v3754, %v3753
    %v3846 = vpack.c.b16 %v3756, %v3755
    %v3847 = vpack.c.b16 %v3758, %v3757
    %v3848 = vpack.c.b16 %v3760, %v3759
    %v3849 = vpack.c.b16 %v3762, %v3761
    %v3850 = vpack.c.b16 %v3764, %v3763
    %v3851 = vpack.c.b16 %v3766, %v3765
    %v3852 = vpack.c.b16 %v3768, %v3767
    %v3853 = vpack.c.b16 %v3770, %v3769
    %v3854 = vpack.c.b16 %v3772, %v3771
    %v3855 = vpack.c.b16 %v3774, %v3773
    %v3856 = vpack.c.b16 %v3776, %v3775
    %v3857 = vpack.c.b16 %v3778, %v3777
    %v3858 = vpack.c.b16 %v3780, %v3779
    %v3859 = vpack.c.b16 %v3782, %v3781
    %v3860 = vpack.c.b16 %v3784, %v3783
    %v3861 = vpack.c.b16 %v3786, %v3785
    %v3862 = vpack.c.b16 %v3788, %v3787
    %v3863 = vpack.c.b16 %v3790, %v3789
    %v3864 = vpack.c.b16 %v3792, %v3791
    %3937 = vmatprep.subr.bf16.mxu0 0
    %3938 = vmatpush1.bf16.msra.mxu0 %v3793
    %3939 = vmatprep.subr.bf16.mxu0 0
    %3940 = vmatpush1.bf16.msra.mxu0 %v3794
    %3941 = vmatprep.subr.bf16.mxu0 0
    %3942 = vmatpush1.bf16.msra.mxu0 %v3795
    %3943 = vmatprep.subr.bf16.mxu0 0
    %3944 = vmatpush1.bf16.msra.mxu0 %v3796
    %3945 = vmatprep.subr.bf16.mxu0 0
    %3946 = vmatpush1.bf16.msra.mxu0 %v3797
    %3947 = vmatprep.subr.bf16.mxu0 0
    %3948 = vmatpush1.bf16.msra.mxu0 %v3798
    %3949 = vmatprep.subr.bf16.mxu0 0
    %3950 = vmatpush1.bf16.msra.mxu0 %v3799
    %3951 = vmatprep.subr.bf16.mxu0 0
    %3952 = vmatpush1.bf16.msra.mxu0 %v3800
    %3953 = vmatprep.subr.bf16.mxu0 0
    %3954 = vmatpush1.bf16.msra.mxu0 %v3801
    %3955 = vmatprep.subr.bf16.mxu0 0
    %3956 = vmatpush1.bf16.msra.mxu0 %v3802
    %3957 = vmatprep.subr.bf16.mxu0 0
    %3958 = vmatpush1.bf16.msra.mxu0 %v3803
    %3959 = vmatprep.subr.bf16.mxu0 0
    %3960 = vmatpush1.bf16.msra.mxu0 %v3804
    %3961 = vmatprep.subr.bf16.mxu0 0
    %3962 = vmatpush1.bf16.msra.mxu0 %v3805
    %3963 = vmatprep.subr.bf16.mxu0 0
    %3964 = vmatpush1.bf16.msra.mxu0 %v3806
    %3965 = vmatprep.subr.bf16.mxu0 0
    %3966 = vmatpush1.bf16.msra.mxu0 %v3807
    %3967 = vmatprep.subr.bf16.mxu0 0
    %3968 = vmatpush1.bf16.msra.mxu0 %v3808
    %3969 = vmatprep.mubr.bf16.mxu0 %v3211
    %3970 = vmatmul.mubr.bf16.gmra.mrb[0].mxu0 %v3210
    %v3971 = vpop.f32.mrb[0].mxu0
    %v3972 = vadd.f32 %v3503, %v3971
    %v3973 = vpop.f32.mrb[0].mxu0
    %v3974 = vpop.f32.mrb[0].mxu0
    %v3975 = vadd.f32 %v3503, %v3974
    %v3976 = vpop.f32.mrb[0].mxu0
    %3977 = vmatprep.mubr.bf16.mxu0 %v3220
    %3978 = vmatmul.mubr.bf16.gmra.mrb[0].mxu0 %v3219
    %v3979 = vpop.f32.mrb[0].mxu0
    %v3980 = vadd.f32 %v3503, %v3979
    %v3981 = vpop.f32.mrb[0].mxu0
    %v3982 = vpop.f32.mrb[0].mxu0
    %v3983 = vadd.f32 %v3503, %v3982
    %v3984 = vpop.f32.mrb[0].mxu0
    %3985 = vmatprep.mubr.bf16.mxu0 %v3229
    %3986 = vmatmul.mubr.bf16.gmra.mrb[0].mxu0 %v3228
    %v3987 = vpop.f32.mrb[0].mxu0
    %v3988 = vadd.f32 %v3503, %v3987
    %v3989 = vpop.f32.mrb[0].mxu0
    %v3990 = vpop.f32.mrb[0].mxu0
    %v3991 = vadd.f32 %v3503, %v3990
    %v3992 = vpop.f32.mrb[0].mxu0
    %3993 = vmatprep.mubr.bf16.mxu0 %v3238
    %3994 = vmatmul.mubr.bf16.gmra.mrb[0].mxu0 %v3237
    %v3995 = vpop.f32.mrb[0].mxu0
    %v3996 = vadd.f32 %v3503, %v3995
    %v3997 = vpop.f32.mrb[0].mxu0
    %v3998 = vpop.f32.mrb[0].mxu0
    %v3999 = vadd.f32 %v3503, %v3998
    %v4000 = vpop.f32.mrb[0].mxu0
    %4001 = vmatprep.mubr.bf16.mxu0 %v3247
    %4002 = vmatmul.mubr.bf16.gmra.mrb[0].mxu0 %v3246
    %v4003 = vpop.f32.mrb[0].mxu0
    %v4004 = vadd.f32 %v3503, %v4003
    %v4005 = vpop.f32.mrb[0].mxu0
    %v4006 = vpop.f32.mrb[0].mxu0
    %v4007 = vadd.f32 %v3503, %v4006
    %v4008 = vpop.f32.mrb[0].mxu0
    %4009 = vmatprep.mubr.bf16.mxu0 %v3256
    %4010 = vmatmul.mubr.bf16.gmra.mrb[0].mxu0 %v3255
    %v4011 = vpop.f32.mrb[0].mxu0
    %v4012 = vadd.f32 %v3503, %v4011
    %v4013 = vpop.f32.mrb[0].mxu0
    %v4014 = vpop.f32.mrb[0].mxu0
    %v4015 = vadd.f32 %v3503, %v4014
    %v4016 = vpop.f32.mrb[0].mxu0
    %4017 = vmatprep.mubr.bf16.mxu0 %v3265
    %4018 = vmatmul.mubr.bf16.gmra.mrb[0].mxu0 %v3264
    %v4019 = vpop.f32.mrb[0].mxu0
    %v4020 = vadd.f32 %v3503, %v4019
    %v4021 = vpop.f32.mrb[0].mxu0
    %v4022 = vpop.f32.mrb[0].mxu0
    %v4023 = vadd.f32 %v3503, %v4022
    %v4024 = vpop.f32.mrb[0].mxu0
    %4025 = vmatprep.mubr.bf16.mxu0 %v3274
    %4026 = vmatmul.mubr.bf16.gmra.mrb[0].mxu0 %v3273
    %v4027 = vpop.f32.mrb[0].mxu0
    %v4028 = vadd.f32 %v3503, %v4027
    %v4029 = vpop.f32.mrb[0].mxu0
    %v4030 = vpop.f32.mrb[0].mxu0
    %v4031 = vadd.f32 %v3503, %v4030
    %v4032 = vpop.f32.mrb[0].mxu0
    %4033 = vmatprep.mubr.bf16.mxu0 %v3283
    %4034 = vmatmul.mubr.bf16.gmra.mrb[0].mxu0 %v3282
    %v4035 = vpop.f32.mrb[0].mxu0
    %v4036 = vadd.f32 %v3503, %v4035
    %v4037 = vpop.f32.mrb[0].mxu0
    %v4038 = vpop.f32.mrb[0].mxu0
    %v4039 = vadd.f32 %v3503, %v4038
    %v4040 = vpop.f32.mrb[0].mxu0
    %4041 = vmatprep.mubr.bf16.mxu0 %v3292
    %4042 = vmatmul.mubr.bf16.gmra.mrb[0].mxu0 %v3291
    %v4043 = vpop.f32.mrb[0].mxu0
    %v4044 = vadd.f32 %v3503, %v4043
    %v4045 = vpop.f32.mrb[0].mxu0
    %v4046 = vpop.f32.mrb[0].mxu0
    %v4047 = vadd.f32 %v3503, %v4046
    %v4048 = vpop.f32.mrb[0].mxu0
    %4049 = vmatprep.mubr.bf16.mxu0 %v3301
    %4050 = vmatmul.mubr.bf16.gmra.mrb[0].mxu0 %v3300
    %v4051 = vpop.f32.mrb[0].mxu0
    %v4052 = vadd.f32 %v3503, %v4051
    %v4053 = vpop.f32.mrb[0].mxu0
    %v4054 = vpop.f32.mrb[0].mxu0
    %v4055 = vadd.f32 %v3503, %v4054
    %v4056 = vpop.f32.mrb[0].mxu0
    %4057 = vmatprep.mubr.bf16.mxu0 %v3310
    %4058 = vmatmul.mubr.bf16.gmra.mrb[0].mxu0 %v3309
    %v4059 = vpop.f32.mrb[0].mxu0
    %v4060 = vadd.f32 %v3503, %v4059
    %v4061 = vpop.f32.mrb[0].mxu0
    %v4062 = vpop.f32.mrb[0].mxu0
    %v4063 = vadd.f32 %v3503, %v4062
    %v4064 = vpop.f32.mrb[0].mxu0
    %4065 = vmatprep.mubr.bf16.mxu0 %v3319
    %4066 = vmatmul.mubr.bf16.gmra.mrb[0].mxu0 %v3318
    %v4067 = vpop.f32.mrb[0].mxu0
    %v4068 = vadd.f32 %v3503, %v4067
    %v4069 = vpop.f32.mrb[0].mxu0
    %v4070 = vpop.f32.mrb[0].mxu0
    %v4071 = vadd.f32 %v3503, %v4070
    %v4072 = vpop.f32.mrb[0].mxu0
    %4073 = vmatprep.mubr.bf16.mxu0 %v3328
    %4074 = vmatmul.mubr.bf16.gmra.mrb[0].mxu0 %v3327
    %v4075 = vpop.f32.mrb[0].mxu0
    %v4076 = vadd.f32 %v3503, %v4075
    %v4077 = vpop.f32.mrb[0].mxu0
    %v4078 = vpop.f32.mrb[0].mxu0
    %v4079 = vadd.f32 %v3503, %v4078
    %v4080 = vpop.f32.mrb[0].mxu0
    %4081 = vmatprep.mubr.bf16.mxu0 %v3337
    %4082 = vmatmul.mubr.bf16.gmra.mrb[0].mxu0 %v3336
    %v4083 = vpop.f32.mrb[0].mxu0
    %v4084 = vadd.f32 %v3503, %v4083
    %v4085 = vpop.f32.mrb[0].mxu0
    %v4086 = vpop.f32.mrb[0].mxu0
    %v4087 = vadd.f32 %v3503, %v4086
    %v4088 = vpop.f32.mrb[0].mxu0
    %4089 = vmatprep.mubr.bf16.mxu0 %v3346
    %4090 = vmatmul.mubr.bf16.gmra.mrb[0].mxu0 %v3345
    %v4091 = vpop.f32.mrb[0].mxu0
    %v4092 = vadd.f32 %v3503, %v4091
    %v4093 = vpop.f32.mrb[0].mxu0
    %v4094 = vpop.f32.mrb[0].mxu0
    %v4095 = vadd.f32 %v3503, %v4094
    %v4096 = vpop.f32.mrb[0].mxu0
    %4097 = vdwg.mxu0
    %4098 = vmatprep.subr.bf16.mxu0 0
    %4099 = vmatpush1.bf16.msra.mxu0 %v3809
    %4100 = vmatprep.subr.bf16.mxu0 0
    %4101 = vmatpush1.bf16.msra.mxu0 %v3810
    %4102 = vmatprep.subr.bf16.mxu0 0
    %4103 = vmatpush1.bf16.msra.mxu0 %v3811
    %4104 = vmatprep.subr.bf16.mxu0 0
    %4105 = vmatpush1.bf16.msra.mxu0 %v3812
    %4106 = vmatprep.subr.bf16.mxu0 0
    %4107 = vmatpush1.bf16.msra.mxu0 %v3813
    %4108 = vmatprep.subr.bf16.mxu0 0
    %4109 = vmatpush1.bf16.msra.mxu0 %v3814
    %4110 = vmatprep.subr.bf16.mxu0 0
    %4111 = vmatpush1.bf16.msra.mxu0 %v3815
    %4112 = vmatprep.subr.bf16.mxu0 0
    %4113 = vmatpush1.bf16.msra.mxu0 %v3816
    %4114 = vmatprep.subr.bf16.mxu0 0
    %4115 = vmatpush1.bf16.msra.mxu0 %v3817
    %4116 = vmatprep.subr.bf16.mxu0 0
    %4117 = vmatpush1.bf16.msra.mxu0 %v3818
    %4118 = vmatprep.subr.bf16.mxu0 0
    %4119 = vmatpush1.bf16.msra.mxu0 %v3819
    %4120 = vmatprep.subr.bf16.mxu0 0
    %4121 = vmatpush1.bf16.msra.mxu0 %v3820
    %4122 = vmatprep.subr.bf16.mxu0 0
    %4123 = vmatpush1.bf16.msra.mxu0 %v3821
    %4124 = vmatprep.subr.bf16.mxu0 0
    %4125 = vmatpush1.bf16.msra.mxu0 %v3822
    %4126 = vmatprep.subr.bf16.mxu0 0
    %4127 = vmatpush1.bf16.msra.mxu0 %v3823
    %4128 = vmatprep.subr.bf16.mxu0 0
    %4129 = vmatpush1.bf16.msra.mxu0 %v3824
    %4130 = vmatprep.mubr.bf16.mxu0 %v3213
    %4131 = vmatmul.mubr.bf16.gmra.mrb[0].mxu0 %v3212
    %v4132 = vpop.f32.mrb[0].mxu0
    %v4133 = vadd.f32 %v3972, %v4132
    %v4134 = vpop.f32.mrb[0].mxu0
    %v4135 = vpop.f32.mrb[0].mxu0
    %v4136 = vadd.f32 %v3975, %v4135
    %v4137 = vpop.f32.mrb[0].mxu0
    %4138 = vmatprep.mubr.bf16.mxu0 %v3222
    %4139 = vmatmul.mubr.bf16.gmra.mrb[0].mxu0 %v3221
    %v4140 = vpop.f32.mrb[0].mxu0
    %v4141 = vadd.f32 %v3980, %v4140
    %v4142 = vpop.f32.mrb[0].mxu0
    %v4143 = vpop.f32.mrb[0].mxu0
    %v4144 = vadd.f32 %v3983, %v4143
    %v4145 = vpop.f32.mrb[0].mxu0
    %4146 = vmatprep.mubr.bf16.mxu0 %v3231
    %4147 = vmatmul.mubr.bf16.gmra.mrb[0].mxu0 %v3230
    %v4148 = vpop.f32.mrb[0].mxu0
    %v4149 = vadd.f32 %v3988, %v4148
    %v4150 = vpop.f32.mrb[0].mxu0
    %v4151 = vpop.f32.mrb[0].mxu0
    %v4152 = vadd.f32 %v3991, %v4151
    %v4153 = vpop.f32.mrb[0].mxu0
    %4154 = vmatprep.mubr.bf16.mxu0 %v3240
    %4155 = vmatmul.mubr.bf16.gmra.mrb[0].mxu0 %v3239
    %v4156 = vpop.f32.mrb[0].mxu0
    %v4157 = vadd.f32 %v3996, %v4156
    %v4158 = vpop.f32.mrb[0].mxu0
    %v4159 = vpop.f32.mrb[0].mxu0
    %v4160 = vadd.f32 %v3999, %v4159
    %v4161 = vpop.f32.mrb[0].mxu0
    %4162 = vmatprep.mubr.bf16.mxu0 %v3249
    %4163 = vmatmul.mubr.bf16.gmra.mrb[0].mxu0 %v3248
    %v4164 = vpop.f32.mrb[0].mxu0
    %v4165 = vadd.f32 %v4004, %v4164
    %v4166 = vpop.f32.mrb[0].mxu0
    %v4167 = vpop.f32.mrb[0].mxu0
    %v4168 = vadd.f32 %v4007, %v4167
    %v4169 = vpop.f32.mrb[0].mxu0
    %4170 = vmatprep.mubr.bf16.mxu0 %v3258
    %4171 = vmatmul.mubr.bf16.gmra.mrb[0].mxu0 %v3257
    %v4172 = vpop.f32.mrb[0].mxu0
    %v4173 = vadd.f32 %v4012, %v4172
    %v4174 = vpop.f32.mrb[0].mxu0
    %v4175 = vpop.f32.mrb[0].mxu0
    %v4176 = vadd.f32 %v4015, %v4175
    %v4177 = vpop.f32.mrb[0].mxu0
    %4178 = vmatprep.mubr.bf16.mxu0 %v3267
    %4179 = vmatmul.mubr.bf16.gmra.mrb[0].mxu0 %v3266
    %v4180 = vpop.f32.mrb[0].mxu0
    %v4181 = vadd.f32 %v4020, %v4180
    %v4182 = vpop.f32.mrb[0].mxu0
    %v4183 = vpop.f32.mrb[0].mxu0
    %v4184 = vadd.f32 %v4023, %v4183
    %v4185 = vpop.f32.mrb[0].mxu0
    %4186 = vmatprep.mubr.bf16.mxu0 %v3276
    %4187 = vmatmul.mubr.bf16.gmra.mrb[0].mxu0 %v3275
    %v4188 = vpop.f32.mrb[0].mxu0
    %v4189 = vadd.f32 %v4028, %v4188
    %v4190 = vpop.f32.mrb[0].mxu0
    %v4191 = vpop.f32.mrb[0].mxu0
    %v4192 = vadd.f32 %v4031, %v4191
    %v4193 = vpop.f32.mrb[0].mxu0
    %4194 = vmatprep.mubr.bf16.mxu0 %v3285
    %4195 = vmatmul.mubr.bf16.gmra.mrb[0].mxu0 %v3284
    %v4196 = vpop.f32.mrb[0].mxu0
    %v4197 = vadd.f32 %v4036, %v4196
    %v4198 = vpop.f32.mrb[0].mxu0
    %v4199 = vpop.f32.mrb[0].mxu0
    %v4200 = vadd.f32 %v4039, %v4199
    %v4201 = vpop.f32.mrb[0].mxu0
    %4202 = vmatprep.mubr.bf16.mxu0 %v3294
    %4203 = vmatmul.mubr.bf16.gmra.mrb[0].mxu0 %v3293
    %v4204 = vpop.f32.mrb[0].mxu0
    %v4205 = vadd.f32 %v4044, %v4204
    %v4206 = vpop.f32.mrb[0].mxu0
    %v4207 = vpop.f32.mrb[0].mxu0
    %v4208 = vadd.f32 %v4047, %v4207
    %v4209 = vpop.f32.mrb[0].mxu0
    %4210 = vmatprep.mubr.bf16.mxu0 %v3303
    %4211 = vmatmul.mubr.bf16.gmra.mrb[0].mxu0 %v3302
    %v4212 = vpop.f32.mrb[0].mxu0
    %v4213 = vadd.f32 %v4052, %v4212
    %v4214 = vpop.f32.mrb[0].mxu0
    %v4215 = vpop.f32.mrb[0].mxu0
    %v4216 = vadd.f32 %v4055, %v4215
    %v4217 = vpop.f32.mrb[0].mxu0
    %4218 = vmatprep.mubr.bf16.mxu0 %v3312
    %4219 = vmatmul.mubr.bf16.gmra.mrb[0].mxu0 %v3311
    %v4220 = vpop.f32.mrb[0].mxu0
    %v4221 = vadd.f32 %v4060, %v4220
    %v4222 = vpop.f32.mrb[0].mxu0
    %v4223 = vpop.f32.mrb[0].mxu0
    %v4224 = vadd.f32 %v4063, %v4223
    %v4225 = vpop.f32.mrb[0].mxu0
    %4226 = vmatprep.mubr.bf16.mxu0 %v3321
    %4227 = vmatmul.mubr.bf16.gmra.mrb[0].mxu0 %v3320
    %v4228 = vpop.f32.mrb[0].mxu0
    %v4229 = vadd.f32 %v4068, %v4228
    %v4230 = vpop.f32.mrb[0].mxu0
    %v4231 = vpop.f32.mrb[0].mxu0
    %v4232 = vadd.f32 %v4071, %v4231
    %v4233 = vpop.f32.mrb[0].mxu0
    %4234 = vmatprep.mubr.bf16.mxu0 %v3330
    %4235 = vmatmul.mubr.bf16.gmra.mrb[0].mxu0 %v3329
    %v4236 = vpop.f32.mrb[0].mxu0
    %v4237 = vadd.f32 %v4076, %v4236
    %v4238 = vpop.f32.mrb[0].mxu0
    %v4239 = vpop.f32.mrb[0].mxu0
    %v4240 = vadd.f32 %v4079, %v4239
    %v4241 = vpop.f32.mrb[0].mxu0
    %4242 = vmatprep.mubr.bf16.mxu0 %v3339
    %4243 = vmatmul.mubr.bf16.gmra.mrb[0].mxu0 %v3338
    %v4244 = vpop.f32.mrb[0].mxu0
    %v4245 = vadd.f32 %v4084, %v4244
    %v4246 = vpop.f32.mrb[0].mxu0
    %v4247 = vpop.f32.mrb[0].mxu0
    %v4248 = vadd.f32 %v4087, %v4247
    %v4249 = vpop.f32.mrb[0].mxu0
    %4250 = vmatprep.mubr.bf16.mxu0 %v3348
    %4251 = vmatmul.mubr.bf16.gmra.mrb[0].mxu0 %v3347
    %v4252 = vpop.f32.mrb[0].mxu0
    %v4253 = vadd.f32 %v4092, %v4252
    %v4254 = vpop.f32.mrb[0].mxu0
    %v4255 = vpop.f32.mrb[0].mxu0
    %v4256 = vadd.f32 %v4095, %v4255
    %v4257 = vpop.f32.mrb[0].mxu0
    %4258 = vdwg.mxu0
    %4259 = vmatprep.subr.bf16.mxu0 0
    %4260 = vmatpush1.bf16.msra.mxu0 %v3825
    %4261 = vmatprep.subr.bf16.mxu0 0
    %4262 = vmatpush1.bf16.msra.mxu0 %v3826
    %4263 = vmatprep.subr.bf16.mxu0 0
    %4264 = vmatpush1.bf16.msra.mxu0 %v3827
    %4265 = vmatprep.subr.bf16.mxu0 0
    %4266 = vmatpush1.bf16.msra.mxu0 %v3828
    %4267 = vmatprep.subr.bf16.mxu0 0
    %4268 = vmatpush1.bf16.msra.mxu0 %v3829
    %4269 = vmatprep.subr.bf16.mxu0 0
    %4270 = vmatpush1.bf16.msra.mxu0 %v3830
    %4271 = vmatprep.subr.bf16.mxu0 0
    %4272 = vmatpush1.bf16.msra.mxu0 %v3831
    %4273 = vmatprep.subr.bf16.mxu0 0
    %4274 = vmatpush1.bf16.msra.mxu0 %v3832
    %4275 = vmatprep.subr.bf16.mxu0 0
    %4276 = vmatpush1.bf16.msra.mxu0 %v3833
    %4277 = vmatprep.subr.bf16.mxu0 0
    %4278 = vmatpush1.bf16.msra.mxu0 %v3834
    %4279 = vmatprep.subr.bf16.mxu0 0
    %4280 = vmatpush1.bf16.msra.mxu0 %v3835
    %4281 = vmatprep.subr.bf16.mxu0 0
    %4282 = vmatpush1.bf16.msra.mxu0 %v3836
    %4283 = vmatprep.subr.bf16.mxu0 0
    %4284 = vmatpush1.bf16.msra.mxu0 %v3837
    %4285 = vmatprep.subr.bf16.mxu0 0
    %4286 = vmatpush1.bf16.msra.mxu0 %v3838
    %4287 = vmatprep.subr.bf16.mxu0 0
    %4288 = vmatpush1.bf16.msra.mxu0 %v3839
    %4289 = vmatprep.subr.bf16.mxu0 0
    %4290 = vmatpush1.bf16.msra.mxu0 %v3840
    %4291 = vmatprep.mubr.bf16.mxu0 %v3215
    %4292 = vmatmul.mubr.bf16.gmra.mrb[0].mxu0 %v3214
    %v4293 = vpop.f32.mrb[0].mxu0
    %v4294 = vadd.f32 %v4133, %v4293
    %v4295 = vpop.f32.mrb[0].mxu0
    %v4296 = vpop.f32.mrb[0].mxu0
    %v4297 = vadd.f32 %v4136, %v4296
    %v4298 = vpop.f32.mrb[0].mxu0
    %4299 = vmatprep.mubr.bf16.mxu0 %v3224
    %4300 = vmatmul.mubr.bf16.gmra.mrb[0].mxu0 %v3223
    %v4301 = vpop.f32.mrb[0].mxu0
    %v4302 = vadd.f32 %v4141, %v4301
    %v4303 = vpop.f32.mrb[0].mxu0
    %v4304 = vpop.f32.mrb[0].mxu0
    %v4305 = vadd.f32 %v4144, %v4304
    %v4306 = vpop.f32.mrb[0].mxu0
    %4307 = vmatprep.mubr.bf16.mxu0 %v3233
    %4308 = vmatmul.mubr.bf16.gmra.mrb[0].mxu0 %v3232
    %v4309 = vpop.f32.mrb[0].mxu0
    %v4310 = vadd.f32 %v4149, %v4309
    %v4311 = vpop.f32.mrb[0].mxu0
    %v4312 = vpop.f32.mrb[0].mxu0
    %v4313 = vadd.f32 %v4152, %v4312
    %v4314 = vpop.f32.mrb[0].mxu0
    %4315 = vmatprep.mubr.bf16.mxu0 %v3242
    %4316 = vmatmul.mubr.bf16.gmra.mrb[0].mxu0 %v3241
    %v4317 = vpop.f32.mrb[0].mxu0
    %v4318 = vadd.f32 %v4157, %v4317
    %v4319 = vpop.f32.mrb[0].mxu0
    %v4320 = vpop.f32.mrb[0].mxu0
    %v4321 = vadd.f32 %v4160, %v4320
    %v4322 = vpop.f32.mrb[0].mxu0
    %4323 = vmatprep.mubr.bf16.mxu0 %v3251
    %4324 = vmatmul.mubr.bf16.gmra.mrb[0].mxu0 %v3250
    %v4325 = vpop.f32.mrb[0].mxu0
    %v4326 = vadd.f32 %v4165, %v4325
    %v4327 = vpop.f32.mrb[0].mxu0
    %v4328 = vpop.f32.mrb[0].mxu0
    %v4329 = vadd.f32 %v4168, %v4328
    %v4330 = vpop.f32.mrb[0].mxu0
    %4331 = vmatprep.mubr.bf16.mxu0 %v3260
    %4332 = vmatmul.mubr.bf16.gmra.mrb[0].mxu0 %v3259
    %v4333 = vpop.f32.mrb[0].mxu0
    %v4334 = vadd.f32 %v4173, %v4333
    %v4335 = vpop.f32.mrb[0].mxu0
    %v4336 = vpop.f32.mrb[0].mxu0
    %v4337 = vadd.f32 %v4176, %v4336
    %v4338 = vpop.f32.mrb[0].mxu0
    %4339 = vmatprep.mubr.bf16.mxu0 %v3269
    %4340 = vmatmul.mubr.bf16.gmra.mrb[0].mxu0 %v3268
    %v4341 = vpop.f32.mrb[0].mxu0
    %v4342 = vadd.f32 %v4181, %v4341
    %v4343 = vpop.f32.mrb[0].mxu0
    %v4344 = vpop.f32.mrb[0].mxu0
    %v4345 = vadd.f32 %v4184, %v4344
    %v4346 = vpop.f32.mrb[0].mxu0
    %4347 = vmatprep.mubr.bf16.mxu0 %v3278
    %4348 = vmatmul.mubr.bf16.gmra.mrb[0].mxu0 %v3277
    %v4349 = vpop.f32.mrb[0].mxu0
    %v4350 = vadd.f32 %v4189, %v4349
    %v4351 = vpop.f32.mrb[0].mxu0
    %v4352 = vpop.f32.mrb[0].mxu0
    %v4353 = vadd.f32 %v4192, %v4352
    %v4354 = vpop.f32.mrb[0].mxu0
    %4355 = vmatprep.mubr.bf16.mxu0 %v3287
    %4356 = vmatmul.mubr.bf16.gmra.mrb[0].mxu0 %v3286
    %v4357 = vpop.f32.mrb[0].mxu0
    %v4358 = vadd.f32 %v4197, %v4357
    %v4359 = vpop.f32.mrb[0].mxu0
    %v4360 = vpop.f32.mrb[0].mxu0
    %v4361 = vadd.f32 %v4200, %v4360
    %v4362 = vpop.f32.mrb[0].mxu0
    %4363 = vmatprep.mubr.bf16.mxu0 %v3296
    %4364 = vmatmul.mubr.bf16.gmra.mrb[0].mxu0 %v3295
    %v4365 = vpop.f32.mrb[0].mxu0
    %v4366 = vadd.f32 %v4205, %v4365
    %v4367 = vpop.f32.mrb[0].mxu0
    %v4368 = vpop.f32.mrb[0].mxu0
    %v4369 = vadd.f32 %v4208, %v4368
    %v4370 = vpop.f32.mrb[0].mxu0
    %4371 = vmatprep.mubr.bf16.mxu0 %v3305
    %4372 = vmatmul.mubr.bf16.gmra.mrb[0].mxu0 %v3304
    %v4373 = vpop.f32.mrb[0].mxu0
    %v4374 = vadd.f32 %v4213, %v4373
    %v4375 = vpop.f32.mrb[0].mxu0
    %v4376 = vpop.f32.mrb[0].mxu0
    %v4377 = vadd.f32 %v4216, %v4376
    %v4378 = vpop.f32.mrb[0].mxu0
    %4379 = vmatprep.mubr.bf16.mxu0 %v3314
    %4380 = vmatmul.mubr.bf16.gmra.mrb[0].mxu0 %v3313
    %v4381 = vpop.f32.mrb[0].mxu0
    %v4382 = vadd.f32 %v4221, %v4381
    %v4383 = vpop.f32.mrb[0].mxu0
    %v4384 = vpop.f32.mrb[0].mxu0
    %v4385 = vadd.f32 %v4224, %v4384
    %v4386 = vpop.f32.mrb[0].mxu0
    %4387 = vmatprep.mubr.bf16.mxu0 %v3323
    %4388 = vmatmul.mubr.bf16.gmra.mrb[0].mxu0 %v3322
    %v4389 = vpop.f32.mrb[0].mxu0
    %v4390 = vadd.f32 %v4229, %v4389
    %v4391 = vpop.f32.mrb[0].mxu0
    %v4392 = vpop.f32.mrb[0].mxu0
    %v4393 = vadd.f32 %v4232, %v4392
    %v4394 = vpop.f32.mrb[0].mxu0
    %4395 = vmatprep.mubr.bf16.mxu0 %v3332
    %4396 = vmatmul.mubr.bf16.gmra.mrb[0].mxu0 %v3331
    %v4397 = vpop.f32.mrb[0].mxu0
    %v4398 = vadd.f32 %v4237, %v4397
    %v4399 = vpop.f32.mrb[0].mxu0
    %v4400 = vpop.f32.mrb[0].mxu0
    %v4401 = vadd.f32 %v4240, %v4400
    %v4402 = vpop.f32.mrb[0].mxu0
    %4403 = vmatprep.mubr.bf16.mxu0 %v3341
    %4404 = vmatmul.mubr.bf16.gmra.mrb[0].mxu0 %v3340
    %v4405 = vpop.f32.mrb[0].mxu0
    %v4406 = vadd.f32 %v4245, %v4405
    %v4407 = vpop.f32.mrb[0].mxu0
    %v4408 = vpop.f32.mrb[0].mxu0
    %v4409 = vadd.f32 %v4248, %v4408
    %v4410 = vpop.f32.mrb[0].mxu0
    %4411 = vmatprep.mubr.bf16.mxu0 %v3350
    %4412 = vmatmul.mubr.bf16.gmra.mrb[0].mxu0 %v3349
    %v4413 = vpop.f32.mrb[0].mxu0
    %v4414 = vadd.f32 %v4253, %v4413
    %v4415 = vpop.f32.mrb[0].mxu0
    %v4416 = vpop.f32.mrb[0].mxu0
    %v4417 = vadd.f32 %v4256, %v4416
    %v4418 = vpop.f32.mrb[0].mxu0
    %4419 = vdwg.mxu0
    %4420 = vmatprep.subr.bf16.mxu0 0
    %4421 = vmatpush1.bf16.msra.mxu0 %v3841
    %4422 = vmatprep.subr.bf16.mxu0 0
    %4423 = vmatpush1.bf16.msra.mxu0 %v3842
    %4424 = vmatprep.subr.bf16.mxu0 0
    %4425 = vmatpush1.bf16.msra.mxu0 %v3843
    %4426 = vmatprep.subr.bf16.mxu0 0
    %4427 = vmatpush1.bf16.msra.mxu0 %v3844
    %4428 = vmatprep.subr.bf16.mxu0 0
    %4429 = vmatpush1.bf16.msra.mxu0 %v3845
    %4430 = vmatprep.subr.bf16.mxu0 0
    %4431 = vmatpush1.bf16.msra.mxu0 %v3846
    %4432 = vmatprep.subr.bf16.mxu0 0
    %4433 = vmatpush1.bf16.msra.mxu0 %v3847
    %4434 = vmatprep.subr.bf16.mxu0 0
    %4435 = vmatpush1.bf16.msra.mxu0 %v3848
    %4436 = vmatprep.subr.bf16.mxu0 0
    %4437 = vmatpush1.bf16.msra.mxu0 %v3849
    %4438 = vmatprep.subr.bf16.mxu0 0
    %4439 = vmatpush1.bf16.msra.mxu0 %v3850
    %4440 = vmatprep.subr.bf16.mxu0 0
    %4441 = vmatpush1.bf16.msra.mxu0 %v3851
    %4442 = vmatprep.subr.bf16.mxu0 0
    %4443 = vmatpush1.bf16.msra.mxu0 %v3852
    %4444 = vmatprep.subr.bf16.mxu0 0
    %4445 = vmatpush1.bf16.msra.mxu0 %v3853
    %4446 = vmatprep.subr.bf16.mxu0 0
    %4447 = vmatpush1.bf16.msra.mxu0 %v3854
    %4448 = vmatprep.subr.bf16.mxu0 0
    %4449 = vmatpush1.bf16.msra.mxu0 %v3855
    %4450 = vmatprep.subr.bf16.mxu0 0
    %4451 = vmatpush1.bf16.msra.mxu0 %v3856
    %4452 = vmatprep.mubr.bf16.mxu0 %v3217
    %4453 = vmatmul.mubr.bf16.gmra.mrb[0].mxu0 %v3216
    %v4454 = vpop.f32.mrb[0].mxu0
    %v4455 = vadd.f32 %v4294, %v4454
    %v4456 = vpop.f32.mrb[0].mxu0
    %v4457 = vpop.f32.mrb[0].mxu0
    %v4458 = vadd.f32 %v4297, %v4457
    %v4459 = vpop.f32.mrb[0].mxu0
    %4460 = vmatprep.mubr.bf16.mxu0 %v3226
    %4461 = vmatmul.mubr.bf16.gmra.mrb[0].mxu0 %v3225
    %v4462 = vpop.f32.mrb[0].mxu0
    %v4463 = vadd.f32 %v4302, %v4462
    %v4464 = vpop.f32.mrb[0].mxu0
    %v4465 = vpop.f32.mrb[0].mxu0
    %v4466 = vadd.f32 %v4305, %v4465
    %v4467 = vpop.f32.mrb[0].mxu0
    %4468 = vmatprep.mubr.bf16.mxu0 %v3235
    %4469 = vmatmul.mubr.bf16.gmra.mrb[0].mxu0 %v3234
    %v4470 = vpop.f32.mrb[0].mxu0
    %v4471 = vadd.f32 %v4310, %v4470
    %v4472 = vpop.f32.mrb[0].mxu0
    %v4473 = vpop.f32.mrb[0].mxu0
    %v4474 = vadd.f32 %v4313, %v4473
    %v4475 = vpop.f32.mrb[0].mxu0
    %4476 = vmatprep.mubr.bf16.mxu0 %v3244
    %4477 = vmatmul.mubr.bf16.gmra.mrb[0].mxu0 %v3243
    %v4478 = vpop.f32.mrb[0].mxu0
    %v4479 = vadd.f32 %v4318, %v4478
    %v4480 = vpop.f32.mrb[0].mxu0
    %v4481 = vpop.f32.mrb[0].mxu0
    %v4482 = vadd.f32 %v4321, %v4481
    %v4483 = vpop.f32.mrb[0].mxu0
    %4484 = vmatprep.mubr.bf16.mxu0 %v3253
    %4485 = vmatmul.mubr.bf16.gmra.mrb[0].mxu0 %v3252
    %v4486 = vpop.f32.mrb[0].mxu0
    %v4487 = vadd.f32 %v4326, %v4486
    %v4488 = vpop.f32.mrb[0].mxu0
    %v4489 = vpop.f32.mrb[0].mxu0
    %v4490 = vadd.f32 %v4329, %v4489
    %v4491 = vpop.f32.mrb[0].mxu0
    %4492 = vmatprep.mubr.bf16.mxu0 %v3262
    %4493 = vmatmul.mubr.bf16.gmra.mrb[0].mxu0 %v3261
    %v4494 = vpop.f32.mrb[0].mxu0
    %v4495 = vadd.f32 %v4334, %v4494
    %v4496 = vpop.f32.mrb[0].mxu0
    %v4497 = vpop.f32.mrb[0].mxu0
    %v4498 = vadd.f32 %v4337, %v4497
    %v4499 = vpop.f32.mrb[0].mxu0
    %4500 = vmatprep.mubr.bf16.mxu0 %v3271
    %4501 = vmatmul.mubr.bf16.gmra.mrb[0].mxu0 %v3270
    %v4502 = vpop.f32.mrb[0].mxu0
    %v4503 = vadd.f32 %v4342, %v4502
    %v4504 = vpop.f32.mrb[0].mxu0
    %v4505 = vpop.f32.mrb[0].mxu0
    %v4506 = vadd.f32 %v4345, %v4505
    %v4507 = vpop.f32.mrb[0].mxu0
    %4508 = vmatprep.mubr.bf16.mxu0 %v3280
    %4509 = vmatmul.mubr.bf16.gmra.mrb[0].mxu0 %v3279
    %v4510 = vpop.f32.mrb[0].mxu0
    %v4511 = vadd.f32 %v4350, %v4510
    %v4512 = vpop.f32.mrb[0].mxu0
    %v4513 = vpop.f32.mrb[0].mxu0
    %v4514 = vadd.f32 %v4353, %v4513
    %v4515 = vpop.f32.mrb[0].mxu0
    %4516 = vmatprep.mubr.bf16.mxu0 %v3289
    %4517 = vmatmul.mubr.bf16.gmra.mrb[0].mxu0 %v3288
    %v4518 = vpop.f32.mrb[0].mxu0
    %v4519 = vadd.f32 %v4358, %v4518
    %v4520 = vpop.f32.mrb[0].mxu0
    %v4521 = vpop.f32.mrb[0].mxu0
    %v4522 = vadd.f32 %v4361, %v4521
    %v4523 = vpop.f32.mrb[0].mxu0
    %4524 = vmatprep.mubr.bf16.mxu0 %v3298
    %4525 = vmatmul.mubr.bf16.gmra.mrb[0].mxu0 %v3297
    %v4526 = vpop.f32.mrb[0].mxu0
    %v4527 = vadd.f32 %v4366, %v4526
    %v4528 = vpop.f32.mrb[0].mxu0
    %v4529 = vpop.f32.mrb[0].mxu0
    %v4530 = vadd.f32 %v4369, %v4529
    %v4531 = vpop.f32.mrb[0].mxu0
    %4532 = vmatprep.mubr.bf16.mxu0 %v3307
    %4533 = vmatmul.mubr.bf16.gmra.mrb[0].mxu0 %v3306
    %v4534 = vpop.f32.mrb[0].mxu0
    %v4535 = vadd.f32 %v4374, %v4534
    %v4536 = vpop.f32.mrb[0].mxu0
    %v4537 = vpop.f32.mrb[0].mxu0
    %v4538 = vadd.f32 %v4377, %v4537
    %v4539 = vpop.f32.mrb[0].mxu0
    %4540 = vmatprep.mubr.bf16.mxu0 %v3316
    %4541 = vmatmul.mubr.bf16.gmra.mrb[0].mxu0 %v3315
    %v4542 = vpop.f32.mrb[0].mxu0
    %v4543 = vadd.f32 %v4382, %v4542
    %v4544 = vpop.f32.mrb[0].mxu0
    %v4545 = vpop.f32.mrb[0].mxu0
    %v4546 = vadd.f32 %v4385, %v4545
    %v4547 = vpop.f32.mrb[0].mxu0
    %4548 = vmatprep.mubr.bf16.mxu0 %v3325
    %4549 = vmatmul.mubr.bf16.gmra.mrb[0].mxu0 %v3324
    %v4550 = vpop.f32.mrb[0].mxu0
    %v4551 = vadd.f32 %v4390, %v4550
    %v4552 = vpop.f32.mrb[0].mxu0
    %v4553 = vpop.f32.mrb[0].mxu0
    %v4554 = vadd.f32 %v4393, %v4553
    %v4555 = vpop.f32.mrb[0].mxu0
    %4556 = vmatprep.mubr.bf16.mxu0 %v3334
    %4557 = vmatmul.mubr.bf16.gmra.mrb[0].mxu0 %v3333
    %v4558 = vpop.f32.mrb[0].mxu0
    %v4559 = vadd.f32 %v4398, %v4558
    %v4560 = vpop.f32.mrb[0].mxu0
    %v4561 = vpop.f32.mrb[0].mxu0
    %v4562 = vadd.f32 %v4401, %v4561
    %v4563 = vpop.f32.mrb[0].mxu0
    %4564 = vmatprep.mubr.bf16.mxu0 %v3343
    %4565 = vmatmul.mubr.bf16.gmra.mrb[0].mxu0 %v3342
    %v4566 = vpop.f32.mrb[0].mxu0
    %v4567 = vadd.f32 %v4406, %v4566
    %v4568 = vpop.f32.mrb[0].mxu0
    %v4569 = vpop.f32.mrb[0].mxu0
    %v4570 = vadd.f32 %v4409, %v4569
    %v4571 = vpop.f32.mrb[0].mxu0
    %4572 = vmatprep.mubr.bf16.mxu0 %v3352
    %4573 = vmatmul.mubr.bf16.gmra.mrb[0].mxu0 %v3351
    %v4574 = vpop.f32.mrb[0].mxu0
    %v4575 = vadd.f32 %v4414, %v4574
    %v4576 = vpop.f32.mrb[0].mxu0
    %v4577 = vpop.f32.mrb[0].mxu0
    %v4578 = vadd.f32 %v4417, %v4577
    %v4579 = vpop.f32.mrb[0].mxu0
    %4580 = vdwg.mxu0
    %4581 = vmatprep.subr.bf16.mxu0 0
    %4582 = vmatpush1.bf16.msra.mxu0 %v3857
    %4583 = vmatprep.subr.bf16.mxu0 0
    %4584 = vmatpush1.bf16.msra.mxu0 %v3858
    %4585 = vmatprep.subr.bf16.mxu0 0
    %4586 = vmatpush1.bf16.msra.mxu0 %v3859
    %4587 = vmatprep.subr.bf16.mxu0 0
    %4588 = vmatpush1.bf16.msra.mxu0 %v3860
    %4589 = vmatprep.subr.bf16.mxu0 0
    %4590 = vmatpush1.bf16.msra.mxu0 %v3861
    %4591 = vmatprep.subr.bf16.mxu0 0
    %4592 = vmatpush1.bf16.msra.mxu0 %v3862
    %4593 = vmatprep.subr.bf16.mxu0 0
    %4594 = vmatpush1.bf16.msra.mxu0 %v3863
    %4595 = vmatprep.subr.bf16.mxu0 0
    %4596 = vmatpush1.bf16.msra.mxu0 %v3864
    %4597 = vmatprep.subr.bf16.mxu0 0
    %4598 = vmatpush1.bf16.msra.mxu0 0
    %4599 = vmatprep.subr.bf16.mxu0 0
    %4600 = vmatpush1.bf16.msra.mxu0 0
    %4601 = vmatprep.subr.bf16.mxu0 0
    %4602 = vmatpush1.bf16.msra.mxu0 0
    %4603 = vmatprep.subr.bf16.mxu0 0
    %4604 = vmatpush1.bf16.msra.mxu0 0
    %4605 = vmatprep.subr.bf16.mxu0 0
    %4606 = vmatpush1.bf16.msra.mxu0 0
    %4607 = vmatprep.subr.bf16.mxu0 0
    %4608 = vmatpush1.bf16.msra.mxu0 0
    %4609 = vmatprep.subr.bf16.mxu0 0
    %4610 = vmatpush1.bf16.msra.mxu0 0
    %4611 = vmatprep.subr.bf16.mxu0 0
    %4612 = vmatpush1.bf16.msra.mxu0 0
    %4613 = vmatprep.mubr.bf16.mxu0 0
    %4614 = vmatmul.mubr.bf16.gmra.mrb[0].mxu0 %v3218
    %v4615 = vpop.f32.mrb[0].mxu0
    %v4616 = vadd.f32 %v4455, %v4615
    %v4617 = vpop.f32.mrb[0].mxu0
    %v4618 = vpop.f32.mrb[0].mxu0
    %v4619 = vadd.f32 %v4458, %v4618
    %v4620 = vpop.f32.mrb[0].mxu0
    %4621 = vmatprep.mubr.bf16.mxu0 0
    %4622 = vmatmul.mubr.bf16.gmra.mrb[0].mxu0 %v3227
    %v4623 = vpop.f32.mrb[0].mxu0
    %v4624 = vadd.f32 %v4463, %v4623
    %v4625 = vpop.f32.mrb[0].mxu0
    %v4626 = vpop.f32.mrb[0].mxu0
    %v4627 = vadd.f32 %v4466, %v4626
    %v4628 = vpop.f32.mrb[0].mxu0
    %4629 = vmatprep.mubr.bf16.mxu0 0
    %4630 = vmatmul.mubr.bf16.gmra.mrb[0].mxu0 %v3236
    %v4631 = vpop.f32.mrb[0].mxu0
    %v4632 = vadd.f32 %v4471, %v4631
    %v4633 = vpop.f32.mrb[0].mxu0
    %v4634 = vpop.f32.mrb[0].mxu0
    %v4635 = vadd.f32 %v4474, %v4634
    %v4636 = vpop.f32.mrb[0].mxu0
    %4637 = vmatprep.mubr.bf16.mxu0 0
    %4638 = vmatmul.mubr.bf16.gmra.mrb[0].mxu0 %v3245
    %v4639 = vpop.f32.mrb[0].mxu0
    %v4640 = vadd.f32 %v4479, %v4639
    %v4641 = vpop.f32.mrb[0].mxu0
    %v4642 = vpop.f32.mrb[0].mxu0
    %v4643 = vadd.f32 %v4482, %v4642
    %v4644 = vpop.f32.mrb[0].mxu0
    %4645 = vmatprep.mubr.bf16.mxu0 0
    %4646 = vmatmul.mubr.bf16.gmra.mrb[0].mxu0 %v3254
    %v4647 = vpop.f32.mrb[0].mxu0
    %v4648 = vadd.f32 %v4487, %v4647
    %v4649 = vpop.f32.mrb[0].mxu0
    %v4650 = vpop.f32.mrb[0].mxu0
    %v4651 = vadd.f32 %v4490, %v4650
    %v4652 = vpop.f32.mrb[0].mxu0
    %4653 = vmatprep.mubr.bf16.mxu0 0
    %4654 = vmatmul.mubr.bf16.gmra.mrb[0].mxu0 %v3263
    %v4655 = vpop.f32.mrb[0].mxu0
    %v4656 = vadd.f32 %v4495, %v4655
    %v4657 = vpop.f32.mrb[0].mxu0
    %v4658 = vpop.f32.mrb[0].mxu0
    %v4659 = vadd.f32 %v4498, %v4658
    %v4660 = vpop.f32.mrb[0].mxu0
    %4661 = vmatprep.mubr.bf16.mxu0 0
    %4662 = vmatmul.mubr.bf16.gmra.mrb[0].mxu0 %v3272
    %v4663 = vpop.f32.mrb[0].mxu0
    %v4664 = vadd.f32 %v4503, %v4663
    %v4665 = vpop.f32.mrb[0].mxu0
    %v4666 = vpop.f32.mrb[0].mxu0
    %v4667 = vadd.f32 %v4506, %v4666
    %v4668 = vpop.f32.mrb[0].mxu0
    %4669 = vmatprep.mubr.bf16.mxu0 0
    %4670 = vmatmul.mubr.bf16.gmra.mrb[0].mxu0 %v3281
    %v4671 = vpop.f32.mrb[0].mxu0
    %v4672 = vadd.f32 %v4511, %v4671
    %v4673 = vpop.f32.mrb[0].mxu0
    %v4674 = vpop.f32.mrb[0].mxu0
    %v4675 = vadd.f32 %v4514, %v4674
    %v4676 = vpop.f32.mrb[0].mxu0
    %4677 = vmatprep.mubr.bf16.mxu0 0
    %4678 = vmatmul.mubr.bf16.gmra.mrb[0].mxu0 %v3290
    %v4679 = vpop.f32.mrb[0].mxu0
    %v4680 = vadd.f32 %v4519, %v4679
    %v4681 = vpop.f32.mrb[0].mxu0
    %v4682 = vpop.f32.mrb[0].mxu0
    %v4683 = vadd.f32 %v4522, %v4682
    %v4684 = vpop.f32.mrb[0].mxu0
    %4685 = vmatprep.mubr.bf16.mxu0 0
    %4686 = vmatmul.mubr.bf16.gmra.mrb[0].mxu0 %v3299
    %v4687 = vpop.f32.mrb[0].mxu0
    %v4688 = vadd.f32 %v4527, %v4687
    %v4689 = vpop.f32.mrb[0].mxu0
    %v4690 = vpop.f32.mrb[0].mxu0
    %v4691 = vadd.f32 %v4530, %v4690
    %v4692 = vpop.f32.mrb[0].mxu0
    %4693 = vmatprep.mubr.bf16.mxu0 0
    %4694 = vmatmul.mubr.bf16.gmra.mrb[0].mxu0 %v3308
    %v4695 = vpop.f32.mrb[0].mxu0
    %v4696 = vadd.f32 %v4535, %v4695
    %v4697 = vpop.f32.mrb[0].mxu0
    %v4698 = vpop.f32.mrb[0].mxu0
    %v4699 = vadd.f32 %v4538, %v4698
    %v4700 = vpop.f32.mrb[0].mxu0
    %4701 = vmatprep.mubr.bf16.mxu0 0
    %4702 = vmatmul.mubr.bf16.gmra.mrb[0].mxu0 %v3317
    %v4703 = vpop.f32.mrb[0].mxu0
    %v4704 = vadd.f32 %v4543, %v4703
    %v4705 = vpop.f32.mrb[0].mxu0
    %v4706 = vpop.f32.mrb[0].mxu0
    %v4707 = vadd.f32 %v4546, %v4706
    %v4708 = vpop.f32.mrb[0].mxu0
    %4709 = vmatprep.mubr.bf16.mxu0 0
    %4710 = vmatmul.mubr.bf16.gmra.mrb[0].mxu0 %v3326
    %v4711 = vpop.f32.mrb[0].mxu0
    %v4712 = vadd.f32 %v4551, %v4711
    %v4713 = vpop.f32.mrb[0].mxu0
    %v4714 = vpop.f32.mrb[0].mxu0
    %v4715 = vadd.f32 %v4554, %v4714
    %v4716 = vpop.f32.mrb[0].mxu0
    %4717 = vmatprep.mubr.bf16.mxu0 0
    %4718 = vmatmul.mubr.bf16.gmra.mrb[0].mxu0 %v3335
    %v4719 = vpop.f32.mrb[0].mxu0
    %v4720 = vadd.f32 %v4559, %v4719
    %v4721 = vpop.f32.mrb[0].mxu0
    %v4722 = vpop.f32.mrb[0].mxu0
    %v4723 = vadd.f32 %v4562, %v4722
    %v4724 = vpop.f32.mrb[0].mxu0
    %4725 = vmatprep.mubr.bf16.mxu0 0
    %4726 = vmatmul.mubr.bf16.gmra.mrb[0].mxu0 %v3344
    %v4727 = vpop.f32.mrb[0].mxu0
    %v4728 = vadd.f32 %v4567, %v4727
    %v4729 = vpop.f32.mrb[0].mxu0
    %v4730 = vpop.f32.mrb[0].mxu0
    %v4731 = vadd.f32 %v4570, %v4730
    %v4732 = vpop.f32.mrb[0].mxu0
    %4733 = vmatprep.mubr.bf16.mxu0 0
    %4734 = vmatmul.mubr.bf16.gmra.mrb[0].mxu0 %v3353
    %v4735 = vpop.f32.mrb[0].mxu0
    %v4736 = vadd.f32 %v4575, %v4735
    %v4737 = vpop.f32.mrb[0].mxu0
    %v4738 = vpop.f32.mrb[0].mxu0
    %v4739 = vadd.f32 %v4578, %v4738
    %v4740 = vpop.f32.mrb[0].mxu0
    %4741 = vdwg.mxu0
    %v4742 = vld [vmem:[#allocation4] sm:$0xff]
    %v4743 = vld [vmem:[#allocation4 + $0x8] sm:$0xff]
    %v4744 = vld [vmem:[#allocation4 + $0x10] sm:$0xff]
    %v4745 = vld [vmem:[#allocation4 + $0x18] sm:$0xff]
    %v4746 = vld [vmem:[#allocation4 + $0x20] sm:$0xff]
    %v4747 = vld [vmem:[#allocation4 + $0x28] sm:$0xff]
    %v4748 = vld [vmem:[#allocation4 + $0x30] sm:$0xff]
    %v4749 = vld [vmem:[#allocation4 + $0x38] sm:$0xff]
    %v4750 = vld [vmem:[#allocation4 + $0x40] sm:$0xff]
    %v4751 = vld [vmem:[#allocation4 + $0x48] sm:$0xff]
    %v4752 = vld [vmem:[#allocation4 + $0x50] sm:$0xff]
    %v4753 = vld [vmem:[#allocation4 + $0x58] sm:$0xff]
    %v4754 = vld [vmem:[#allocation4 + $0x60] sm:$0xff]
    %v4755 = vld [vmem:[#allocation4 + $0x68] sm:$0xff]
    %v4756 = vld [vmem:[#allocation4 + $0x70] sm:$0xff]
    %v4757 = vld [vmem:[#allocation4 + $0x78] sm:$0xff]
    %v4758 = vld [vmem:[#allocation4 + $0x80] sm:$0xff]
    %v4759 = vld [vmem:[#allocation4 + $0x88] sm:$0xff]
    %v4760 = vld [vmem:[#allocation4 + $0x90] sm:$0xff]
    %v4761 = vld [vmem:[#allocation4 + $0x98] sm:$0xff]
    %v4762 = vld [vmem:[#allocation4 + $0xa0] sm:$0xff]
    %v4763 = vld [vmem:[#allocation4 + $0xa8] sm:$0xff]
    %v4764 = vld [vmem:[#allocation4 + $0xb0] sm:$0xff]
    %v4765 = vld [vmem:[#allocation4 + $0xb8] sm:$0xff]
    %v4766 = vld [vmem:[#allocation4 + $0xc0] sm:$0xff]
    %v4767 = vld [vmem:[#allocation4 + $0xc8] sm:$0xff]
    %v4768 = vld [vmem:[#allocation4 + $0xd0] sm:$0xff]
    %v4769 = vld [vmem:[#allocation4 + $0xd8] sm:$0xff]
    %v4770 = vld [vmem:[#allocation4 + $0xe0] sm:$0xff]
    %v4771 = vld [vmem:[#allocation4 + $0xe8] sm:$0xff]
    %v4772 = vld [vmem:[#allocation4 + $0xf0] sm:$0xff]
    %v4773 = vld [vmem:[#allocation4 + $0xf8] sm:$0xff]
    %v4774 = vadd.f32 %v4616, %v4742
    %v4775 = vadd.f32 %v4619, %v4743
    %v4776 = vadd.f32 %v4624, %v4744
    %v4777 = vadd.f32 %v4627, %v4745
    %v4778 = vadd.f32 %v4632, %v4746
    %v4779 = vadd.f32 %v4635, %v4747
    %v4780 = vadd.f32 %v4640, %v4748
    %v4781 = vadd.f32 %v4643, %v4749
    %v4782 = vadd.f32 %v4648, %v4750
    %v4783 = vadd.f32 %v4651, %v4751
    %v4784 = vadd.f32 %v4656, %v4752
    %v4785 = vadd.f32 %v4659, %v4753
    %v4786 = vadd.f32 %v4664, %v4754
    %v4787 = vadd.f32 %v4667, %v4755
    %v4788 = vadd.f32 %v4672, %v4756
    %v4789 = vadd.f32 %v4675, %v4757
    %v4790 = vadd.f32 %v4680, %v4758
    %v4791 = vadd.f32 %v4683, %v4759
    %v4792 = vadd.f32 %v4688, %v4760
    %v4793 = vadd.f32 %v4691, %v4761
    %v4794 = vadd.f32 %v4696, %v4762
    %v4795 = vadd.f32 %v4699, %v4763
    %v4796 = vadd.f32 %v4704, %v4764
    %v4797 = vadd.f32 %v4707, %v4765
    %v4798 = vadd.f32 %v4712, %v4766
    %v4799 = vadd.f32 %v4715, %v4767
    %v4800 = vadd.f32 %v4720, %v4768
    %v4801 = vadd.f32 %v4723, %v4769
    %v4802 = vadd.f32 %v4728, %v4770
    %v4803 = vadd.f32 %v4731, %v4771
    %v4804 = vadd.f32 %v4736, %v4772
    %v4805 = vadd.f32 %v4739, %v4773
    %4806 = vst [vmem:[#allocation13] sm:$0xff] %v4774
    %4807 = vst [vmem:[#allocation13 + $0x8] sm:$0xff] %v4775
    %4808 = vst [vmem:[#allocation13 + $0x10] sm:$0xff] %v4776
    %4809 = vst [vmem:[#allocation13 + $0x18] sm:$0xff] %v4777
    %4810 = vst [vmem:[#allocation13 + $0x20] sm:$0xff] %v4778
    %4811 = vst [vmem:[#allocation13 + $0x28] sm:$0xff] %v4779
    %4812 = vst [vmem:[#allocation13 + $0x30] sm:$0xff] %v4780
    %4813 = vst [vmem:[#allocation13 + $0x38] sm:$0xff] %v4781
    %4814 = vst [vmem:[#allocation13 + $0x40] sm:$0xff] %v4782
    %4815 = vst [vmem:[#allocation13 + $0x48] sm:$0xff] %v4783
    %4816 = vst [vmem:[#allocation13 + $0x50] sm:$0xff] %v4784
    %4817 = vst [vmem:[#allocation13 + $0x58] sm:$0xff] %v4785
    %4818 = vst [vmem:[#allocation13 + $0x60] sm:$0xff] %v4786
    %4819 = vst [vmem:[#allocation13 + $0x68] sm:$0xff] %v4787
    %4820 = vst [vmem:[#allocation13 + $0x70] sm:$0xff] %v4788
    %4821 = vst [vmem:[#allocation13 + $0x78] sm:$0xff] %v4789
    %4822 = vst [vmem:[#allocation13 + $0x80] sm:$0xff] %v4790
    %4823 = vst [vmem:[#allocation13 + $0x88] sm:$0xff] %v4791
    %4824 = vst [vmem:[#allocation13 + $0x90] sm:$0xff] %v4792
    %4825 = vst [vmem:[#allocation13 + $0x98] sm:$0xff] %v4793
    %4826 = vst [vmem:[#allocation13 + $0xa0] sm:$0xff] %v4794
    %4827 = vst [vmem:[#allocation13 + $0xa8] sm:$0xff] %v4795
    %4828 = vst [vmem:[#allocation13 + $0xb0] sm:$0xff] %v4796
    %4829 = vst [vmem:[#allocation13 + $0xb8] sm:$0xff] %v4797
    %4830 = vst [vmem:[#allocation13 + $0xc0] sm:$0xff] %v4798
    %4831 = vst [vmem:[#allocation13 + $0xc8] sm:$0xff] %v4799
    %4832 = vst [vmem:[#allocation13 + $0xd0] sm:$0xff] %v4800
    %4833 = vst [vmem:[#allocation13 + $0xd8] sm:$0xff] %v4801
    %4834 = vst [vmem:[#allocation13 + $0xe0] sm:$0xff] %v4802
    %4835 = vst [vmem:[#allocation13 + $0xe8] sm:$0xff] %v4803
    %4836 = vst [vmem:[#allocation13 + $0xf0] sm:$0xff] %v4804
    %4837 = vst [vmem:[#allocation13 + $0xf8] sm:$0xff] %v4805
    %s4838 = scalar_lea.vmem [#allocation4], 256
    %v4839 = vld [vmem:[%s4838] sm:$0xff]
    %v4840 = vld [vmem:[%s4838 + $0x8] sm:$0xff]
    %v4841 = vld [vmem:[%s4838 + $0x10] sm:$0xff]
    %v4842 = vld [vmem:[%s4838 + $0x18] sm:$0xff]
    %v4843 = vld [vmem:[%s4838 + $0x20] sm:$0xff]
    %v4844 = vld [vmem:[%s4838 + $0x28] sm:$0xff]
    %v4845 = vld [vmem:[%s4838 + $0x30] sm:$0xff]
    %v4846 = vld [vmem:[%s4838 + $0x38] sm:$0xff]
    %v4847 = vld [vmem:[%s4838 + $0x40] sm:$0xff]
    %v4848 = vld [vmem:[%s4838 + $0x48] sm:$0xff]
    %v4849 = vld [vmem:[%s4838 + $0x50] sm:$0xff]
    %v4850 = vld [vmem:[%s4838 + $0x58] sm:$0xff]
    %v4851 = vld [vmem:[%s4838 + $0x60] sm:$0xff]
    %v4852 = vld [vmem:[%s4838 + $0x68] sm:$0xff]
    %v4853 = vld [vmem:[%s4838 + $0x70] sm:$0xff]
    %v4854 = vld [vmem:[%s4838 + $0x78] sm:$0xff]
    %v4855 = vld [vmem:[%s4838 + $0x80] sm:$0xff]
    %v4856 = vld [vmem:[%s4838 + $0x88] sm:$0xff]
    %v4857 = vld [vmem:[%s4838 + $0x90] sm:$0xff]
    %v4858 = vld [vmem:[%s4838 + $0x98] sm:$0xff]
    %v4859 = vld [vmem:[%s4838 + $0xa0] sm:$0xff]
    %v4860 = vld [vmem:[%s4838 + $0xa8] sm:$0xff]
    %v4861 = vld [vmem:[%s4838 + $0xb0] sm:$0xff]
    %v4862 = vld [vmem:[%s4838 + $0xb8] sm:$0xff]
    %v4863 = vld [vmem:[%s4838 + $0xc0] sm:$0xff]
    %v4864 = vld [vmem:[%s4838 + $0xc8] sm:$0xff]
    %v4865 = vld [vmem:[%s4838 + $0xd0] sm:$0xff]
    %v4866 = vld [vmem:[%s4838 + $0xd8] sm:$0xff]
    %v4867 = vld [vmem:[%s4838 + $0xe0] sm:$0xff]
    %v4868 = vld [vmem:[%s4838 + $0xe8] sm:$0xff]
    %v4869 = vld [vmem:[%s4838 + $0xf0] sm:$0xff]
    %v4870 = vld [vmem:[%s4838 + $0xf8] sm:$0xff]
    %s4871 = scalar_lea.vmem [#allocation7], 2
    %v4872 = vld [vmem:[%s4871] sm:$0x3]
    %v4873 = vadd.f32 %v4839, %v4840
    %v4874 = vadd.f32 %v4873, %v4841
    %v4875 = vadd.f32 %v4874, %v4842
    %v4876 = vadd.f32 %v4875, %v4843
    %v4877 = vadd.f32 %v4876, %v4844
    %v4878 = vadd.f32 %v4877, %v4845
    %v4879 = vadd.f32 %v4878, %v4846
    %v4880 = vadd.f32 %v4879, %v4847
    %v4881 = vadd.f32 %v4880, %v4848
    %v4882 = vadd.f32 %v4881, %v4849
    %v4883 = vadd.f32 %v4882, %v4850
    %v4884 = vadd.f32 %v4883, %v4851
    %v4885 = vadd.f32 %v4884, %v4852
    %v4886 = vadd.f32 %v4885, %v4853
    %v4887 = vadd.f32 %v4886, %v4854
    %v4888 = vadd.f32 %v4887, %v4855
    %v4889 = vadd.f32 %v4888, %v4856
    %v4890 = vadd.f32 %v4889, %v4857
    %v4891 = vadd.f32 %v4890, %v4858
    %v4892 = vadd.f32 %v4891, %v4859
    %v4893 = vadd.f32 %v4892, %v4860
    %v4894 = vadd.f32 %v4893, %v4861
    %v4895 = vadd.f32 %v4894, %v4862
    %v4896 = vadd.f32 %v4895, %v4863
    %v4897 = vadd.f32 %v4896, %v4864
    %v4898 = vadd.f32 %v4897, %v4865
    %v4899 = vadd.f32 %v4898, %v4866
    %v4900 = vadd.f32 %v4899, %v4867
    %v4901 = vadd.f32 %v4900, %v4868
    %v4902 = vadd.f32 %v4901, %v4869
    %v4903 = vadd.f32 %v4902, %v4870
    %v4904 = vrot.slane %v4903, 4
    %v4905 = vadd.f32 %v4903, %v4904
    %v4906 = vrot.slane %v4905, 2
    %v4907 = vadd.f32 %v4905, %v4906
    %v4908 = vrot.slane %v4907, 1
    %v4909 = vadd.f32 %v4907, %v4908
    %v4910 = vmul.f32 %v4839, %v4839
    %v4911 = vmul.f32 %v4840, %v4840
    %v4912 = vmul.f32 %v4841, %v4841
    %v4913 = vmul.f32 %v4842, %v4842
    %v4914 = vmul.f32 %v4843, %v4843
    %v4915 = vmul.f32 %v4844, %v4844
    %v4916 = vmul.f32 %v4845, %v4845
    %v4917 = vmul.f32 %v4846, %v4846
    %v4918 = vmul.f32 %v4847, %v4847
    %v4919 = vmul.f32 %v4848, %v4848
    %v4920 = vmul.f32 %v4849, %v4849
    %v4921 = vmul.f32 %v4850, %v4850
    %v4922 = vmul.f32 %v4851, %v4851
    %v4923 = vmul.f32 %v4852, %v4852
    %v4924 = vmul.f32 %v4853, %v4853
    %v4925 = vmul.f32 %v4854, %v4854
    %v4926 = vmul.f32 %v4855, %v4855
    %v4927 = vmul.f32 %v4856, %v4856
    %v4928 = vmul.f32 %v4857, %v4857
    %v4929 = vmul.f32 %v4858, %v4858
    %v4930 = vmul.f32 %v4859, %v4859
    %v4931 = vmul.f32 %v4860, %v4860
    %v4932 = vmul.f32 %v4861, %v4861
    %v4933 = vmul.f32 %v4862, %v4862
    %v4934 = vmul.f32 %v4863, %v4863
    %v4935 = vmul.f32 %v4864, %v4864
    %v4936 = vmul.f32 %v4865, %v4865
    %v4937 = vmul.f32 %v4866, %v4866
    %v4938 = vmul.f32 %v4867, %v4867
    %v4939 = vmul.f32 %v4868, %v4868
    %v4940 = vmul.f32 %v4869, %v4869
    %v4941 = vmul.f32 %v4870, %v4870
    %v4942 = vadd.f32 %v4910, %v4911
    %v4943 = vadd.f32 %v4942, %v4912
    %v4944 = vadd.f32 %v4943, %v4913
    %v4945 = vadd.f32 %v4944, %v4914
    %v4946 = vadd.f32 %v4945, %v4915
    %v4947 = vadd.f32 %v4946, %v4916
    %v4948 = vadd.f32 %v4947, %v4917
    %v4949 = vadd.f32 %v4948, %v4918
    %v4950 = vadd.f32 %v4949, %v4919
    %v4951 = vadd.f32 %v4950, %v4920
    %v4952 = vadd.f32 %v4951, %v4921
    %v4953 = vadd.f32 %v4952, %v4922
    %v4954 = vadd.f32 %v4953, %v4923
    %v4955 = vadd.f32 %v4954, %v4924
    %v4956 = vadd.f32 %v4955, %v4925
    %v4957 = vadd.f32 %v4956, %v4926
    %v4958 = vadd.f32 %v4957, %v4927
    %v4959 = vadd.f32 %v4958, %v4928
    %v4960 = vadd.f32 %v4959, %v4929
    %v4961 = vadd.f32 %v4960, %v4930
    %v4962 = vadd.f32 %v4961, %v4931
    %v4963 = vadd.f32 %v4962, %v4932
    %v4964 = vadd.f32 %v4963, %v4933
    %v4965 = vadd.f32 %v4964, %v4934
    %v4966 = vadd.f32 %v4965, %v4935
    %v4967 = vadd.f32 %v4966, %v4936
    %v4968 = vadd.f32 %v4967, %v4937
    %v4969 = vadd.f32 %v4968, %v4938
    %v4970 = vadd.f32 %v4969, %v4939
    %v4971 = vadd.f32 %v4970, %v4940
    %v4972 = vadd.f32 %v4971, %v4941
    %v4973 = vrot.slane %v4972, 4
    %v4974 = vadd.f32 %v4972, %v4973
    %v4975 = vrot.slane %v4974, 2
    %v4976 = vadd.f32 %v4974, %v4975
    %v4977 = vrot.slane %v4976, 1
    %v4978 = vadd.f32 %v4976, %v4977
    %v4979 = vmul.f32 %v4909, 0.00390625
    %v4980 = vmul.f32 %v4978, 0.00390625
    %v4981 = vmul.f32 %v4979, %v4979
    %v4982 = vsub.f32 %v4980, %v4981
    %v4983 = vadd.f32 %v4982, 1e-05
    %v4984 = vrsqrt.pop %v4983
    %v4985 = vmul.f32 %v4872, %v4984
    %v4986 = vmul.f32 %v4979, %v4985
    %v4988 = vrot.slane %v4872, 1
    %v4990 = vsub.f32 %v4988, %v4986
    %v4992 = vlaneseq
    %v4993 = vshrl.u32 %v4992, 7
    %v4994 = vsub.s32 0, %v4993
    %v4995 = vrot.slane %v4985, %v4994
    %v4997 = vmul.f32 %v4839, %v4995
    %v4998 = vmul.f32 %v4840, %v4995
    %v4999 = vmul.f32 %v4841, %v4995
    %v5000 = vmul.f32 %v4842, %v4995
    %v5001 = vmul.f32 %v4843, %v4995
    %v5002 = vmul.f32 %v4844, %v4995
    %v5003 = vmul.f32 %v4845, %v4995
    %v5004 = vmul.f32 %v4846, %v4995
    %v5005 = vmul.f32 %v4847, %v4995
    %v5006 = vmul.f32 %v4848, %v4995
    %v5007 = vmul.f32 %v4849, %v4995
    %v5008 = vmul.f32 %v4850, %v4995
    %v5009 = vmul.f32 %v4851, %v4995
    %v5010 = vmul.f32 %v4852, %v4995
    %v5011 = vmul.f32 %v4853, %v4995
    %v5012 = vmul.f32 %v4854, %v4995
    %v5013 = vmul.f32 %v4855, %v4995
    %v5014 = vmul.f32 %v4856, %v4995
    %v5015 = vmul.f32 %v4857, %v4995
    %v5016 = vmul.f32 %v4858, %v4995
    %v5017 = vmul.f32 %v4859, %v4995
    %v5018 = vmul.f32 %v4860, %v4995
    %v5019 = vmul.f32 %v4861, %v4995
    %v5020 = vmul.f32 %v4862, %v4995
    %v5021 = vmul.f32 %v4863, %v4995
    %v5022 = vmul.f32 %v4864, %v4995
    %v5023 = vmul.f32 %v4865, %v4995
    %v5024 = vmul.f32 %v4866, %v4995
    %v5025 = vmul.f32 %v4867, %v4995
    %v5026 = vmul.f32 %v4868, %v4995
    %v5027 = vmul.f32 %v4869, %v4995
    %v5028 = vmul.f32 %v4870, %v4995
    %v5030 = vlaneseq
    %v5031 = vshrl.u32 %v5030, 7
    %v5032 = vsub.s32 0, %v5031
    %v5033 = vrot.slane %v4990, %v5032
    %v5035 = vadd.f32 %v4997, %v5033
    %v5036 = vadd.f32 %v4998, %v5033
    %v5037 = vadd.f32 %v4999, %v5033
    %v5038 = vadd.f32 %v5000, %v5033
    %v5039 = vadd.f32 %v5001, %v5033
    %v5040 = vadd.f32 %v5002, %v5033
    %v5041 = vadd.f32 %v5003, %v5033
    %v5042 = vadd.f32 %v5004, %v5033
    %v5043 = vadd.f32 %v5005, %v5033
    %v5044 = vadd.f32 %v5006, %v5033
    %v5045 = vadd.f32 %v5007, %v5033
    %v5046 = vadd.f32 %v5008, %v5033
    %v5047 = vadd.f32 %v5009, %v5033
    %v5048 = vadd.f32 %v5010, %v5033
    %v5049 = vadd.f32 %v5011, %v5033
    %v5050 = vadd.f32 %v5012, %v5033
    %v5051 = vadd.f32 %v5013, %v5033
    %v5052 = vadd.f32 %v5014, %v5033
    %v5053 = vadd.f32 %v5015, %v5033
    %v5054 = vadd.f32 %v5016, %v5033
    %v5055 = vadd.f32 %v5017, %v5033
    %v5056 = vadd.f32 %v5018, %v5033
    %v5057 = vadd.f32 %v5019, %v5033
    %v5058 = vadd.f32 %v5020, %v5033
    %v5059 = vadd.f32 %v5021, %v5033
    %v5060 = vadd.f32 %v5022, %v5033
    %v5061 = vadd.f32 %v5023, %v5033
    %v5062 = vadd.f32 %v5024, %v5033
    %v5063 = vadd.f32 %v5025, %v5033
    %v5064 = vadd.f32 %v5026, %v5033
    %v5065 = vadd.f32 %v5027, %v5033
    %v5066 = vadd.f32 %v5028, %v5033
    %v5067 = vmax.f32 %v5035, 0.0
    %v5068 = vmax.f32 %v5036, 0.0
    %v5069 = vmax.f32 %v5037, 0.0
    %v5070 = vmax.f32 %v5038, 0.0
    %v5071 = vmax.f32 %v5039, 0.0
    %v5072 = vmax.f32 %v5040, 0.0
    %v5073 = vmax.f32 %v5041, 0.0
    %v5074 = vmax.f32 %v5042, 0.0
    %v5075 = vmax.f32 %v5043, 0.0
    %v5076 = vmax.f32 %v5044, 0.0
    %v5077 = vmax.f32 %v5045, 0.0
    %v5078 = vmax.f32 %v5046, 0.0
    %v5079 = vmax.f32 %v5047, 0.0
    %v5080 = vmax.f32 %v5048, 0.0
    %v5081 = vmax.f32 %v5049, 0.0
    %v5082 = vmax.f32 %v5050, 0.0
    %v5083 = vmax.f32 %v5051, 0.0
    %v5084 = vmax.f32 %v5052, 0.0
    %v5085 = vmax.f32 %v5053, 0.0
    %v5086 = vmax.f32 %v5054, 0.0
    %v5087 = vmax.f32 %v5055, 0.0
    %v5088 = vmax.f32 %v5056, 0.0
    %v5089 = vmax.f32 %v5057, 0.0
    %v5090 = vmax.f32 %v5058, 0.0
    %v5091 = vmax.f32 %v5059, 0.0
    %v5092 = vmax.f32 %v5060, 0.0
    %v5093 = vmax.f32 %v5061, 0.0
    %v5094 = vmax.f32 %v5062, 0.0
    %v5095 = vmax.f32 %v5063, 0.0
    %v5096 = vmax.f32 %v5064, 0.0
    %v5097 = vmax.f32 %v5065, 0.0
    %v5098 = vmax.f32 %v5066, 0.0
    %v5099 = vpack.c.bf16 %v5068, %v5067
    %v5100 = vpack.c.bf16 %v5070, %v5069
    %v5101 = vpack.c.bf16 %v5072, %v5071
    %v5102 = vpack.c.bf16 %v5074, %v5073
    %v5103 = vpack.c.bf16 %v5076, %v5075
    %v5104 = vpack.c.bf16 %v5078, %v5077
    %v5105 = vpack.c.bf16 %v5080, %v5079
    %v5106 = vpack.c.bf16 %v5082, %v5081
    %v5107 = vpack.c.bf16 %v5084, %v5083
    %v5108 = vpack.c.bf16 %v5086, %v5085
    %v5109 = vpack.c.bf16 %v5088, %v5087
    %v5110 = vpack.c.bf16 %v5090, %v5089
    %v5111 = vpack.c.bf16 %v5092, %v5091
    %v5112 = vpack.c.bf16 %v5094, %v5093
    %v5113 = vpack.c.bf16 %v5096, %v5095
    %v5114 = vpack.c.bf16 %v5098, %v5097
    %5115 = vst [vmem:[#allocation2 + $0x10] sm:$0xff] %v5099
    %5116 = vst [vmem:[#allocation2 + $0x18] sm:$0xff] %v5100
    %5117 = vst [vmem:[#allocation2 + $0x20] sm:$0xff] %v5101
    %5118 = vst [vmem:[#allocation2 + $0x28] sm:$0xff] %v5102
    %5119 = vst [vmem:[#allocation2 + $0x30] sm:$0xff] %v5103
    %5120 = vst [vmem:[#allocation2 + $0x38] sm:$0xff] %v5104
    %5121 = vst [vmem:[#allocation2 + $0x40] sm:$0xff] %v5105
    %5122 = vst [vmem:[#allocation2 + $0x48] sm:$0xff] %v5106
    %5123 = vst [vmem:[#allocation2 + $0x50] sm:$0xff] %v5107
    %5124 = vst [vmem:[#allocation2 + $0x58] sm:$0xff] %v5108
    %5125 = vst [vmem:[#allocation2 + $0x60] sm:$0xff] %v5109
    %5126 = vst [vmem:[#allocation2 + $0x68] sm:$0xff] %v5110
    %5127 = vst [vmem:[#allocation2 + $0x70] sm:$0xff] %v5111
    %5128 = vst [vmem:[#allocation2 + $0x78] sm:$0xff] %v5112
    %5129 = vst [vmem:[#allocation2 + $0x80] sm:$0xff] %v5113
    %5130 = vst [vmem:[#allocation2 + $0x88] sm:$0xff] %v5114
    %v5131 = vld [vmem:[#allocation2] sm:$0x80]
    %v5132 = vld [vmem:[#allocation2 + $0x8] sm:$0xff]
    %v5133 = vld [vmem:[#allocation2 + $0x10] sm:$0xff]
    %v5134 = vld [vmem:[#allocation2 + $0x18] sm:$0xff]
    %v5135 = vld [vmem:[#allocation2 + $0x20] sm:$0xff]
    %v5136 = vld [vmem:[#allocation2 + $0x28] sm:$0xff]
    %v5137 = vld [vmem:[#allocation2 + $0x30] sm:$0xff]
    %v5138 = vld [vmem:[#allocation2 + $0x38] sm:$0xff]
    %v5139 = vld [vmem:[#allocation2 + $0x40] sm:$0xff]
    %v5140 = vld [vmem:[#allocation2 + $0x48] sm:$0xff]
    %v5141 = vld [vmem:[#allocation2 + $0x50] sm:$0xff]
    %v5142 = vld [vmem:[#allocation2 + $0x58] sm:$0xff]
    %v5143 = vld [vmem:[#allocation2 + $0x60] sm:$0xff]
    %v5144 = vld [vmem:[#allocation2 + $0x68] sm:$0xff]
    %v5145 = vld [vmem:[#allocation2 + $0x70] sm:$0xff]
    %v5146 = vld [vmem:[#allocation2 + $0x78] sm:$0xff]
    %v5147 = vld [vmem:[#allocation2 + $0x80] sm:$0xff]
    %v5148 = vld [vmem:[#allocation9] sm:$0xf]
    %v5149 = vld [vmem:[#allocation9 + $0x4] sm:$0xf]
    %v5150 = vld [vmem:[#allocation9 + $0x8] sm:$0xf]
    %v5151 = vld [vmem:[#allocation9 + $0xc] sm:$0xf]
    %v5152 = vld [vmem:[#allocation9 + $0x10] sm:$0xf]
    %v5153 = vld [vmem:[#allocation9 + $0x14] sm:$0xf]
    %v5154 = vld [vmem:[#allocation9 + $0x18] sm:$0xf]
    %v5155 = vld [vmem:[#allocation9 + $0x1c] sm:$0xf]
    %v5156 = vld [vmem:[#allocation9 + $0x20] sm:$0xf]
    %v5157 = vld [vmem:[#allocation9 + $0x24] sm:$0xf]
    %v5158 = vld [vmem:[#allocation9 + $0x28] sm:$0xf]
    %v5159 = vld [vmem:[#allocation9 + $0x2c] sm:$0xf]
    %v5160 = vld [vmem:[#allocation9 + $0x30] sm:$0xf]
    %v5161 = vld [vmem:[#allocation9 + $0x34] sm:$0xf]
    %v5162 = vld [vmem:[#allocation9 + $0x38] sm:$0xf]
    %v5163 = vld [vmem:[#allocation9 + $0x3c] sm:$0xf]
    %v5164 = vld [vmem:[#allocation9 + $0x40] sm:$0xf]
    %v5165 = vld [vmem:[#allocation9 + $0x44] sm:$0xf]
    %v5166 = vld [vmem:[#allocation9 + $0x48] sm:$0xf]
    %v5167 = vld [vmem:[#allocation9 + $0x4c] sm:$0xf]
    %v5168 = vld [vmem:[#allocation9 + $0x50] sm:$0xf]
    %v5169 = vld [vmem:[#allocation9 + $0x54] sm:$0xf]
    %v5170 = vld [vmem:[#allocation9 + $0x58] sm:$0xf]
    %v5171 = vld [vmem:[#allocation9 + $0x5c] sm:$0xf]
    %v5172 = vld [vmem:[#allocation9 + $0x60] sm:$0xf]
    %v5173 = vld [vmem:[#allocation9 + $0x64] sm:$0xf]
    %v5174 = vld [vmem:[#allocation9 + $0x68] sm:$0xf]
    %v5175 = vld [vmem:[#allocation9 + $0x6c] sm:$0xf]
    %v5176 = vld [vmem:[#allocation9 + $0x70] sm:$0xf]
    %v5177 = vld [vmem:[#allocation9 + $0x74] sm:$0xf]
    %v5178 = vld [vmem:[#allocation9 + $0x78] sm:$0xf]
    %v5179 = vld [vmem:[#allocation9 + $0x7c] sm:$0xf]
    %v5212 = vunpack.c.l.b16 %v5148
    %v5213 = vunpack.c.l.b16 %v5149
    %v5214 = vunpack.c.l.b16 %v5150
    %v5215 = vunpack.c.l.b16 %v5151
    %v5216 = vunpack.c.l.b16 %v5152
    %v5217 = vunpack.c.l.b16 %v5153
    %v5218 = vunpack.c.l.b16 %v5154
    %v5219 = vunpack.c.l.b16 %v5155
    %v5220 = vunpack.c.l.b16 %v5156
    %v5221 = vunpack.c.l.b16 %v5157
    %v5222 = vunpack.c.l.b16 %v5158
    %v5223 = vunpack.c.l.b16 %v5159
    %v5224 = vunpack.c.l.b16 %v5160
    %v5225 = vunpack.c.l.b16 %v5161
    %v5226 = vunpack.c.l.b16 %v5162
    %v5227 = vunpack.c.l.b16 %v5163
    %v5228 = vunpack.c.l.b16 %v5164
    %v5229 = vunpack.c.l.b16 %v5165
    %v5230 = vunpack.c.l.b16 %v5166
    %v5231 = vunpack.c.l.b16 %v5167
    %v5232 = vunpack.c.l.b16 %v5168
    %v5233 = vunpack.c.l.b16 %v5169
    %v5234 = vunpack.c.l.b16 %v5170
    %v5235 = vunpack.c.l.b16 %v5171
    %v5236 = vunpack.c.l.b16 %v5172
    %v5237 = vunpack.c.l.b16 %v5173
    %v5238 = vunpack.c.l.b16 %v5174
    %v5239 = vunpack.c.l.b16 %v5175
    %v5240 = vunpack.c.l.b16 %v5176
    %v5241 = vunpack.c.l.b16 %v5177
    %v5242 = vunpack.c.l.b16 %v5178
    %v5243 = vunpack.c.l.b16 %v5179
    %v5244 = vpack.c.b16 %v5213, %v5212
    %v5245 = vpack.c.b16 %v5215, %v5214
    %v5246 = vpack.c.b16 %v5217, %v5216
    %v5247 = vpack.c.b16 %v5219, %v5218
    %v5248 = vpack.c.b16 %v5221, %v5220
    %v5249 = vpack.c.b16 %v5223, %v5222
    %v5250 = vpack.c.b16 %v5225, %v5224
    %v5251 = vpack.c.b16 %v5227, %v5226
    %v5252 = vpack.c.b16 %v5229, %v5228
    %v5253 = vpack.c.b16 %v5231, %v5230
    %v5254 = vpack.c.b16 %v5233, %v5232
    %v5255 = vpack.c.b16 %v5235, %v5234
    %v5256 = vpack.c.b16 %v5237, %v5236
    %v5257 = vpack.c.b16 %v5239, %v5238
    %v5258 = vpack.c.b16 %v5241, %v5240
    %v5259 = vpack.c.b16 %v5243, %v5242
    %v5261 = vshll.u32 %v5244, 16
    %v5263 = vrot.slane %v5261, 1
    %v5264 = vshrl.u32 %v5244, 16
    %v5266 = vor.u32 %v5264, %v5263
    %v5268 = vshll.u32 %v5245, 16
    %v5270 = vrot.slane %v5268, 1
    %v5271 = vsel %vm517, %v5266, %v5270
    %v5272 = vshrl.u32 %v5245, 16
    %v5274 = vor.u32 %v5272, %v5270
    %v5276 = vshll.u32 %v5246, 16
    %v5278 = vrot.slane %v5276, 1
    %v5279 = vsel %vm517, %v5274, %v5278
    %v5280 = vshrl.u32 %v5246, 16
    %v5282 = vor.u32 %v5280, %v5278
    %v5284 = vshll.u32 %v5247, 16
    %v5286 = vrot.slane %v5284, 1
    %v5287 = vsel %vm517, %v5282, %v5286
    %v5288 = vshrl.u32 %v5247, 16
    %v5290 = vor.u32 %v5288, %v5286
    %v5292 = vshll.u32 %v5248, 16
    %v5294 = vrot.slane %v5292, 1
    %v5295 = vsel %vm517, %v5290, %v5294
    %v5296 = vshrl.u32 %v5248, 16
    %v5298 = vor.u32 %v5296, %v5294
    %v5300 = vshll.u32 %v5249, 16
    %v5302 = vrot.slane %v5300, 1
    %v5303 = vsel %vm517, %v5298, %v5302
    %v5304 = vshrl.u32 %v5249, 16
    %v5306 = vor.u32 %v5304, %v5302
    %v5308 = vshll.u32 %v5250, 16
    %v5310 = vrot.slane %v5308, 1
    %v5311 = vsel %vm517, %v5306, %v5310
    %v5312 = vshrl.u32 %v5250, 16
    %v5314 = vor.u32 %v5312, %v5310
    %v5316 = vshll.u32 %v5251, 16
    %v5318 = vrot.slane %v5316, 1
    %v5319 = vsel %vm517, %v5314, %v5318
    %v5320 = vshrl.u32 %v5251, 16
    %v5322 = vor.u32 %v5320, %v5318
    %v5324 = vshll.u32 %v5252, 16
    %v5326 = vrot.slane %v5324, 1
    %v5327 = vsel %vm517, %v5322, %v5326
    %v5328 = vshrl.u32 %v5252, 16
    %v5330 = vor.u32 %v5328, %v5326
    %v5332 = vshll.u32 %v5253, 16
    %v5334 = vrot.slane %v5332, 1
    %v5335 = vsel %vm517, %v5330, %v5334
    %v5336 = vshrl.u32 %v5253, 16
    %v5338 = vor.u32 %v5336, %v5334
    %v5340 = vshll.u32 %v5254, 16
    %v5342 = vrot.slane %v5340, 1
    %v5343 = vsel %vm517, %v5338, %v5342
    %v5344 = vshrl.u32 %v5254, 16
    %v5346 = vor.u32 %v5344, %v5342
    %v5348 = vshll.u32 %v5255, 16
    %v5350 = vrot.slane %v5348, 1
    %v5351 = vsel %vm517, %v5346, %v5350
    %v5352 = vshrl.u32 %v5255, 16
    %v5354 = vor.u32 %v5352, %v5350
    %v5356 = vshll.u32 %v5256, 16
    %v5358 = vrot.slane %v5356, 1
    %v5359 = vsel %vm517, %v5354, %v5358
    %v5360 = vshrl.u32 %v5256, 16
    %v5362 = vor.u32 %v5360, %v5358
    %v5364 = vshll.u32 %v5257, 16
    %v5366 = vrot.slane %v5364, 1
    %v5367 = vsel %vm517, %v5362, %v5366
    %v5368 = vshrl.u32 %v5257, 16
    %v5370 = vor.u32 %v5368, %v5366
    %v5372 = vshll.u32 %v5258, 16
    %v5374 = vrot.slane %v5372, 1
    %v5375 = vsel %vm517, %v5370, %v5374
    %v5376 = vshrl.u32 %v5258, 16
    %v5378 = vor.u32 %v5376, %v5374
    %v5380 = vshll.u32 %v5259, 16
    %v5382 = vrot.slane %v5380, 1
    %v5383 = vsel %vm517, %v5378, %v5382
    %v5384 = vshrl.u32 %v5259, 16
    %v5386 = vor.u32 %v5384, %v5382
    %v5404 = vmul.bf16 %v5131, %v5263
    %v5405 = vmul.bf16 %v5132, %v5271
    %v5406 = vmul.bf16 %v5133, %v5279
    %v5407 = vmul.bf16 %v5134, %v5287
    %v5408 = vmul.bf16 %v5135, %v5295
    %v5409 = vmul.bf16 %v5136, %v5303
    %v5410 = vmul.bf16 %v5137, %v5311
    %v5411 = vmul.bf16 %v5138, %v5319
    %v5412 = vmul.bf16 %v5139, %v5327
    %v5413 = vmul.bf16 %v5140, %v5335
    %v5414 = vmul.bf16 %v5141, %v5343
    %v5415 = vmul.bf16 %v5142, %v5351
    %v5416 = vmul.bf16 %v5143, %v5359
    %v5417 = vmul.bf16 %v5144, %v5367
    %v5418 = vmul.bf16 %v5145, %v5375
    %v5419 = vmul.bf16 %v5146, %v5383
    %v5420 = vmul.bf16 %v5147, %v5386
    %v5422 = vshrl.u32 %v5404, 16
    %v5424 = vrot.slane %v5422, 7
    %v5426 = vshrl.u32 %v5405, 16
    %v5428 = vrot.slane %v5426, 7
    %v5429 = vshll.u32 %v5405, 16
    %v5431 = vor.u32 %v5428, %v5429
    %v5432 = vsel %vm679, %v5424, %v5431
    %v5434 = vshrl.u32 %v5406, 16
    %v5436 = vrot.slane %v5434, 7
    %v5437 = vshll.u32 %v5406, 16
    %v5439 = vor.u32 %v5436, %v5437
    %v5440 = vsel %vm679, %v5428, %v5439
    %v5442 = vshrl.u32 %v5407, 16
    %v5444 = vrot.slane %v5442, 7
    %v5445 = vshll.u32 %v5407, 16
    %v5447 = vor.u32 %v5444, %v5445
    %v5448 = vsel %vm679, %v5436, %v5447
    %v5450 = vshrl.u32 %v5408, 16
    %v5452 = vrot.slane %v5450, 7
    %v5453 = vshll.u32 %v5408, 16
    %v5455 = vor.u32 %v5452, %v5453
    %v5456 = vsel %vm679, %v5444, %v5455
    %v5458 = vshrl.u32 %v5409, 16
    %v5460 = vrot.slane %v5458, 7
    %v5461 = vshll.u32 %v5409, 16
    %v5463 = vor.u32 %v5460, %v5461
    %v5464 = vsel %vm679, %v5452, %v5463
    %v5466 = vshrl.u32 %v5410, 16
    %v5468 = vrot.slane %v5466, 7
    %v5469 = vshll.u32 %v5410, 16
    %v5471 = vor.u32 %v5468, %v5469
    %v5472 = vsel %vm679, %v5460, %v5471
    %v5474 = vshrl.u32 %v5411, 16
    %v5476 = vrot.slane %v5474, 7
    %v5477 = vshll.u32 %v5411, 16
    %v5479 = vor.u32 %v5476, %v5477
    %v5480 = vsel %vm679, %v5468, %v5479
    %v5482 = vshrl.u32 %v5412, 16
    %v5484 = vrot.slane %v5482, 7
    %v5485 = vshll.u32 %v5412, 16
    %v5487 = vor.u32 %v5484, %v5485
    %v5488 = vsel %vm679, %v5476, %v5487
    %v5490 = vshrl.u32 %v5413, 16
    %v5492 = vrot.slane %v5490, 7
    %v5493 = vshll.u32 %v5413, 16
    %v5495 = vor.u32 %v5492, %v5493
    %v5496 = vsel %vm679, %v5484, %v5495
    %v5498 = vshrl.u32 %v5414, 16
    %v5500 = vrot.slane %v5498, 7
    %v5501 = vshll.u32 %v5414, 16
    %v5503 = vor.u32 %v5500, %v5501
    %v5504 = vsel %vm679, %v5492, %v5503
    %v5506 = vshrl.u32 %v5415, 16
    %v5508 = vrot.slane %v5506, 7
    %v5509 = vshll.u32 %v5415, 16
    %v5511 = vor.u32 %v5508, %v5509
    %v5512 = vsel %vm679, %v5500, %v5511
    %v5514 = vshrl.u32 %v5416, 16
    %v5516 = vrot.slane %v5514, 7
    %v5517 = vshll.u32 %v5416, 16
    %v5519 = vor.u32 %v5516, %v5517
    %v5520 = vsel %vm679, %v5508, %v5519
    %v5522 = vshrl.u32 %v5417, 16
    %v5524 = vrot.slane %v5522, 7
    %v5525 = vshll.u32 %v5417, 16
    %v5527 = vor.u32 %v5524, %v5525
    %v5528 = vsel %vm679, %v5516, %v5527
    %v5530 = vshrl.u32 %v5418, 16
    %v5532 = vrot.slane %v5530, 7
    %v5533 = vshll.u32 %v5418, 16
    %v5535 = vor.u32 %v5532, %v5533
    %v5536 = vsel %vm679, %v5524, %v5535
    %v5538 = vshrl.u32 %v5419, 16
    %v5540 = vrot.slane %v5538, 7
    %v5541 = vshll.u32 %v5419, 16
    %v5543 = vor.u32 %v5540, %v5541
    %v5544 = vsel %vm679, %v5532, %v5543
    %v5546 = vshrl.u32 %v5420, 16
    %v5548 = vrot.slane %v5546, 7
    %v5549 = vshll.u32 %v5420, 16
    %v5551 = vor.u32 %v5548, %v5549
    %v5552 = vsel %vm679, %v5540, %v5551
    %5569 = vst [vmem:[#allocation3] sm:$0xff] %v5432
    %5570 = vst [vmem:[#allocation3 + $0x48] sm:$0xff] %v5440
    %5571 = vst [vmem:[#allocation3 + $0x90] sm:$0xff] %v5448
    %5572 = vst [vmem:[#allocation3 + $0xd8] sm:$0xff] %v5456
    %5573 = vst [vmem:[#allocation3 + $0x120] sm:$0xff] %v5464
    %5574 = vst [vmem:[#allocation3 + $0x168] sm:$0xff] %v5472
    %5575 = vst [vmem:[#allocation3 + $0x1b0] sm:$0xff] %v5480
    %5576 = vst [vmem:[#allocation3 + $0x1f8] sm:$0xff] %v5488
    %5577 = vst [vmem:[#allocation3 + $0x240] sm:$0xff] %v5496
    %5578 = vst [vmem:[#allocation3 + $0x288] sm:$0xff] %v5504
    %5579 = vst [vmem:[#allocation3 + $0x2d0] sm:$0xff] %v5512
    %5580 = vst [vmem:[#allocation3 + $0x318] sm:$0xff] %v5520
    %5581 = vst [vmem:[#allocation3 + $0x360] sm:$0xff] %v5528
    %5582 = vst [vmem:[#allocation3 + $0x3a8] sm:$0xff] %v5536
    %5583 = vst [vmem:[#allocation3 + $0x3f0] sm:$0xff] %v5544
    %5584 = vst [vmem:[#allocation3 + $0x438] sm:$0xff] %v5552
    %v5585 = vld [vmem:[#allocation2 + $0x8] sm:$0xff]
    %v5586 = vld [vmem:[#allocation2 + $0x10] sm:$0xff]
    %v5587 = vld [vmem:[#allocation2 + $0x18] sm:$0xff]
    %v5588 = vld [vmem:[#allocation2 + $0x20] sm:$0xff]
    %v5589 = vld [vmem:[#allocation2 + $0x28] sm:$0xff]
    %v5590 = vld [vmem:[#allocation2 + $0x30] sm:$0xff]
    %v5591 = vld [vmem:[#allocation2 + $0x38] sm:$0xff]
    %v5592 = vld [vmem:[#allocation2 + $0x40] sm:$0xff]
    %v5593 = vld [vmem:[#allocation2 + $0x48] sm:$0xff]
    %v5594 = vld [vmem:[#allocation2 + $0x50] sm:$0xff]
    %v5595 = vld [vmem:[#allocation2 + $0x58] sm:$0xff]
    %v5596 = vld [vmem:[#allocation2 + $0x60] sm:$0xff]
    %v5597 = vld [vmem:[#allocation2 + $0x68] sm:$0xff]
    %v5598 = vld [vmem:[#allocation2 + $0x70] sm:$0xff]
    %v5599 = vld [vmem:[#allocation2 + $0x78] sm:$0xff]
    %v5600 = vld [vmem:[#allocation2 + $0x80] sm:$0xff]
    %5601 = vst [vmem:[#allocation3 + $0x8] sm:$0xff] %v5585
    %5602 = vst [vmem:[#allocation3 + $0x50] sm:$0xff] %v5586
    %5603 = vst [vmem:[#allocation3 + $0x98] sm:$0xff] %v5587
    %5604 = vst [vmem:[#allocation3 + $0xe0] sm:$0xff] %v5588
    %5605 = vst [vmem:[#allocation3 + $0x128] sm:$0xff] %v5589
    %5606 = vst [vmem:[#allocation3 + $0x170] sm:$0xff] %v5590
    %5607 = vst [vmem:[#allocation3 + $0x1b8] sm:$0xff] %v5591
    %5608 = vst [vmem:[#allocation3 + $0x200] sm:$0xff] %v5592
    %5609 = vst [vmem:[#allocation3 + $0x248] sm:$0xff] %v5593
    %5610 = vst [vmem:[#allocation3 + $0x290] sm:$0xff] %v5594
    %5611 = vst [vmem:[#allocation3 + $0x2d8] sm:$0xff] %v5595
    %5612 = vst [vmem:[#allocation3 + $0x320] sm:$0xff] %v5596
    %5613 = vst [vmem:[#allocation3 + $0x368] sm:$0xff] %v5597
    %5614 = vst [vmem:[#allocation3 + $0x3b0] sm:$0xff] %v5598
    %5615 = vst [vmem:[#allocation3 + $0x3f8] sm:$0xff] %v5599
    %5616 = vst [vmem:[#allocation3 + $0x440] sm:$0xff] %v5600
    %v5617 = vld [vmem:[#allocation2 + $0x8] sm:$0xff]
    %v5618 = vld [vmem:[#allocation2 + $0x10] sm:$0xff]
    %v5619 = vld [vmem:[#allocation2 + $0x18] sm:$0xff]
    %v5620 = vld [vmem:[#allocation2 + $0x20] sm:$0xff]
    %v5621 = vld [vmem:[#allocation2 + $0x28] sm:$0xff]
    %v5622 = vld [vmem:[#allocation2 + $0x30] sm:$0xff]
    %v5623 = vld [vmem:[#allocation2 + $0x38] sm:$0xff]
    %v5624 = vld [vmem:[#allocation2 + $0x40] sm:$0xff]
    %v5625 = vld [vmem:[#allocation2 + $0x48] sm:$0xff]
    %v5626 = vld [vmem:[#allocation2 + $0x50] sm:$0xff]
    %v5627 = vld [vmem:[#allocation2 + $0x58] sm:$0xff]
    %v5628 = vld [vmem:[#allocation2 + $0x60] sm:$0xff]
    %v5629 = vld [vmem:[#allocation2 + $0x68] sm:$0xff]
    %v5630 = vld [vmem:[#allocation2 + $0x70] sm:$0xff]
    %v5631 = vld [vmem:[#allocation2 + $0x78] sm:$0xff]
    %v5632 = vld [vmem:[#allocation2 + $0x80] sm:$0xff]
    %v5633 = vld [vmem:[#allocation2 + $0x88] sm:$0x1]
    %v5634 = vld [vmem:[#allocation10] sm:$0xf]
    %v5635 = vld [vmem:[#allocation10 + $0x4] sm:$0xf]
    %v5636 = vld [vmem:[#allocation10 + $0x8] sm:$0xf]
    %v5637 = vld [vmem:[#allocation10 + $0xc] sm:$0xf]
    %v5638 = vld [vmem:[#allocation10 + $0x10] sm:$0xf]
    %v5639 = vld [vmem:[#allocation10 + $0x14] sm:$0xf]
    %v5640 = vld [vmem:[#allocation10 + $0x18] sm:$0xf]
    %v5641 = vld [vmem:[#allocation10 + $0x1c] sm:$0xf]
    %v5642 = vld [vmem:[#allocation10 + $0x20] sm:$0xf]
    %v5643 = vld [vmem:[#allocation10 + $0x24] sm:$0xf]
    %v5644 = vld [vmem:[#allocation10 + $0x28] sm:$0xf]
    %v5645 = vld [vmem:[#allocation10 + $0x2c] sm:$0xf]
    %v5646 = vld [vmem:[#allocation10 + $0x30] sm:$0xf]
    %v5647 = vld [vmem:[#allocation10 + $0x34] sm:$0xf]
    %v5648 = vld [vmem:[#allocation10 + $0x38] sm:$0xf]
    %v5649 = vld [vmem:[#allocation10 + $0x3c] sm:$0xf]
    %v5650 = vld [vmem:[#allocation10 + $0x40] sm:$0xf]
    %v5651 = vld [vmem:[#allocation10 + $0x44] sm:$0xf]
    %v5652 = vld [vmem:[#allocation10 + $0x48] sm:$0xf]
    %v5653 = vld [vmem:[#allocation10 + $0x4c] sm:$0xf]
    %v5654 = vld [vmem:[#allocation10 + $0x50] sm:$0xf]
    %v5655 = vld [vmem:[#allocation10 + $0x54] sm:$0xf]
    %v5656 = vld [vmem:[#allocation10 + $0x58] sm:$0xf]
    %v5657 = vld [vmem:[#allocation10 + $0x5c] sm:$0xf]
    %v5658 = vld [vmem:[#allocation10 + $0x60] sm:$0xf]
    %v5659 = vld [vmem:[#allocation10 + $0x64] sm:$0xf]
    %v5660 = vld [vmem:[#allocation10 + $0x68] sm:$0xf]
    %v5661 = vld [vmem:[#allocation10 + $0x6c] sm:$0xf]
    %v5662 = vld [vmem:[#allocation10 + $0x70] sm:$0xf]
    %v5663 = vld [vmem:[#allocation10 + $0x74] sm:$0xf]
    %v5664 = vld [vmem:[#allocation10 + $0x78] sm:$0xf]
    %v5665 = vld [vmem:[#allocation10 + $0x7c] sm:$0xf]
    %v5698 = vunpack.c.l.b16 %v5634
    %v5699 = vunpack.c.l.b16 %v5635
    %v5700 = vunpack.c.l.b16 %v5636
    %v5701 = vunpack.c.l.b16 %v5637
    %v5702 = vunpack.c.l.b16 %v5638
    %v5703 = vunpack.c.l.b16 %v5639
    %v5704 = vunpack.c.l.b16 %v5640
    %v5705 = vunpack.c.l.b16 %v5641
    %v5706 = vunpack.c.l.b16 %v5642
    %v5707 = vunpack.c.l.b16 %v5643
    %v5708 = vunpack.c.l.b16 %v5644
    %v5709 = vunpack.c.l.b16 %v5645
    %v5710 = vunpack.c.l.b16 %v5646
    %v5711 = vunpack.c.l.b16 %v5647
    %v5712 = vunpack.c.l.b16 %v5648
    %v5713 = vunpack.c.l.b16 %v5649
    %v5714 = vunpack.c.l.b16 %v5650
    %v5715 = vunpack.c.l.b16 %v5651
    %v5716 = vunpack.c.l.b16 %v5652
    %v5717 = vunpack.c.l.b16 %v5653
    %v5718 = vunpack.c.l.b16 %v5654
    %v5719 = vunpack.c.l.b16 %v5655
    %v5720 = vunpack.c.l.b16 %v5656
    %v5721 = vunpack.c.l.b16 %v5657
    %v5722 = vunpack.c.l.b16 %v5658
    %v5723 = vunpack.c.l.b16 %v5659
    %v5724 = vunpack.c.l.b16 %v5660
    %v5725 = vunpack.c.l.b16 %v5661
    %v5726 = vunpack.c.l.b16 %v5662
    %v5727 = vunpack.c.l.b16 %v5663
    %v5728 = vunpack.c.l.b16 %v5664
    %v5729 = vunpack.c.l.b16 %v5665
    %v5730 = vpack.c.b16 %v5699, %v5698
    %v5731 = vpack.c.b16 %v5701, %v5700
    %v5732 = vpack.c.b16 %v5703, %v5702
    %v5733 = vpack.c.b16 %v5705, %v5704
    %v5734 = vpack.c.b16 %v5707, %v5706
    %v5735 = vpack.c.b16 %v5709, %v5708
    %v5736 = vpack.c.b16 %v5711, %v5710
    %v5737 = vpack.c.b16 %v5713, %v5712
    %v5738 = vpack.c.b16 %v5715, %v5714
    %v5739 = vpack.c.b16 %v5717, %v5716
    %v5740 = vpack.c.b16 %v5719, %v5718
    %v5741 = vpack.c.b16 %v5721, %v5720
    %v5742 = vpack.c.b16 %v5723, %v5722
    %v5743 = vpack.c.b16 %v5725, %v5724
    %v5744 = vpack.c.b16 %v5727, %v5726
    %v5745 = vpack.c.b16 %v5729, %v5728
    %v5747 = vshrl.u32 %v5730, 16
    %v5749 = vrot.slane %v5747, 7
    %v5750 = vshll.u32 %v5730, 16
    %v5752 = vor.u32 %v5749, %v5750
    %v5754 = vshrl.u32 %v5731, 16
    %v5756 = vrot.slane %v5754, 7
    %v5757 = vshll.u32 %v5731, 16
    %v5759 = vor.u32 %v5756, %v5757
    %v5760 = vsel %vm679, %v5749, %v5759
    %v5762 = vshrl.u32 %v5732, 16
    %v5764 = vrot.slane %v5762, 7
    %v5765 = vshll.u32 %v5732, 16
    %v5767 = vor.u32 %v5764, %v5765
    %v5768 = vsel %vm679, %v5756, %v5767
    %v5770 = vshrl.u32 %v5733, 16
    %v5772 = vrot.slane %v5770, 7
    %v5773 = vshll.u32 %v5733, 16
    %v5775 = vor.u32 %v5772, %v5773
    %v5776 = vsel %vm679, %v5764, %v5775
    %v5778 = vshrl.u32 %v5734, 16
    %v5780 = vrot.slane %v5778, 7
    %v5781 = vshll.u32 %v5734, 16
    %v5783 = vor.u32 %v5780, %v5781
    %v5784 = vsel %vm679, %v5772, %v5783
    %v5786 = vshrl.u32 %v5735, 16
    %v5788 = vrot.slane %v5786, 7
    %v5789 = vshll.u32 %v5735, 16
    %v5791 = vor.u32 %v5788, %v5789
    %v5792 = vsel %vm679, %v5780, %v5791
    %v5794 = vshrl.u32 %v5736, 16
    %v5796 = vrot.slane %v5794, 7
    %v5797 = vshll.u32 %v5736, 16
    %v5799 = vor.u32 %v5796, %v5797
    %v5800 = vsel %vm679, %v5788, %v5799
    %v5802 = vshrl.u32 %v5737, 16
    %v5804 = vrot.slane %v5802, 7
    %v5805 = vshll.u32 %v5737, 16
    %v5807 = vor.u32 %v5804, %v5805
    %v5808 = vsel %vm679, %v5796, %v5807
    %v5810 = vshrl.u32 %v5738, 16
    %v5812 = vrot.slane %v5810, 7
    %v5813 = vshll.u32 %v5738, 16
    %v5815 = vor.u32 %v5812, %v5813
    %v5816 = vsel %vm679, %v5804, %v5815
    %v5818 = vshrl.u32 %v5739, 16
    %v5820 = vrot.slane %v5818, 7
    %v5821 = vshll.u32 %v5739, 16
    %v5823 = vor.u32 %v5820, %v5821
    %v5824 = vsel %vm679, %v5812, %v5823
    %v5826 = vshrl.u32 %v5740, 16
    %v5828 = vrot.slane %v5826, 7
    %v5829 = vshll.u32 %v5740, 16
    %v5831 = vor.u32 %v5828, %v5829
    %v5832 = vsel %vm679, %v5820, %v5831
    %v5834 = vshrl.u32 %v5741, 16
    %v5836 = vrot.slane %v5834, 7
    %v5837 = vshll.u32 %v5741, 16
    %v5839 = vor.u32 %v5836, %v5837
    %v5840 = vsel %vm679, %v5828, %v5839
    %v5842 = vshrl.u32 %v5742, 16
    %v5844 = vrot.slane %v5842, 7
    %v5845 = vshll.u32 %v5742, 16
    %v5847 = vor.u32 %v5844, %v5845
    %v5848 = vsel %vm679, %v5836, %v5847
    %v5850 = vshrl.u32 %v5743, 16
    %v5852 = vrot.slane %v5850, 7
    %v5853 = vshll.u32 %v5743, 16
    %v5855 = vor.u32 %v5852, %v5853
    %v5856 = vsel %vm679, %v5844, %v5855
    %v5858 = vshrl.u32 %v5744, 16
    %v5860 = vrot.slane %v5858, 7
    %v5861 = vshll.u32 %v5744, 16
    %v5863 = vor.u32 %v5860, %v5861
    %v5864 = vsel %vm679, %v5852, %v5863
    %v5866 = vshrl.u32 %v5745, 16
    %v5868 = vrot.slane %v5866, 7
    %v5869 = vshll.u32 %v5745, 16
    %v5871 = vor.u32 %v5868, %v5869
    %v5872 = vsel %vm679, %v5860, %v5871
    %v5890 = vmul.bf16 %v5617, %v5752
    %v5891 = vmul.bf16 %v5618, %v5760
    %v5892 = vmul.bf16 %v5619, %v5768
    %v5893 = vmul.bf16 %v5620, %v5776
    %v5894 = vmul.bf16 %v5621, %v5784
    %v5895 = vmul.bf16 %v5622, %v5792
    %v5896 = vmul.bf16 %v5623, %v5800
    %v5897 = vmul.bf16 %v5624, %v5808
    %v5898 = vmul.bf16 %v5625, %v5816
    %v5899 = vmul.bf16 %v5626, %v5824
    %v5900 = vmul.bf16 %v5627, %v5832
    %v5901 = vmul.bf16 %v5628, %v5840
    %v5902 = vmul.bf16 %v5629, %v5848
    %v5903 = vmul.bf16 %v5630, %v5856
    %v5904 = vmul.bf16 %v5631, %v5864
    %v5905 = vmul.bf16 %v5632, %v5872
    %v5906 = vmul.bf16 %v5633, %v5868
    %v5908 = vshrl.u32 %v5890, 16
    %v5910 = vshll.u32 %v5890, 16
    %v5912 = vrot.slane %v5910, 1
    %v5913 = vor.u32 %v5908, %v5912
    %v5915 = vshll.u32 %v5891, 16
    %v5917 = vrot.slane %v5915, 1
    %v5918 = vsel %vm517, %v5913, %v5917
    %v5919 = vshrl.u32 %v5891, 16
    %v5921 = vor.u32 %v5919, %v5917
    %v5923 = vshll.u32 %v5892, 16
    %v5925 = vrot.slane %v5923, 1
    %v5926 = vsel %vm517, %v5921, %v5925
    %v5927 = vshrl.u32 %v5892, 16
    %v5929 = vor.u32 %v5927, %v5925
    %v5931 = vshll.u32 %v5893, 16
    %v5933 = vrot.slane %v5931, 1
    %v5934 = vsel %vm517, %v5929, %v5933
    %v5935 = vshrl.u32 %v5893, 16
    %v5937 = vor.u32 %v5935, %v5933
    %v5939 = vshll.u32 %v5894, 16
    %v5941 = vrot.slane %v5939, 1
    %v5942 = vsel %vm517, %v5937, %v5941
    %v5943 = vshrl.u32 %v5894, 16
    %v5945 = vor.u32 %v5943, %v5941
    %v5947 = vshll.u32 %v5895, 16
    %v5949 = vrot.slane %v5947, 1
    %v5950 = vsel %vm517, %v5945, %v5949
    %v5951 = vshrl.u32 %v5895, 16
    %v5953 = vor.u32 %v5951, %v5949
    %v5955 = vshll.u32 %v5896, 16
    %v5957 = vrot.slane %v5955, 1
    %v5958 = vsel %vm517, %v5953, %v5957
    %v5959 = vshrl.u32 %v5896, 16
    %v5961 = vor.u32 %v5959, %v5957
    %v5963 = vshll.u32 %v5897, 16
    %v5965 = vrot.slane %v5963, 1
    %v5966 = vsel %vm517, %v5961, %v5965
    %v5967 = vshrl.u32 %v5897, 16
    %v5969 = vor.u32 %v5967, %v5965
    %v5971 = vshll.u32 %v5898, 16
    %v5973 = vrot.slane %v5971, 1
    %v5974 = vsel %vm517, %v5969, %v5973
    %v5975 = vshrl.u32 %v5898, 16
    %v5977 = vor.u32 %v5975, %v5973
    %v5979 = vshll.u32 %v5899, 16
    %v5981 = vrot.slane %v5979, 1
    %v5982 = vsel %vm517, %v5977, %v5981
    %v5983 = vshrl.u32 %v5899, 16
    %v5985 = vor.u32 %v5983, %v5981
    %v5987 = vshll.u32 %v5900, 16
    %v5989 = vrot.slane %v5987, 1
    %v5990 = vsel %vm517, %v5985, %v5989
    %v5991 = vshrl.u32 %v5900, 16
    %v5993 = vor.u32 %v5991, %v5989
    %v5995 = vshll.u32 %v5901, 16
    %v5997 = vrot.slane %v5995, 1
    %v5998 = vsel %vm517, %v5993, %v5997
    %v5999 = vshrl.u32 %v5901, 16
    %v6001 = vor.u32 %v5999, %v5997
    %v6003 = vshll.u32 %v5902, 16
    %v6005 = vrot.slane %v6003, 1
    %v6006 = vsel %vm517, %v6001, %v6005
    %v6007 = vshrl.u32 %v5902, 16
    %v6009 = vor.u32 %v6007, %v6005
    %v6011 = vshll.u32 %v5903, 16
    %v6013 = vrot.slane %v6011, 1
    %v6014 = vsel %vm517, %v6009, %v6013
    %v6015 = vshrl.u32 %v5903, 16
    %v6017 = vor.u32 %v6015, %v6013
    %v6019 = vshll.u32 %v5904, 16
    %v6021 = vrot.slane %v6019, 1
    %v6022 = vsel %vm517, %v6017, %v6021
    %v6023 = vshrl.u32 %v5904, 16
    %v6025 = vor.u32 %v6023, %v6021
    %v6027 = vshll.u32 %v5905, 16
    %v6029 = vrot.slane %v6027, 1
    %v6030 = vsel %vm517, %v6025, %v6029
    %v6031 = vshrl.u32 %v5905, 16
    %v6033 = vor.u32 %v6031, %v6029
    %v6035 = vshll.u32 %v5906, 16
    %v6037 = vrot.slane %v6035, 1
    %v6038 = vsel %vm517, %v6033, %v6037
    %6055 = vst [vmem:[#allocation3 + $0x10] sm:$0xff] %v5918
    %6056 = vst [vmem:[#allocation3 + $0x58] sm:$0xff] %v5926
    %6057 = vst [vmem:[#allocation3 + $0xa0] sm:$0xff] %v5934
    %6058 = vst [vmem:[#allocation3 + $0xe8] sm:$0xff] %v5942
    %6059 = vst [vmem:[#allocation3 + $0x130] sm:$0xff] %v5950
    %6060 = vst [vmem:[#allocation3 + $0x178] sm:$0xff] %v5958
    %6061 = vst [vmem:[#allocation3 + $0x1c0] sm:$0xff] %v5966
    %6062 = vst [vmem:[#allocation3 + $0x208] sm:$0xff] %v5974
    %6063 = vst [vmem:[#allocation3 + $0x250] sm:$0xff] %v5982
    %6064 = vst [vmem:[#allocation3 + $0x298] sm:$0xff] %v5990
    %6065 = vst [vmem:[#allocation3 + $0x2e0] sm:$0xff] %v5998
    %6066 = vst [vmem:[#allocation3 + $0x328] sm:$0xff] %v6006
    %6067 = vst [vmem:[#allocation3 + $0x370] sm:$0xff] %v6014
    %6068 = vst [vmem:[#allocation3 + $0x3b8] sm:$0xff] %v6022
    %6069 = vst [vmem:[#allocation3 + $0x400] sm:$0xff] %v6030
    %6070 = vst [vmem:[#allocation3 + $0x448] sm:$0xff] %v6038
    %v6071 = vld [vmem:[#allocation2 + $0x8] sm:$0x80]
    %v6072 = vld [vmem:[#allocation2 + $0x10] sm:$0xff]
    %v6073 = vld [vmem:[#allocation2 + $0x18] sm:$0xff]
    %v6074 = vld [vmem:[#allocation2 + $0x20] sm:$0xff]
    %v6075 = vld [vmem:[#allocation2 + $0x28] sm:$0xff]
    %v6076 = vld [vmem:[#allocation2 + $0x30] sm:$0xff]
    %v6077 = vld [vmem:[#allocation2 + $0x38] sm:$0xff]
    %v6078 = vld [vmem:[#allocation2 + $0x40] sm:$0xff]
    %v6079 = vld [vmem:[#allocation2 + $0x48] sm:$0xff]
    %v6080 = vld [vmem:[#allocation2 + $0x50] sm:$0xff]
    %v6081 = vld [vmem:[#allocation2 + $0x58] sm:$0xff]
    %v6082 = vld [vmem:[#allocation2 + $0x60] sm:$0xff]
    %v6083 = vld [vmem:[#allocation2 + $0x68] sm:$0xff]
    %v6084 = vld [vmem:[#allocation2 + $0x70] sm:$0xff]
    %v6085 = vld [vmem:[#allocation2 + $0x78] sm:$0xff]
    %v6086 = vld [vmem:[#allocation2 + $0x80] sm:$0xff]
    %v6087 = vld [vmem:[#allocation2 + $0x88] sm:$0xff]
    %v6088 = vld [vmem:[#allocation9] sm:$0xf]
    %v6089 = vld [vmem:[#allocation9 + $0x4] sm:$0xf]
    %v6090 = vld [vmem:[#allocation9 + $0x8] sm:$0xf]
    %v6091 = vld [vmem:[#allocation9 + $0xc] sm:$0xf]
    %v6092 = vld [vmem:[#allocation9 + $0x10] sm:$0xf]
    %v6093 = vld [vmem:[#allocation9 + $0x14] sm:$0xf]
    %v6094 = vld [vmem:[#allocation9 + $0x18] sm:$0xf]
    %v6095 = vld [vmem:[#allocation9 + $0x1c] sm:$0xf]
    %v6096 = vld [vmem:[#allocation9 + $0x20] sm:$0xf]
    %v6097 = vld [vmem:[#allocation9 + $0x24] sm:$0xf]
    %v6098 = vld [vmem:[#allocation9 + $0x28] sm:$0xf]
    %v6099 = vld [vmem:[#allocation9 + $0x2c] sm:$0xf]
    %v6100 = vld [vmem:[#allocation9 + $0x30] sm:$0xf]
    %v6101 = vld [vmem:[#allocation9 + $0x34] sm:$0xf]
    %v6102 = vld [vmem:[#allocation9 + $0x38] sm:$0xf]
    %v6103 = vld [vmem:[#allocation9 + $0x3c] sm:$0xf]
    %v6104 = vld [vmem:[#allocation9 + $0x40] sm:$0xf]
    %v6105 = vld [vmem:[#allocation9 + $0x44] sm:$0xf]
    %v6106 = vld [vmem:[#allocation9 + $0x48] sm:$0xf]
    %v6107 = vld [vmem:[#allocation9 + $0x4c] sm:$0xf]
    %v6108 = vld [vmem:[#allocation9 + $0x50] sm:$0xf]
    %v6109 = vld [vmem:[#allocation9 + $0x54] sm:$0xf]
    %v6110 = vld [vmem:[#allocation9 + $0x58] sm:$0xf]
    %v6111 = vld [vmem:[#allocation9 + $0x5c] sm:$0xf]
    %v6112 = vld [vmem:[#allocation9 + $0x60] sm:$0xf]
    %v6113 = vld [vmem:[#allocation9 + $0x64] sm:$0xf]
    %v6114 = vld [vmem:[#allocation9 + $0x68] sm:$0xf]
    %v6115 = vld [vmem:[#allocation9 + $0x6c] sm:$0xf]
    %v6116 = vld [vmem:[#allocation9 + $0x70] sm:$0xf]
    %v6117 = vld [vmem:[#allocation9 + $0x74] sm:$0xf]
    %v6118 = vld [vmem:[#allocation9 + $0x78] sm:$0xf]
    %v6119 = vld [vmem:[#allocation9 + $0x7c] sm:$0xf]
    %v6152 = vunpack.c.l.b16 %v6088
    %v6153 = vunpack.c.l.b16 %v6089
    %v6154 = vunpack.c.l.b16 %v6090
    %v6155 = vunpack.c.l.b16 %v6091
    %v6156 = vunpack.c.l.b16 %v6092
    %v6157 = vunpack.c.l.b16 %v6093
    %v6158 = vunpack.c.l.b16 %v6094
    %v6159 = vunpack.c.l.b16 %v6095
    %v6160 = vunpack.c.l.b16 %v6096
    %v6161 = vunpack.c.l.b16 %v6097
    %v6162 = vunpack.c.l.b16 %v6098
    %v6163 = vunpack.c.l.b16 %v6099
    %v6164 = vunpack.c.l.b16 %v6100
    %v6165 = vunpack.c.l.b16 %v6101
    %v6166 = vunpack.c.l.b16 %v6102
    %v6167 = vunpack.c.l.b16 %v6103
    %v6168 = vunpack.c.l.b16 %v6104
    %v6169 = vunpack.c.l.b16 %v6105
    %v6170 = vunpack.c.l.b16 %v6106
    %v6171 = vunpack.c.l.b16 %v6107
    %v6172 = vunpack.c.l.b16 %v6108
    %v6173 = vunpack.c.l.b16 %v6109
    %v6174 = vunpack.c.l.b16 %v6110
    %v6175 = vunpack.c.l.b16 %v6111
    %v6176 = vunpack.c.l.b16 %v6112
    %v6177 = vunpack.c.l.b16 %v6113
    %v6178 = vunpack.c.l.b16 %v6114
    %v6179 = vunpack.c.l.b16 %v6115
    %v6180 = vunpack.c.l.b16 %v6116
    %v6181 = vunpack.c.l.b16 %v6117
    %v6182 = vunpack.c.l.b16 %v6118
    %v6183 = vunpack.c.l.b16 %v6119
    %v6184 = vpack.c.b16 %v6153, %v6152
    %v6185 = vpack.c.b16 %v6155, %v6154
    %v6186 = vpack.c.b16 %v6157, %v6156
    %v6187 = vpack.c.b16 %v6159, %v6158
    %v6188 = vpack.c.b16 %v6161, %v6160
    %v6189 = vpack.c.b16 %v6163, %v6162
    %v6190 = vpack.c.b16 %v6165, %v6164
    %v6191 = vpack.c.b16 %v6167, %v6166
    %v6192 = vpack.c.b16 %v6169, %v6168
    %v6193 = vpack.c.b16 %v6171, %v6170
    %v6194 = vpack.c.b16 %v6173, %v6172
    %v6195 = vpack.c.b16 %v6175, %v6174
    %v6196 = vpack.c.b16 %v6177, %v6176
    %v6197 = vpack.c.b16 %v6179, %v6178
    %v6198 = vpack.c.b16 %v6181, %v6180
    %v6199 = vpack.c.b16 %v6183, %v6182
    %v6201 = vshll.u32 %v6184, 16
    %v6203 = vrot.slane %v6201, 1
    %v6204 = vshrl.u32 %v6184, 16
    %v6206 = vor.u32 %v6204, %v6203
    %v6208 = vshll.u32 %v6185, 16
    %v6210 = vrot.slane %v6208, 1
    %v6211 = vsel %vm517, %v6206, %v6210
    %v6212 = vshrl.u32 %v6185, 16
    %v6214 = vor.u32 %v6212, %v6210
    %v6216 = vshll.u32 %v6186, 16
    %v6218 = vrot.slane %v6216, 1
    %v6219 = vsel %vm517, %v6214, %v6218
    %v6220 = vshrl.u32 %v6186, 16
    %v6222 = vor.u32 %v6220, %v6218
    %v6224 = vshll.u32 %v6187, 16
    %v6226 = vrot.slane %v6224, 1
    %v6227 = vsel %vm517, %v6222, %v6226
    %v6228 = vshrl.u32 %v6187, 16
    %v6230 = vor.u32 %v6228, %v6226
    %v6232 = vshll.u32 %v6188, 16
    %v6234 = vrot.slane %v6232, 1
    %v6235 = vsel %vm517, %v6230, %v6234
    %v6236 = vshrl.u32 %v6188, 16
    %v6238 = vor.u32 %v6236, %v6234
    %v6240 = vshll.u32 %v6189, 16
    %v6242 = vrot.slane %v6240, 1
    %v6243 = vsel %vm517, %v6238, %v6242
    %v6244 = vshrl.u32 %v6189, 16
    %v6246 = vor.u32 %v6244, %v6242
    %v6248 = vshll.u32 %v6190, 16
    %v6250 = vrot.slane %v6248, 1
    %v6251 = vsel %vm517, %v6246, %v6250
    %v6252 = vshrl.u32 %v6190, 16
    %v6254 = vor.u32 %v6252, %v6250
    %v6256 = vshll.u32 %v6191, 16
    %v6258 = vrot.slane %v6256, 1
    %v6259 = vsel %vm517, %v6254, %v6258
    %v6260 = vshrl.u32 %v6191, 16
    %v6262 = vor.u32 %v6260, %v6258
    %v6264 = vshll.u32 %v6192, 16
    %v6266 = vrot.slane %v6264, 1
    %v6267 = vsel %vm517, %v6262, %v6266
    %v6268 = vshrl.u32 %v6192, 16
    %v6270 = vor.u32 %v6268, %v6266
    %v6272 = vshll.u32 %v6193, 16
    %v6274 = vrot.slane %v6272, 1
    %v6275 = vsel %vm517, %v6270, %v6274
    %v6276 = vshrl.u32 %v6193, 16
    %v6278 = vor.u32 %v6276, %v6274
    %v6280 = vshll.u32 %v6194, 16
    %v6282 = vrot.slane %v6280, 1
    %v6283 = vsel %vm517, %v6278, %v6282
    %v6284 = vshrl.u32 %v6194, 16
    %v6286 = vor.u32 %v6284, %v6282
    %v6288 = vshll.u32 %v6195, 16
    %v6290 = vrot.slane %v6288, 1
    %v6291 = vsel %vm517, %v6286, %v6290
    %v6292 = vshrl.u32 %v6195, 16
    %v6294 = vor.u32 %v6292, %v6290
    %v6296 = vshll.u32 %v6196, 16
    %v6298 = vrot.slane %v6296, 1
    %v6299 = vsel %vm517, %v6294, %v6298
    %v6300 = vshrl.u32 %v6196, 16
    %v6302 = vor.u32 %v6300, %v6298
    %v6304 = vshll.u32 %v6197, 16
    %v6306 = vrot.slane %v6304, 1
    %v6307 = vsel %vm517, %v6302, %v6306
    %v6308 = vshrl.u32 %v6197, 16
    %v6310 = vor.u32 %v6308, %v6306
    %v6312 = vshll.u32 %v6198, 16
    %v6314 = vrot.slane %v6312, 1
    %v6315 = vsel %vm517, %v6310, %v6314
    %v6316 = vshrl.u32 %v6198, 16
    %v6318 = vor.u32 %v6316, %v6314
    %v6320 = vshll.u32 %v6199, 16
    %v6322 = vrot.slane %v6320, 1
    %v6323 = vsel %vm517, %v6318, %v6322
    %v6324 = vshrl.u32 %v6199, 16
    %v6326 = vor.u32 %v6324, %v6322
    %v6344 = vmul.bf16 %v6071, %v6203
    %v6345 = vmul.bf16 %v6072, %v6211
    %v6346 = vmul.bf16 %v6073, %v6219
    %v6347 = vmul.bf16 %v6074, %v6227
    %v6348 = vmul.bf16 %v6075, %v6235
    %v6349 = vmul.bf16 %v6076, %v6243
    %v6350 = vmul.bf16 %v6077, %v6251
    %v6351 = vmul.bf16 %v6078, %v6259
    %v6352 = vmul.bf16 %v6079, %v6267
    %v6353 = vmul.bf16 %v6080, %v6275
    %v6354 = vmul.bf16 %v6081, %v6283
    %v6355 = vmul.bf16 %v6082, %v6291
    %v6356 = vmul.bf16 %v6083, %v6299
    %v6357 = vmul.bf16 %v6084, %v6307
    %v6358 = vmul.bf16 %v6085, %v6315
    %v6359 = vmul.bf16 %v6086, %v6323
    %v6360 = vmul.bf16 %v6087, %v6326
    %v6362 = vshrl.u32 %v6344, 16
    %v6364 = vrot.slane %v6362, 7
    %v6366 = vshrl.u32 %v6345, 16
    %v6368 = vrot.slane %v6366, 7
    %v6369 = vshll.u32 %v6345, 16
    %v6371 = vor.u32 %v6368, %v6369
    %v6372 = vsel %vm679, %v6364, %v6371
    %v6374 = vshrl.u32 %v6346, 16
    %v6376 = vrot.slane %v6374, 7
    %v6377 = vshll.u32 %v6346, 16
    %v6379 = vor.u32 %v6376, %v6377
    %v6380 = vsel %vm679, %v6368, %v6379
    %v6382 = vshrl.u32 %v6347, 16
    %v6384 = vrot.slane %v6382, 7
    %v6385 = vshll.u32 %v6347, 16
    %v6387 = vor.u32 %v6384, %v6385
    %v6388 = vsel %vm679, %v6376, %v6387
    %v6390 = vshrl.u32 %v6348, 16
    %v6392 = vrot.slane %v6390, 7
    %v6393 = vshll.u32 %v6348, 16
    %v6395 = vor.u32 %v6392, %v6393
    %v6396 = vsel %vm679, %v6384, %v6395
    %v6398 = vshrl.u32 %v6349, 16
    %v6400 = vrot.slane %v6398, 7
    %v6401 = vshll.u32 %v6349, 16
    %v6403 = vor.u32 %v6400, %v6401
    %v6404 = vsel %vm679, %v6392, %v6403
    %v6406 = vshrl.u32 %v6350, 16
    %v6408 = vrot.slane %v6406, 7
    %v6409 = vshll.u32 %v6350, 16
    %v6411 = vor.u32 %v6408, %v6409
    %v6412 = vsel %vm679, %v6400, %v6411
    %v6414 = vshrl.u32 %v6351, 16
    %v6416 = vrot.slane %v6414, 7
    %v6417 = vshll.u32 %v6351, 16
    %v6419 = vor.u32 %v6416, %v6417
    %v6420 = vsel %vm679, %v6408, %v6419
    %v6422 = vshrl.u32 %v6352, 16
    %v6424 = vrot.slane %v6422, 7
    %v6425 = vshll.u32 %v6352, 16
    %v6427 = vor.u32 %v6424, %v6425
    %v6428 = vsel %vm679, %v6416, %v6427
    %v6430 = vshrl.u32 %v6353, 16
    %v6432 = vrot.slane %v6430, 7
    %v6433 = vshll.u32 %v6353, 16
    %v6435 = vor.u32 %v6432, %v6433
    %v6436 = vsel %vm679, %v6424, %v6435
    %v6438 = vshrl.u32 %v6354, 16
    %v6440 = vrot.slane %v6438, 7
    %v6441 = vshll.u32 %v6354, 16
    %v6443 = vor.u32 %v6440, %v6441
    %v6444 = vsel %vm679, %v6432, %v6443
    %v6446 = vshrl.u32 %v6355, 16
    %v6448 = vrot.slane %v6446, 7
    %v6449 = vshll.u32 %v6355, 16
    %v6451 = vor.u32 %v6448, %v6449
    %v6452 = vsel %vm679, %v6440, %v6451
    %v6454 = vshrl.u32 %v6356, 16
    %v6456 = vrot.slane %v6454, 7
    %v6457 = vshll.u32 %v6356, 16
    %v6459 = vor.u32 %v6456, %v6457
    %v6460 = vsel %vm679, %v6448, %v6459
    %v6462 = vshrl.u32 %v6357, 16
    %v6464 = vrot.slane %v6462, 7
    %v6465 = vshll.u32 %v6357, 16
    %v6467 = vor.u32 %v6464, %v6465
    %v6468 = vsel %vm679, %v6456, %v6467
    %v6470 = vshrl.u32 %v6358, 16
    %v6472 = vrot.slane %v6470, 7
    %v6473 = vshll.u32 %v6358, 16
    %v6475 = vor.u32 %v6472, %v6473
    %v6476 = vsel %vm679, %v6464, %v6475
    %v6478 = vshrl.u32 %v6359, 16
    %v6480 = vrot.slane %v6478, 7
    %v6481 = vshll.u32 %v6359, 16
    %v6483 = vor.u32 %v6480, %v6481
    %v6484 = vsel %vm679, %v6472, %v6483
    %v6486 = vshrl.u32 %v6360, 16
    %v6488 = vrot.slane %v6486, 7
    %v6489 = vshll.u32 %v6360, 16
    %v6491 = vor.u32 %v6488, %v6489
    %v6492 = vsel %vm679, %v6480, %v6491
    %6509 = vst [vmem:[#allocation3 + $0x18] sm:$0xff] %v6372
    %6510 = vst [vmem:[#allocation3 + $0x60] sm:$0xff] %v6380
    %6511 = vst [vmem:[#allocation3 + $0xa8] sm:$0xff] %v6388
    %6512 = vst [vmem:[#allocation3 + $0xf0] sm:$0xff] %v6396
    %6513 = vst [vmem:[#allocation3 + $0x138] sm:$0xff] %v6404
    %6514 = vst [vmem:[#allocation3 + $0x180] sm:$0xff] %v6412
    %6515 = vst [vmem:[#allocation3 + $0x1c8] sm:$0xff] %v6420
    %6516 = vst [vmem:[#allocation3 + $0x210] sm:$0xff] %v6428
    %6517 = vst [vmem:[#allocation3 + $0x258] sm:$0xff] %v6436
    %6518 = vst [vmem:[#allocation3 + $0x2a0] sm:$0xff] %v6444
    %6519 = vst [vmem:[#allocation3 + $0x2e8] sm:$0xff] %v6452
    %6520 = vst [vmem:[#allocation3 + $0x330] sm:$0xff] %v6460
    %6521 = vst [vmem:[#allocation3 + $0x378] sm:$0xff] %v6468
    %6522 = vst [vmem:[#allocation3 + $0x3c0] sm:$0xff] %v6476
    %6523 = vst [vmem:[#allocation3 + $0x408] sm:$0xff] %v6484
    %6524 = vst [vmem:[#allocation3 + $0x450] sm:$0xff] %v6492
    %v6525 = vld [vmem:[#allocation2 + $0x10] sm:$0xff]
    %v6526 = vld [vmem:[#allocation2 + $0x18] sm:$0xff]
    %v6527 = vld [vmem:[#allocation2 + $0x20] sm:$0xff]
    %v6528 = vld [vmem:[#allocation2 + $0x28] sm:$0xff]
    %v6529 = vld [vmem:[#allocation2 + $0x30] sm:$0xff]
    %v6530 = vld [vmem:[#allocation2 + $0x38] sm:$0xff]
    %v6531 = vld [vmem:[#allocation2 + $0x40] sm:$0xff]
    %v6532 = vld [vmem:[#allocation2 + $0x48] sm:$0xff]
    %v6533 = vld [vmem:[#allocation2 + $0x50] sm:$0xff]
    %v6534 = vld [vmem:[#allocation2 + $0x58] sm:$0xff]
    %v6535 = vld [vmem:[#allocation2 + $0x60] sm:$0xff]
    %v6536 = vld [vmem:[#allocation2 + $0x68] sm:$0xff]
    %v6537 = vld [vmem:[#allocation2 + $0x70] sm:$0xff]
    %v6538 = vld [vmem:[#allocation2 + $0x78] sm:$0xff]
    %v6539 = vld [vmem:[#allocation2 + $0x80] sm:$0xff]
    %v6540 = vld [vmem:[#allocation2 + $0x88] sm:$0xff]
    %6541 = vst [vmem:[#allocation3 + $0x20] sm:$0xff] %v6525
    %6542 = vst [vmem:[#allocation3 + $0x68] sm:$0xff] %v6526
    %6543 = vst [vmem:[#allocation3 + $0xb0] sm:$0xff] %v6527
    %6544 = vst [vmem:[#allocation3 + $0xf8] sm:$0xff] %v6528
    %6545 = vst [vmem:[#allocation3 + $0x140] sm:$0xff] %v6529
    %6546 = vst [vmem:[#allocation3 + $0x188] sm:$0xff] %v6530
    %6547 = vst [vmem:[#allocation3 + $0x1d0] sm:$0xff] %v6531
    %6548 = vst [vmem:[#allocation3 + $0x218] sm:$0xff] %v6532
    %6549 = vst [vmem:[#allocation3 + $0x260] sm:$0xff] %v6533
    %6550 = vst [vmem:[#allocation3 + $0x2a8] sm:$0xff] %v6534
    %6551 = vst [vmem:[#allocation3 + $0x2f0] sm:$0xff] %v6535
    %6552 = vst [vmem:[#allocation3 + $0x338] sm:$0xff] %v6536
    %6553 = vst [vmem:[#allocation3 + $0x380] sm:$0xff] %v6537
    %6554 = vst [vmem:[#allocation3 + $0x3c8] sm:$0xff] %v6538
    %6555 = vst [vmem:[#allocation3 + $0x410] sm:$0xff] %v6539
    %6556 = vst [vmem:[#allocation3 + $0x458] sm:$0xff] %v6540
    %v6557 = vld [vmem:[#allocation2 + $0x10] sm:$0xff]
    %v6558 = vld [vmem:[#allocation2 + $0x18] sm:$0xff]
    %v6559 = vld [vmem:[#allocation2 + $0x20] sm:$0xff]
    %v6560 = vld [vmem:[#allocation2 + $0x28] sm:$0xff]
    %v6561 = vld [vmem:[#allocation2 + $0x30] sm:$0xff]
    %v6562 = vld [vmem:[#allocation2 + $0x38] sm:$0xff]
    %v6563 = vld [vmem:[#allocation2 + $0x40] sm:$0xff]
    %v6564 = vld [vmem:[#allocation2 + $0x48] sm:$0xff]
    %v6565 = vld [vmem:[#allocation2 + $0x50] sm:$0xff]
    %v6566 = vld [vmem:[#allocation2 + $0x58] sm:$0xff]
    %v6567 = vld [vmem:[#allocation2 + $0x60] sm:$0xff]
    %v6568 = vld [vmem:[#allocation2 + $0x68] sm:$0xff]
    %v6569 = vld [vmem:[#allocation2 + $0x70] sm:$0xff]
    %v6570 = vld [vmem:[#allocation2 + $0x78] sm:$0xff]
    %v6571 = vld [vmem:[#allocation2 + $0x80] sm:$0xff]
    %v6572 = vld [vmem:[#allocation2 + $0x88] sm:$0xff]
    %v6573 = vld [vmem:[#allocation2 + $0x90] sm:$0x1]
    %v6574 = vld [vmem:[#allocation10] sm:$0xf]
    %v6575 = vld [vmem:[#allocation10 + $0x4] sm:$0xf]
    %v6576 = vld [vmem:[#allocation10 + $0x8] sm:$0xf]
    %v6577 = vld [vmem:[#allocation10 + $0xc] sm:$0xf]
    %v6578 = vld [vmem:[#allocation10 + $0x10] sm:$0xf]
    %v6579 = vld [vmem:[#allocation10 + $0x14] sm:$0xf]
    %v6580 = vld [vmem:[#allocation10 + $0x18] sm:$0xf]
    %v6581 = vld [vmem:[#allocation10 + $0x1c] sm:$0xf]
    %v6582 = vld [vmem:[#allocation10 + $0x20] sm:$0xf]
    %v6583 = vld [vmem:[#allocation10 + $0x24] sm:$0xf]
    %v6584 = vld [vmem:[#allocation10 + $0x28] sm:$0xf]
    %v6585 = vld [vmem:[#allocation10 + $0x2c] sm:$0xf]
    %v6586 = vld [vmem:[#allocation10 + $0x30] sm:$0xf]
    %v6587 = vld [vmem:[#allocation10 + $0x34] sm:$0xf]
    %v6588 = vld [vmem:[#allocation10 + $0x38] sm:$0xf]
    %v6589 = vld [vmem:[#allocation10 + $0x3c] sm:$0xf]
    %v6590 = vld [vmem:[#allocation10 + $0x40] sm:$0xf]
    %v6591 = vld [vmem:[#allocation10 + $0x44] sm:$0xf]
    %v6592 = vld [vmem:[#allocation10 + $0x48] sm:$0xf]
    %v6593 = vld [vmem:[#allocation10 + $0x4c] sm:$0xf]
    %v6594 = vld [vmem:[#allocation10 + $0x50] sm:$0xf]
    %v6595 = vld [vmem:[#allocation10 + $0x54] sm:$0xf]
    %v6596 = vld [vmem:[#allocation10 + $0x58] sm:$0xf]
    %v6597 = vld [vmem:[#allocation10 + $0x5c] sm:$0xf]
    %v6598 = vld [vmem:[#allocation10 + $0x60] sm:$0xf]
    %v6599 = vld [vmem:[#allocation10 + $0x64] sm:$0xf]
    %v6600 = vld [vmem:[#allocation10 + $0x68] sm:$0xf]
    %v6601 = vld [vmem:[#allocation10 + $0x6c] sm:$0xf]
    %v6602 = vld [vmem:[#allocation10 + $0x70] sm:$0xf]
    %v6603 = vld [vmem:[#allocation10 + $0x74] sm:$0xf]
    %v6604 = vld [vmem:[#allocation10 + $0x78] sm:$0xf]
    %v6605 = vld [vmem:[#allocation10 + $0x7c] sm:$0xf]
    %v6638 = vunpack.c.l.b16 %v6574
    %v6639 = vunpack.c.l.b16 %v6575
    %v6640 = vunpack.c.l.b16 %v6576
    %v6641 = vunpack.c.l.b16 %v6577
    %v6642 = vunpack.c.l.b16 %v6578
    %v6643 = vunpack.c.l.b16 %v6579
    %v6644 = vunpack.c.l.b16 %v6580
    %v6645 = vunpack.c.l.b16 %v6581
    %v6646 = vunpack.c.l.b16 %v6582
    %v6647 = vunpack.c.l.b16 %v6583
    %v6648 = vunpack.c.l.b16 %v6584
    %v6649 = vunpack.c.l.b16 %v6585
    %v6650 = vunpack.c.l.b16 %v6586
    %v6651 = vunpack.c.l.b16 %v6587
    %v6652 = vunpack.c.l.b16 %v6588
    %v6653 = vunpack.c.l.b16 %v6589
    %v6654 = vunpack.c.l.b16 %v6590
    %v6655 = vunpack.c.l.b16 %v6591
    %v6656 = vunpack.c.l.b16 %v6592
    %v6657 = vunpack.c.l.b16 %v6593
    %v6658 = vunpack.c.l.b16 %v6594
    %v6659 = vunpack.c.l.b16 %v6595
    %v6660 = vunpack.c.l.b16 %v6596
    %v6661 = vunpack.c.l.b16 %v6597
    %v6662 = vunpack.c.l.b16 %v6598
    %v6663 = vunpack.c.l.b16 %v6599
    %v6664 = vunpack.c.l.b16 %v6600
    %v6665 = vunpack.c.l.b16 %v6601
    %v6666 = vunpack.c.l.b16 %v6602
    %v6667 = vunpack.c.l.b16 %v6603
    %v6668 = vunpack.c.l.b16 %v6604
    %v6669 = vunpack.c.l.b16 %v6605
    %v6670 = vpack.c.b16 %v6639, %v6638
    %v6671 = vpack.c.b16 %v6641, %v6640
    %v6672 = vpack.c.b16 %v6643, %v6642
    %v6673 = vpack.c.b16 %v6645, %v6644
    %v6674 = vpack.c.b16 %v6647, %v6646
    %v6675 = vpack.c.b16 %v6649, %v6648
    %v6676 = vpack.c.b16 %v6651, %v6650
    %v6677 = vpack.c.b16 %v6653, %v6652
    %v6678 = vpack.c.b16 %v6655, %v6654
    %v6679 = vpack.c.b16 %v6657, %v6656
    %v6680 = vpack.c.b16 %v6659, %v6658
    %v6681 = vpack.c.b16 %v6661, %v6660
    %v6682 = vpack.c.b16 %v6663, %v6662
    %v6683 = vpack.c.b16 %v6665, %v6664
    %v6684 = vpack.c.b16 %v6667, %v6666
    %v6685 = vpack.c.b16 %v6669, %v6668
    %v6687 = vshrl.u32 %v6670, 16
    %v6689 = vrot.slane %v6687, 7
    %v6690 = vshll.u32 %v6670, 16
    %v6692 = vor.u32 %v6689, %v6690
    %v6694 = vshrl.u32 %v6671, 16
    %v6696 = vrot.slane %v6694, 7
    %v6697 = vshll.u32 %v6671, 16
    %v6699 = vor.u32 %v6696, %v6697
    %v6700 = vsel %vm679, %v6689, %v6699
    %v6702 = vshrl.u32 %v6672, 16
    %v6704 = vrot.slane %v6702, 7
    %v6705 = vshll.u32 %v6672, 16
    %v6707 = vor.u32 %v6704, %v6705
    %v6708 = vsel %vm679, %v6696, %v6707
    %v6710 = vshrl.u32 %v6673, 16
    %v6712 = vrot.slane %v6710, 7
    %v6713 = vshll.u32 %v6673, 16
    %v6715 = vor.u32 %v6712, %v6713
    %v6716 = vsel %vm679, %v6704, %v6715
    %v6718 = vshrl.u32 %v6674, 16
    %v6720 = vrot.slane %v6718, 7
    %v6721 = vshll.u32 %v6674, 16
    %v6723 = vor.u32 %v6720, %v6721
    %v6724 = vsel %vm679, %v6712, %v6723
    %v6726 = vshrl.u32 %v6675, 16
    %v6728 = vrot.slane %v6726, 7
    %v6729 = vshll.u32 %v6675, 16
    %v6731 = vor.u32 %v6728, %v6729
    %v6732 = vsel %vm679, %v6720, %v6731
    %v6734 = vshrl.u32 %v6676, 16
    %v6736 = vrot.slane %v6734, 7
    %v6737 = vshll.u32 %v6676, 16
    %v6739 = vor.u32 %v6736, %v6737
    %v6740 = vsel %vm679, %v6728, %v6739
    %v6742 = vshrl.u32 %v6677, 16
    %v6744 = vrot.slane %v6742, 7
    %v6745 = vshll.u32 %v6677, 16
    %v6747 = vor.u32 %v6744, %v6745
    %v6748 = vsel %vm679, %v6736, %v6747
    %v6750 = vshrl.u32 %v6678, 16
    %v6752 = vrot.slane %v6750, 7
    %v6753 = vshll.u32 %v6678, 16
    %v6755 = vor.u32 %v6752, %v6753
    %v6756 = vsel %vm679, %v6744, %v6755
    %v6758 = vshrl.u32 %v6679, 16
    %v6760 = vrot.slane %v6758, 7
    %v6761 = vshll.u32 %v6679, 16
    %v6763 = vor.u32 %v6760, %v6761
    %v6764 = vsel %vm679, %v6752, %v6763
    %v6766 = vshrl.u32 %v6680, 16
    %v6768 = vrot.slane %v6766, 7
    %v6769 = vshll.u32 %v6680, 16
    %v6771 = vor.u32 %v6768, %v6769
    %v6772 = vsel %vm679, %v6760, %v6771
    %v6774 = vshrl.u32 %v6681, 16
    %v6776 = vrot.slane %v6774, 7
    %v6777 = vshll.u32 %v6681, 16
    %v6779 = vor.u32 %v6776, %v6777
    %v6780 = vsel %vm679, %v6768, %v6779
    %v6782 = vshrl.u32 %v6682, 16
    %v6784 = vrot.slane %v6782, 7
    %v6785 = vshll.u32 %v6682, 16
    %v6787 = vor.u32 %v6784, %v6785
    %v6788 = vsel %vm679, %v6776, %v6787
    %v6790 = vshrl.u32 %v6683, 16
    %v6792 = vrot.slane %v6790, 7
    %v6793 = vshll.u32 %v6683, 16
    %v6795 = vor.u32 %v6792, %v6793
    %v6796 = vsel %vm679, %v6784, %v6795
    %v6798 = vshrl.u32 %v6684, 16
    %v6800 = vrot.slane %v6798, 7
    %v6801 = vshll.u32 %v6684, 16
    %v6803 = vor.u32 %v6800, %v6801
    %v6804 = vsel %vm679, %v6792, %v6803
    %v6806 = vshrl.u32 %v6685, 16
    %v6808 = vrot.slane %v6806, 7
    %v6809 = vshll.u32 %v6685, 16
    %v6811 = vor.u32 %v6808, %v6809
    %v6812 = vsel %vm679, %v6800, %v6811
    %v6830 = vmul.bf16 %v6557, %v6692
    %v6831 = vmul.bf16 %v6558, %v6700
    %v6832 = vmul.bf16 %v6559, %v6708
    %v6833 = vmul.bf16 %v6560, %v6716
    %v6834 = vmul.bf16 %v6561, %v6724
    %v6835 = vmul.bf16 %v6562, %v6732
    %v6836 = vmul.bf16 %v6563, %v6740
    %v6837 = vmul.bf16 %v6564, %v6748
    %v6838 = vmul.bf16 %v6565, %v6756
    %v6839 = vmul.bf16 %v6566, %v6764
    %v6840 = vmul.bf16 %v6567, %v6772
    %v6841 = vmul.bf16 %v6568, %v6780
    %v6842 = vmul.bf16 %v6569, %v6788
    %v6843 = vmul.bf16 %v6570, %v6796
    %v6844 = vmul.bf16 %v6571, %v6804
    %v6845 = vmul.bf16 %v6572, %v6812
    %v6846 = vmul.bf16 %v6573, %v6808
    %v6848 = vshrl.u32 %v6830, 16
    %v6850 = vshll.u32 %v6830, 16
    %v6852 = vrot.slane %v6850, 1
    %v6853 = vor.u32 %v6848, %v6852
    %v6855 = vshll.u32 %v6831, 16
    %v6857 = vrot.slane %v6855, 1
    %v6858 = vsel %vm517, %v6853, %v6857
    %v6859 = vshrl.u32 %v6831, 16
    %v6861 = vor.u32 %v6859, %v6857
    %v6863 = vshll.u32 %v6832, 16
    %v6865 = vrot.slane %v6863, 1
    %v6866 = vsel %vm517, %v6861, %v6865
    %v6867 = vshrl.u32 %v6832, 16
    %v6869 = vor.u32 %v6867, %v6865
    %v6871 = vshll.u32 %v6833, 16
    %v6873 = vrot.slane %v6871, 1
    %v6874 = vsel %vm517, %v6869, %v6873
    %v6875 = vshrl.u32 %v6833, 16
    %v6877 = vor.u32 %v6875, %v6873
    %v6879 = vshll.u32 %v6834, 16
    %v6881 = vrot.slane %v6879, 1
    %v6882 = vsel %vm517, %v6877, %v6881
    %v6883 = vshrl.u32 %v6834, 16
    %v6885 = vor.u32 %v6883, %v6881
    %v6887 = vshll.u32 %v6835, 16
    %v6889 = vrot.slane %v6887, 1
    %v6890 = vsel %vm517, %v6885, %v6889
    %v6891 = vshrl.u32 %v6835, 16
    %v6893 = vor.u32 %v6891, %v6889
    %v6895 = vshll.u32 %v6836, 16
    %v6897 = vrot.slane %v6895, 1
    %v6898 = vsel %vm517, %v6893, %v6897
    %v6899 = vshrl.u32 %v6836, 16
    %v6901 = vor.u32 %v6899, %v6897
    %v6903 = vshll.u32 %v6837, 16
    %v6905 = vrot.slane %v6903, 1
    %v6906 = vsel %vm517, %v6901, %v6905
    %v6907 = vshrl.u32 %v6837, 16
    %v6909 = vor.u32 %v6907, %v6905
    %v6911 = vshll.u32 %v6838, 16
    %v6913 = vrot.slane %v6911, 1
    %v6914 = vsel %vm517, %v6909, %v6913
    %v6915 = vshrl.u32 %v6838, 16
    %v6917 = vor.u32 %v6915, %v6913
    %v6919 = vshll.u32 %v6839, 16
    %v6921 = vrot.slane %v6919, 1
    %v6922 = vsel %vm517, %v6917, %v6921
    %v6923 = vshrl.u32 %v6839, 16
    %v6925 = vor.u32 %v6923, %v6921
    %v6927 = vshll.u32 %v6840, 16
    %v6929 = vrot.slane %v6927, 1
    %v6930 = vsel %vm517, %v6925, %v6929
    %v6931 = vshrl.u32 %v6840, 16
    %v6933 = vor.u32 %v6931, %v6929
    %v6935 = vshll.u32 %v6841, 16
    %v6937 = vrot.slane %v6935, 1
    %v6938 = vsel %vm517, %v6933, %v6937
    %v6939 = vshrl.u32 %v6841, 16
    %v6941 = vor.u32 %v6939, %v6937
    %v6943 = vshll.u32 %v6842, 16
    %v6945 = vrot.slane %v6943, 1
    %v6946 = vsel %vm517, %v6941, %v6945
    %v6947 = vshrl.u32 %v6842, 16
    %v6949 = vor.u32 %v6947, %v6945
    %v6951 = vshll.u32 %v6843, 16
    %v6953 = vrot.slane %v6951, 1
    %v6954 = vsel %vm517, %v6949, %v6953
    %v6955 = vshrl.u32 %v6843, 16
    %v6957 = vor.u32 %v6955, %v6953
    %v6959 = vshll.u32 %v6844, 16
    %v6961 = vrot.slane %v6959, 1
    %v6962 = vsel %vm517, %v6957, %v6961
    %v6963 = vshrl.u32 %v6844, 16
    %v6965 = vor.u32 %v6963, %v6961
    %v6967 = vshll.u32 %v6845, 16
    %v6969 = vrot.slane %v6967, 1
    %v6970 = vsel %vm517, %v6965, %v6969
    %v6971 = vshrl.u32 %v6845, 16
    %v6973 = vor.u32 %v6971, %v6969
    %v6975 = vshll.u32 %v6846, 16
    %v6977 = vrot.slane %v6975, 1
    %v6978 = vsel %vm517, %v6973, %v6977
    %6995 = vst [vmem:[#allocation3 + $0x28] sm:$0xff] %v6858
    %6996 = vst [vmem:[#allocation3 + $0x70] sm:$0xff] %v6866
    %6997 = vst [vmem:[#allocation3 + $0xb8] sm:$0xff] %v6874
    %6998 = vst [vmem:[#allocation3 + $0x100] sm:$0xff] %v6882
    %6999 = vst [vmem:[#allocation3 + $0x148] sm:$0xff] %v6890
    %7000 = vst [vmem:[#allocation3 + $0x190] sm:$0xff] %v6898
    %7001 = vst [vmem:[#allocation3 + $0x1d8] sm:$0xff] %v6906
    %7002 = vst [vmem:[#allocation3 + $0x220] sm:$0xff] %v6914
    %7003 = vst [vmem:[#allocation3 + $0x268] sm:$0xff] %v6922
    %7004 = vst [vmem:[#allocation3 + $0x2b0] sm:$0xff] %v6930
    %7005 = vst [vmem:[#allocation3 + $0x2f8] sm:$0xff] %v6938
    %7006 = vst [vmem:[#allocation3 + $0x340] sm:$0xff] %v6946
    %7007 = vst [vmem:[#allocation3 + $0x388] sm:$0xff] %v6954
    %7008 = vst [vmem:[#allocation3 + $0x3d0] sm:$0xff] %v6962
    %7009 = vst [vmem:[#allocation3 + $0x418] sm:$0xff] %v6970
    %7010 = vst [vmem:[#allocation3 + $0x460] sm:$0xff] %v6978
    %v7011 = vld [vmem:[#allocation2 + $0x10] sm:$0x80]
    %v7012 = vld [vmem:[#allocation2 + $0x18] sm:$0xff]
    %v7013 = vld [vmem:[#allocation2 + $0x20] sm:$0xff]
    %v7014 = vld [vmem:[#allocation2 + $0x28] sm:$0xff]
    %v7015 = vld [vmem:[#allocation2 + $0x30] sm:$0xff]
    %v7016 = vld [vmem:[#allocation2 + $0x38] sm:$0xff]
    %v7017 = vld [vmem:[#allocation2 + $0x40] sm:$0xff]
    %v7018 = vld [vmem:[#allocation2 + $0x48] sm:$0xff]
    %v7019 = vld [vmem:[#allocation2 + $0x50] sm:$0xff]
    %v7020 = vld [vmem:[#allocation2 + $0x58] sm:$0xff]
    %v7021 = vld [vmem:[#allocation2 + $0x60] sm:$0xff]
    %v7022 = vld [vmem:[#allocation2 + $0x68] sm:$0xff]
    %v7023 = vld [vmem:[#allocation2 + $0x70] sm:$0xff]
    %v7024 = vld [vmem:[#allocation2 + $0x78] sm:$0xff]
    %v7025 = vld [vmem:[#allocation2 + $0x80] sm:$0xff]
    %v7026 = vld [vmem:[#allocation2 + $0x88] sm:$0xff]
    %v7027 = vld [vmem:[#allocation2 + $0x90] sm:$0xff]
    %v7028 = vld [vmem:[#allocation9] sm:$0xf]
    %v7029 = vld [vmem:[#allocation9 + $0x4] sm:$0xf]
    %v7030 = vld [vmem:[#allocation9 + $0x8] sm:$0xf]
    %v7031 = vld [vmem:[#allocation9 + $0xc] sm:$0xf]
    %v7032 = vld [vmem:[#allocation9 + $0x10] sm:$0xf]
    %v7033 = vld [vmem:[#allocation9 + $0x14] sm:$0xf]
    %v7034 = vld [vmem:[#allocation9 + $0x18] sm:$0xf]
    %v7035 = vld [vmem:[#allocation9 + $0x1c] sm:$0xf]
    %v7036 = vld [vmem:[#allocation9 + $0x20] sm:$0xf]
    %v7037 = vld [vmem:[#allocation9 + $0x24] sm:$0xf]
    %v7038 = vld [vmem:[#allocation9 + $0x28] sm:$0xf]
    %v7039 = vld [vmem:[#allocation9 + $0x2c] sm:$0xf]
    %v7040 = vld [vmem:[#allocation9 + $0x30] sm:$0xf]
    %v7041 = vld [vmem:[#allocation9 + $0x34] sm:$0xf]
    %v7042 = vld [vmem:[#allocation9 + $0x38] sm:$0xf]
    %v7043 = vld [vmem:[#allocation9 + $0x3c] sm:$0xf]
    %v7044 = vld [vmem:[#allocation9 + $0x40] sm:$0xf]
    %v7045 = vld [vmem:[#allocation9 + $0x44] sm:$0xf]
    %v7046 = vld [vmem:[#allocation9 + $0x48] sm:$0xf]
    %v7047 = vld [vmem:[#allocation9 + $0x4c] sm:$0xf]
    %v7048 = vld [vmem:[#allocation9 + $0x50] sm:$0xf]
    %v7049 = vld [vmem:[#allocation9 + $0x54] sm:$0xf]
    %v7050 = vld [vmem:[#allocation9 + $0x58] sm:$0xf]
    %v7051 = vld [vmem:[#allocation9 + $0x5c] sm:$0xf]
    %v7052 = vld [vmem:[#allocation9 + $0x60] sm:$0xf]
    %v7053 = vld [vmem:[#allocation9 + $0x64] sm:$0xf]
    %v7054 = vld [vmem:[#allocation9 + $0x68] sm:$0xf]
    %v7055 = vld [vmem:[#allocation9 + $0x6c] sm:$0xf]
    %v7056 = vld [vmem:[#allocation9 + $0x70] sm:$0xf]
    %v7057 = vld [vmem:[#allocation9 + $0x74] sm:$0xf]
    %v7058 = vld [vmem:[#allocation9 + $0x78] sm:$0xf]
    %v7059 = vld [vmem:[#allocation9 + $0x7c] sm:$0xf]
    %v7092 = vunpack.c.l.b16 %v7028
    %v7093 = vunpack.c.l.b16 %v7029
    %v7094 = vunpack.c.l.b16 %v7030
    %v7095 = vunpack.c.l.b16 %v7031
    %v7096 = vunpack.c.l.b16 %v7032
    %v7097 = vunpack.c.l.b16 %v7033
    %v7098 = vunpack.c.l.b16 %v7034
    %v7099 = vunpack.c.l.b16 %v7035
    %v7100 = vunpack.c.l.b16 %v7036
    %v7101 = vunpack.c.l.b16 %v7037
    %v7102 = vunpack.c.l.b16 %v7038
    %v7103 = vunpack.c.l.b16 %v7039
    %v7104 = vunpack.c.l.b16 %v7040
    %v7105 = vunpack.c.l.b16 %v7041
    %v7106 = vunpack.c.l.b16 %v7042
    %v7107 = vunpack.c.l.b16 %v7043
    %v7108 = vunpack.c.l.b16 %v7044
    %v7109 = vunpack.c.l.b16 %v7045
    %v7110 = vunpack.c.l.b16 %v7046
    %v7111 = vunpack.c.l.b16 %v7047
    %v7112 = vunpack.c.l.b16 %v7048
    %v7113 = vunpack.c.l.b16 %v7049
    %v7114 = vunpack.c.l.b16 %v7050
    %v7115 = vunpack.c.l.b16 %v7051
    %v7116 = vunpack.c.l.b16 %v7052
    %v7117 = vunpack.c.l.b16 %v7053
    %v7118 = vunpack.c.l.b16 %v7054
    %v7119 = vunpack.c.l.b16 %v7055
    %v7120 = vunpack.c.l.b16 %v7056
    %v7121 = vunpack.c.l.b16 %v7057
    %v7122 = vunpack.c.l.b16 %v7058
    %v7123 = vunpack.c.l.b16 %v7059
    %v7124 = vpack.c.b16 %v7093, %v7092
    %v7125 = vpack.c.b16 %v7095, %v7094
    %v7126 = vpack.c.b16 %v7097, %v7096
    %v7127 = vpack.c.b16 %v7099, %v7098
    %v7128 = vpack.c.b16 %v7101, %v7100
    %v7129 = vpack.c.b16 %v7103, %v7102
    %v7130 = vpack.c.b16 %v7105, %v7104
    %v7131 = vpack.c.b16 %v7107, %v7106
    %v7132 = vpack.c.b16 %v7109, %v7108
    %v7133 = vpack.c.b16 %v7111, %v7110
    %v7134 = vpack.c.b16 %v7113, %v7112
    %v7135 = vpack.c.b16 %v7115, %v7114
    %v7136 = vpack.c.b16 %v7117, %v7116
    %v7137 = vpack.c.b16 %v7119, %v7118
    %v7138 = vpack.c.b16 %v7121, %v7120
    %v7139 = vpack.c.b16 %v7123, %v7122
    %v7141 = vshll.u32 %v7124, 16
    %v7143 = vrot.slane %v7141, 1
    %v7144 = vshrl.u32 %v7124, 16
    %v7146 = vor.u32 %v7144, %v7143
    %v7148 = vshll.u32 %v7125, 16
    %v7150 = vrot.slane %v7148, 1
    %v7151 = vsel %vm517, %v7146, %v7150
    %v7152 = vshrl.u32 %v7125, 16
    %v7154 = vor.u32 %v7152, %v7150
    %v7156 = vshll.u32 %v7126, 16
    %v7158 = vrot.slane %v7156, 1
    %v7159 = vsel %vm517, %v7154, %v7158
    %v7160 = vshrl.u32 %v7126, 16
    %v7162 = vor.u32 %v7160, %v7158
    %v7164 = vshll.u32 %v7127, 16
    %v7166 = vrot.slane %v7164, 1
    %v7167 = vsel %vm517, %v7162, %v7166
    %v7168 = vshrl.u32 %v7127, 16
    %v7170 = vor.u32 %v7168, %v7166
    %v7172 = vshll.u32 %v7128, 16
    %v7174 = vrot.slane %v7172, 1
    %v7175 = vsel %vm517, %v7170, %v7174
    %v7176 = vshrl.u32 %v7128, 16
    %v7178 = vor.u32 %v7176, %v7174
    %v7180 = vshll.u32 %v7129, 16
    %v7182 = vrot.slane %v7180, 1
    %v7183 = vsel %vm517, %v7178, %v7182
    %v7184 = vshrl.u32 %v7129, 16
    %v7186 = vor.u32 %v7184, %v7182
    %v7188 = vshll.u32 %v7130, 16
    %v7190 = vrot.slane %v7188, 1
    %v7191 = vsel %vm517, %v7186, %v7190
    %v7192 = vshrl.u32 %v7130, 16
    %v7194 = vor.u32 %v7192, %v7190
    %v7196 = vshll.u32 %v7131, 16
    %v7198 = vrot.slane %v7196, 1
    %v7199 = vsel %vm517, %v7194, %v7198
    %v7200 = vshrl.u32 %v7131, 16
    %v7202 = vor.u32 %v7200, %v7198
    %v7204 = vshll.u32 %v7132, 16
    %v7206 = vrot.slane %v7204, 1
    %v7207 = vsel %vm517, %v7202, %v7206
    %v7208 = vshrl.u32 %v7132, 16
    %v7210 = vor.u32 %v7208, %v7206
    %v7212 = vshll.u32 %v7133, 16
    %v7214 = vrot.slane %v7212, 1
    %v7215 = vsel %vm517, %v7210, %v7214
    %v7216 = vshrl.u32 %v7133, 16
    %v7218 = vor.u32 %v7216, %v7214
    %v7220 = vshll.u32 %v7134, 16
    %v7222 = vrot.slane %v7220, 1
    %v7223 = vsel %vm517, %v7218, %v7222
    %v7224 = vshrl.u32 %v7134, 16
    %v7226 = vor.u32 %v7224, %v7222
    %v7228 = vshll.u32 %v7135, 16
    %v7230 = vrot.slane %v7228, 1
    %v7231 = vsel %vm517, %v7226, %v7230
    %v7232 = vshrl.u32 %v7135, 16
    %v7234 = vor.u32 %v7232, %v7230
    %v7236 = vshll.u32 %v7136, 16
    %v7238 = vrot.slane %v7236, 1
    %v7239 = vsel %vm517, %v7234, %v7238
    %v7240 = vshrl.u32 %v7136, 16
    %v7242 = vor.u32 %v7240, %v7238
    %v7244 = vshll.u32 %v7137, 16
    %v7246 = vrot.slane %v7244, 1
    %v7247 = vsel %vm517, %v7242, %v7246
    %v7248 = vshrl.u32 %v7137, 16
    %v7250 = vor.u32 %v7248, %v7246
    %v7252 = vshll.u32 %v7138, 16
    %v7254 = vrot.slane %v7252, 1
    %v7255 = vsel %vm517, %v7250, %v7254
    %v7256 = vshrl.u32 %v7138, 16
    %v7258 = vor.u32 %v7256, %v7254
    %v7260 = vshll.u32 %v7139, 16
    %v7262 = vrot.slane %v7260, 1
    %v7263 = vsel %vm517, %v7258, %v7262
    %v7264 = vshrl.u32 %v7139, 16
    %v7266 = vor.u32 %v7264, %v7262
    %v7284 = vmul.bf16 %v7011, %v7143
    %v7285 = vmul.bf16 %v7012, %v7151
    %v7286 = vmul.bf16 %v7013, %v7159
    %v7287 = vmul.bf16 %v7014, %v7167
    %v7288 = vmul.bf16 %v7015, %v7175
    %v7289 = vmul.bf16 %v7016, %v7183
    %v7290 = vmul.bf16 %v7017, %v7191
    %v7291 = vmul.bf16 %v7018, %v7199
    %v7292 = vmul.bf16 %v7019, %v7207
    %v7293 = vmul.bf16 %v7020, %v7215
    %v7294 = vmul.bf16 %v7021, %v7223
    %v7295 = vmul.bf16 %v7022, %v7231
    %v7296 = vmul.bf16 %v7023, %v7239
    %v7297 = vmul.bf16 %v7024, %v7247
    %v7298 = vmul.bf16 %v7025, %v7255
    %v7299 = vmul.bf16 %v7026, %v7263
    %v7300 = vmul.bf16 %v7027, %v7266
    %v7302 = vshrl.u32 %v7284, 16
    %v7304 = vrot.slane %v7302, 7
    %v7306 = vshrl.u32 %v7285, 16
    %v7308 = vrot.slane %v7306, 7
    %v7309 = vshll.u32 %v7285, 16
    %v7311 = vor.u32 %v7308, %v7309
    %v7312 = vsel %vm679, %v7304, %v7311
    %v7314 = vshrl.u32 %v7286, 16
    %v7316 = vrot.slane %v7314, 7
    %v7317 = vshll.u32 %v7286, 16
    %v7319 = vor.u32 %v7316, %v7317
    %v7320 = vsel %vm679, %v7308, %v7319
    %v7322 = vshrl.u32 %v7287, 16
    %v7324 = vrot.slane %v7322, 7
    %v7325 = vshll.u32 %v7287, 16
    %v7327 = vor.u32 %v7324, %v7325
    %v7328 = vsel %vm679, %v7316, %v7327
    %v7330 = vshrl.u32 %v7288, 16
    %v7332 = vrot.slane %v7330, 7
    %v7333 = vshll.u32 %v7288, 16
    %v7335 = vor.u32 %v7332, %v7333
    %v7336 = vsel %vm679, %v7324, %v7335
    %v7338 = vshrl.u32 %v7289, 16
    %v7340 = vrot.slane %v7338, 7
    %v7341 = vshll.u32 %v7289, 16
    %v7343 = vor.u32 %v7340, %v7341
    %v7344 = vsel %vm679, %v7332, %v7343
    %v7346 = vshrl.u32 %v7290, 16
    %v7348 = vrot.slane %v7346, 7
    %v7349 = vshll.u32 %v7290, 16
    %v7351 = vor.u32 %v7348, %v7349
    %v7352 = vsel %vm679, %v7340, %v7351
    %v7354 = vshrl.u32 %v7291, 16
    %v7356 = vrot.slane %v7354, 7
    %v7357 = vshll.u32 %v7291, 16
    %v7359 = vor.u32 %v7356, %v7357
    %v7360 = vsel %vm679, %v7348, %v7359
    %v7362 = vshrl.u32 %v7292, 16
    %v7364 = vrot.slane %v7362, 7
    %v7365 = vshll.u32 %v7292, 16
    %v7367 = vor.u32 %v7364, %v7365
    %v7368 = vsel %vm679, %v7356, %v7367
    %v7370 = vshrl.u32 %v7293, 16
    %v7372 = vrot.slane %v7370, 7
    %v7373 = vshll.u32 %v7293, 16
    %v7375 = vor.u32 %v7372, %v7373
    %v7376 = vsel %vm679, %v7364, %v7375
    %v7378 = vshrl.u32 %v7294, 16
    %v7380 = vrot.slane %v7378, 7
    %v7381 = vshll.u32 %v7294, 16
    %v7383 = vor.u32 %v7380, %v7381
    %v7384 = vsel %vm679, %v7372, %v7383
    %v7386 = vshrl.u32 %v7295, 16
    %v7388 = vrot.slane %v7386, 7
    %v7389 = vshll.u32 %v7295, 16
    %v7391 = vor.u32 %v7388, %v7389
    %v7392 = vsel %vm679, %v7380, %v7391
    %v7394 = vshrl.u32 %v7296, 16
    %v7396 = vrot.slane %v7394, 7
    %v7397 = vshll.u32 %v7296, 16
    %v7399 = vor.u32 %v7396, %v7397
    %v7400 = vsel %vm679, %v7388, %v7399
    %v7402 = vshrl.u32 %v7297, 16
    %v7404 = vrot.slane %v7402, 7
    %v7405 = vshll.u32 %v7297, 16
    %v7407 = vor.u32 %v7404, %v7405
    %v7408 = vsel %vm679, %v7396, %v7407
    %v7410 = vshrl.u32 %v7298, 16
    %v7412 = vrot.slane %v7410, 7
    %v7413 = vshll.u32 %v7298, 16
    %v7415 = vor.u32 %v7412, %v7413
    %v7416 = vsel %vm679, %v7404, %v7415
    %v7418 = vshrl.u32 %v7299, 16
    %v7420 = vrot.slane %v7418, 7
    %v7421 = vshll.u32 %v7299, 16
    %v7423 = vor.u32 %v7420, %v7421
    %v7424 = vsel %vm679, %v7412, %v7423
    %v7426 = vshrl.u32 %v7300, 16
    %v7428 = vrot.slane %v7426, 7
    %v7429 = vshll.u32 %v7300, 16
    %v7431 = vor.u32 %v7428, %v7429
    %v7432 = vsel %vm679, %v7420, %v7431
    %7449 = vst [vmem:[#allocation3 + $0x30] sm:$0xff] %v7312
    %7450 = vst [vmem:[#allocation3 + $0x78] sm:$0xff] %v7320
    %7451 = vst [vmem:[#allocation3 + $0xc0] sm:$0xff] %v7328
    %7452 = vst [vmem:[#allocation3 + $0x108] sm:$0xff] %v7336
    %7453 = vst [vmem:[#allocation3 + $0x150] sm:$0xff] %v7344
    %7454 = vst [vmem:[#allocation3 + $0x198] sm:$0xff] %v7352
    %7455 = vst [vmem:[#allocation3 + $0x1e0] sm:$0xff] %v7360
    %7456 = vst [vmem:[#allocation3 + $0x228] sm:$0xff] %v7368
    %7457 = vst [vmem:[#allocation3 + $0x270] sm:$0xff] %v7376
    %7458 = vst [vmem:[#allocation3 + $0x2b8] sm:$0xff] %v7384
    %7459 = vst [vmem:[#allocation3 + $0x300] sm:$0xff] %v7392
    %7460 = vst [vmem:[#allocation3 + $0x348] sm:$0xff] %v7400
    %7461 = vst [vmem:[#allocation3 + $0x390] sm:$0xff] %v7408
    %7462 = vst [vmem:[#allocation3 + $0x3d8] sm:$0xff] %v7416
    %7463 = vst [vmem:[#allocation3 + $0x420] sm:$0xff] %v7424
    %7464 = vst [vmem:[#allocation3 + $0x468] sm:$0xff] %v7432
    %v7465 = vld [vmem:[#allocation2 + $0x18] sm:$0xff]
    %v7466 = vld [vmem:[#allocation2 + $0x20] sm:$0xff]
    %v7467 = vld [vmem:[#allocation2 + $0x28] sm:$0xff]
    %v7468 = vld [vmem:[#allocation2 + $0x30] sm:$0xff]
    %v7469 = vld [vmem:[#allocation2 + $0x38] sm:$0xff]
    %v7470 = vld [vmem:[#allocation2 + $0x40] sm:$0xff]
    %v7471 = vld [vmem:[#allocation2 + $0x48] sm:$0xff]
    %v7472 = vld [vmem:[#allocation2 + $0x50] sm:$0xff]
    %v7473 = vld [vmem:[#allocation2 + $0x58] sm:$0xff]
    %v7474 = vld [vmem:[#allocation2 + $0x60] sm:$0xff]
    %v7475 = vld [vmem:[#allocation2 + $0x68] sm:$0xff]
    %v7476 = vld [vmem:[#allocation2 + $0x70] sm:$0xff]
    %v7477 = vld [vmem:[#allocation2 + $0x78] sm:$0xff]
    %v7478 = vld [vmem:[#allocation2 + $0x80] sm:$0xff]
    %v7479 = vld [vmem:[#allocation2 + $0x88] sm:$0xff]
    %v7480 = vld [vmem:[#allocation2 + $0x90] sm:$0xff]
    %7481 = vst [vmem:[#allocation3 + $0x38] sm:$0xff] %v7465
    %7482 = vst [vmem:[#allocation3 + $0x80] sm:$0xff] %v7466
    %7483 = vst [vmem:[#allocation3 + $0xc8] sm:$0xff] %v7467
    %7484 = vst [vmem:[#allocation3 + $0x110] sm:$0xff] %v7468
    %7485 = vst [vmem:[#allocation3 + $0x158] sm:$0xff] %v7469
    %7486 = vst [vmem:[#allocation3 + $0x1a0] sm:$0xff] %v7470
    %7487 = vst [vmem:[#allocation3 + $0x1e8] sm:$0xff] %v7471
    %7488 = vst [vmem:[#allocation3 + $0x230] sm:$0xff] %v7472
    %7489 = vst [vmem:[#allocation3 + $0x278] sm:$0xff] %v7473
    %7490 = vst [vmem:[#allocation3 + $0x2c0] sm:$0xff] %v7474
    %7491 = vst [vmem:[#allocation3 + $0x308] sm:$0xff] %v7475
    %7492 = vst [vmem:[#allocation3 + $0x350] sm:$0xff] %v7476
    %7493 = vst [vmem:[#allocation3 + $0x398] sm:$0xff] %v7477
    %7494 = vst [vmem:[#allocation3 + $0x3e0] sm:$0xff] %v7478
    %7495 = vst [vmem:[#allocation3 + $0x428] sm:$0xff] %v7479
    %7496 = vst [vmem:[#allocation3 + $0x470] sm:$0xff] %v7480
    %v7497 = vld [vmem:[#allocation2 + $0x18] sm:$0xff]
    %v7498 = vld [vmem:[#allocation2 + $0x20] sm:$0xff]
    %v7499 = vld [vmem:[#allocation2 + $0x28] sm:$0xff]
    %v7500 = vld [vmem:[#allocation2 + $0x30] sm:$0xff]
    %v7501 = vld [vmem:[#allocation2 + $0x38] sm:$0xff]
    %v7502 = vld [vmem:[#allocation2 + $0x40] sm:$0xff]
    %v7503 = vld [vmem:[#allocation2 + $0x48] sm:$0xff]
    %v7504 = vld [vmem:[#allocation2 + $0x50] sm:$0xff]
    %v7505 = vld [vmem:[#allocation2 + $0x58] sm:$0xff]
    %v7506 = vld [vmem:[#allocation2 + $0x60] sm:$0xff]
    %v7507 = vld [vmem:[#allocation2 + $0x68] sm:$0xff]
    %v7508 = vld [vmem:[#allocation2 + $0x70] sm:$0xff]
    %v7509 = vld [vmem:[#allocation2 + $0x78] sm:$0xff]
    %v7510 = vld [vmem:[#allocation2 + $0x80] sm:$0xff]
    %v7511 = vld [vmem:[#allocation2 + $0x88] sm:$0xff]
    %v7512 = vld [vmem:[#allocation2 + $0x90] sm:$0xff]
    %v7513 = vld [vmem:[#allocation2 + $0x98] sm:$0x1]
    %v7514 = vld [vmem:[#allocation10] sm:$0xf]
    %v7515 = vld [vmem:[#allocation10 + $0x4] sm:$0xf]
    %v7516 = vld [vmem:[#allocation10 + $0x8] sm:$0xf]
    %v7517 = vld [vmem:[#allocation10 + $0xc] sm:$0xf]
    %v7518 = vld [vmem:[#allocation10 + $0x10] sm:$0xf]
    %v7519 = vld [vmem:[#allocation10 + $0x14] sm:$0xf]
    %v7520 = vld [vmem:[#allocation10 + $0x18] sm:$0xf]
    %v7521 = vld [vmem:[#allocation10 + $0x1c] sm:$0xf]
    %v7522 = vld [vmem:[#allocation10 + $0x20] sm:$0xf]
    %v7523 = vld [vmem:[#allocation10 + $0x24] sm:$0xf]
    %v7524 = vld [vmem:[#allocation10 + $0x28] sm:$0xf]
    %v7525 = vld [vmem:[#allocation10 + $0x2c] sm:$0xf]
    %v7526 = vld [vmem:[#allocation10 + $0x30] sm:$0xf]
    %v7527 = vld [vmem:[#allocation10 + $0x34] sm:$0xf]
    %v7528 = vld [vmem:[#allocation10 + $0x38] sm:$0xf]
    %v7529 = vld [vmem:[#allocation10 + $0x3c] sm:$0xf]
    %v7530 = vld [vmem:[#allocation10 + $0x40] sm:$0xf]
    %v7531 = vld [vmem:[#allocation10 + $0x44] sm:$0xf]
    %v7532 = vld [vmem:[#allocation10 + $0x48] sm:$0xf]
    %v7533 = vld [vmem:[#allocation10 + $0x4c] sm:$0xf]
    %v7534 = vld [vmem:[#allocation10 + $0x50] sm:$0xf]
    %v7535 = vld [vmem:[#allocation10 + $0x54] sm:$0xf]
    %v7536 = vld [vmem:[#allocation10 + $0x58] sm:$0xf]
    %v7537 = vld [vmem:[#allocation10 + $0x5c] sm:$0xf]
    %v7538 = vld [vmem:[#allocation10 + $0x60] sm:$0xf]
    %v7539 = vld [vmem:[#allocation10 + $0x64] sm:$0xf]
    %v7540 = vld [vmem:[#allocation10 + $0x68] sm:$0xf]
    %v7541 = vld [vmem:[#allocation10 + $0x6c] sm:$0xf]
    %v7542 = vld [vmem:[#allocation10 + $0x70] sm:$0xf]
    %v7543 = vld [vmem:[#allocation10 + $0x74] sm:$0xf]
    %v7544 = vld [vmem:[#allocation10 + $0x78] sm:$0xf]
    %v7545 = vld [vmem:[#allocation10 + $0x7c] sm:$0xf]
    %v7578 = vunpack.c.l.b16 %v7514
    %v7579 = vunpack.c.l.b16 %v7515
    %v7580 = vunpack.c.l.b16 %v7516
    %v7581 = vunpack.c.l.b16 %v7517
    %v7582 = vunpack.c.l.b16 %v7518
    %v7583 = vunpack.c.l.b16 %v7519
    %v7584 = vunpack.c.l.b16 %v7520
    %v7585 = vunpack.c.l.b16 %v7521
    %v7586 = vunpack.c.l.b16 %v7522
    %v7587 = vunpack.c.l.b16 %v7523
    %v7588 = vunpack.c.l.b16 %v7524
    %v7589 = vunpack.c.l.b16 %v7525
    %v7590 = vunpack.c.l.b16 %v7526
    %v7591 = vunpack.c.l.b16 %v7527
    %v7592 = vunpack.c.l.b16 %v7528
    %v7593 = vunpack.c.l.b16 %v7529
    %v7594 = vunpack.c.l.b16 %v7530
    %v7595 = vunpack.c.l.b16 %v7531
    %v7596 = vunpack.c.l.b16 %v7532
    %v7597 = vunpack.c.l.b16 %v7533
    %v7598 = vunpack.c.l.b16 %v7534
    %v7599 = vunpack.c.l.b16 %v7535
    %v7600 = vunpack.c.l.b16 %v7536
    %v7601 = vunpack.c.l.b16 %v7537
    %v7602 = vunpack.c.l.b16 %v7538
    %v7603 = vunpack.c.l.b16 %v7539
    %v7604 = vunpack.c.l.b16 %v7540
    %v7605 = vunpack.c.l.b16 %v7541
    %v7606 = vunpack.c.l.b16 %v7542
    %v7607 = vunpack.c.l.b16 %v7543
    %v7608 = vunpack.c.l.b16 %v7544
    %v7609 = vunpack.c.l.b16 %v7545
    %v7610 = vpack.c.b16 %v7579, %v7578
    %v7611 = vpack.c.b16 %v7581, %v7580
    %v7612 = vpack.c.b16 %v7583, %v7582
    %v7613 = vpack.c.b16 %v7585, %v7584
    %v7614 = vpack.c.b16 %v7587, %v7586
    %v7615 = vpack.c.b16 %v7589, %v7588
    %v7616 = vpack.c.b16 %v7591, %v7590
    %v7617 = vpack.c.b16 %v7593, %v7592
    %v7618 = vpack.c.b16 %v7595, %v7594
    %v7619 = vpack.c.b16 %v7597, %v7596
    %v7620 = vpack.c.b16 %v7599, %v7598
    %v7621 = vpack.c.b16 %v7601, %v7600
    %v7622 = vpack.c.b16 %v7603, %v7602
    %v7623 = vpack.c.b16 %v7605, %v7604
    %v7624 = vpack.c.b16 %v7607, %v7606
    %v7625 = vpack.c.b16 %v7609, %v7608
    %v7627 = vshrl.u32 %v7610, 16
    %v7629 = vrot.slane %v7627, 7
    %v7630 = vshll.u32 %v7610, 16
    %v7632 = vor.u32 %v7629, %v7630
    %v7634 = vshrl.u32 %v7611, 16
    %v7636 = vrot.slane %v7634, 7
    %v7637 = vshll.u32 %v7611, 16
    %v7639 = vor.u32 %v7636, %v7637
    %v7640 = vsel %vm679, %v7629, %v7639
    %v7642 = vshrl.u32 %v7612, 16
    %v7644 = vrot.slane %v7642, 7
    %v7645 = vshll.u32 %v7612, 16
    %v7647 = vor.u32 %v7644, %v7645
    %v7648 = vsel %vm679, %v7636, %v7647
    %v7650 = vshrl.u32 %v7613, 16
    %v7652 = vrot.slane %v7650, 7
    %v7653 = vshll.u32 %v7613, 16
    %v7655 = vor.u32 %v7652, %v7653
    %v7656 = vsel %vm679, %v7644, %v7655
    %v7658 = vshrl.u32 %v7614, 16
    %v7660 = vrot.slane %v7658, 7
    %v7661 = vshll.u32 %v7614, 16
    %v7663 = vor.u32 %v7660, %v7661
    %v7664 = vsel %vm679, %v7652, %v7663
    %v7666 = vshrl.u32 %v7615, 16
    %v7668 = vrot.slane %v7666, 7
    %v7669 = vshll.u32 %v7615, 16
    %v7671 = vor.u32 %v7668, %v7669
    %v7672 = vsel %vm679, %v7660, %v7671
    %v7674 = vshrl.u32 %v7616, 16
    %v7676 = vrot.slane %v7674, 7
    %v7677 = vshll.u32 %v7616, 16
    %v7679 = vor.u32 %v7676, %v7677
    %v7680 = vsel %vm679, %v7668, %v7679
    %v7682 = vshrl.u32 %v7617, 16
    %v7684 = vrot.slane %v7682, 7
    %v7685 = vshll.u32 %v7617, 16
    %v7687 = vor.u32 %v7684, %v7685
    %v7688 = vsel %vm679, %v7676, %v7687
    %v7690 = vshrl.u32 %v7618, 16
    %v7692 = vrot.slane %v7690, 7
    %v7693 = vshll.u32 %v7618, 16
    %v7695 = vor.u32 %v7692, %v7693
    %v7696 = vsel %vm679, %v7684, %v7695
    %v7698 = vshrl.u32 %v7619, 16
    %v7700 = vrot.slane %v7698, 7
    %v7701 = vshll.u32 %v7619, 16
    %v7703 = vor.u32 %v7700, %v7701
    %v7704 = vsel %vm679, %v7692, %v7703
    %v7706 = vshrl.u32 %v7620, 16
    %v7708 = vrot.slane %v7706, 7
    %v7709 = vshll.u32 %v7620, 16
    %v7711 = vor.u32 %v7708, %v7709
    %v7712 = vsel %vm679, %v7700, %v7711
    %v7714 = vshrl.u32 %v7621, 16
    %v7716 = vrot.slane %v7714, 7
    %v7717 = vshll.u32 %v7621, 16
    %v7719 = vor.u32 %v7716, %v7717
    %v7720 = vsel %vm679, %v7708, %v7719
    %v7722 = vshrl.u32 %v7622, 16
    %v7724 = vrot.slane %v7722, 7
    %v7725 = vshll.u32 %v7622, 16
    %v7727 = vor.u32 %v7724, %v7725
    %v7728 = vsel %vm679, %v7716, %v7727
    %v7730 = vshrl.u32 %v7623, 16
    %v7732 = vrot.slane %v7730, 7
    %v7733 = vshll.u32 %v7623, 16
    %v7735 = vor.u32 %v7732, %v7733
    %v7736 = vsel %vm679, %v7724, %v7735
    %v7738 = vshrl.u32 %v7624, 16
    %v7740 = vrot.slane %v7738, 7
    %v7741 = vshll.u32 %v7624, 16
    %v7743 = vor.u32 %v7740, %v7741
    %v7744 = vsel %vm679, %v7732, %v7743
    %v7746 = vshrl.u32 %v7625, 16
    %v7748 = vrot.slane %v7746, 7
    %v7749 = vshll.u32 %v7625, 16
    %v7751 = vor.u32 %v7748, %v7749
    %v7752 = vsel %vm679, %v7740, %v7751
    %v7770 = vmul.bf16 %v7497, %v7632
    %v7771 = vmul.bf16 %v7498, %v7640
    %v7772 = vmul.bf16 %v7499, %v7648
    %v7773 = vmul.bf16 %v7500, %v7656
    %v7774 = vmul.bf16 %v7501, %v7664
    %v7775 = vmul.bf16 %v7502, %v7672
    %v7776 = vmul.bf16 %v7503, %v7680
    %v7777 = vmul.bf16 %v7504, %v7688
    %v7778 = vmul.bf16 %v7505, %v7696
    %v7779 = vmul.bf16 %v7506, %v7704
    %v7780 = vmul.bf16 %v7507, %v7712
    %v7781 = vmul.bf16 %v7508, %v7720
    %v7782 = vmul.bf16 %v7509, %v7728
    %v7783 = vmul.bf16 %v7510, %v7736
    %v7784 = vmul.bf16 %v7511, %v7744
    %v7785 = vmul.bf16 %v7512, %v7752
    %v7786 = vmul.bf16 %v7513, %v7748
    %v7788 = vshrl.u32 %v7770, 16
    %v7790 = vshll.u32 %v7770, 16
    %v7792 = vrot.slane %v7790, 1
    %v7793 = vor.u32 %v7788, %v7792
    %v7795 = vshll.u32 %v7771, 16
    %v7797 = vrot.slane %v7795, 1
    %v7798 = vsel %vm517, %v7793, %v7797
    %v7799 = vshrl.u32 %v7771, 16
    %v7801 = vor.u32 %v7799, %v7797
    %v7803 = vshll.u32 %v7772, 16
    %v7805 = vrot.slane %v7803, 1
    %v7806 = vsel %vm517, %v7801, %v7805
    %v7807 = vshrl.u32 %v7772, 16
    %v7809 = vor.u32 %v7807, %v7805
    %v7811 = vshll.u32 %v7773, 16
    %v7813 = vrot.slane %v7811, 1
    %v7814 = vsel %vm517, %v7809, %v7813
    %v7815 = vshrl.u32 %v7773, 16
    %v7817 = vor.u32 %v7815, %v7813
    %v7819 = vshll.u32 %v7774, 16
    %v7821 = vrot.slane %v7819, 1
    %v7822 = vsel %vm517, %v7817, %v7821
    %v7823 = vshrl.u32 %v7774, 16
    %v7825 = vor.u32 %v7823, %v7821
    %v7827 = vshll.u32 %v7775, 16
    %v7829 = vrot.slane %v7827, 1
    %v7830 = vsel %vm517, %v7825, %v7829
    %v7831 = vshrl.u32 %v7775, 16
    %v7833 = vor.u32 %v7831, %v7829
    %v7835 = vshll.u32 %v7776, 16
    %v7837 = vrot.slane %v7835, 1
    %v7838 = vsel %vm517, %v7833, %v7837
    %v7839 = vshrl.u32 %v7776, 16
    %v7841 = vor.u32 %v7839, %v7837
    %v7843 = vshll.u32 %v7777, 16
    %v7845 = vrot.slane %v7843, 1
    %v7846 = vsel %vm517, %v7841, %v7845
    %v7847 = vshrl.u32 %v7777, 16
    %v7849 = vor.u32 %v7847, %v7845
    %v7851 = vshll.u32 %v7778, 16
    %v7853 = vrot.slane %v7851, 1
    %v7854 = vsel %vm517, %v7849, %v7853
    %v7855 = vshrl.u32 %v7778, 16
    %v7857 = vor.u32 %v7855, %v7853
    %v7859 = vshll.u32 %v7779, 16
    %v7861 = vrot.slane %v7859, 1
    %v7862 = vsel %vm517, %v7857, %v7861
    %v7863 = vshrl.u32 %v7779, 16
    %v7865 = vor.u32 %v7863, %v7861
    %v7867 = vshll.u32 %v7780, 16
    %v7869 = vrot.slane %v7867, 1
    %v7870 = vsel %vm517, %v7865, %v7869
    %v7871 = vshrl.u32 %v7780, 16
    %v7873 = vor.u32 %v7871, %v7869
    %v7875 = vshll.u32 %v7781, 16
    %v7877 = vrot.slane %v7875, 1
    %v7878 = vsel %vm517, %v7873, %v7877
    %v7879 = vshrl.u32 %v7781, 16
    %v7881 = vor.u32 %v7879, %v7877
    %v7883 = vshll.u32 %v7782, 16
    %v7885 = vrot.slane %v7883, 1
    %v7886 = vsel %vm517, %v7881, %v7885
    %v7887 = vshrl.u32 %v7782, 16
    %v7889 = vor.u32 %v7887, %v7885
    %v7891 = vshll.u32 %v7783, 16
    %v7893 = vrot.slane %v7891, 1
    %v7894 = vsel %vm517, %v7889, %v7893
    %v7895 = vshrl.u32 %v7783, 16
    %v7897 = vor.u32 %v7895, %v7893
    %v7899 = vshll.u32 %v7784, 16
    %v7901 = vrot.slane %v7899, 1
    %v7902 = vsel %vm517, %v7897, %v7901
    %v7903 = vshrl.u32 %v7784, 16
    %v7905 = vor.u32 %v7903, %v7901
    %v7907 = vshll.u32 %v7785, 16
    %v7909 = vrot.slane %v7907, 1
    %v7910 = vsel %vm517, %v7905, %v7909
    %v7911 = vshrl.u32 %v7785, 16
    %v7913 = vor.u32 %v7911, %v7909
    %v7915 = vshll.u32 %v7786, 16
    %v7917 = vrot.slane %v7915, 1
    %v7918 = vsel %vm517, %v7913, %v7917
    %7935 = vst [vmem:[#allocation3 + $0x40] sm:$0xff] %v7798
    %7936 = vst [vmem:[#allocation3 + $0x88] sm:$0xff] %v7806
    %7937 = vst [vmem:[#allocation3 + $0xd0] sm:$0xff] %v7814
    %7938 = vst [vmem:[#allocation3 + $0x118] sm:$0xff] %v7822
    %7939 = vst [vmem:[#allocation3 + $0x160] sm:$0xff] %v7830
    %7940 = vst [vmem:[#allocation3 + $0x1a8] sm:$0xff] %v7838
    %7941 = vst [vmem:[#allocation3 + $0x1f0] sm:$0xff] %v7846
    %7942 = vst [vmem:[#allocation3 + $0x238] sm:$0xff] %v7854
    %7943 = vst [vmem:[#allocation3 + $0x280] sm:$0xff] %v7862
    %7944 = vst [vmem:[#allocation3 + $0x2c8] sm:$0xff] %v7870
    %7945 = vst [vmem:[#allocation3 + $0x310] sm:$0xff] %v7878
    %7946 = vst [vmem:[#allocation3 + $0x358] sm:$0xff] %v7886
    %7947 = vst [vmem:[#allocation3 + $0x3a0] sm:$0xff] %v7894
    %7948 = vst [vmem:[#allocation3 + $0x3e8] sm:$0xff] %v7902
    %7949 = vst [vmem:[#allocation3 + $0x430] sm:$0xff] %v7910
    %7950 = vst [vmem:[#allocation3 + $0x478] sm:$0xff] %v7918
    %v7951 = vld [vmem:[#allocation3] sm:$0xff]
    %v7952 = vld [vmem:[#allocation3 + $0x8] sm:$0xff]
    %v7953 = vld [vmem:[#allocation3 + $0x10] sm:$0xff]
    %v7954 = vld [vmem:[#allocation3 + $0x18] sm:$0xff]
    %v7955 = vld [vmem:[#allocation3 + $0x20] sm:$0xff]
    %v7956 = vld [vmem:[#allocation3 + $0x28] sm:$0xff]
    %v7957 = vld [vmem:[#allocation3 + $0x30] sm:$0xff]
    %v7958 = vld [vmem:[#allocation3 + $0x38] sm:$0xff]
    %v7959 = vld [vmem:[#allocation3 + $0x40] sm:$0xff]
    %v7960 = vld [vmem:[#allocation3 + $0x48] sm:$0xff]
    %v7961 = vld [vmem:[#allocation3 + $0x50] sm:$0xff]
    %v7962 = vld [vmem:[#allocation3 + $0x58] sm:$0xff]
    %v7963 = vld [vmem:[#allocation3 + $0x60] sm:$0xff]
    %v7964 = vld [vmem:[#allocation3 + $0x68] sm:$0xff]
    %v7965 = vld [vmem:[#allocation3 + $0x70] sm:$0xff]
    %v7966 = vld [vmem:[#allocation3 + $0x78] sm:$0xff]
    %v7967 = vld [vmem:[#allocation3 + $0x80] sm:$0xff]
    %v7968 = vld [vmem:[#allocation3 + $0x88] sm:$0xff]
    %v7969 = vld [vmem:[#allocation3 + $0x90] sm:$0xff]
    %v7970 = vld [vmem:[#allocation3 + $0x98] sm:$0xff]
    %v7971 = vld [vmem:[#allocation3 + $0xa0] sm:$0xff]
    %v7972 = vld [vmem:[#allocation3 + $0xa8] sm:$0xff]
    %v7973 = vld [vmem:[#allocation3 + $0xb0] sm:$0xff]
    %v7974 = vld [vmem:[#allocation3 + $0xb8] sm:$0xff]
    %v7975 = vld [vmem:[#allocation3 + $0xc0] sm:$0xff]
    %v7976 = vld [vmem:[#allocation3 + $0xc8] sm:$0xff]
    %v7977 = vld [vmem:[#allocation3 + $0xd0] sm:$0xff]
    %v7978 = vld [vmem:[#allocation3 + $0xd8] sm:$0xff]
    %v7979 = vld [vmem:[#allocation3 + $0xe0] sm:$0xff]
    %v7980 = vld [vmem:[#allocation3 + $0xe8] sm:$0xff]
    %v7981 = vld [vmem:[#allocation3 + $0xf0] sm:$0xff]
    %v7982 = vld [vmem:[#allocation3 + $0xf8] sm:$0xff]
    %v7983 = vld [vmem:[#allocation3 + $0x100] sm:$0xff]
    %v7984 = vld [vmem:[#allocation3 + $0x108] sm:$0xff]
    %v7985 = vld [vmem:[#allocation3 + $0x110] sm:$0xff]
    %v7986 = vld [vmem:[#allocation3 + $0x118] sm:$0xff]
    %v7987 = vld [vmem:[#allocation3 + $0x120] sm:$0xff]
    %v7988 = vld [vmem:[#allocation3 + $0x128] sm:$0xff]
    %v7989 = vld [vmem:[#allocation3 + $0x130] sm:$0xff]
    %v7990 = vld [vmem:[#allocation3 + $0x138] sm:$0xff]
    %v7991 = vld [vmem:[#allocation3 + $0x140] sm:$0xff]
    %v7992 = vld [vmem:[#allocation3 + $0x148] sm:$0xff]
    %v7993 = vld [vmem:[#allocation3 + $0x150] sm:$0xff]
    %v7994 = vld [vmem:[#allocation3 + $0x158] sm:$0xff]
    %v7995 = vld [vmem:[#allocation3 + $0x160] sm:$0xff]
    %v7996 = vld [vmem:[#allocation3 + $0x168] sm:$0xff]
    %v7997 = vld [vmem:[#allocation3 + $0x170] sm:$0xff]
    %v7998 = vld [vmem:[#allocation3 + $0x178] sm:$0xff]
    %v7999 = vld [vmem:[#allocation3 + $0x180] sm:$0xff]
    %v8000 = vld [vmem:[#allocation3 + $0x188] sm:$0xff]
    %v8001 = vld [vmem:[#allocation3 + $0x190] sm:$0xff]
    %v8002 = vld [vmem:[#allocation3 + $0x198] sm:$0xff]
    %v8003 = vld [vmem:[#allocation3 + $0x1a0] sm:$0xff]
    %v8004 = vld [vmem:[#allocation3 + $0x1a8] sm:$0xff]
    %v8005 = vld [vmem:[#allocation3 + $0x1b0] sm:$0xff]
    %v8006 = vld [vmem:[#allocation3 + $0x1b8] sm:$0xff]
    %v8007 = vld [vmem:[#allocation3 + $0x1c0] sm:$0xff]
    %v8008 = vld [vmem:[#allocation3 + $0x1c8] sm:$0xff]
    %v8009 = vld [vmem:[#allocation3 + $0x1d0] sm:$0xff]
    %v8010 = vld [vmem:[#allocation3 + $0x1d8] sm:$0xff]
    %v8011 = vld [vmem:[#allocation3 + $0x1e0] sm:$0xff]
    %v8012 = vld [vmem:[#allocation3 + $0x1e8] sm:$0xff]
    %v8013 = vld [vmem:[#allocation3 + $0x1f0] sm:$0xff]
    %v8014 = vld [vmem:[#allocation3 + $0x1f8] sm:$0xff]
    %v8015 = vld [vmem:[#allocation3 + $0x200] sm:$0xff]
    %v8016 = vld [vmem:[#allocation3 + $0x208] sm:$0xff]
    %v8017 = vld [vmem:[#allocation3 + $0x210] sm:$0xff]
    %v8018 = vld [vmem:[#allocation3 + $0x218] sm:$0xff]
    %v8019 = vld [vmem:[#allocation3 + $0x220] sm:$0xff]
    %v8020 = vld [vmem:[#allocation3 + $0x228] sm:$0xff]
    %v8021 = vld [vmem:[#allocation3 + $0x230] sm:$0xff]
    %v8022 = vld [vmem:[#allocation3 + $0x238] sm:$0xff]
    %v8023 = vld [vmem:[#allocation3 + $0x240] sm:$0xff]
    %v8024 = vld [vmem:[#allocation3 + $0x248] sm:$0xff]
    %v8025 = vld [vmem:[#allocation3 + $0x250] sm:$0xff]
    %v8026 = vld [vmem:[#allocation3 + $0x258] sm:$0xff]
    %v8027 = vld [vmem:[#allocation3 + $0x260] sm:$0xff]
    %v8028 = vld [vmem:[#allocation3 + $0x268] sm:$0xff]
    %v8029 = vld [vmem:[#allocation3 + $0x270] sm:$0xff]
    %v8030 = vld [vmem:[#allocation3 + $0x278] sm:$0xff]
    %v8031 = vld [vmem:[#allocation3 + $0x280] sm:$0xff]
    %v8032 = vld [vmem:[#allocation3 + $0x288] sm:$0xff]
    %v8033 = vld [vmem:[#allocation3 + $0x290] sm:$0xff]
    %v8034 = vld [vmem:[#allocation3 + $0x298] sm:$0xff]
    %v8035 = vld [vmem:[#allocation3 + $0x2a0] sm:$0xff]
    %v8036 = vld [vmem:[#allocation3 + $0x2a8] sm:$0xff]
    %v8037 = vld [vmem:[#allocation3 + $0x2b0] sm:$0xff]
    %v8038 = vld [vmem:[#allocation3 + $0x2b8] sm:$0xff]
    %v8039 = vld [vmem:[#allocation3 + $0x2c0] sm:$0xff]
    %v8040 = vld [vmem:[#allocation3 + $0x2c8] sm:$0xff]
    %v8041 = vld [vmem:[#allocation3 + $0x2d0] sm:$0xff]
    %v8042 = vld [vmem:[#allocation3 + $0x2d8] sm:$0xff]
    %v8043 = vld [vmem:[#allocation3 + $0x2e0] sm:$0xff]
    %v8044 = vld [vmem:[#allocation3 + $0x2e8] sm:$0xff]
    %v8045 = vld [vmem:[#allocation3 + $0x2f0] sm:$0xff]
    %v8046 = vld [vmem:[#allocation3 + $0x2f8] sm:$0xff]
    %v8047 = vld [vmem:[#allocation3 + $0x300] sm:$0xff]
    %v8048 = vld [vmem:[#allocation3 + $0x308] sm:$0xff]
    %v8049 = vld [vmem:[#allocation3 + $0x310] sm:$0xff]
    %v8050 = vld [vmem:[#allocation3 + $0x318] sm:$0xff]
    %v8051 = vld [vmem:[#allocation3 + $0x320] sm:$0xff]
    %v8052 = vld [vmem:[#allocation3 + $0x328] sm:$0xff]
    %v8053 = vld [vmem:[#allocation3 + $0x330] sm:$0xff]
    %v8054 = vld [vmem:[#allocation3 + $0x338] sm:$0xff]
    %v8055 = vld [vmem:[#allocation3 + $0x340] sm:$0xff]
    %v8056 = vld [vmem:[#allocation3 + $0x348] sm:$0xff]
    %v8057 = vld [vmem:[#allocation3 + $0x350] sm:$0xff]
    %v8058 = vld [vmem:[#allocation3 + $0x358] sm:$0xff]
    %v8059 = vld [vmem:[#allocation3 + $0x360] sm:$0xff]
    %v8060 = vld [vmem:[#allocation3 + $0x368] sm:$0xff]
    %v8061 = vld [vmem:[#allocation3 + $0x370] sm:$0xff]
    %v8062 = vld [vmem:[#allocation3 + $0x378] sm:$0xff]
    %v8063 = vld [vmem:[#allocation3 + $0x380] sm:$0xff]
    %v8064 = vld [vmem:[#allocation3 + $0x388] sm:$0xff]
    %v8065 = vld [vmem:[#allocation3 + $0x390] sm:$0xff]
    %v8066 = vld [vmem:[#allocation3 + $0x398] sm:$0xff]
    %v8067 = vld [vmem:[#allocation3 + $0x3a0] sm:$0xff]
    %v8068 = vld [vmem:[#allocation3 + $0x3a8] sm:$0xff]
    %v8069 = vld [vmem:[#allocation3 + $0x3b0] sm:$0xff]
    %v8070 = vld [vmem:[#allocation3 + $0x3b8] sm:$0xff]
    %v8071 = vld [vmem:[#allocation3 + $0x3c0] sm:$0xff]
    %v8072 = vld [vmem:[#allocation3 + $0x3c8] sm:$0xff]
    %v8073 = vld [vmem:[#allocation3 + $0x3d0] sm:$0xff]
    %v8074 = vld [vmem:[#allocation3 + $0x3d8] sm:$0xff]
    %v8075 = vld [vmem:[#allocation3 + $0x3e0] sm:$0xff]
    %v8076 = vld [vmem:[#allocation3 + $0x3e8] sm:$0xff]
    %v8077 = vld [vmem:[#allocation3 + $0x3f0] sm:$0xff]
    %v8078 = vld [vmem:[#allocation3 + $0x3f8] sm:$0xff]
    %v8079 = vld [vmem:[#allocation3 + $0x400] sm:$0xff]
    %v8080 = vld [vmem:[#allocation3 + $0x408] sm:$0xff]
    %v8081 = vld [vmem:[#allocation3 + $0x410] sm:$0xff]
    %v8082 = vld [vmem:[#allocation3 + $0x418] sm:$0xff]
    %v8083 = vld [vmem:[#allocation3 + $0x420] sm:$0xff]
    %v8084 = vld [vmem:[#allocation3 + $0x428] sm:$0xff]
    %v8085 = vld [vmem:[#allocation3 + $0x430] sm:$0xff]
    %v8086 = vld [vmem:[#allocation3 + $0x438] sm:$0xff]
    %v8087 = vld [vmem:[#allocation3 + $0x440] sm:$0xff]
    %v8088 = vld [vmem:[#allocation3 + $0x448] sm:$0xff]
    %v8089 = vld [vmem:[#allocation3 + $0x450] sm:$0xff]
    %v8090 = vld [vmem:[#allocation3 + $0x458] sm:$0xff]
    %v8091 = vld [vmem:[#allocation3 + $0x460] sm:$0xff]
    %v8092 = vld [vmem:[#allocation3 + $0x468] sm:$0xff]
    %v8093 = vld [vmem:[#allocation3 + $0x470] sm:$0xff]
    %v8094 = vld [vmem:[#allocation3 + $0x478] sm:$0xff]
    %v8095 = vld [vmem:[#allocation12] sm:$0xf]
    %v8096 = vld [vmem:[#allocation12 + $0x4] sm:$0xf]
    %v8097 = vld [vmem:[#allocation12 + $0x8] sm:$0xf]
    %v8098 = vld [vmem:[#allocation12 + $0xc] sm:$0xf]
    %v8099 = vld [vmem:[#allocation12 + $0x10] sm:$0xf]
    %v8100 = vld [vmem:[#allocation12 + $0x14] sm:$0xf]
    %v8101 = vld [vmem:[#allocation12 + $0x18] sm:$0xf]
    %v8102 = vld [vmem:[#allocation12 + $0x1c] sm:$0xf]
    %v8103 = vld [vmem:[#allocation12 + $0x20] sm:$0xf]
    %v8104 = vld [vmem:[#allocation12 + $0x24] sm:$0xf]
    %v8105 = vld [vmem:[#allocation12 + $0x28] sm:$0xf]
    %v8106 = vld [vmem:[#allocation12 + $0x2c] sm:$0xf]
    %v8107 = vld [vmem:[#allocation12 + $0x30] sm:$0xf]
    %v8108 = vld [vmem:[#allocation12 + $0x34] sm:$0xf]
    %v8109 = vld [vmem:[#allocation12 + $0x38] sm:$0xf]
    %v8110 = vld [vmem:[#allocation12 + $0x3c] sm:$0xf]
    %v8111 = vld [vmem:[#allocation12 + $0x40] sm:$0xf]
    %v8112 = vld [vmem:[#allocation12 + $0x44] sm:$0xf]
    %v8113 = vld [vmem:[#allocation12 + $0x48] sm:$0xf]
    %v8114 = vld [vmem:[#allocation12 + $0x4c] sm:$0xf]
    %v8115 = vld [vmem:[#allocation12 + $0x50] sm:$0xf]
    %v8116 = vld [vmem:[#allocation12 + $0x54] sm:$0xf]
    %v8117 = vld [vmem:[#allocation12 + $0x58] sm:$0xf]
    %v8118 = vld [vmem:[#allocation12 + $0x5c] sm:$0xf]
    %v8119 = vld [vmem:[#allocation12 + $0x60] sm:$0xf]
    %v8120 = vld [vmem:[#allocation12 + $0x64] sm:$0xf]
    %v8121 = vld [vmem:[#allocation12 + $0x68] sm:$0xf]
    %v8122 = vld [vmem:[#allocation12 + $0x6c] sm:$0xf]
    %v8123 = vld [vmem:[#allocation12 + $0x70] sm:$0xf]
    %v8124 = vld [vmem:[#allocation12 + $0x74] sm:$0xf]
    %v8125 = vld [vmem:[#allocation12 + $0x78] sm:$0xf]
    %v8126 = vld [vmem:[#allocation12 + $0x7c] sm:$0xf]
    %v8127 = vld [vmem:[#allocation12 + $0x80] sm:$0xf]
    %v8128 = vld [vmem:[#allocation12 + $0x84] sm:$0xf]
    %v8129 = vld [vmem:[#allocation12 + $0x88] sm:$0xf]
    %v8130 = vld [vmem:[#allocation12 + $0x8c] sm:$0xf]
    %v8131 = vld [vmem:[#allocation12 + $0x90] sm:$0xf]
    %v8132 = vld [vmem:[#allocation12 + $0x94] sm:$0xf]
    %v8133 = vld [vmem:[#allocation12 + $0x98] sm:$0xf]
    %v8134 = vld [vmem:[#allocation12 + $0x9c] sm:$0xf]
    %v8135 = vld [vmem:[#allocation12 + $0xa0] sm:$0xf]
    %v8136 = vld [vmem:[#allocation12 + $0xa4] sm:$0xf]
    %v8137 = vld [vmem:[#allocation12 + $0xa8] sm:$0xf]
    %v8138 = vld [vmem:[#allocation12 + $0xac] sm:$0xf]
    %v8139 = vld [vmem:[#allocation12 + $0xb0] sm:$0xf]
    %v8140 = vld [vmem:[#allocation12 + $0xb4] sm:$0xf]
    %v8141 = vld [vmem:[#allocation12 + $0xb8] sm:$0xf]
    %v8142 = vld [vmem:[#allocation12 + $0xbc] sm:$0xf]
    %v8143 = vld [vmem:[#allocation12 + $0xc0] sm:$0xf]
    %v8144 = vld [vmem:[#allocation12 + $0xc4] sm:$0xf]
    %v8145 = vld [vmem:[#allocation12 + $0xc8] sm:$0xf]
    %v8146 = vld [vmem:[#allocation12 + $0xcc] sm:$0xf]
    %v8147 = vld [vmem:[#allocation12 + $0xd0] sm:$0xf]
    %v8148 = vld [vmem:[#allocation12 + $0xd4] sm:$0xf]
    %v8149 = vld [vmem:[#allocation12 + $0xd8] sm:$0xf]
    %v8150 = vld [vmem:[#allocation12 + $0xdc] sm:$0xf]
    %v8151 = vld [vmem:[#allocation12 + $0xe0] sm:$0xf]
    %v8152 = vld [vmem:[#allocation12 + $0xe4] sm:$0xf]
    %v8153 = vld [vmem:[#allocation12 + $0xe8] sm:$0xf]
    %v8154 = vld [vmem:[#allocation12 + $0xec] sm:$0xf]
    %v8155 = vld [vmem:[#allocation12 + $0xf0] sm:$0xf]
    %v8156 = vld [vmem:[#allocation12 + $0xf4] sm:$0xf]
    %v8157 = vld [vmem:[#allocation12 + $0xf8] sm:$0xf]
    %v8158 = vld [vmem:[#allocation12 + $0xfc] sm:$0xf]
    %v8159 = vld [vmem:[#allocation12 + $0x100] sm:$0xf]
    %v8160 = vld [vmem:[#allocation12 + $0x104] sm:$0xf]
    %v8161 = vld [vmem:[#allocation12 + $0x108] sm:$0xf]
    %v8162 = vld [vmem:[#allocation12 + $0x10c] sm:$0xf]
    %v8163 = vld [vmem:[#allocation12 + $0x110] sm:$0xf]
    %v8164 = vld [vmem:[#allocation12 + $0x114] sm:$0xf]
    %v8165 = vld [vmem:[#allocation12 + $0x118] sm:$0xf]
    %v8166 = vld [vmem:[#allocation12 + $0x11c] sm:$0xf]
    %v8167 = vld [vmem:[#allocation12 + $0x120] sm:$0xf]
    %v8168 = vld [vmem:[#allocation12 + $0x124] sm:$0xf]
    %v8169 = vld [vmem:[#allocation12 + $0x128] sm:$0xf]
    %v8170 = vld [vmem:[#allocation12 + $0x12c] sm:$0xf]
    %v8171 = vld [vmem:[#allocation12 + $0x130] sm:$0xf]
    %v8172 = vld [vmem:[#allocation12 + $0x134] sm:$0xf]
    %v8173 = vld [vmem:[#allocation12 + $0x138] sm:$0xf]
    %v8174 = vld [vmem:[#allocation12 + $0x13c] sm:$0xf]
    %v8175 = vld [vmem:[#allocation12 + $0x140] sm:$0xf]
    %v8176 = vld [vmem:[#allocation12 + $0x144] sm:$0xf]
    %v8177 = vld [vmem:[#allocation12 + $0x148] sm:$0xf]
    %v8178 = vld [vmem:[#allocation12 + $0x14c] sm:$0xf]
    %v8179 = vld [vmem:[#allocation12 + $0x150] sm:$0xf]
    %v8180 = vld [vmem:[#allocation12 + $0x154] sm:$0xf]
    %v8181 = vld [vmem:[#allocation12 + $0x158] sm:$0xf]
    %v8182 = vld [vmem:[#allocation12 + $0x15c] sm:$0xf]
    %v8183 = vld [vmem:[#allocation12 + $0x160] sm:$0xf]
    %v8184 = vld [vmem:[#allocation12 + $0x164] sm:$0xf]
    %v8185 = vld [vmem:[#allocation12 + $0x168] sm:$0xf]
    %v8186 = vld [vmem:[#allocation12 + $0x16c] sm:$0xf]
    %v8187 = vld [vmem:[#allocation12 + $0x170] sm:$0xf]
    %v8188 = vld [vmem:[#allocation12 + $0x174] sm:$0xf]
    %v8189 = vld [vmem:[#allocation12 + $0x178] sm:$0xf]
    %v8190 = vld [vmem:[#allocation12 + $0x17c] sm:$0xf]
    %v8191 = vld [vmem:[#allocation12 + $0x180] sm:$0xf]
    %v8192 = vld [vmem:[#allocation12 + $0x184] sm:$0xf]
    %v8193 = vld [vmem:[#allocation12 + $0x188] sm:$0xf]
    %v8194 = vld [vmem:[#allocation12 + $0x18c] sm:$0xf]
    %v8195 = vld [vmem:[#allocation12 + $0x190] sm:$0xf]
    %v8196 = vld [vmem:[#allocation12 + $0x194] sm:$0xf]
    %v8197 = vld [vmem:[#allocation12 + $0x198] sm:$0xf]
    %v8198 = vld [vmem:[#allocation12 + $0x19c] sm:$0xf]
    %v8199 = vld [vmem:[#allocation12 + $0x1a0] sm:$0xf]
    %v8200 = vld [vmem:[#allocation12 + $0x1a4] sm:$0xf]
    %v8201 = vld [vmem:[#allocation12 + $0x1a8] sm:$0xf]
    %v8202 = vld [vmem:[#allocation12 + $0x1ac] sm:$0xf]
    %v8203 = vld [vmem:[#allocation12 + $0x1b0] sm:$0xf]
    %v8204 = vld [vmem:[#allocation12 + $0x1b4] sm:$0xf]
    %v8205 = vld [vmem:[#allocation12 + $0x1b8] sm:$0xf]
    %v8206 = vld [vmem:[#allocation12 + $0x1bc] sm:$0xf]
    %v8207 = vld [vmem:[#allocation12 + $0x1c0] sm:$0xf]
    %v8208 = vld [vmem:[#allocation12 + $0x1c4] sm:$0xf]
    %v8209 = vld [vmem:[#allocation12 + $0x1c8] sm:$0xf]
    %v8210 = vld [vmem:[#allocation12 + $0x1cc] sm:$0xf]
    %v8211 = vld [vmem:[#allocation12 + $0x1d0] sm:$0xf]
    %v8212 = vld [vmem:[#allocation12 + $0x1d4] sm:$0xf]
    %v8213 = vld [vmem:[#allocation12 + $0x1d8] sm:$0xf]
    %v8214 = vld [vmem:[#allocation12 + $0x1dc] sm:$0xf]
    %v8215 = vld [vmem:[#allocation12 + $0x1e0] sm:$0xf]
    %v8216 = vld [vmem:[#allocation12 + $0x1e4] sm:$0xf]
    %v8217 = vld [vmem:[#allocation12 + $0x1e8] sm:$0xf]
    %v8218 = vld [vmem:[#allocation12 + $0x1ec] sm:$0xf]
    %v8219 = vld [vmem:[#allocation12 + $0x1f0] sm:$0xf]
    %v8220 = vld [vmem:[#allocation12 + $0x1f4] sm:$0xf]
    %v8221 = vld [vmem:[#allocation12 + $0x1f8] sm:$0xf]
    %v8222 = vld [vmem:[#allocation12 + $0x1fc] sm:$0xf]
    %v8223 = vld [vmem:[#allocation12 + $0x200] sm:$0xf]
    %v8224 = vld [vmem:[#allocation12 + $0x204] sm:$0xf]
    %v8225 = vld [vmem:[#allocation12 + $0x208] sm:$0xf]
    %v8226 = vld [vmem:[#allocation12 + $0x20c] sm:$0xf]
    %v8227 = vld [vmem:[#allocation12 + $0x210] sm:$0xf]
    %v8228 = vld [vmem:[#allocation12 + $0x214] sm:$0xf]
    %v8229 = vld [vmem:[#allocation12 + $0x218] sm:$0xf]
    %v8230 = vld [vmem:[#allocation12 + $0x21c] sm:$0xf]
    %v8231 = vld [vmem:[#allocation12 + $0x220] sm:$0xf]
    %v8232 = vld [vmem:[#allocation12 + $0x224] sm:$0xf]
    %v8233 = vld [vmem:[#allocation12 + $0x228] sm:$0xf]
    %v8234 = vld [vmem:[#allocation12 + $0x22c] sm:$0xf]
    %v8235 = vld [vmem:[#allocation12 + $0x230] sm:$0xf]
    %v8236 = vld [vmem:[#allocation12 + $0x234] sm:$0xf]
    %v8237 = vld [vmem:[#allocation12 + $0x238] sm:$0xf]
    %v8238 = vld [vmem:[#allocation12 + $0x23c] sm:$0xf]
    %v8239 = vld [vmem:[%s5] sm:$0x1]
    %v8241 = vlaneseq
    %v8242 = vshrl.u32 %v8241, 7
    %v8243 = vsub.s32 0, %v8242
    %v8244 = vrot.slane %v8239, %v8243
    %v8390 = vunpack.c.l.b16 %v8095
    %v8391 = vunpack.c.l.b16 %v8096
    %v8392 = vunpack.c.l.b16 %v8097
    %v8393 = vunpack.c.l.b16 %v8098
    %v8394 = vunpack.c.l.b16 %v8099
    %v8395 = vunpack.c.l.b16 %v8100
    %v8396 = vunpack.c.l.b16 %v8101
    %v8397 = vunpack.c.l.b16 %v8102
    %v8398 = vunpack.c.l.b16 %v8103
    %v8399 = vunpack.c.l.b16 %v8104
    %v8400 = vunpack.c.l.b16 %v8105
    %v8401 = vunpack.c.l.b16 %v8106
    %v8402 = vunpack.c.l.b16 %v8107
    %v8403 = vunpack.c.l.b16 %v8108
    %v8404 = vunpack.c.l.b16 %v8109
    %v8405 = vunpack.c.l.b16 %v8110
    %v8406 = vunpack.c.l.b16 %v8111
    %v8407 = vunpack.c.l.b16 %v8112
    %v8408 = vunpack.c.l.b16 %v8113
    %v8409 = vunpack.c.l.b16 %v8114
    %v8410 = vunpack.c.l.b16 %v8115
    %v8411 = vunpack.c.l.b16 %v8116
    %v8412 = vunpack.c.l.b16 %v8117
    %v8413 = vunpack.c.l.b16 %v8118
    %v8414 = vunpack.c.l.b16 %v8119
    %v8415 = vunpack.c.l.b16 %v8120
    %v8416 = vunpack.c.l.b16 %v8121
    %v8417 = vunpack.c.l.b16 %v8122
    %v8418 = vunpack.c.l.b16 %v8123
    %v8419 = vunpack.c.l.b16 %v8124
    %v8420 = vunpack.c.l.b16 %v8125
    %v8421 = vunpack.c.l.b16 %v8126
    %v8422 = vunpack.c.l.b16 %v8127
    %v8423 = vunpack.c.l.b16 %v8128
    %v8424 = vunpack.c.l.b16 %v8129
    %v8425 = vunpack.c.l.b16 %v8130
    %v8426 = vunpack.c.l.b16 %v8131
    %v8427 = vunpack.c.l.b16 %v8132
    %v8428 = vunpack.c.l.b16 %v8133
    %v8429 = vunpack.c.l.b16 %v8134
    %v8430 = vunpack.c.l.b16 %v8135
    %v8431 = vunpack.c.l.b16 %v8136
    %v8432 = vunpack.c.l.b16 %v8137
    %v8433 = vunpack.c.l.b16 %v8138
    %v8434 = vunpack.c.l.b16 %v8139
    %v8435 = vunpack.c.l.b16 %v8140
    %v8436 = vunpack.c.l.b16 %v8141
    %v8437 = vunpack.c.l.b16 %v8142
    %v8438 = vunpack.c.l.b16 %v8143
    %v8439 = vunpack.c.l.b16 %v8144
    %v8440 = vunpack.c.l.b16 %v8145
    %v8441 = vunpack.c.l.b16 %v8146
    %v8442 = vunpack.c.l.b16 %v8147
    %v8443 = vunpack.c.l.b16 %v8148
    %v8444 = vunpack.c.l.b16 %v8149
    %v8445 = vunpack.c.l.b16 %v8150
    %v8446 = vunpack.c.l.b16 %v8151
    %v8447 = vunpack.c.l.b16 %v8152
    %v8448 = vunpack.c.l.b16 %v8153
    %v8449 = vunpack.c.l.b16 %v8154
    %v8450 = vunpack.c.l.b16 %v8155
    %v8451 = vunpack.c.l.b16 %v8156
    %v8452 = vunpack.c.l.b16 %v8157
    %v8453 = vunpack.c.l.b16 %v8158
    %v8454 = vunpack.c.l.b16 %v8159
    %v8455 = vunpack.c.l.b16 %v8160
    %v8456 = vunpack.c.l.b16 %v8161
    %v8457 = vunpack.c.l.b16 %v8162
    %v8458 = vunpack.c.l.b16 %v8163
    %v8459 = vunpack.c.l.b16 %v8164
    %v8460 = vunpack.c.l.b16 %v8165
    %v8461 = vunpack.c.l.b16 %v8166
    %v8462 = vunpack.c.l.b16 %v8167
    %v8463 = vunpack.c.l.b16 %v8168
    %v8464 = vunpack.c.l.b16 %v8169
    %v8465 = vunpack.c.l.b16 %v8170
    %v8466 = vunpack.c.l.b16 %v8171
    %v8467 = vunpack.c.l.b16 %v8172
    %v8468 = vunpack.c.l.b16 %v8173
    %v8469 = vunpack.c.l.b16 %v8174
    %v8470 = vunpack.c.l.b16 %v8175
    %v8471 = vunpack.c.l.b16 %v8176
    %v8472 = vunpack.c.l.b16 %v8177
    %v8473 = vunpack.c.l.b16 %v8178
    %v8474 = vunpack.c.l.b16 %v8179
    %v8475 = vunpack.c.l.b16 %v8180
    %v8476 = vunpack.c.l.b16 %v8181
    %v8477 = vunpack.c.l.b16 %v8182
    %v8478 = vunpack.c.l.b16 %v8183
    %v8479 = vunpack.c.l.b16 %v8184
    %v8480 = vunpack.c.l.b16 %v8185
    %v8481 = vunpack.c.l.b16 %v8186
    %v8482 = vunpack.c.l.b16 %v8187
    %v8483 = vunpack.c.l.b16 %v8188
    %v8484 = vunpack.c.l.b16 %v8189
    %v8485 = vunpack.c.l.b16 %v8190
    %v8486 = vunpack.c.l.b16 %v8191
    %v8487 = vunpack.c.l.b16 %v8192
    %v8488 = vunpack.c.l.b16 %v8193
    %v8489 = vunpack.c.l.b16 %v8194
    %v8490 = vunpack.c.l.b16 %v8195
    %v8491 = vunpack.c.l.b16 %v8196
    %v8492 = vunpack.c.l.b16 %v8197
    %v8493 = vunpack.c.l.b16 %v8198
    %v8494 = vunpack.c.l.b16 %v8199
    %v8495 = vunpack.c.l.b16 %v8200
    %v8496 = vunpack.c.l.b16 %v8201
    %v8497 = vunpack.c.l.b16 %v8202
    %v8498 = vunpack.c.l.b16 %v8203
    %v8499 = vunpack.c.l.b16 %v8204
    %v8500 = vunpack.c.l.b16 %v8205
    %v8501 = vunpack.c.l.b16 %v8206
    %v8502 = vunpack.c.l.b16 %v8207
    %v8503 = vunpack.c.l.b16 %v8208
    %v8504 = vunpack.c.l.b16 %v8209
    %v8505 = vunpack.c.l.b16 %v8210
    %v8506 = vunpack.c.l.b16 %v8211
    %v8507 = vunpack.c.l.b16 %v8212
    %v8508 = vunpack.c.l.b16 %v8213
    %v8509 = vunpack.c.l.b16 %v8214
    %v8510 = vunpack.c.l.b16 %v8215
    %v8511 = vunpack.c.l.b16 %v8216
    %v8512 = vunpack.c.l.b16 %v8217
    %v8513 = vunpack.c.l.b16 %v8218
    %v8514 = vunpack.c.l.b16 %v8219
    %v8515 = vunpack.c.l.b16 %v8220
    %v8516 = vunpack.c.l.b16 %v8221
    %v8517 = vunpack.c.l.b16 %v8222
    %v8518 = vunpack.c.l.b16 %v8223
    %v8519 = vunpack.c.l.b16 %v8224
    %v8520 = vunpack.c.l.b16 %v8225
    %v8521 = vunpack.c.l.b16 %v8226
    %v8522 = vunpack.c.l.b16 %v8227
    %v8523 = vunpack.c.l.b16 %v8228
    %v8524 = vunpack.c.l.b16 %v8229
    %v8525 = vunpack.c.l.b16 %v8230
    %v8526 = vunpack.c.l.b16 %v8231
    %v8527 = vunpack.c.l.b16 %v8232
    %v8528 = vunpack.c.l.b16 %v8233
    %v8529 = vunpack.c.l.b16 %v8234
    %v8530 = vunpack.c.l.b16 %v8235
    %v8531 = vunpack.c.l.b16 %v8236
    %v8532 = vunpack.c.l.b16 %v8237
    %v8533 = vunpack.c.l.b16 %v8238
    %v8534 = vpack.c.b16 %v8391, %v8390
    %v8535 = vpack.c.b16 %v8393, %v8392
    %v8536 = vpack.c.b16 %v8395, %v8394
    %v8537 = vpack.c.b16 %v8397, %v8396
    %v8538 = vpack.c.b16 %v8399, %v8398
    %v8539 = vpack.c.b16 %v8401, %v8400
    %v8540 = vpack.c.b16 %v8403, %v8402
    %v8541 = vpack.c.b16 %v8405, %v8404
    %v8542 = vpack.c.b16 %v8407, %v8406
    %v8543 = vpack.c.b16 %v8409, %v8408
    %v8544 = vpack.c.b16 %v8411, %v8410
    %v8545 = vpack.c.b16 %v8413, %v8412
    %v8546 = vpack.c.b16 %v8415, %v8414
    %v8547 = vpack.c.b16 %v8417, %v8416
    %v8548 = vpack.c.b16 %v8419, %v8418
    %v8549 = vpack.c.b16 %v8421, %v8420
    %v8550 = vpack.c.b16 %v8423, %v8422
    %v8551 = vpack.c.b16 %v8425, %v8424
    %v8552 = vpack.c.b16 %v8427, %v8426
    %v8553 = vpack.c.b16 %v8429, %v8428
    %v8554 = vpack.c.b16 %v8431, %v8430
    %v8555 = vpack.c.b16 %v8433, %v8432
    %v8556 = vpack.c.b16 %v8435, %v8434
    %v8557 = vpack.c.b16 %v8437, %v8436
    %v8558 = vpack.c.b16 %v8439, %v8438
    %v8559 = vpack.c.b16 %v8441, %v8440
    %v8560 = vpack.c.b16 %v8443, %v8442
    %v8561 = vpack.c.b16 %v8445, %v8444
    %v8562 = vpack.c.b16 %v8447, %v8446
    %v8563 = vpack.c.b16 %v8449, %v8448
    %v8564 = vpack.c.b16 %v8451, %v8450
    %v8565 = vpack.c.b16 %v8453, %v8452
    %v8566 = vpack.c.b16 %v8455, %v8454
    %v8567 = vpack.c.b16 %v8457, %v8456
    %v8568 = vpack.c.b16 %v8459, %v8458
    %v8569 = vpack.c.b16 %v8461, %v8460
    %v8570 = vpack.c.b16 %v8463, %v8462
    %v8571 = vpack.c.b16 %v8465, %v8464
    %v8572 = vpack.c.b16 %v8467, %v8466
    %v8573 = vpack.c.b16 %v8469, %v8468
    %v8574 = vpack.c.b16 %v8471, %v8470
    %v8575 = vpack.c.b16 %v8473, %v8472
    %v8576 = vpack.c.b16 %v8475, %v8474
    %v8577 = vpack.c.b16 %v8477, %v8476
    %v8578 = vpack.c.b16 %v8479, %v8478
    %v8579 = vpack.c.b16 %v8481, %v8480
    %v8580 = vpack.c.b16 %v8483, %v8482
    %v8581 = vpack.c.b16 %v8485, %v8484
    %v8582 = vpack.c.b16 %v8487, %v8486
    %v8583 = vpack.c.b16 %v8489, %v8488
    %v8584 = vpack.c.b16 %v8491, %v8490
    %v8585 = vpack.c.b16 %v8493, %v8492
    %v8586 = vpack.c.b16 %v8495, %v8494
    %v8587 = vpack.c.b16 %v8497, %v8496
    %v8588 = vpack.c.b16 %v8499, %v8498
    %v8589 = vpack.c.b16 %v8501, %v8500
    %v8590 = vpack.c.b16 %v8503, %v8502
    %v8591 = vpack.c.b16 %v8505, %v8504
    %v8592 = vpack.c.b16 %v8507, %v8506
    %v8593 = vpack.c.b16 %v8509, %v8508
    %v8594 = vpack.c.b16 %v8511, %v8510
    %v8595 = vpack.c.b16 %v8513, %v8512
    %v8596 = vpack.c.b16 %v8515, %v8514
    %v8597 = vpack.c.b16 %v8517, %v8516
    %v8598 = vpack.c.b16 %v8519, %v8518
    %v8599 = vpack.c.b16 %v8521, %v8520
    %v8600 = vpack.c.b16 %v8523, %v8522
    %v8601 = vpack.c.b16 %v8525, %v8524
    %v8602 = vpack.c.b16 %v8527, %v8526
    %v8603 = vpack.c.b16 %v8529, %v8528
    %v8604 = vpack.c.b16 %v8531, %v8530
    %v8605 = vpack.c.b16 %v8533, %v8532
    %8678 = vmatprep.subr.bf16.mxu0 0
    %8679 = vmatpush1.bf16.msra.mxu0 %v8534
    %8680 = vmatprep.subr.bf16.mxu0 0
    %8681 = vmatpush1.bf16.msra.mxu0 %v8535
    %8682 = vmatprep.subr.bf16.mxu0 0
    %8683 = vmatpush1.bf16.msra.mxu0 %v8536
    %8684 = vmatprep.subr.bf16.mxu0 0
    %8685 = vmatpush1.bf16.msra.mxu0 %v8537
    %8686 = vmatprep.subr.bf16.mxu0 0
    %8687 = vmatpush1.bf16.msra.mxu0 %v8538
    %8688 = vmatprep.subr.bf16.mxu0 0
    %8689 = vmatpush1.bf16.msra.mxu0 %v8539
    %8690 = vmatprep.subr.bf16.mxu0 0
    %8691 = vmatpush1.bf16.msra.mxu0 %v8540
    %8692 = vmatprep.subr.bf16.mxu0 0
    %8693 = vmatpush1.bf16.msra.mxu0 %v8541
    %8694 = vmatprep.subr.bf16.mxu0 0
    %8695 = vmatpush1.bf16.msra.mxu0 %v8542
    %8696 = vmatprep.subr.bf16.mxu0 0
    %8697 = vmatpush1.bf16.msra.mxu0 %v8543
    %8698 = vmatprep.subr.bf16.mxu0 0
    %8699 = vmatpush1.bf16.msra.mxu0 %v8544
    %8700 = vmatprep.subr.bf16.mxu0 0
    %8701 = vmatpush1.bf16.msra.mxu0 %v8545
    %8702 = vmatprep.subr.bf16.mxu0 0
    %8703 = vmatpush1.bf16.msra.mxu0 %v8546
    %8704 = vmatprep.subr.bf16.mxu0 0
    %8705 = vmatpush1.bf16.msra.mxu0 %v8547
    %8706 = vmatprep.subr.bf16.mxu0 0
    %8707 = vmatpush1.bf16.msra.mxu0 %v8548
    %8708 = vmatprep.subr.bf16.mxu0 0
    %8709 = vmatpush1.bf16.msra.mxu0 %v8549
    %8710 = vmatprep.mubr.bf16.mxu0 %v7952
    %8711 = vmatmul.mubr.bf16.gmra.mrb[0].mxu0 %v7951
    %v8712 = vpop.f32.mrb[0].mxu0
    %v8713 = vadd.f32 %v8244, %v8712
    %v8714 = vpop.f32.mrb[0].mxu0
    %v8715 = vpop.f32.mrb[0].mxu0
    %v8716 = vadd.f32 %v8244, %v8715
    %v8717 = vpop.f32.mrb[0].mxu0
    %8718 = vmatprep.mubr.bf16.mxu0 %v7961
    %8719 = vmatmul.mubr.bf16.gmra.mrb[0].mxu0 %v7960
    %v8720 = vpop.f32.mrb[0].mxu0
    %v8721 = vadd.f32 %v8244, %v8720
    %v8722 = vpop.f32.mrb[0].mxu0
    %v8723 = vpop.f32.mrb[0].mxu0
    %v8724 = vadd.f32 %v8244, %v8723
    %v8725 = vpop.f32.mrb[0].mxu0
    %8726 = vmatprep.mubr.bf16.mxu0 %v7970
    %8727 = vmatmul.mubr.bf16.gmra.mrb[0].mxu0 %v7969
    %v8728 = vpop.f32.mrb[0].mxu0
    %v8729 = vadd.f32 %v8244, %v8728
    %v8730 = vpop.f32.mrb[0].mxu0
    %v8731 = vpop.f32.mrb[0].mxu0
    %v8732 = vadd.f32 %v8244, %v8731
    %v8733 = vpop.f32.mrb[0].mxu0
    %8734 = vmatprep.mubr.bf16.mxu0 %v7979
    %8735 = vmatmul.mubr.bf16.gmra.mrb[0].mxu0 %v7978
    %v8736 = vpop.f32.mrb[0].mxu0
    %v8737 = vadd.f32 %v8244, %v8736
    %v8738 = vpop.f32.mrb[0].mxu0
    %v8739 = vpop.f32.mrb[0].mxu0
    %v8740 = vadd.f32 %v8244, %v8739
    %v8741 = vpop.f32.mrb[0].mxu0
    %8742 = vmatprep.mubr.bf16.mxu0 %v7988
    %8743 = vmatmul.mubr.bf16.gmra.mrb[0].mxu0 %v7987
    %v8744 = vpop.f32.mrb[0].mxu0
    %v8745 = vadd.f32 %v8244, %v8744
    %v8746 = vpop.f32.mrb[0].mxu0
    %v8747 = vpop.f32.mrb[0].mxu0
    %v8748 = vadd.f32 %v8244, %v8747
    %v8749 = vpop.f32.mrb[0].mxu0
    %8750 = vmatprep.mubr.bf16.mxu0 %v7997
    %8751 = vmatmul.mubr.bf16.gmra.mrb[0].mxu0 %v7996
    %v8752 = vpop.f32.mrb[0].mxu0
    %v8753 = vadd.f32 %v8244, %v8752
    %v8754 = vpop.f32.mrb[0].mxu0
    %v8755 = vpop.f32.mrb[0].mxu0
    %v8756 = vadd.f32 %v8244, %v8755
    %v8757 = vpop.f32.mrb[0].mxu0
    %8758 = vmatprep.mubr.bf16.mxu0 %v8006
    %8759 = vmatmul.mubr.bf16.gmra.mrb[0].mxu0 %v8005
    %v8760 = vpop.f32.mrb[0].mxu0
    %v8761 = vadd.f32 %v8244, %v8760
    %v8762 = vpop.f32.mrb[0].mxu0
    %v8763 = vpop.f32.mrb[0].mxu0
    %v8764 = vadd.f32 %v8244, %v8763
    %v8765 = vpop.f32.mrb[0].mxu0
    %8766 = vmatprep.mubr.bf16.mxu0 %v8015
    %8767 = vmatmul.mubr.bf16.gmra.mrb[0].mxu0 %v8014
    %v8768 = vpop.f32.mrb[0].mxu0
    %v8769 = vadd.f32 %v8244, %v8768
    %v8770 = vpop.f32.mrb[0].mxu0
    %v8771 = vpop.f32.mrb[0].mxu0
    %v8772 = vadd.f32 %v8244, %v8771
    %v8773 = vpop.f32.mrb[0].mxu0
    %8774 = vmatprep.mubr.bf16.mxu0 %v8024
    %8775 = vmatmul.mubr.bf16.gmra.mrb[0].mxu0 %v8023
    %v8776 = vpop.f32.mrb[0].mxu0
    %v8777 = vadd.f32 %v8244, %v8776
    %v8778 = vpop.f32.mrb[0].mxu0
    %v8779 = vpop.f32.mrb[0].mxu0
    %v8780 = vadd.f32 %v8244, %v8779
    %v8781 = vpop.f32.mrb[0].mxu0
    %8782 = vmatprep.mubr.bf16.mxu0 %v8033
    %8783 = vmatmul.mubr.bf16.gmra.mrb[0].mxu0 %v8032
    %v8784 = vpop.f32.mrb[0].mxu0
    %v8785 = vadd.f32 %v8244, %v8784
    %v8786 = vpop.f32.mrb[0].mxu0
    %v8787 = vpop.f32.mrb[0].mxu0
    %v8788 = vadd.f32 %v8244, %v8787
    %v8789 = vpop.f32.mrb[0].mxu0
    %8790 = vmatprep.mubr.bf16.mxu0 %v8042
    %8791 = vmatmul.mubr.bf16.gmra.mrb[0].mxu0 %v8041
    %v8792 = vpop.f32.mrb[0].mxu0
    %v8793 = vadd.f32 %v8244, %v8792
    %v8794 = vpop.f32.mrb[0].mxu0
    %v8795 = vpop.f32.mrb[0].mxu0
    %v8796 = vadd.f32 %v8244, %v8795
    %v8797 = vpop.f32.mrb[0].mxu0
    %8798 = vmatprep.mubr.bf16.mxu0 %v8051
    %8799 = vmatmul.mubr.bf16.gmra.mrb[0].mxu0 %v8050
    %v8800 = vpop.f32.mrb[0].mxu0
    %v8801 = vadd.f32 %v8244, %v8800
    %v8802 = vpop.f32.mrb[0].mxu0
    %v8803 = vpop.f32.mrb[0].mxu0
    %v8804 = vadd.f32 %v8244, %v8803
    %v8805 = vpop.f32.mrb[0].mxu0
    %8806 = vmatprep.mubr.bf16.mxu0 %v8060
    %8807 = vmatmul.mubr.bf16.gmra.mrb[0].mxu0 %v8059
    %v8808 = vpop.f32.mrb[0].mxu0
    %v8809 = vadd.f32 %v8244, %v8808
    %v8810 = vpop.f32.mrb[0].mxu0
    %v8811 = vpop.f32.mrb[0].mxu0
    %v8812 = vadd.f32 %v8244, %v8811
    %v8813 = vpop.f32.mrb[0].mxu0
    %8814 = vmatprep.mubr.bf16.mxu0 %v8069
    %8815 = vmatmul.mubr.bf16.gmra.mrb[0].mxu0 %v8068
    %v8816 = vpop.f32.mrb[0].mxu0
    %v8817 = vadd.f32 %v8244, %v8816
    %v8818 = vpop.f32.mrb[0].mxu0
    %v8819 = vpop.f32.mrb[0].mxu0
    %v8820 = vadd.f32 %v8244, %v8819
    %v8821 = vpop.f32.mrb[0].mxu0
    %8822 = vmatprep.mubr.bf16.mxu0 %v8078
    %8823 = vmatmul.mubr.bf16.gmra.mrb[0].mxu0 %v8077
    %v8824 = vpop.f32.mrb[0].mxu0
    %v8825 = vadd.f32 %v8244, %v8824
    %v8826 = vpop.f32.mrb[0].mxu0
    %v8827 = vpop.f32.mrb[0].mxu0
    %v8828 = vadd.f32 %v8244, %v8827
    %v8829 = vpop.f32.mrb[0].mxu0
    %8830 = vmatprep.mubr.bf16.mxu0 %v8087
    %8831 = vmatmul.mubr.bf16.gmra.mrb[0].mxu0 %v8086
    %v8832 = vpop.f32.mrb[0].mxu0
    %v8833 = vadd.f32 %v8244, %v8832
    %v8834 = vpop.f32.mrb[0].mxu0
    %v8835 = vpop.f32.mrb[0].mxu0
    %v8836 = vadd.f32 %v8244, %v8835
    %v8837 = vpop.f32.mrb[0].mxu0
    %8838 = vdwg.mxu0
    %8839 = vmatprep.subr.bf16.mxu0 0
    %8840 = vmatpush1.bf16.msra.mxu0 %v8550
    %8841 = vmatprep.subr.bf16.mxu0 0
    %8842 = vmatpush1.bf16.msra.mxu0 %v8551
    %8843 = vmatprep.subr.bf16.mxu0 0
    %8844 = vmatpush1.bf16.msra.mxu0 %v8552
    %8845 = vmatprep.subr.bf16.mxu0 0
    %8846 = vmatpush1.bf16.msra.mxu0 %v8553
    %8847 = vmatprep.subr.bf16.mxu0 0
    %8848 = vmatpush1.bf16.msra.mxu0 %v8554
    %8849 = vmatprep.subr.bf16.mxu0 0
    %8850 = vmatpush1.bf16.msra.mxu0 %v8555
    %8851 = vmatprep.subr.bf16.mxu0 0
    %8852 = vmatpush1.bf16.msra.mxu0 %v8556
    %8853 = vmatprep.subr.bf16.mxu0 0
    %8854 = vmatpush1.bf16.msra.mxu0 %v8557
    %8855 = vmatprep.subr.bf16.mxu0 0
    %8856 = vmatpush1.bf16.msra.mxu0 %v8558
    %8857 = vmatprep.subr.bf16.mxu0 0
    %8858 = vmatpush1.bf16.msra.mxu0 %v8559
    %8859 = vmatprep.subr.bf16.mxu0 0
    %8860 = vmatpush1.bf16.msra.mxu0 %v8560
    %8861 = vmatprep.subr.bf16.mxu0 0
    %8862 = vmatpush1.bf16.msra.mxu0 %v8561
    %8863 = vmatprep.subr.bf16.mxu0 0
    %8864 = vmatpush1.bf16.msra.mxu0 %v8562
    %8865 = vmatprep.subr.bf16.mxu0 0
    %8866 = vmatpush1.bf16.msra.mxu0 %v8563
    %8867 = vmatprep.subr.bf16.mxu0 0
    %8868 = vmatpush1.bf16.msra.mxu0 %v8564
    %8869 = vmatprep.subr.bf16.mxu0 0
    %8870 = vmatpush1.bf16.msra.mxu0 %v8565
    %8871 = vmatprep.mubr.bf16.mxu0 %v7954
    %8872 = vmatmul.mubr.bf16.gmra.mrb[0].mxu0 %v7953
    %v8873 = vpop.f32.mrb[0].mxu0
    %v8874 = vadd.f32 %v8713, %v8873
    %v8875 = vpop.f32.mrb[0].mxu0
    %v8876 = vpop.f32.mrb[0].mxu0
    %v8877 = vadd.f32 %v8716, %v8876
    %v8878 = vpop.f32.mrb[0].mxu0
    %8879 = vmatprep.mubr.bf16.mxu0 %v7963
    %8880 = vmatmul.mubr.bf16.gmra.mrb[0].mxu0 %v7962
    %v8881 = vpop.f32.mrb[0].mxu0
    %v8882 = vadd.f32 %v8721, %v8881
    %v8883 = vpop.f32.mrb[0].mxu0
    %v8884 = vpop.f32.mrb[0].mxu0
    %v8885 = vadd.f32 %v8724, %v8884
    %v8886 = vpop.f32.mrb[0].mxu0
    %8887 = vmatprep.mubr.bf16.mxu0 %v7972
    %8888 = vmatmul.mubr.bf16.gmra.mrb[0].mxu0 %v7971
    %v8889 = vpop.f32.mrb[0].mxu0
    %v8890 = vadd.f32 %v8729, %v8889
    %v8891 = vpop.f32.mrb[0].mxu0
    %v8892 = vpop.f32.mrb[0].mxu0
    %v8893 = vadd.f32 %v8732, %v8892
    %v8894 = vpop.f32.mrb[0].mxu0
    %8895 = vmatprep.mubr.bf16.mxu0 %v7981
    %8896 = vmatmul.mubr.bf16.gmra.mrb[0].mxu0 %v7980
    %v8897 = vpop.f32.mrb[0].mxu0
    %v8898 = vadd.f32 %v8737, %v8897
    %v8899 = vpop.f32.mrb[0].mxu0
    %v8900 = vpop.f32.mrb[0].mxu0
    %v8901 = vadd.f32 %v8740, %v8900
    %v8902 = vpop.f32.mrb[0].mxu0
    %8903 = vmatprep.mubr.bf16.mxu0 %v7990
    %8904 = vmatmul.mubr.bf16.gmra.mrb[0].mxu0 %v7989
    %v8905 = vpop.f32.mrb[0].mxu0
    %v8906 = vadd.f32 %v8745, %v8905
    %v8907 = vpop.f32.mrb[0].mxu0
    %v8908 = vpop.f32.mrb[0].mxu0
    %v8909 = vadd.f32 %v8748, %v8908
    %v8910 = vpop.f32.mrb[0].mxu0
    %8911 = vmatprep.mubr.bf16.mxu0 %v7999
    %8912 = vmatmul.mubr.bf16.gmra.mrb[0].mxu0 %v7998
    %v8913 = vpop.f32.mrb[0].mxu0
    %v8914 = vadd.f32 %v8753, %v8913
    %v8915 = vpop.f32.mrb[0].mxu0
    %v8916 = vpop.f32.mrb[0].mxu0
    %v8917 = vadd.f32 %v8756, %v8916
    %v8918 = vpop.f32.mrb[0].mxu0
    %8919 = vmatprep.mubr.bf16.mxu0 %v8008
    %8920 = vmatmul.mubr.bf16.gmra.mrb[0].mxu0 %v8007
    %v8921 = vpop.f32.mrb[0].mxu0
    %v8922 = vadd.f32 %v8761, %v8921
    %v8923 = vpop.f32.mrb[0].mxu0
    %v8924 = vpop.f32.mrb[0].mxu0
    %v8925 = vadd.f32 %v8764, %v8924
    %v8926 = vpop.f32.mrb[0].mxu0
    %8927 = vmatprep.mubr.bf16.mxu0 %v8017
    %8928 = vmatmul.mubr.bf16.gmra.mrb[0].mxu0 %v8016
    %v8929 = vpop.f32.mrb[0].mxu0
    %v8930 = vadd.f32 %v8769, %v8929
    %v8931 = vpop.f32.mrb[0].mxu0
    %v8932 = vpop.f32.mrb[0].mxu0
    %v8933 = vadd.f32 %v8772, %v8932
    %v8934 = vpop.f32.mrb[0].mxu0
    %8935 = vmatprep.mubr.bf16.mxu0 %v8026
    %8936 = vmatmul.mubr.bf16.gmra.mrb[0].mxu0 %v8025
    %v8937 = vpop.f32.mrb[0].mxu0
    %v8938 = vadd.f32 %v8777, %v8937
    %v8939 = vpop.f32.mrb[0].mxu0
    %v8940 = vpop.f32.mrb[0].mxu0
    %v8941 = vadd.f32 %v8780, %v8940
    %v8942 = vpop.f32.mrb[0].mxu0
    %8943 = vmatprep.mubr.bf16.mxu0 %v8035
    %8944 = vmatmul.mubr.bf16.gmra.mrb[0].mxu0 %v8034
    %v8945 = vpop.f32.mrb[0].mxu0
    %v8946 = vadd.f32 %v8785, %v8945
    %v8947 = vpop.f32.mrb[0].mxu0
    %v8948 = vpop.f32.mrb[0].mxu0
    %v8949 = vadd.f32 %v8788, %v8948
    %v8950 = vpop.f32.mrb[0].mxu0
    %8951 = vmatprep.mubr.bf16.mxu0 %v8044
    %8952 = vmatmul.mubr.bf16.gmra.mrb[0].mxu0 %v8043
    %v8953 = vpop.f32.mrb[0].mxu0
    %v8954 = vadd.f32 %v8793, %v8953
    %v8955 = vpop.f32.mrb[0].mxu0
    %v8956 = vpop.f32.mrb[0].mxu0
    %v8957 = vadd.f32 %v8796, %v8956
    %v8958 = vpop.f32.mrb[0].mxu0
    %8959 = vmatprep.mubr.bf16.mxu0 %v8053
    %8960 = vmatmul.mubr.bf16.gmra.mrb[0].mxu0 %v8052
    %v8961 = vpop.f32.mrb[0].mxu0
    %v8962 = vadd.f32 %v8801, %v8961
    %v8963 = vpop.f32.mrb[0].mxu0
    %v8964 = vpop.f32.mrb[0].mxu0
    %v8965 = vadd.f32 %v8804, %v8964
    %v8966 = vpop.f32.mrb[0].mxu0
    %8967 = vmatprep.mubr.bf16.mxu0 %v8062
    %8968 = vmatmul.mubr.bf16.gmra.mrb[0].mxu0 %v8061
    %v8969 = vpop.f32.mrb[0].mxu0
    %v8970 = vadd.f32 %v8809, %v8969
    %v8971 = vpop.f32.mrb[0].mxu0
    %v8972 = vpop.f32.mrb[0].mxu0
    %v8973 = vadd.f32 %v8812, %v8972
    %v8974 = vpop.f32.mrb[0].mxu0
    %8975 = vmatprep.mubr.bf16.mxu0 %v8071
    %8976 = vmatmul.mubr.bf16.gmra.mrb[0].mxu0 %v8070
    %v8977 = vpop.f32.mrb[0].mxu0
    %v8978 = vadd.f32 %v8817, %v8977
    %v8979 = vpop.f32.mrb[0].mxu0
    %v8980 = vpop.f32.mrb[0].mxu0
    %v8981 = vadd.f32 %v8820, %v8980
    %v8982 = vpop.f32.mrb[0].mxu0
    %8983 = vmatprep.mubr.bf16.mxu0 %v8080
    %8984 = vmatmul.mubr.bf16.gmra.mrb[0].mxu0 %v8079
    %v8985 = vpop.f32.mrb[0].mxu0
    %v8986 = vadd.f32 %v8825, %v8985
    %v8987 = vpop.f32.mrb[0].mxu0
    %v8988 = vpop.f32.mrb[0].mxu0
    %v8989 = vadd.f32 %v8828, %v8988
    %v8990 = vpop.f32.mrb[0].mxu0
    %8991 = vmatprep.mubr.bf16.mxu0 %v8089
    %8992 = vmatmul.mubr.bf16.gmra.mrb[0].mxu0 %v8088
    %v8993 = vpop.f32.mrb[0].mxu0
    %v8994 = vadd.f32 %v8833, %v8993
    %v8995 = vpop.f32.mrb[0].mxu0
    %v8996 = vpop.f32.mrb[0].mxu0
    %v8997 = vadd.f32 %v8836, %v8996
    %v8998 = vpop.f32.mrb[0].mxu0
    %8999 = vdwg.mxu0
    %9000 = vmatprep.subr.bf16.mxu0 0
    %9001 = vmatpush1.bf16.msra.mxu0 %v8566
    %9002 = vmatprep.subr.bf16.mxu0 0
    %9003 = vmatpush1.bf16.msra.mxu0 %v8567
    %9004 = vmatprep.subr.bf16.mxu0 0
    %9005 = vmatpush1.bf16.msra.mxu0 %v8568
    %9006 = vmatprep.subr.bf16.mxu0 0
    %9007 = vmatpush1.bf16.msra.mxu0 %v8569
    %9008 = vmatprep.subr.bf16.mxu0 0
    %9009 = vmatpush1.bf16.msra.mxu0 %v8570
    %9010 = vmatprep.subr.bf16.mxu0 0
    %9011 = vmatpush1.bf16.msra.mxu0 %v8571
    %9012 = vmatprep.subr.bf16.mxu0 0
    %9013 = vmatpush1.bf16.msra.mxu0 %v8572
    %9014 = vmatprep.subr.bf16.mxu0 0
    %9015 = vmatpush1.bf16.msra.mxu0 %v8573
    %9016 = vmatprep.subr.bf16.mxu0 0
    %9017 = vmatpush1.bf16.msra.mxu0 %v8574
    %9018 = vmatprep.subr.bf16.mxu0 0
    %9019 = vmatpush1.bf16.msra.mxu0 %v8575
    %9020 = vmatprep.subr.bf16.mxu0 0
    %9021 = vmatpush1.bf16.msra.mxu0 %v8576
    %9022 = vmatprep.subr.bf16.mxu0 0
    %9023 = vmatpush1.bf16.msra.mxu0 %v8577
    %9024 = vmatprep.subr.bf16.mxu0 0
    %9025 = vmatpush1.bf16.msra.mxu0 %v8578
    %9026 = vmatprep.subr.bf16.mxu0 0
    %9027 = vmatpush1.bf16.msra.mxu0 %v8579
    %9028 = vmatprep.subr.bf16.mxu0 0
    %9029 = vmatpush1.bf16.msra.mxu0 %v8580
    %9030 = vmatprep.subr.bf16.mxu0 0
    %9031 = vmatpush1.bf16.msra.mxu0 %v8581
    %9032 = vmatprep.mubr.bf16.mxu0 %v7956
    %9033 = vmatmul.mubr.bf16.gmra.mrb[0].mxu0 %v7955
    %v9034 = vpop.f32.mrb[0].mxu0
    %v9035 = vadd.f32 %v8874, %v9034
    %v9036 = vpop.f32.mrb[0].mxu0
    %v9037 = vpop.f32.mrb[0].mxu0
    %v9038 = vadd.f32 %v8877, %v9037
    %v9039 = vpop.f32.mrb[0].mxu0
    %9040 = vmatprep.mubr.bf16.mxu0 %v7965
    %9041 = vmatmul.mubr.bf16.gmra.mrb[0].mxu0 %v7964
    %v9042 = vpop.f32.mrb[0].mxu0
    %v9043 = vadd.f32 %v8882, %v9042
    %v9044 = vpop.f32.mrb[0].mxu0
    %v9045 = vpop.f32.mrb[0].mxu0
    %v9046 = vadd.f32 %v8885, %v9045
    %v9047 = vpop.f32.mrb[0].mxu0
    %9048 = vmatprep.mubr.bf16.mxu0 %v7974
    %9049 = vmatmul.mubr.bf16.gmra.mrb[0].mxu0 %v7973
    %v9050 = vpop.f32.mrb[0].mxu0
    %v9051 = vadd.f32 %v8890, %v9050
    %v9052 = vpop.f32.mrb[0].mxu0
    %v9053 = vpop.f32.mrb[0].mxu0
    %v9054 = vadd.f32 %v8893, %v9053
    %v9055 = vpop.f32.mrb[0].mxu0
    %9056 = vmatprep.mubr.bf16.mxu0 %v7983
    %9057 = vmatmul.mubr.bf16.gmra.mrb[0].mxu0 %v7982
    %v9058 = vpop.f32.mrb[0].mxu0
    %v9059 = vadd.f32 %v8898, %v9058
    %v9060 = vpop.f32.mrb[0].mxu0
    %v9061 = vpop.f32.mrb[0].mxu0
    %v9062 = vadd.f32 %v8901, %v9061
    %v9063 = vpop.f32.mrb[0].mxu0
    %9064 = vmatprep.mubr.bf16.mxu0 %v7992
    %9065 = vmatmul.mubr.bf16.gmra.mrb[0].mxu0 %v7991
    %v9066 = vpop.f32.mrb[0].mxu0
    %v9067 = vadd.f32 %v8906, %v9066
    %v9068 = vpop.f32.mrb[0].mxu0
    %v9069 = vpop.f32.mrb[0].mxu0
    %v9070 = vadd.f32 %v8909, %v9069
    %v9071 = vpop.f32.mrb[0].mxu0
    %9072 = vmatprep.mubr.bf16.mxu0 %v8001
    %9073 = vmatmul.mubr.bf16.gmra.mrb[0].mxu0 %v8000
    %v9074 = vpop.f32.mrb[0].mxu0
    %v9075 = vadd.f32 %v8914, %v9074
    %v9076 = vpop.f32.mrb[0].mxu0
    %v9077 = vpop.f32.mrb[0].mxu0
    %v9078 = vadd.f32 %v8917, %v9077
    %v9079 = vpop.f32.mrb[0].mxu0
    %9080 = vmatprep.mubr.bf16.mxu0 %v8010
    %9081 = vmatmul.mubr.bf16.gmra.mrb[0].mxu0 %v8009
    %v9082 = vpop.f32.mrb[0].mxu0
    %v9083 = vadd.f32 %v8922, %v9082
    %v9084 = vpop.f32.mrb[0].mxu0
    %v9085 = vpop.f32.mrb[0].mxu0
    %v9086 = vadd.f32 %v8925, %v9085
    %v9087 = vpop.f32.mrb[0].mxu0
    %9088 = vmatprep.mubr.bf16.mxu0 %v8019
    %9089 = vmatmul.mubr.bf16.gmra.mrb[0].mxu0 %v8018
    %v9090 = vpop.f32.mrb[0].mxu0
    %v9091 = vadd.f32 %v8930, %v9090
    %v9092 = vpop.f32.mrb[0].mxu0
    %v9093 = vpop.f32.mrb[0].mxu0
    %v9094 = vadd.f32 %v8933, %v9093
    %v9095 = vpop.f32.mrb[0].mxu0
    %9096 = vmatprep.mubr.bf16.mxu0 %v8028
    %9097 = vmatmul.mubr.bf16.gmra.mrb[0].mxu0 %v8027
    %v9098 = vpop.f32.mrb[0].mxu0
    %v9099 = vadd.f32 %v8938, %v9098
    %v9100 = vpop.f32.mrb[0].mxu0
    %v9101 = vpop.f32.mrb[0].mxu0
    %v9102 = vadd.f32 %v8941, %v9101
    %v9103 = vpop.f32.mrb[0].mxu0
    %9104 = vmatprep.mubr.bf16.mxu0 %v8037
    %9105 = vmatmul.mubr.bf16.gmra.mrb[0].mxu0 %v8036
    %v9106 = vpop.f32.mrb[0].mxu0
    %v9107 = vadd.f32 %v8946, %v9106
    %v9108 = vpop.f32.mrb[0].mxu0
    %v9109 = vpop.f32.mrb[0].mxu0
    %v9110 = vadd.f32 %v8949, %v9109
    %v9111 = vpop.f32.mrb[0].mxu0
    %9112 = vmatprep.mubr.bf16.mxu0 %v8046
    %9113 = vmatmul.mubr.bf16.gmra.mrb[0].mxu0 %v8045
    %v9114 = vpop.f32.mrb[0].mxu0
    %v9115 = vadd.f32 %v8954, %v9114
    %v9116 = vpop.f32.mrb[0].mxu0
    %v9117 = vpop.f32.mrb[0].mxu0
    %v9118 = vadd.f32 %v8957, %v9117
    %v9119 = vpop.f32.mrb[0].mxu0
    %9120 = vmatprep.mubr.bf16.mxu0 %v8055
    %9121 = vmatmul.mubr.bf16.gmra.mrb[0].mxu0 %v8054
    %v9122 = vpop.f32.mrb[0].mxu0
    %v9123 = vadd.f32 %v8962, %v9122
    %v9124 = vpop.f32.mrb[0].mxu0
    %v9125 = vpop.f32.mrb[0].mxu0
    %v9126 = vadd.f32 %v8965, %v9125
    %v9127 = vpop.f32.mrb[0].mxu0
    %9128 = vmatprep.mubr.bf16.mxu0 %v8064
    %9129 = vmatmul.mubr.bf16.gmra.mrb[0].mxu0 %v8063
    %v9130 = vpop.f32.mrb[0].mxu0
    %v9131 = vadd.f32 %v8970, %v9130
    %v9132 = vpop.f32.mrb[0].mxu0
    %v9133 = vpop.f32.mrb[0].mxu0
    %v9134 = vadd.f32 %v8973, %v9133
    %v9135 = vpop.f32.mrb[0].mxu0
    %9136 = vmatprep.mubr.bf16.mxu0 %v8073
    %9137 = vmatmul.mubr.bf16.gmra.mrb[0].mxu0 %v8072
    %v9138 = vpop.f32.mrb[0].mxu0
    %v9139 = vadd.f32 %v8978, %v9138
    %v9140 = vpop.f32.mrb[0].mxu0
    %v9141 = vpop.f32.mrb[0].mxu0
    %v9142 = vadd.f32 %v8981, %v9141
    %v9143 = vpop.f32.mrb[0].mxu0
    %9144 = vmatprep.mubr.bf16.mxu0 %v8082
    %9145 = vmatmul.mubr.bf16.gmra.mrb[0].mxu0 %v8081
    %v9146 = vpop.f32.mrb[0].mxu0
    %v9147 = vadd.f32 %v8986, %v9146
    %v9148 = vpop.f32.mrb[0].mxu0
    %v9149 = vpop.f32.mrb[0].mxu0
    %v9150 = vadd.f32 %v8989, %v9149
    %v9151 = vpop.f32.mrb[0].mxu0
    %9152 = vmatprep.mubr.bf16.mxu0 %v8091
    %9153 = vmatmul.mubr.bf16.gmra.mrb[0].mxu0 %v8090
    %v9154 = vpop.f32.mrb[0].mxu0
    %v9155 = vadd.f32 %v8994, %v9154
    %v9156 = vpop.f32.mrb[0].mxu0
    %v9157 = vpop.f32.mrb[0].mxu0
    %v9158 = vadd.f32 %v8997, %v9157
    %v9159 = vpop.f32.mrb[0].mxu0
    %9160 = vdwg.mxu0
    %9161 = vmatprep.subr.bf16.mxu0 0
    %9162 = vmatpush1.bf16.msra.mxu0 %v8582
    %9163 = vmatprep.subr.bf16.mxu0 0
    %9164 = vmatpush1.bf16.msra.mxu0 %v8583
    %9165 = vmatprep.subr.bf16.mxu0 0
    %9166 = vmatpush1.bf16.msra.mxu0 %v8584
    %9167 = vmatprep.subr.bf16.mxu0 0
    %9168 = vmatpush1.bf16.msra.mxu0 %v8585
    %9169 = vmatprep.subr.bf16.mxu0 0
    %9170 = vmatpush1.bf16.msra.mxu0 %v8586
    %9171 = vmatprep.subr.bf16.mxu0 0
    %9172 = vmatpush1.bf16.msra.mxu0 %v8587
    %9173 = vmatprep.subr.bf16.mxu0 0
    %9174 = vmatpush1.bf16.msra.mxu0 %v8588
    %9175 = vmatprep.subr.bf16.mxu0 0
    %9176 = vmatpush1.bf16.msra.mxu0 %v8589
    %9177 = vmatprep.subr.bf16.mxu0 0
    %9178 = vmatpush1.bf16.msra.mxu0 %v8590
    %9179 = vmatprep.subr.bf16.mxu0 0
    %9180 = vmatpush1.bf16.msra.mxu0 %v8591
    %9181 = vmatprep.subr.bf16.mxu0 0
    %9182 = vmatpush1.bf16.msra.mxu0 %v8592
    %9183 = vmatprep.subr.bf16.mxu0 0
    %9184 = vmatpush1.bf16.msra.mxu0 %v8593
    %9185 = vmatprep.subr.bf16.mxu0 0
    %9186 = vmatpush1.bf16.msra.mxu0 %v8594
    %9187 = vmatprep.subr.bf16.mxu0 0
    %9188 = vmatpush1.bf16.msra.mxu0 %v8595
    %9189 = vmatprep.subr.bf16.mxu0 0
    %9190 = vmatpush1.bf16.msra.mxu0 %v8596
    %9191 = vmatprep.subr.bf16.mxu0 0
    %9192 = vmatpush1.bf16.msra.mxu0 %v8597
    %9193 = vmatprep.mubr.bf16.mxu0 %v7958
    %9194 = vmatmul.mubr.bf16.gmra.mrb[0].mxu0 %v7957
    %v9195 = vpop.f32.mrb[0].mxu0
    %v9196 = vadd.f32 %v9035, %v9195
    %v9197 = vpop.f32.mrb[0].mxu0
    %v9198 = vpop.f32.mrb[0].mxu0
    %v9199 = vadd.f32 %v9038, %v9198
    %v9200 = vpop.f32.mrb[0].mxu0
    %9201 = vmatprep.mubr.bf16.mxu0 %v7967
    %9202 = vmatmul.mubr.bf16.gmra.mrb[0].mxu0 %v7966
    %v9203 = vpop.f32.mrb[0].mxu0
    %v9204 = vadd.f32 %v9043, %v9203
    %v9205 = vpop.f32.mrb[0].mxu0
    %v9206 = vpop.f32.mrb[0].mxu0
    %v9207 = vadd.f32 %v9046, %v9206
    %v9208 = vpop.f32.mrb[0].mxu0
    %9209 = vmatprep.mubr.bf16.mxu0 %v7976
    %9210 = vmatmul.mubr.bf16.gmra.mrb[0].mxu0 %v7975
    %v9211 = vpop.f32.mrb[0].mxu0
    %v9212 = vadd.f32 %v9051, %v9211
    %v9213 = vpop.f32.mrb[0].mxu0
    %v9214 = vpop.f32.mrb[0].mxu0
    %v9215 = vadd.f32 %v9054, %v9214
    %v9216 = vpop.f32.mrb[0].mxu0
    %9217 = vmatprep.mubr.bf16.mxu0 %v7985
    %9218 = vmatmul.mubr.bf16.gmra.mrb[0].mxu0 %v7984
    %v9219 = vpop.f32.mrb[0].mxu0
    %v9220 = vadd.f32 %v9059, %v9219
    %v9221 = vpop.f32.mrb[0].mxu0
    %v9222 = vpop.f32.mrb[0].mxu0
    %v9223 = vadd.f32 %v9062, %v9222
    %v9224 = vpop.f32.mrb[0].mxu0
    %9225 = vmatprep.mubr.bf16.mxu0 %v7994
    %9226 = vmatmul.mubr.bf16.gmra.mrb[0].mxu0 %v7993
    %v9227 = vpop.f32.mrb[0].mxu0
    %v9228 = vadd.f32 %v9067, %v9227
    %v9229 = vpop.f32.mrb[0].mxu0
    %v9230 = vpop.f32.mrb[0].mxu0
    %v9231 = vadd.f32 %v9070, %v9230
    %v9232 = vpop.f32.mrb[0].mxu0
    %9233 = vmatprep.mubr.bf16.mxu0 %v8003
    %9234 = vmatmul.mubr.bf16.gmra.mrb[0].mxu0 %v8002
    %v9235 = vpop.f32.mrb[0].mxu0
    %v9236 = vadd.f32 %v9075, %v9235
    %v9237 = vpop.f32.mrb[0].mxu0
    %v9238 = vpop.f32.mrb[0].mxu0
    %v9239 = vadd.f32 %v9078, %v9238
    %v9240 = vpop.f32.mrb[0].mxu0
    %9241 = vmatprep.mubr.bf16.mxu0 %v8012
    %9242 = vmatmul.mubr.bf16.gmra.mrb[0].mxu0 %v8011
    %v9243 = vpop.f32.mrb[0].mxu0
    %v9244 = vadd.f32 %v9083, %v9243
    %v9245 = vpop.f32.mrb[0].mxu0
    %v9246 = vpop.f32.mrb[0].mxu0
    %v9247 = vadd.f32 %v9086, %v9246
    %v9248 = vpop.f32.mrb[0].mxu0
    %9249 = vmatprep.mubr.bf16.mxu0 %v8021
    %9250 = vmatmul.mubr.bf16.gmra.mrb[0].mxu0 %v8020
    %v9251 = vpop.f32.mrb[0].mxu0
    %v9252 = vadd.f32 %v9091, %v9251
    %v9253 = vpop.f32.mrb[0].mxu0
    %v9254 = vpop.f32.mrb[0].mxu0
    %v9255 = vadd.f32 %v9094, %v9254
    %v9256 = vpop.f32.mrb[0].mxu0
    %9257 = vmatprep.mubr.bf16.mxu0 %v8030
    %9258 = vmatmul.mubr.bf16.gmra.mrb[0].mxu0 %v8029
    %v9259 = vpop.f32.mrb[0].mxu0
    %v9260 = vadd.f32 %v9099, %v9259
    %v9261 = vpop.f32.mrb[0].mxu0
    %v9262 = vpop.f32.mrb[0].mxu0
    %v9263 = vadd.f32 %v9102, %v9262
    %v9264 = vpop.f32.mrb[0].mxu0
    %9265 = vmatprep.mubr.bf16.mxu0 %v8039
    %9266 = vmatmul.mubr.bf16.gmra.mrb[0].mxu0 %v8038
    %v9267 = vpop.f32.mrb[0].mxu0
    %v9268 = vadd.f32 %v9107, %v9267
    %v9269 = vpop.f32.mrb[0].mxu0
    %v9270 = vpop.f32.mrb[0].mxu0
    %v9271 = vadd.f32 %v9110, %v9270
    %v9272 = vpop.f32.mrb[0].mxu0
    %9273 = vmatprep.mubr.bf16.mxu0 %v8048
    %9274 = vmatmul.mubr.bf16.gmra.mrb[0].mxu0 %v8047
    %v9275 = vpop.f32.mrb[0].mxu0
    %v9276 = vadd.f32 %v9115, %v9275
    %v9277 = vpop.f32.mrb[0].mxu0
    %v9278 = vpop.f32.mrb[0].mxu0
    %v9279 = vadd.f32 %v9118, %v9278
    %v9280 = vpop.f32.mrb[0].mxu0
    %9281 = vmatprep.mubr.bf16.mxu0 %v8057
    %9282 = vmatmul.mubr.bf16.gmra.mrb[0].mxu0 %v8056
    %v9283 = vpop.f32.mrb[0].mxu0
    %v9284 = vadd.f32 %v9123, %v9283
    %v9285 = vpop.f32.mrb[0].mxu0
    %v9286 = vpop.f32.mrb[0].mxu0
    %v9287 = vadd.f32 %v9126, %v9286
    %v9288 = vpop.f32.mrb[0].mxu0
    %9289 = vmatprep.mubr.bf16.mxu0 %v8066
    %9290 = vmatmul.mubr.bf16.gmra.mrb[0].mxu0 %v8065
    %v9291 = vpop.f32.mrb[0].mxu0
    %v9292 = vadd.f32 %v9131, %v9291
    %v9293 = vpop.f32.mrb[0].mxu0
    %v9294 = vpop.f32.mrb[0].mxu0
    %v9295 = vadd.f32 %v9134, %v9294
    %v9296 = vpop.f32.mrb[0].mxu0
    %9297 = vmatprep.mubr.bf16.mxu0 %v8075
    %9298 = vmatmul.mubr.bf16.gmra.mrb[0].mxu0 %v8074
    %v9299 = vpop.f32.mrb[0].mxu0
    %v9300 = vadd.f32 %v9139, %v9299
    %v9301 = vpop.f32.mrb[0].mxu0
    %v9302 = vpop.f32.mrb[0].mxu0
    %v9303 = vadd.f32 %v9142, %v9302
    %v9304 = vpop.f32.mrb[0].mxu0
    %9305 = vmatprep.mubr.bf16.mxu0 %v8084
    %9306 = vmatmul.mubr.bf16.gmra.mrb[0].mxu0 %v8083
    %v9307 = vpop.f32.mrb[0].mxu0
    %v9308 = vadd.f32 %v9147, %v9307
    %v9309 = vpop.f32.mrb[0].mxu0
    %v9310 = vpop.f32.mrb[0].mxu0
    %v9311 = vadd.f32 %v9150, %v9310
    %v9312 = vpop.f32.mrb[0].mxu0
    %9313 = vmatprep.mubr.bf16.mxu0 %v8093
    %9314 = vmatmul.mubr.bf16.gmra.mrb[0].mxu0 %v8092
    %v9315 = vpop.f32.mrb[0].mxu0
    %v9316 = vadd.f32 %v9155, %v9315
    %v9317 = vpop.f32.mrb[0].mxu0
    %v9318 = vpop.f32.mrb[0].mxu0
    %v9319 = vadd.f32 %v9158, %v9318
    %v9320 = vpop.f32.mrb[0].mxu0
    %9321 = vdwg.mxu0
    %9322 = vmatprep.subr.bf16.mxu0 0
    %9323 = vmatpush1.bf16.msra.mxu0 %v8598
    %9324 = vmatprep.subr.bf16.mxu0 0
    %9325 = vmatpush1.bf16.msra.mxu0 %v8599
    %9326 = vmatprep.subr.bf16.mxu0 0
    %9327 = vmatpush1.bf16.msra.mxu0 %v8600
    %9328 = vmatprep.subr.bf16.mxu0 0
    %9329 = vmatpush1.bf16.msra.mxu0 %v8601
    %9330 = vmatprep.subr.bf16.mxu0 0
    %9331 = vmatpush1.bf16.msra.mxu0 %v8602
    %9332 = vmatprep.subr.bf16.mxu0 0
    %9333 = vmatpush1.bf16.msra.mxu0 %v8603
    %9334 = vmatprep.subr.bf16.mxu0 0
    %9335 = vmatpush1.bf16.msra.mxu0 %v8604
    %9336 = vmatprep.subr.bf16.mxu0 0
    %9337 = vmatpush1.bf16.msra.mxu0 %v8605
    %9338 = vmatprep.subr.bf16.mxu0 0
    %9339 = vmatpush1.bf16.msra.mxu0 0
    %9340 = vmatprep.subr.bf16.mxu0 0
    %9341 = vmatpush1.bf16.msra.mxu0 0
    %9342 = vmatprep.subr.bf16.mxu0 0
    %9343 = vmatpush1.bf16.msra.mxu0 0
    %9344 = vmatprep.subr.bf16.mxu0 0
    %9345 = vmatpush1.bf16.msra.mxu0 0
    %9346 = vmatprep.subr.bf16.mxu0 0
    %9347 = vmatpush1.bf16.msra.mxu0 0
    %9348 = vmatprep.subr.bf16.mxu0 0
    %9349 = vmatpush1.bf16.msra.mxu0 0
    %9350 = vmatprep.subr.bf16.mxu0 0
    %9351 = vmatpush1.bf16.msra.mxu0 0
    %9352 = vmatprep.subr.bf16.mxu0 0
    %9353 = vmatpush1.bf16.msra.mxu0 0
    %9354 = vmatprep.mubr.bf16.mxu0 0
    %9355 = vmatmul.mubr.bf16.gmra.mrb[0].mxu0 %v7959
    %v9356 = vpop.f32.mrb[0].mxu0
    %v9357 = vadd.f32 %v9196, %v9356
    %v9358 = vpop.f32.mrb[0].mxu0
    %v9359 = vpop.f32.mrb[0].mxu0
    %v9360 = vadd.f32 %v9199, %v9359
    %v9361 = vpop.f32.mrb[0].mxu0
    %9362 = vmatprep.mubr.bf16.mxu0 0
    %9363 = vmatmul.mubr.bf16.gmra.mrb[0].mxu0 %v7968
    %v9364 = vpop.f32.mrb[0].mxu0
    %v9365 = vadd.f32 %v9204, %v9364
    %v9366 = vpop.f32.mrb[0].mxu0
    %v9367 = vpop.f32.mrb[0].mxu0
    %v9368 = vadd.f32 %v9207, %v9367
    %v9369 = vpop.f32.mrb[0].mxu0
    %9370 = vmatprep.mubr.bf16.mxu0 0
    %9371 = vmatmul.mubr.bf16.gmra.mrb[0].mxu0 %v7977
    %v9372 = vpop.f32.mrb[0].mxu0
    %v9373 = vadd.f32 %v9212, %v9372
    %v9374 = vpop.f32.mrb[0].mxu0
    %v9375 = vpop.f32.mrb[0].mxu0
    %v9376 = vadd.f32 %v9215, %v9375
    %v9377 = vpop.f32.mrb[0].mxu0
    %9378 = vmatprep.mubr.bf16.mxu0 0
    %9379 = vmatmul.mubr.bf16.gmra.mrb[0].mxu0 %v7986
    %v9380 = vpop.f32.mrb[0].mxu0
    %v9381 = vadd.f32 %v9220, %v9380
    %v9382 = vpop.f32.mrb[0].mxu0
    %v9383 = vpop.f32.mrb[0].mxu0
    %v9384 = vadd.f32 %v9223, %v9383
    %v9385 = vpop.f32.mrb[0].mxu0
    %9386 = vmatprep.mubr.bf16.mxu0 0
    %9387 = vmatmul.mubr.bf16.gmra.mrb[0].mxu0 %v7995
    %v9388 = vpop.f32.mrb[0].mxu0
    %v9389 = vadd.f32 %v9228, %v9388
    %v9390 = vpop.f32.mrb[0].mxu0
    %v9391 = vpop.f32.mrb[0].mxu0
    %v9392 = vadd.f32 %v9231, %v9391
    %v9393 = vpop.f32.mrb[0].mxu0
    %9394 = vmatprep.mubr.bf16.mxu0 0
    %9395 = vmatmul.mubr.bf16.gmra.mrb[0].mxu0 %v8004
    %v9396 = vpop.f32.mrb[0].mxu0
    %v9397 = vadd.f32 %v9236, %v9396
    %v9398 = vpop.f32.mrb[0].mxu0
    %v9399 = vpop.f32.mrb[0].mxu0
    %v9400 = vadd.f32 %v9239, %v9399
    %v9401 = vpop.f32.mrb[0].mxu0
    %9402 = vmatprep.mubr.bf16.mxu0 0
    %9403 = vmatmul.mubr.bf16.gmra.mrb[0].mxu0 %v8013
    %v9404 = vpop.f32.mrb[0].mxu0
    %v9405 = vadd.f32 %v9244, %v9404
    %v9406 = vpop.f32.mrb[0].mxu0
    %v9407 = vpop.f32.mrb[0].mxu0
    %v9408 = vadd.f32 %v9247, %v9407
    %v9409 = vpop.f32.mrb[0].mxu0
    %9410 = vmatprep.mubr.bf16.mxu0 0
    %9411 = vmatmul.mubr.bf16.gmra.mrb[0].mxu0 %v8022
    %v9412 = vpop.f32.mrb[0].mxu0
    %v9413 = vadd.f32 %v9252, %v9412
    %v9414 = vpop.f32.mrb[0].mxu0
    %v9415 = vpop.f32.mrb[0].mxu0
    %v9416 = vadd.f32 %v9255, %v9415
    %v9417 = vpop.f32.mrb[0].mxu0
    %9418 = vmatprep.mubr.bf16.mxu0 0
    %9419 = vmatmul.mubr.bf16.gmra.mrb[0].mxu0 %v8031
    %v9420 = vpop.f32.mrb[0].mxu0
    %v9421 = vadd.f32 %v9260, %v9420
    %v9422 = vpop.f32.mrb[0].mxu0
    %v9423 = vpop.f32.mrb[0].mxu0
    %v9424 = vadd.f32 %v9263, %v9423
    %v9425 = vpop.f32.mrb[0].mxu0
    %9426 = vmatprep.mubr.bf16.mxu0 0
    %9427 = vmatmul.mubr.bf16.gmra.mrb[0].mxu0 %v8040
    %v9428 = vpop.f32.mrb[0].mxu0
    %v9429 = vadd.f32 %v9268, %v9428
    %v9430 = vpop.f32.mrb[0].mxu0
    %v9431 = vpop.f32.mrb[0].mxu0
    %v9432 = vadd.f32 %v9271, %v9431
    %v9433 = vpop.f32.mrb[0].mxu0
    %9434 = vmatprep.mubr.bf16.mxu0 0
    %9435 = vmatmul.mubr.bf16.gmra.mrb[0].mxu0 %v8049
    %v9436 = vpop.f32.mrb[0].mxu0
    %v9437 = vadd.f32 %v9276, %v9436
    %v9438 = vpop.f32.mrb[0].mxu0
    %v9439 = vpop.f32.mrb[0].mxu0
    %v9440 = vadd.f32 %v9279, %v9439
    %v9441 = vpop.f32.mrb[0].mxu0
    %9442 = vmatprep.mubr.bf16.mxu0 0
    %9443 = vmatmul.mubr.bf16.gmra.mrb[0].mxu0 %v8058
    %v9444 = vpop.f32.mrb[0].mxu0
    %v9445 = vadd.f32 %v9284, %v9444
    %v9446 = vpop.f32.mrb[0].mxu0
    %v9447 = vpop.f32.mrb[0].mxu0
    %v9448 = vadd.f32 %v9287, %v9447
    %v9449 = vpop.f32.mrb[0].mxu0
    %9450 = vmatprep.mubr.bf16.mxu0 0
    %9451 = vmatmul.mubr.bf16.gmra.mrb[0].mxu0 %v8067
    %v9452 = vpop.f32.mrb[0].mxu0
    %v9453 = vadd.f32 %v9292, %v9452
    %v9454 = vpop.f32.mrb[0].mxu0
    %v9455 = vpop.f32.mrb[0].mxu0
    %v9456 = vadd.f32 %v9295, %v9455
    %v9457 = vpop.f32.mrb[0].mxu0
    %9458 = vmatprep.mubr.bf16.mxu0 0
    %9459 = vmatmul.mubr.bf16.gmra.mrb[0].mxu0 %v8076
    %v9460 = vpop.f32.mrb[0].mxu0
    %v9461 = vadd.f32 %v9300, %v9460
    %v9462 = vpop.f32.mrb[0].mxu0
    %v9463 = vpop.f32.mrb[0].mxu0
    %v9464 = vadd.f32 %v9303, %v9463
    %v9465 = vpop.f32.mrb[0].mxu0
    %9466 = vmatprep.mubr.bf16.mxu0 0
    %9467 = vmatmul.mubr.bf16.gmra.mrb[0].mxu0 %v8085
    %v9468 = vpop.f32.mrb[0].mxu0
    %v9469 = vadd.f32 %v9308, %v9468
    %v9470 = vpop.f32.mrb[0].mxu0
    %v9471 = vpop.f32.mrb[0].mxu0
    %v9472 = vadd.f32 %v9311, %v9471
    %v9473 = vpop.f32.mrb[0].mxu0
    %9474 = vmatprep.mubr.bf16.mxu0 0
    %9475 = vmatmul.mubr.bf16.gmra.mrb[0].mxu0 %v8094
    %v9476 = vpop.f32.mrb[0].mxu0
    %v9477 = vadd.f32 %v9316, %v9476
    %v9478 = vpop.f32.mrb[0].mxu0
    %v9479 = vpop.f32.mrb[0].mxu0
    %v9480 = vadd.f32 %v9319, %v9479
    %v9481 = vpop.f32.mrb[0].mxu0
    %9482 = vdwg.mxu0
    %v9483 = vld [vmem:[%s4838] sm:$0xff]
    %v9484 = vld [vmem:[%s4838 + $0x8] sm:$0xff]
    %v9485 = vld [vmem:[%s4838 + $0x10] sm:$0xff]
    %v9486 = vld [vmem:[%s4838 + $0x18] sm:$0xff]
    %v9487 = vld [vmem:[%s4838 + $0x20] sm:$0xff]
    %v9488 = vld [vmem:[%s4838 + $0x28] sm:$0xff]
    %v9489 = vld [vmem:[%s4838 + $0x30] sm:$0xff]
    %v9490 = vld [vmem:[%s4838 + $0x38] sm:$0xff]
    %v9491 = vld [vmem:[%s4838 + $0x40] sm:$0xff]
    %v9492 = vld [vmem:[%s4838 + $0x48] sm:$0xff]
    %v9493 = vld [vmem:[%s4838 + $0x50] sm:$0xff]
    %v9494 = vld [vmem:[%s4838 + $0x58] sm:$0xff]
    %v9495 = vld [vmem:[%s4838 + $0x60] sm:$0xff]
    %v9496 = vld [vmem:[%s4838 + $0x68] sm:$0xff]
    %v9497 = vld [vmem:[%s4838 + $0x70] sm:$0xff]
    %v9498 = vld [vmem:[%s4838 + $0x78] sm:$0xff]
    %v9499 = vld [vmem:[%s4838 + $0x80] sm:$0xff]
    %v9500 = vld [vmem:[%s4838 + $0x88] sm:$0xff]
    %v9501 = vld [vmem:[%s4838 + $0x90] sm:$0xff]
    %v9502 = vld [vmem:[%s4838 + $0x98] sm:$0xff]
    %v9503 = vld [vmem:[%s4838 + $0xa0] sm:$0xff]
    %v9504 = vld [vmem:[%s4838 + $0xa8] sm:$0xff]
    %v9505 = vld [vmem:[%s4838 + $0xb0] sm:$0xff]
    %v9506 = vld [vmem:[%s4838 + $0xb8] sm:$0xff]
    %v9507 = vld [vmem:[%s4838 + $0xc0] sm:$0xff]
    %v9508 = vld [vmem:[%s4838 + $0xc8] sm:$0xff]
    %v9509 = vld [vmem:[%s4838 + $0xd0] sm:$0xff]
    %v9510 = vld [vmem:[%s4838 + $0xd8] sm:$0xff]
    %v9511 = vld [vmem:[%s4838 + $0xe0] sm:$0xff]
    %v9512 = vld [vmem:[%s4838 + $0xe8] sm:$0xff]
    %v9513 = vld [vmem:[%s4838 + $0xf0] sm:$0xff]
    %v9514 = vld [vmem:[%s4838 + $0xf8] sm:$0xff]
    %v9515 = vadd.f32 %v9357, %v9483
    %v9516 = vadd.f32 %v9360, %v9484
    %v9517 = vadd.f32 %v9365, %v9485
    %v9518 = vadd.f32 %v9368, %v9486
    %v9519 = vadd.f32 %v9373, %v9487
    %v9520 = vadd.f32 %v9376, %v9488
    %v9521 = vadd.f32 %v9381, %v9489
    %v9522 = vadd.f32 %v9384, %v9490
    %v9523 = vadd.f32 %v9389, %v9491
    %v9524 = vadd.f32 %v9392, %v9492
    %v9525 = vadd.f32 %v9397, %v9493
    %v9526 = vadd.f32 %v9400, %v9494
    %v9527 = vadd.f32 %v9405, %v9495
    %v9528 = vadd.f32 %v9408, %v9496
    %v9529 = vadd.f32 %v9413, %v9497
    %v9530 = vadd.f32 %v9416, %v9498
    %v9531 = vadd.f32 %v9421, %v9499
    %v9532 = vadd.f32 %v9424, %v9500
    %v9533 = vadd.f32 %v9429, %v9501
    %v9534 = vadd.f32 %v9432, %v9502
    %v9535 = vadd.f32 %v9437, %v9503
    %v9536 = vadd.f32 %v9440, %v9504
    %v9537 = vadd.f32 %v9445, %v9505
    %v9538 = vadd.f32 %v9448, %v9506
    %v9539 = vadd.f32 %v9453, %v9507
    %v9540 = vadd.f32 %v9456, %v9508
    %v9541 = vadd.f32 %v9461, %v9509
    %v9542 = vadd.f32 %v9464, %v9510
    %v9543 = vadd.f32 %v9469, %v9511
    %v9544 = vadd.f32 %v9472, %v9512
    %v9545 = vadd.f32 %v9477, %v9513
    %v9546 = vadd.f32 %v9480, %v9514
    %s9547 = scalar_lea.vmem [#allocation13], 256
    %9548 = vst [vmem:[%s9547] sm:$0xff] %v9515
    %9549 = vst [vmem:[%s9547 + $0x8] sm:$0xff] %v9516
    %9550 = vst [vmem:[%s9547 + $0x10] sm:$0xff] %v9517
    %9551 = vst [vmem:[%s9547 + $0x18] sm:$0xff] %v9518
    %9552 = vst [vmem:[%s9547 + $0x20] sm:$0xff] %v9519
    %9553 = vst [vmem:[%s9547 + $0x28] sm:$0xff] %v9520
    %9554 = vst [vmem:[%s9547 + $0x30] sm:$0xff] %v9521
    %9555 = vst [vmem:[%s9547 + $0x38] sm:$0xff] %v9522
    %9556 = vst [vmem:[%s9547 + $0x40] sm:$0xff] %v9523
    %9557 = vst [vmem:[%s9547 + $0x48] sm:$0xff] %v9524
    %9558 = vst [vmem:[%s9547 + $0x50] sm:$0xff] %v9525
    %9559 = vst [vmem:[%s9547 + $0x58] sm:$0xff] %v9526
    %9560 = vst [vmem:[%s9547 + $0x60] sm:$0xff] %v9527
    %9561 = vst [vmem:[%s9547 + $0x68] sm:$0xff] %v9528
    %9562 = vst [vmem:[%s9547 + $0x70] sm:$0xff] %v9529
    %9563 = vst [vmem:[%s9547 + $0x78] sm:$0xff] %v9530
    %9564 = vst [vmem:[%s9547 + $0x80] sm:$0xff] %v9531
    %9565 = vst [vmem:[%s9547 + $0x88] sm:$0xff] %v9532
    %9566 = vst [vmem:[%s9547 + $0x90] sm:$0xff] %v9533
    %9567 = vst [vmem:[%s9547 + $0x98] sm:$0xff] %v9534
    %9568 = vst [vmem:[%s9547 + $0xa0] sm:$0xff] %v9535
    %9569 = vst [vmem:[%s9547 + $0xa8] sm:$0xff] %v9536
    %9570 = vst [vmem:[%s9547 + $0xb0] sm:$0xff] %v9537
    %9571 = vst [vmem:[%s9547 + $0xb8] sm:$0xff] %v9538
    %9572 = vst [vmem:[%s9547 + $0xc0] sm:$0xff] %v9539
    %9573 = vst [vmem:[%s9547 + $0xc8] sm:$0xff] %v9540
    %9574 = vst [vmem:[%s9547 + $0xd0] sm:$0xff] %v9541
    %9575 = vst [vmem:[%s9547 + $0xd8] sm:$0xff] %v9542
    %9576 = vst [vmem:[%s9547 + $0xe0] sm:$0xff] %v9543
    %9577 = vst [vmem:[%s9547 + $0xe8] sm:$0xff] %v9544
    %9578 = vst [vmem:[%s9547 + $0xf0] sm:$0xff] %v9545
    %9579 = vst [vmem:[%s9547 + $0xf8] sm:$0xff] %v9546
    // Predicated region
    $region46: #{tpu_custom_call.1} parent=1 // pred_check
      _
    $region47: #{tpu_custom_call.1} parent=1 // pred_check_branch
      %9581 = sbr.rel (0) target = $region49
    $region48: #{tpu_custom_call.1} parent=1 // pred_region
      %s9583 = ssub.s32 8192, 8192
      %9584 = vsyncadd [#allocation6], %s9583
      %s9585 = sshll.u32 [#allocation13], 4
      %s9586 = int_to_ptr.vmem [resolvable:$true] %s9585
      %9591 = dma.vmem_to_hbm [thread:$0]  %s9586, 8192, %s6, [#allocation6], 128, 128, 8
    $region49: #{tpu_custom_call.1} parent=1 // pred_fallthru
      _
    // Predicated region
    $region50: #{tpu_custom_call.1} parent=1 // pred_check
      _
    $region51: #{tpu_custom_call.1} parent=1 // pred_check_branch
      %9593 = sbr.rel (0) target = $region53
    $region52: #{tpu_custom_call.1} parent=1 // pred_region
      %9594 = dma.done [#allocation6], 8192
    $region53: #{tpu_custom_call.1} parent=1 // pred_fallthru
      _
    %9595 = vsyncpa [#allocation5], 1
    %9596 = vsyncpa [#allocation8], 1
    %9597 = vsyncpa [#allocation11], 1
    %9598 = vsyncpa [#allocation6], 1

</llo_original>
